<compile_context>
chip_gen: v6e
topology: v6e:2x2x1
jax: 0.10.0
libtpu: 0.0.40
codegen_flags: <defaults>
</compile_context>

<pallas_src>
import jax
import jax.numpy as jnp
from jax.experimental import pallas as pl
from jax.experimental.pallas import tpu as pltpu

D_EMBED = 768                # backbone feature width (BiomedCLIP ViT / BERT)
MM_DIM = 1600                # Block fusion mm_dim == output_dim
CHUNKS = 20                  # Block fusion chunks
CHUNK = MM_DIM // CHUNKS     # 80
RANK = 15                    # Block fusion rank
MERGE_DIM = RANK * CHUNK     # 1200
OUT_SIZE = 13                # classifier out_size
OUT_PAD = 16                 # classifier padded to 16 lanes (store is tiny)
VOCAB = 64                   # stand-in token vocab
EPS = 1e-12                  # F.normalize eps
B_PAD = 8                    # batch padded to 8 sublanes
N_HALVES = 2                 # leading "parallel" grid axis (v7x: one per core)
CH_HALF = CHUNKS // N_HALVES # 10 chunks per half


def _l2norm(x):
    return x / jnp.maximum(jnp.sqrt(jnp.sum(x * x, axis=-1, keepdims=True)), EPS)


def _qlinear(x, wq_ref, scale, bias):
    """int8-weight linear: y = (x @ widen(wq)) * scale + bias.

    Weights are int8 in VMEM, widened to bf16 for the MXU; the per-output-channel
    f32 scale is applied to the small (B, N) f32 accumulator, not per weight."""
    y = jnp.dot(x.astype(jnp.bfloat16), wq_ref[...].astype(jnp.bfloat16),
                preferred_element_type=jnp.float32)
    return y * scale + bias


# ---------------------------------------------------------------------------
# Kernel: grid = (N_HALVES, CH_HALF); one Block chunk per grid step.
# ---------------------------------------------------------------------------
def _mm_block_kernel(img_ref, txt_ref,
                     wqi_ref, sbi_ref, wqt_ref, sbt_ref,
                     fw0_ref, fs0_ref, fb0_ref,
                     fw1_ref, fs1_ref, fb1_ref,
                     mw0_ref, ms0_ref, mb0_ref,
                     mw1_ref, ms1_ref, mb1_ref,
                     wo_ref, so_ref, sel_ref, clsw_ref,
                     out_ref,
                     imgn_sc, txtn_sc, acc_sc):
    h = pl.program_id(0)            # which half of the chunks (v7x: one per core)
    j = pl.program_id(1)            # chunk within the half (weights stream on j)
    c = h * CH_HALF + j             # global Block chunk id

    @pl.when(j == 0)
    def _init():
        # Stand-in backbone heads (int8 768->768 proj) + F.normalize(p=2, dim=-1).
        imgn_sc[...] = _l2norm(
            _qlinear(img_ref[...], wqi_ref, sbi_ref[0:1, :], sbi_ref[1:2, :]))
        txtn_sc[...] = _l2norm(
            _qlinear(txt_ref[...], wqt_ref, sbt_ref[0:1, :], sbt_ref[1:2, :]))
        acc_sc[...] = jnp.zeros_like(acc_sc)

    # ---- Block fusion, chunk c ---------------------------------------------
    # linear0 / linear1 column slab for this chunk only (768 -> 80).
    x0c = _qlinear(imgn_sc[...], fw0_ref,
                   fs0_ref[pl.ds(c, 1), :], fb0_ref[pl.ds(c, 1), :])
    x1c = _qlinear(txtn_sc[...], fw1_ref,
                   fs1_ref[pl.ds(c, 1), :], fb1_ref[pl.ds(c, 1), :])
    # low-rank bilinear merge (80 -> 1200 each) and elementwise product.
    m = (_qlinear(x0c, mw0_ref, ms0_ref[pl.ds(c, 1), :], mb0_ref[pl.ds(c, 1), :]) *
         _qlinear(x1c, mw1_ref, ms1_ref[pl.ds(c, 1), :], mb1_ref[pl.ds(c, 1), :]))
    # rank reduction == m.view(B, RANK, CHUNK).sum(1): done on the idle MXU via a
    # 0/1 selection matrix instead of 15 lane-unaligned slice-adds.
    z = jnp.dot(m.astype(jnp.bfloat16), sel_ref[...],
                preferred_element_type=jnp.float32)
    # signed sqrt + per-chunk L2 normalisation ('before_cat').
    z = jnp.sqrt(jnp.maximum(z, 0.0)) - jnp.sqrt(jnp.maximum(-z, 0.0))
    z = _l2norm(z)
    # accumulate this chunk's 80-row slab of linear_out (replaces concat + matmul).
    acc_sc[...] += (jnp.dot(z.astype(jnp.bfloat16), wo_ref[...].astype(jnp.bfloat16),
                            preferred_element_type=jnp.float32)
                    * so_ref[pl.ds(c, 1), :])

    @pl.when(j == CH_HALF - 1)
    def _finalize():
        # classifier on this half's partial sum; the classifier is linear, so the
        # two halves (and the linear_out bias) are combined in the wrapper.
        out_ref[...] = jnp.dot(acc_sc[...], clsw_ref[...],
                               preferred_element_type=jnp.float32)


def _full(shape):
    nd = len(shape)
    return pl.BlockSpec(shape, lambda h, j: (0,) * nd)


def _chunk(full_shape):
    # deliver slab c = h*CH_HALF + j of a (CHUNKS, d1, d2) weight each grid step
    return pl.BlockSpec((None,) + tuple(full_shape[1:]),
                        lambda h, j: (h * CH_HALF + j, 0, 0))


def mm_model_fused(img_flat, txt_emb, p):
    B = img_flat.shape[0]
    assert B <= B_PAD
    img_p = jnp.pad(img_flat, ((0, B_PAD - B), (0, 0)))
    txt_p = jnp.pad(txt_emb, ((0, B_PAD - B), (0, 0)))

    part = pl.pallas_call(
        _mm_block_kernel,
        out_shape=jax.ShapeDtypeStruct((N_HALVES, B_PAD, OUT_PAD), jnp.float32),
        grid_spec=pltpu.PrefetchScalarGridSpec(
            num_scalar_prefetch=0,
            grid=(N_HALVES, CH_HALF),
            in_specs=[
                _full((B_PAD, D_EMBED)),                 # img features
                _full((B_PAD, D_EMBED)),                 # txt features
                _full((D_EMBED, D_EMBED)),               # wq_img (int8)
                _full((2, D_EMBED)),                     # sb_img (scale, bias)
                _full((D_EMBED, D_EMBED)),               # wq_txt (int8)
                _full((2, D_EMBED)),                     # sb_txt
                _chunk((CHUNKS, D_EMBED, CHUNK)),        # fuse linear0 slabs (int8)
                _full((CHUNKS, CHUNK)),                  # fs0
                _full((CHUNKS, CHUNK)),                  # fb0
                _chunk((CHUNKS, D_EMBED, CHUNK)),        # fuse linear1 slabs (int8)
                _full((CHUNKS, CHUNK)),                  # fs1
                _full((CHUNKS, CHUNK)),                  # fb1
                _chunk((CHUNKS, CHUNK, MERGE_DIM)),      # merge_w0 (int8)
                _full((CHUNKS, MERGE_DIM)),              # ms0
                _full((CHUNKS, MERGE_DIM)),              # mb0
                _chunk((CHUNKS, CHUNK, MERGE_DIM)),      # merge_w1 (int8)
                _full((CHUNKS, MERGE_DIM)),              # ms1
                _full((CHUNKS, MERGE_DIM)),              # mb1
                _chunk((CHUNKS, CHUNK, MM_DIM)),         # linear_out slabs (int8)
                _full((CHUNKS, MM_DIM)),                 # ws_out
                _full((MERGE_DIM, CHUNK)),               # rank-sum selection matrix
                _full((MM_DIM, OUT_PAD)),                # classifier weight (f32)
            ],
            out_specs=pl.BlockSpec((None, B_PAD, OUT_PAD), lambda h, j: (h, 0, 0)),
            scratch_shapes=[
                pltpu.VMEM((B_PAD, D_EMBED), jnp.float32),   # normalized img feature
                pltpu.VMEM((B_PAD, D_EMBED), jnp.float32),   # normalized txt feature
                pltpu.VMEM((B_PAD, MM_DIM), jnp.float32),    # linear_out accumulator
            ]),
        compiler_params=pltpu.CompilerParams(
            dimension_semantics=("parallel", "arbitrary"),
            vmem_limit_bytes=32 << 20),
    )(img_p, txt_p,
      p["wq_img"], p["sb_img"], p["wq_txt"], p["sb_txt"],
      p["fw0_q"], p["fs0"], p["fb0"],
      p["fw1_q"], p["fs1"], p["fb1"],
      p["mw0_q"], p["ms0"], p["mb0"],
      p["mw1_q"], p["ms1"], p["mb1"],
      p["wout_q"], p["ws_out"], p["sel"], p["cls_w"])

    # combine the two half partial sums; cls_const = linear_out bias pushed through
    # the (linear) classifier plus the classifier bias.
    logits = part[0] + part[1] + p["cls_const"]
    return logits[:B, :OUT_SIZE]


# ---------------------------------------------------------------------------
# Full forward
# ---------------------------------------------------------------------------
def mm_model_forward(x_img, text_input_ids, params):
    B = x_img.shape[0]
    # TODO(synk): the real module runs pretrained BiomedCLIP ViT-B/16 and PubMedBERT
    # backbones (open_clip); they are replaced here by deterministic stand-ins
    # (flatten / mean token embedding feeding in-kernel 768-d projection heads).
    img_flat = x_img.reshape(B, -1).astype(jnp.float32)                # (B, 768)
    txt_emb = jnp.mean(params["tok_embed"][text_input_ids], axis=1)    # (B, 768)
    logits = mm_model_fused(img_flat, txt_emb, params)
    return {"out": logits}


# ---------------------------------------------------------------------------
# Parameters: PyTorch nn.Linear-style init, then per-output-channel int8 quant.
# ---------------------------------------------------------------------------
def _quant_per_col(w):
    """Symmetric int8 quantization with per-output-column f32 scales.
    w: (..., fan_in, fan_out) -> (int8 weights, (..., fan_out) scales)."""
    amax = jnp.max(jnp.abs(w), axis=-2, keepdims=True)
    scale = jnp.maximum(amax, 1e-8) / 127.0
    q = jnp.clip(jnp.round(w / scale), -127.0, 127.0).astype(jnp.int8)
    return q, jnp.squeeze(scale, axis=-2)


def init_params(key):
    def lin(k, fan_in, fan_out, lead=None):
        bound = 1.0 / (fan_in ** 0.5)
        kw, kb = jax.random.split(k)
        wshape = (fan_in, fan_out) if lead is None else (lead, fan_in, fan_out)
        bshape = (fan_out,) if lead is None else (lead, fan_out)
        w = jax.random.uniform(kw, wshape, jnp.float32, -bound, bound)
        b = jax.random.uniform(kb, bshape, jnp.float32, -bound, bound)
        return w, b

    ks = jax.random.split(key, 9)
    p = {}
    p["tok_embed"] = 0.02 * jax.random.normal(ks[0], (VOCAB, D_EMBED), jnp.float32)

    # stand-in backbone projection heads (768 -> 768)
    w, b = lin(ks[1], D_EMBED, D_EMBED)
    q, s = _quant_per_col(w)
    p["wq_img"], p["sb_img"] = q, jnp.stack([s, b])          # (2, 768)
    w, b = lin(ks[2], D_EMBED, D_EMBED)
    q, s = _quant_per_col(w)
    p["wq_txt"], p["sb_txt"] = q, jnp.stack([s, b])

    # Block linear0 / linear1 (768 -> 1600), stored as per-chunk slabs (20, 768, 80)
    for name, k in (("0", ks[3]), ("1", ks[4])):
        w, b = lin(k, D_EMBED, MM_DIM)
        wc = w.reshape(D_EMBED, CHUNKS, CHUNK).transpose(1, 0, 2)
        q, s = _quant_per_col(wc)
        p[f"fw{name}_q"], p[f"fs{name}"] = q, s               # (20,768,80) i8, (20,80)
        p[f"fb{name}"] = b.reshape(CHUNKS, CHUNK)             # (20,80)

    # Block per-chunk merge linears (80 -> 1200), 20 chunks
    for name, k in (("0", ks[5]), ("1", ks[6])):
        w, b = lin(k, CHUNK, MERGE_DIM, lead=CHUNKS)
        q, s = _quant_per_col(w)
        p[f"mw{name}_q"], p[f"ms{name}"] = q, s               # (20,80,1200) i8, (20,1200)
        p[f"mb{name}"] = b                                    # (20,1200)

    # Block linear_out (1600 -> 1600), stored as 80-row slabs (20, 80, 1600)
    w, bout = lin(ks[7], MM_DIM, MM_DIM)
    q, s = _quant_per_col(w.reshape(CHUNKS, CHUNK, MM_DIM))
    p["wout_q"], p["ws_out"] = q, s                           # (20,80,1600) i8, (20,1600)

    # classifier (1600 -> 13), kept f32 (tiny), zero-padded to 16 output lanes
    cw, cb = lin(ks[8], MM_DIM, OUT_SIZE)
    cw = jnp.pad(cw, ((0, 0), (0, OUT_PAD - OUT_SIZE)))
    cb = jnp.pad(cb, ((0, OUT_PAD - OUT_SIZE),))
    p["cls_w"] = cw
    # logits = (acc + bout) @ cls_w + cls_b = acc @ cls_w + (bout @ cls_w + cls_b)
    p["cls_const"] = (bout @ cw + cb).reshape(1, OUT_PAD)

    # rank-sum selection matrix: sel[r*CHUNK + s, t] = (s == t)
    rows = jnp.arange(MERGE_DIM) % CHUNK
    p["sel"] = (rows[:, None] == jnp.arange(CHUNK)[None, :]).astype(jnp.bfloat16)
    return p


# ---------------------------------------------------------------------------
# Pure-JAX f32 reference using the same (dequantized) parameters.
# ---------------------------------------------------------------------------
def _reference_forward(img_flat, txt_emb, p):
    def deq(q, s):
        return q.astype(jnp.float32) * s[..., None, :]

    def l2n(x):
        return x / jnp.maximum(jnp.sqrt(jnp.sum(x * x, -1, keepdims=True)), EPS)

    xi = l2n(img_flat @ deq(p["wq_img"], p["sb_img"][0]) + p["sb_img"][1])
    xt = l2n(txt_emb @ deq(p["wq_txt"], p["sb_txt"][0]) + p["sb_txt"][1])
    fw0 = deq(p["fw0_q"], p["fs0"])
    fw1 = deq(p["fw1_q"], p["fs1"])
    mw0 = deq(p["mw0_q"], p["ms0"])
    mw1 = deq(p["mw1_q"], p["ms1"])
    wout = deq(p["wout_q"], p["ws_out"])
    acc = jnp.zeros((img_flat.shape[0], MM_DIM), jnp.float32)
    for c in range(CHUNKS):
        x0c = xi @ fw0[c] + p["fb0"][c]
        x1c = xt @ fw1[c] + p["fb1"][c]
        m = (x0c @ mw0[c] + p["mb0"][c]) * (x1c @ mw1[c] + p["mb1"][c])
        z = m.reshape(-1, RANK, CHUNK).sum(axis=1)
        z = jnp.sqrt(jnp.maximum(z, 0.0)) - jnp.sqrt(jnp.maximum(-z, 0.0))
        z = l2n(z)
        acc = acc + z @ wout[c]
    logits = acc @ p["cls_w"] + p["cls_const"]
    return logits[:, :OUT_SIZE]


if __name__ == "__main__":
    key = jax.random.PRNGKey(0)
    kp, ki, kt = jax.random.split(key, 3)
    params = init_params(kp)

    B = 2
    x_img = jax.random.normal(ki, (B, 3, 16, 16), jnp.float32)   # NCHW images
    text_ids = jax.random.randint(kt, (B, 8), 0, VOCAB)          # (B, seq=8) token ids

    fwd = jax.jit(mm_model_forward)
    out = fwd(x_img, text_ids, params)
    logits = jax.block_until_ready(out["out"])
    assert logits.shape == (B, OUT_SIZE)
    assert bool(jnp.all(jnp.isfinite(logits)))

    # sanity-check against an f32 reference built from the same quantized params
    img_flat = x_img.reshape(B, -1).astype(jnp.float32)
    txt_emb = jnp.mean(params["tok_embed"][text_ids], axis=1)
    ref = _reference_forward(img_flat, txt_emb, params)
    err = float(jnp.max(jnp.abs(logits - ref)))
    assert err < 0.05, f"kernel/reference mismatch: max abs err = {err}"

    print("KERNEL_OK")
</pallas_src>

<mosaic_0001>
module attributes {stable_mosaic.version = 11 : i64} {
  func.func @_mm_block_kernel(%arg0: i32, %arg1: i32, %arg2: memref<8x768xf32, #tpu.memory_space<vmem>>, %arg3: memref<8x768xf32, #tpu.memory_space<vmem>>, %arg4: memref<768x768xi8, #tpu.memory_space<vmem>>, %arg5: memref<2x768xf32, #tpu.memory_space<vmem>>, %arg6: memref<768x768xi8, #tpu.memory_space<vmem>>, %arg7: memref<2x768xf32, #tpu.memory_space<vmem>>, %arg8: memref<1x768x80xi8, #tpu.memory_space<vmem>>, %arg9: memref<20x80xf32, #tpu.memory_space<vmem>>, %arg10: memref<20x80xf32, #tpu.memory_space<vmem>>, %arg11: memref<1x768x80xi8, #tpu.memory_space<vmem>>, %arg12: memref<20x80xf32, #tpu.memory_space<vmem>>, %arg13: memref<20x80xf32, #tpu.memory_space<vmem>>, %arg14: memref<1x80x1200xi8, #tpu.memory_space<vmem>>, %arg15: memref<20x1200xf32, #tpu.memory_space<vmem>>, %arg16: memref<20x1200xf32, #tpu.memory_space<vmem>>, %arg17: memref<1x80x1200xi8, #tpu.memory_space<vmem>>, %arg18: memref<20x1200xf32, #tpu.memory_space<vmem>>, %arg19: memref<20x1200xf32, #tpu.memory_space<vmem>>, %arg20: memref<1x80x1600xi8, #tpu.memory_space<vmem>>, %arg21: memref<20x1600xf32, #tpu.memory_space<vmem>>, %arg22: memref<1200x80xbf16, #tpu.memory_space<vmem>>, %arg23: memref<1600x16xf32, #tpu.memory_space<vmem>>, %arg24: memref<1x8x16xf32, #tpu.memory_space<vmem>>, %arg25: memref<8x768xf32, #tpu.memory_space<vmem>>, %arg26: memref<8x768xf32, #tpu.memory_space<vmem>>, %arg27: memref<8x1600xf32, #tpu.memory_space<vmem>>) attributes {dimension_semantics = [#tpu.dimension_semantics<parallel>, #tpu.dimension_semantics<arbitrary>], iteration_bounds = array<i64: 2, 10>, scalar_prefetch = 0 : i64, scratch_operands = 3 : i64, tpu.core_type = #tpu.core_type<tc>, window_params = [{pipeline_mode = #tpu.pipeline_mode<synchronous>, transform_indices = @transform_0, window_bounds = array<i64: 8, 768>}, {pipeline_mode = #tpu.pipeline_mode<synchronous>, transform_indices = @transform_1, window_bounds = array<i64: 8, 768>}, {pipeline_mode = #tpu.pipeline_mode<synchronous>, transform_indices = @transform_2, window_bounds = array<i64: 768, 768>}, {pipeline_mode = #tpu.pipeline_mode<synchronous>, transform_indices = @transform_3, window_bounds = array<i64: 2, 768>}, {pipeline_mode = #tpu.pipeline_mode<synchronous>, transform_indices = @transform_4, window_bounds = array<i64: 768, 768>}, {pipeline_mode = #tpu.pipeline_mode<synchronous>, transform_indices = @transform_5, window_bounds = array<i64: 2, 768>}, {transform_indices = @transform_6, window_bounds = array<i64: 1, 768, 80>}, {pipeline_mode = #tpu.pipeline_mode<synchronous>, transform_indices = @transform_7, window_bounds = array<i64: 20, 80>}, {pipeline_mode = #tpu.pipeline_mode<synchronous>, transform_indices = @transform_8, window_bounds = array<i64: 20, 80>}, {transform_indices = @transform_9, window_bounds = array<i64: 1, 768, 80>}, {pipeline_mode = #tpu.pipeline_mode<synchronous>, transform_indices = @transform_10, window_bounds = array<i64: 20, 80>}, {pipeline_mode = #tpu.pipeline_mode<synchronous>, transform_indices = @transform_11, window_bounds = array<i64: 20, 80>}, {transform_indices = @transform_12, window_bounds = array<i64: 1, 80, 1200>}, {pipeline_mode = #tpu.pipeline_mode<synchronous>, transform_indices = @transform_13, window_bounds = array<i64: 20, 1200>}, {pipeline_mode = #tpu.pipeline_mode<synchronous>, transform_indices = @transform_14, window_bounds = array<i64: 20, 1200>}, {transform_indices = @transform_15, window_bounds = array<i64: 1, 80, 1200>}, {pipeline_mode = #tpu.pipeline_mode<synchronous>, transform_indices = @transform_16, window_bounds = array<i64: 20, 1200>}, {pipeline_mode = #tpu.pipeline_mode<synchronous>, transform_indices = @transform_17, window_bounds = array<i64: 20, 1200>}, {transform_indices = @transform_18, window_bounds = array<i64: 1, 80, 1600>}, {pipeline_mode = #tpu.pipeline_mode<synchronous>, transform_indices = @transform_19, window_bounds = array<i64: 20, 1600>}, {pipeline_mode = #tpu.pipeline_mode<synchronous>, transform_indices = @transform_20, window_bounds = array<i64: 1200, 80>}, {pipeline_mode = #tpu.pipeline_mode<synchronous>, transform_indices = @transform_21, window_bounds = array<i64: 1600, 16>}, {transform_indices = @transform_22, window_bounds = array<i64: 1, 8, 16>}]} {
    %c10_i32 = arith.constant 10 : i32
    %0 = arith.muli %arg0, %c10_i32 : i32
    %1 = arith.addi %0, %arg1 : i32
    %c0_i32 = arith.constant 0 : i32
    %2 = arith.cmpi eq, %arg1, %c0_i32 : i32
    %3 = arith.extui %2 : i1 to i32
    %c0_i32_0 = arith.constant 0 : i32
    %4 = arith.cmpi ne, %3, %c0_i32_0 : i32
    scf.if %4 {
      %c0_45 = arith.constant 0 : index
      %c0_46 = arith.constant 0 : index
      %95 = vector.load %arg2[%c0_45, %c0_46] : memref<8x768xf32, #tpu.memory_space<vmem>>, vector<8x768xf32>
      %c0_47 = arith.constant 0 : index
      %c0_48 = arith.constant 0 : index
      %96 = vector.load %arg5[%c0_47, %c0_48] : memref<2x768xf32, #tpu.memory_space<vmem>>, vector<1x768xf32>
      %c1 = arith.constant 1 : index
      %c0_49 = arith.constant 0 : index
      %97 = vector.load %arg5[%c1, %c0_49] : memref<2x768xf32, #tpu.memory_space<vmem>>, vector<1x768xf32>
      %98 = arith.truncf %95 : vector<8x768xf32> to vector<8x768xbf16>
      %c0_50 = arith.constant 0 : index
      %c0_51 = arith.constant 0 : index
      %99 = vector.load %arg4[%c0_50, %c0_51] : memref<768x768xi8, #tpu.memory_space<vmem>>, vector<768x768xi8>
      %100 = arith.sitofp %99 : vector<768x768xi8> to vector<768x768xbf16>
      %cst_52 = arith.constant dense<0.000000e+00> : vector<8x768xf32>
      %101 = tpu.matmul %98, %100, %cst_52 {dimension_numbers = #tpu.dot_dimension_numbers<[1], [0], [0], [1], [0, 0, 1, 1], [], []>} : vector<8x768xbf16>, vector<768x768xbf16>, vector<8x768xf32> -> vector<8x768xf32>
      %102 = vector.broadcast %96 : vector<1x768xf32> to vector<8x768xf32>
      %103 = arith.mulf %101, %102 : vector<8x768xf32>
      %104 = vector.broadcast %97 : vector<1x768xf32> to vector<8x768xf32>
      %105 = arith.addf %103, %104 : vector<8x768xf32>
      %106 = arith.mulf %105, %105 : vector<8x768xf32>
      %cst_53 = arith.constant dense<0.000000e+00> : vector<8xf32>
      %107 = vector.multi_reduction <add>, %106, %cst_53 [1] : vector<8x768xf32> to vector<8xf32>
      %108 = vector.shape_cast %107 : vector<8xf32> to vector<8x1xf32>
      %109 = math.sqrt %108 : vector<8x1xf32>
      %cst_54 = arith.constant 9.99999996E-13 : f32
      %110 = vector.broadcast %cst_54 : f32 to vector<8x1xf32>
      %111 = arith.maximumf %109, %110 : vector<8x1xf32>
      %112 = vector.broadcast %111 : vector<8x1xf32> to vector<8x768xf32>
      %113 = arith.divf %105, %112 : vector<8x768xf32>
      %c0_55 = arith.constant 0 : index
      %c0_56 = arith.constant 0 : index
      %114 = vector.load %arg25[%c0_55, %c0_56] : memref<8x768xf32, #tpu.memory_space<vmem>>, vector<8x768xf32>
      tpu.vector_store %arg25[%c0_55, %c0_56], %113 {strides = array<i32>} : memref<8x768xf32, #tpu.memory_space<vmem>>, vector<8x768xf32>,
      %c0_57 = arith.constant 0 : index
      %c0_58 = arith.constant 0 : index
      %115 = vector.load %arg3[%c0_57, %c0_58] : memref<8x768xf32, #tpu.memory_space<vmem>>, vector<8x768xf32>
      %c0_59 = arith.constant 0 : index
      %c0_60 = arith.constant 0 : index
      %116 = vector.load %arg7[%c0_59, %c0_60] : memref<2x768xf32, #tpu.memory_space<vmem>>, vector<1x768xf32>
      %c1_61 = arith.constant 1 : index
      %c0_62 = arith.constant 0 : index
      %117 = vector.load %arg7[%c1_61, %c0_62] : memref<2x768xf32, #tpu.memory_space<vmem>>, vector<1x768xf32>
      %118 = arith.truncf %115 : vector<8x768xf32> to vector<8x768xbf16>
      %c0_63 = arith.constant 0 : index
      %c0_64 = arith.constant 0 : index
      %119 = vector.load %arg6[%c0_63, %c0_64] : memref<768x768xi8, #tpu.memory_space<vmem>>, vector<768x768xi8>
      %120 = arith.sitofp %119 : vector<768x768xi8> to vector<768x768xbf16>
      %cst_65 = arith.constant dense<0.000000e+00> : vector<8x768xf32>
      %121 = tpu.matmul %118, %120, %cst_65 {dimension_numbers = #tpu.dot_dimension_numbers<[1], [0], [0], [1], [0, 0, 1, 1], [], []>} : vector<8x768xbf16>, vector<768x768xbf16>, vector<8x768xf32> -> vector<8x768xf32>
      %122 = vector.broadcast %116 : vector<1x768xf32> to vector<8x768xf32>
      %123 = arith.mulf %121, %122 : vector<8x768xf32>
      %124 = vector.broadcast %117 : vector<1x768xf32> to vector<8x768xf32>
      %125 = arith.addf %123, %124 : vector<8x768xf32>
      %126 = arith.mulf %125, %125 : vector<8x768xf32>
      %cst_66 = arith.constant dense<0.000000e+00> : vector<8xf32>
      %127 = vector.multi_reduction <add>, %126, %cst_66 [1] : vector<8x768xf32> to vector<8xf32>
      %128 = vector.shape_cast %127 : vector<8xf32> to vector<8x1xf32>
      %129 = math.sqrt %128 : vector<8x1xf32>
      %cst_67 = arith.constant 9.99999996E-13 : f32
      %130 = vector.broadcast %cst_67 : f32 to vector<8x1xf32>
      %131 = arith.maximumf %129, %130 : vector<8x1xf32>
      %132 = vector.broadcast %131 : vector<8x1xf32> to vector<8x768xf32>
      %133 = arith.divf %125, %132 : vector<8x768xf32>
      %c0_68 = arith.constant 0 : index
      %c0_69 = arith.constant 0 : index
      %134 = vector.load %arg26[%c0_68, %c0_69] : memref<8x768xf32, #tpu.memory_space<vmem>>, vector<8x768xf32>
      tpu.vector_store %arg26[%c0_68, %c0_69], %133 {strides = array<i32>} : memref<8x768xf32, #tpu.memory_space<vmem>>, vector<8x768xf32>,
      %cst_70 = arith.constant 0.000000e+00 : f32
      %135 = vector.broadcast %cst_70 : f32 to vector<8x1600xf32>
      %c0_71 = arith.constant 0 : index
      %c0_72 = arith.constant 0 : index
      %136 = vector.load %arg27[%c0_71, %c0_72] : memref<8x1600xf32, #tpu.memory_space<vmem>>, vector<8x1600xf32>
      tpu.vector_store %arg27[%c0_71, %c0_72], %135 {strides = array<i32>} : memref<8x1600xf32, #tpu.memory_space<vmem>>, vector<8x1600xf32>,
    } else {
    }
    %c0 = arith.constant 0 : index
    %c0_1 = arith.constant 0 : index
    %5 = vector.load %arg25[%c0, %c0_1] : memref<8x768xf32, #tpu.memory_space<vmem>>, vector<8x768xf32>
    %6 = arith.index_cast %1 : i32 to index
    %c0_2 = arith.constant 0 : index
    %7 = vector.load %arg9[%6, %c0_2] : memref<20x80xf32, #tpu.memory_space<vmem>>, vector<1x80xf32>
    %8 = arith.index_cast %1 : i32 to index
    %c0_3 = arith.constant 0 : index
    %9 = vector.load %arg10[%8, %c0_3] : memref<20x80xf32, #tpu.memory_space<vmem>>, vector<1x80xf32>
    %10 = arith.truncf %5 : vector<8x768xf32> to vector<8x768xbf16>
    %c0_4 = arith.constant 0 : index
    %c0_5 = arith.constant 0 : index
    %c0_6 = arith.constant 0 : index
    %11 = vector.load %arg8[%c0_4, %c0_5, %c0_6] : memref<1x768x80xi8, #tpu.memory_space<vmem>>, vector<1x768x80xi8>
    %12 = vector.shape_cast %11 : vector<1x768x80xi8> to vector<768x80xi8>
    %13 = arith.sitofp %12 : vector<768x80xi8> to vector<768x80xbf16>
    %cst = arith.constant dense<0.000000e+00> : vector<8x80xf32>
    %14 = tpu.matmul %10, %13, %cst {dimension_numbers = #tpu.dot_dimension_numbers<[1], [0], [0], [1], [0, 0, 1, 1], [], []>} : vector<8x768xbf16>, vector<768x80xbf16>, vector<8x80xf32> -> vector<8x80xf32>
    %15 = vector.broadcast %7 : vector<1x80xf32> to vector<8x80xf32>
    %16 = arith.mulf %14, %15 : vector<8x80xf32>
    %17 = vector.broadcast %9 : vector<1x80xf32> to vector<8x80xf32>
    %18 = arith.addf %16, %17 : vector<8x80xf32>
    %c0_7 = arith.constant 0 : index
    %c0_8 = arith.constant 0 : index
    %19 = vector.load %arg26[%c0_7, %c0_8] : memref<8x768xf32, #tpu.memory_space<vmem>>, vector<8x768xf32>
    %20 = arith.index_cast %1 : i32 to index
    %c0_9 = arith.constant 0 : index
    %21 = vector.load %arg12[%20, %c0_9] : memref<20x80xf32, #tpu.memory_space<vmem>>, vector<1x80xf32>
    %22 = arith.index_cast %1 : i32 to index
    %c0_10 = arith.constant 0 : index
    %23 = vector.load %arg13[%22, %c0_10] : memref<20x80xf32, #tpu.memory_space<vmem>>, vector<1x80xf32>
    %24 = arith.truncf %19 : vector<8x768xf32> to vector<8x768xbf16>
    %c0_11 = arith.constant 0 : index
    %c0_12 = arith.constant 0 : index
    %c0_13 = arith.constant 0 : index
    %25 = vector.load %arg11[%c0_11, %c0_12, %c0_13] : memref<1x768x80xi8, #tpu.memory_space<vmem>>, vector<1x768x80xi8>
    %26 = vector.shape_cast %25 : vector<1x768x80xi8> to vector<768x80xi8>
    %27 = arith.sitofp %26 : vector<768x80xi8> to vector<768x80xbf16>
    %cst_14 = arith.constant dense<0.000000e+00> : vector<8x80xf32>
    %28 = tpu.matmul %24, %27, %cst_14 {dimension_numbers = #tpu.dot_dimension_numbers<[1], [0], [0], [1], [0, 0, 1, 1], [], []>} : vector<8x768xbf16>, vector<768x80xbf16>, vector<8x80xf32> -> vector<8x80xf32>
    %29 = vector.broadcast %21 : vector<1x80xf32> to vector<8x80xf32>
    %30 = arith.mulf %28, %29 : vector<8x80xf32>
    %31 = vector.broadcast %23 : vector<1x80xf32> to vector<8x80xf32>
    %32 = arith.addf %30, %31 : vector<8x80xf32>
    %33 = arith.index_cast %1 : i32 to index
    %c0_15 = arith.constant 0 : index
    %34 = vector.load %arg15[%33, %c0_15] : memref<20x1200xf32, #tpu.memory_space<vmem>>, vector<1x1200xf32>
    %35 = arith.index_cast %1 : i32 to index
    %c0_16 = arith.constant 0 : index
    %36 = vector.load %arg16[%35, %c0_16] : memref<20x1200xf32, #tpu.memory_space<vmem>>, vector<1x1200xf32>
    %37 = arith.truncf %18 : vector<8x80xf32> to vector<8x80xbf16>
    %c0_17 = arith.constant 0 : index
    %c0_18 = arith.constant 0 : index
    %c0_19 = arith.constant 0 : index
    %38 = vector.load %arg14[%c0_17, %c0_18, %c0_19] : memref<1x80x1200xi8, #tpu.memory_space<vmem>>, vector<1x80x1200xi8>
    %39 = vector.shape_cast %38 : vector<1x80x1200xi8> to vector<80x1200xi8>
    %40 = arith.sitofp %39 : vector<80x1200xi8> to vector<80x1200xbf16>
    %cst_20 = arith.constant dense<0.000000e+00> : vector<8x1200xf32>
    %41 = tpu.matmul %37, %40, %cst_20 {dimension_numbers = #tpu.dot_dimension_numbers<[1], [0], [0], [1], [0, 0, 1, 1], [], []>} : vector<8x80xbf16>, vector<80x1200xbf16>, vector<8x1200xf32> -> vector<8x1200xf32>
    %42 = vector.broadcast %34 : vector<1x1200xf32> to vector<8x1200xf32>
    %43 = arith.mulf %41, %42 : vector<8x1200xf32>
    %44 = vector.broadcast %36 : vector<1x1200xf32> to vector<8x1200xf32>
    %45 = arith.addf %43, %44 : vector<8x1200xf32>
    %46 = arith.index_cast %1 : i32 to index
    %c0_21 = arith.constant 0 : index
    %47 = vector.load %arg18[%46, %c0_21] : memref<20x1200xf32, #tpu.memory_space<vmem>>, vector<1x1200xf32>
    %48 = arith.index_cast %1 : i32 to index
    %c0_22 = arith.constant 0 : index
    %49 = vector.load %arg19[%48, %c0_22] : memref<20x1200xf32, #tpu.memory_space<vmem>>, vector<1x1200xf32>
    %50 = arith.truncf %32 : vector<8x80xf32> to vector<8x80xbf16>
    %c0_23 = arith.constant 0 : index
    %c0_24 = arith.constant 0 : index
    %c0_25 = arith.constant 0 : index
    %51 = vector.load %arg17[%c0_23, %c0_24, %c0_25] : memref<1x80x1200xi8, #tpu.memory_space<vmem>>, vector<1x80x1200xi8>
    %52 = vector.shape_cast %51 : vector<1x80x1200xi8> to vector<80x1200xi8>
    %53 = arith.sitofp %52 : vector<80x1200xi8> to vector<80x1200xbf16>
    %cst_26 = arith.constant dense<0.000000e+00> : vector<8x1200xf32>
    %54 = tpu.matmul %50, %53, %cst_26 {dimension_numbers = #tpu.dot_dimension_numbers<[1], [0], [0], [1], [0, 0, 1, 1], [], []>} : vector<8x80xbf16>, vector<80x1200xbf16>, vector<8x1200xf32> -> vector<8x1200xf32>
    %55 = vector.broadcast %47 : vector<1x1200xf32> to vector<8x1200xf32>
    %56 = arith.mulf %54, %55 : vector<8x1200xf32>
    %57 = vector.broadcast %49 : vector<1x1200xf32> to vector<8x1200xf32>
    %58 = arith.addf %56, %57 : vector<8x1200xf32>
    %59 = arith.mulf %45, %58 : vector<8x1200xf32>
    %60 = arith.truncf %59 : vector<8x1200xf32> to vector<8x1200xbf16>
    %c0_27 = arith.constant 0 : index
    %c0_28 = arith.constant 0 : index
    %61 = vector.load %arg22[%c0_27, %c0_28] : memref<1200x80xbf16, #tpu.memory_space<vmem>>, vector<1200x80xbf16>
    %cst_29 = arith.constant dense<0.000000e+00> : vector<8x80xf32>
    %62 = tpu.matmul %60, %61, %cst_29 {dimension_numbers = #tpu.dot_dimension_numbers<[1], [0], [0], [1], [0, 0, 1, 1], [], []>} : vector<8x1200xbf16>, vector<1200x80xbf16>, vector<8x80xf32> -> vector<8x80xf32>
    %cst_30 = arith.constant 0.000000e+00 : f32
    %63 = vector.broadcast %cst_30 : f32 to vector<8x80xf32>
    %64 = arith.maximumf %62, %63 : vector<8x80xf32>
    %65 = math.sqrt %64 : vector<8x80xf32>
    %cst_31 = arith.constant 0.000000e+00 : f32
    %66 = vector.broadcast %cst_31 : f32 to vector<8x80xf32>
    %67 = arith.subf %66, %62 : vector<8x80xf32>
    %cst_32 = arith.constant 0.000000e+00 : f32
    %68 = vector.broadcast %cst_32 : f32 to vector<8x80xf32>
    %69 = arith.maximumf %67, %68 : vector<8x80xf32>
    %70 = math.sqrt %69 : vector<8x80xf32>
    %71 = arith.subf %65, %70 : vector<8x80xf32>
    %72 = arith.mulf %71, %71 : vector<8x80xf32>
    %cst_33 = arith.constant dense<0.000000e+00> : vector<8xf32>
    %73 = vector.multi_reduction <add>, %72, %cst_33 [1] : vector<8x80xf32> to vector<8xf32>
    %74 = vector.shape_cast %73 : vector<8xf32> to vector<8x1xf32>
    %75 = math.sqrt %74 : vector<8x1xf32>
    %cst_34 = arith.constant 9.99999996E-13 : f32
    %76 = vector.broadcast %cst_34 : f32 to vector<8x1xf32>
    %77 = arith.maximumf %75, %76 : vector<8x1xf32>
    %78 = vector.broadcast %77 : vector<8x1xf32> to vector<8x80xf32>
    %79 = arith.divf %71, %78 : vector<8x80xf32>
    %c0_35 = arith.constant 0 : index
    %c0_36 = arith.constant 0 : index
    %80 = vector.load %arg27[%c0_35, %c0_36] : memref<8x1600xf32, #tpu.memory_space<vmem>>, vector<8x1600xf32>
    %81 = arith.truncf %79 : vector<8x80xf32> to vector<8x80xbf16>
    %c0_37 = arith.constant 0 : index
    %c0_38 = arith.constant 0 : index
    %c0_39 = arith.constant 0 : index
    %82 = vector.load %arg20[%c0_37, %c0_38, %c0_39] : memref<1x80x1600xi8, #tpu.memory_space<vmem>>, vector<1x80x1600xi8>
    %83 = vector.shape_cast %82 : vector<1x80x1600xi8> to vector<80x1600xi8>
    %84 = arith.sitofp %83 : vector<80x1600xi8> to vector<80x1600xbf16>
    %cst_40 = arith.constant dense<0.000000e+00> : vector<8x1600xf32>
    %85 = tpu.matmul %81, %84, %cst_40 {dimension_numbers = #tpu.dot_dimension_numbers<[1], [0], [0], [1], [0, 0, 1, 1], [], []>} : vector<8x80xbf16>, vector<80x1600xbf16>, vector<8x1600xf32> -> vector<8x1600xf32>
    %86 = arith.index_cast %1 : i32 to index
    %c0_41 = arith.constant 0 : index
    %87 = vector.load %arg21[%86, %c0_41] : memref<20x1600xf32, #tpu.memory_space<vmem>>, vector<1x1600xf32>
    %88 = vector.broadcast %87 : vector<1x1600xf32> to vector<8x1600xf32>
    %89 = arith.mulf %85, %88 : vector<8x1600xf32>
    %90 = arith.addf %80, %89 : vector<8x1600xf32>
    %c0_42 = arith.constant 0 : index
    %c0_43 = arith.constant 0 : index
    %91 = vector.load %arg27[%c0_42, %c0_43] : memref<8x1600xf32, #tpu.memory_space<vmem>>, vector<8x1600xf32>
    tpu.vector_store %arg27[%c0_42, %c0_43], %90 {strides = array<i32>} : memref<8x1600xf32, #tpu.memory_space<vmem>>, vector<8x1600xf32>,
    %c9_i32 = arith.constant 9 : i32
    %92 = arith.cmpi eq, %arg1, %c9_i32 : i32
    %93 = arith.extui %92 : i1 to i32
    %c0_i32_44 = arith.constant 0 : i32
    %94 = arith.cmpi ne, %93, %c0_i32_44 : i32
    scf.if %94 {
      %c0_45 = arith.constant 0 : index
      %c0_46 = arith.constant 0 : index
      %95 = vector.load %arg27[%c0_45, %c0_46] : memref<8x1600xf32, #tpu.memory_space<vmem>>, vector<8x1600xf32>
      %c0_47 = arith.constant 0 : index
      %c0_48 = arith.constant 0 : index
      %96 = vector.load %arg23[%c0_47, %c0_48] : memref<1600x16xf32, #tpu.memory_space<vmem>>, vector<1600x16xf32>
      %cst_49 = arith.constant dense<0.000000e+00> : vector<8x16xf32>
      %97 = tpu.matmul %95, %96, %cst_49 {dimension_numbers = #tpu.dot_dimension_numbers<[1], [0], [0], [1], [0, 0, 1, 1], [], []>} : vector<8x1600xf32>, vector<1600x16xf32>, vector<8x16xf32> -> vector<8x16xf32>
      %c0_50 = arith.constant 0 : index
      %c0_51 = arith.constant 0 : index
      %c0_52 = arith.constant 0 : index
      %98 = vector.load %arg24[%c0_50, %c0_51, %c0_52] : memref<1x8x16xf32, #tpu.memory_space<vmem>>, vector<1x8x16xf32>
      %99 = vector.shape_cast %98 : vector<1x8x16xf32> to vector<8x16xf32>
      %100 = vector.shape_cast %97 : vector<8x16xf32> to vector<1x8x16xf32>
      tpu.vector_store %arg24[%c0_50, %c0_51, %c0_52], %100 {strides = array<i32>} : memref<1x8x16xf32, #tpu.memory_space<vmem>>, vector<1x8x16xf32>,
    } else {
    }
    return
  }
  func.func @transform_0(%arg0: i32, %arg1: i32) -> (i32, i32) {
    %c0_i32 = arith.constant 0 : i32
    %c0_i32_0 = arith.constant 0 : i32
    %c0_i32_1 = arith.constant 0 : i32
    return %c0_i32, %c0_i32_0 : i32, i32
  }
  func.func @transform_1(%arg0: i32, %arg1: i32) -> (i32, i32) {
    %c0_i32 = arith.constant 0 : i32
    %c0_i32_0 = arith.constant 0 : i32
    %c0_i32_1 = arith.constant 0 : i32
    return %c0_i32, %c0_i32_0 : i32, i32
  }
  func.func @transform_2(%arg0: i32, %arg1: i32) -> (i32, i32) {
    %c0_i32 = arith.constant 0 : i32
    %c0_i32_0 = arith.constant 0 : i32
    %c0_i32_1 = arith.constant 0 : i32
    return %c0_i32, %c0_i32_0 : i32, i32
  }
  func.func @transform_3(%arg0: i32, %arg1: i32) -> (i32, i32) {
    %c0_i32 = arith.constant 0 : i32
    %c0_i32_0 = arith.constant 0 : i32
    %c0_i32_1 = arith.constant 0 : i32
    return %c0_i32, %c0_i32_0 : i32, i32
  }
  func.func @transform_4(%arg0: i32, %arg1: i32) -> (i32, i32) {
    %c0_i32 = arith.constant 0 : i32
    %c0_i32_0 = arith.constant 0 : i32
    %c0_i32_1 = arith.constant 0 : i32
    return %c0_i32, %c0_i32_0 : i32, i32
  }
  func.func @transform_5(%arg0: i32, %arg1: i32) -> (i32, i32) {
    %c0_i32 = arith.constant 0 : i32
    %c0_i32_0 = arith.constant 0 : i32
    %c0_i32_1 = arith.constant 0 : i32
    return %c0_i32, %c0_i32_0 : i32, i32
  }
  func.func @transform_6(%arg0: i32, %arg1: i32) -> (i32, i32, i32) {
    %c10_i32 = arith.constant 10 : i32
    %0 = arith.muli %arg0, %c10_i32 : i32
    %1 = arith.addi %0, %arg1 : i32
    %c0_i32 = arith.constant 0 : i32
    %c0_i32_0 = arith.constant 0 : i32
    %c0_i32_1 = arith.constant 0 : i32
    return %1, %c0_i32, %c0_i32_0 : i32, i32, i32
  }
  func.func @transform_7(%arg0: i32, %arg1: i32) -> (i32, i32) {
    %c0_i32 = arith.constant 0 : i32
    %c0_i32_0 = arith.constant 0 : i32
    %c0_i32_1 = arith.constant 0 : i32
    return %c0_i32, %c0_i32_0 : i32, i32
  }
  func.func @transform_8(%arg0: i32, %arg1: i32) -> (i32, i32) {
    %c0_i32 = arith.constant 0 : i32
    %c0_i32_0 = arith.constant 0 : i32
    %c0_i32_1 = arith.constant 0 : i32
    return %c0_i32, %c0_i32_0 : i32, i32
  }
  func.func @transform_9(%arg0: i32, %arg1: i32) -> (i32, i32, i32) {
    %c10_i32 = arith.constant 10 : i32
    %0 = arith.muli %arg0, %c10_i32 : i32
    %1 = arith.addi %0, %arg1 : i32
    %c0_i32 = arith.constant 0 : i32
    %c0_i32_0 = arith.constant 0 : i32
    %c0_i32_1 = arith.constant 0 : i32
    return %1, %c0_i32, %c0_i32_0 : i32, i32, i32
  }
  func.func @transform_10(%arg0: i32, %arg1: i32) -> (i32, i32) {
    %c0_i32 = arith.constant 0 : i32
    %c0_i32_0 = arith.constant 0 : i32
    %c0_i32_1 = arith.constant 0 : i32
    return %c0_i32, %c0_i32_0 : i32, i32
  }
  func.func @transform_11(%arg0: i32, %arg1: i32) -> (i32, i32) {
    %c0_i32 = arith.constant 0 : i32
    %c0_i32_0 = arith.constant 0 : i32
    %c0_i32_1 = arith.constant 0 : i32
    return %c0_i32, %c0_i32_0 : i32, i32
  }
  func.func @transform_12(%arg0: i32, %arg1: i32) -> (i32, i32, i32) {
    %c10_i32 = arith.constant 10 : i32
    %0 = arith.muli %arg0, %c10_i32 : i32
    %1 = arith.addi %0, %arg1 : i32
    %c0_i32 = arith.constant 0 : i32
    %c0_i32_0 = arith.constant 0 : i32
    %c0_i32_1 = arith.constant 0 : i32
    return %1, %c0_i32, %c0_i32_0 : i32, i32, i32
  }
  func.func @transform_13(%arg0: i32, %arg1: i32) -> (i32, i32) {
    %c0_i32 = arith.constant 0 : i32
    %c0_i32_0 = arith.constant 0 : i32
    %c0_i32_1 = arith.constant 0 : i32
    return %c0_i32, %c0_i32_0 : i32, i32
  }
  func.func @transform_14(%arg0: i32, %arg1: i32) -> (i32, i32) {
    %c0_i32 = arith.constant 0 : i32
    %c0_i32_0 = arith.constant 0 : i32
    %c0_i32_1 = arith.constant 0 : i32
    return %c0_i32, %c0_i32_0 : i32, i32
  }
  func.func @transform_15(%arg0: i32, %arg1: i32) -> (i32, i32, i32) {
    %c10_i32 = arith.constant 10 : i32
    %0 = arith.muli %arg0, %c10_i32 : i32
    %1 = arith.addi %0, %arg1 : i32
    %c0_i32 = arith.constant 0 : i32
    %c0_i32_0 = arith.constant 0 : i32
    %c0_i32_1 = arith.constant 0 : i32
    return %1, %c0_i32, %c0_i32_0 : i32, i32, i32
  }
  func.func @transform_16(%arg0: i32, %arg1: i32) -> (i32, i32) {
    %c0_i32 = arith.constant 0 : i32
    %c0_i32_0 = arith.constant 0 : i32
    %c0_i32_1 = arith.constant 0 : i32
    return %c0_i32, %c0_i32_0 : i32, i32
  }
  func.func @transform_17(%arg0: i32, %arg1: i32) -> (i32, i32) {
    %c0_i32 = arith.constant 0 : i32
    %c0_i32_0 = arith.constant 0 : i32
    %c0_i32_1 = arith.constant 0 : i32
    return %c0_i32, %c0_i32_0 : i32, i32
  }
  func.func @transform_18(%arg0: i32, %arg1: i32) -> (i32, i32, i32) {
    %c10_i32 = arith.constant 10 : i32
    %0 = arith.muli %arg0, %c10_i32 : i32
    %1 = arith.addi %0, %arg1 : i32
    %c0_i32 = arith.constant 0 : i32
    %c0_i32_0 = arith.constant 0 : i32
    %c0_i32_1 = arith.constant 0 : i32
    return %1, %c0_i32, %c0_i32_0 : i32, i32, i32
  }
  func.func @transform_19(%arg0: i32, %arg1: i32) -> (i32, i32) {
    %c0_i32 = arith.constant 0 : i32
    %c0_i32_0 = arith.constant 0 : i32
    %c0_i32_1 = arith.constant 0 : i32
    return %c0_i32, %c0_i32_0 : i32, i32
  }
  func.func @transform_20(%arg0: i32, %arg1: i32) -> (i32, i32) {
    %c0_i32 = arith.constant 0 : i32
    %c0_i32_0 = arith.constant 0 : i32
    %c0_i32_1 = arith.constant 0 : i32
    return %c0_i32, %c0_i32_0 : i32, i32
  }
  func.func @transform_21(%arg0: i32, %arg1: i32) -> (i32, i32) {
    %c0_i32 = arith.constant 0 : i32
    %c0_i32_0 = arith.constant 0 : i32
    %c0_i32_1 = arith.constant 0 : i32
    return %c0_i32, %c0_i32_0 : i32, i32
  }
  func.func @transform_22(%arg0: i32, %arg1: i32) -> (i32, i32, i32) {
    %c0_i32 = arith.constant 0 : i32
    %c0_i32_0 = arith.constant 0 : i32
    %c0_i32_1 = arith.constant 0 : i32
    return %arg0, %c0_i32, %c0_i32_0 : i32, i32, i32
  }
}

</mosaic_0001>

<llo_original>
// kernel: mm_model_forward.1
$region0: #{mm_model_forward.1}
  #allocation0 [shape = 'u32[]', space=smem, size = 0x4, offset = 0x4, fixed_abs, tag = 'smem constant byte address 0x4 - core index']
  #allocation1 [shape = 'u32[144,128]{1,0:T(1,128)}', space=vmem, size = 0x12000, scoped, tag = 'internal scratch']
  #allocation2 [shape = 'f32[8,768]{1,0:T(8,128)}', space=vmem, size = 0x6000, scoped, tag = 'scratch operand']
  #allocation3 [shape = 'f32[8,768]{1,0:T(8,128)}', space=vmem, size = 0x6000, scoped, tag = 'scratch operand']
  #allocation4 [shape = 'f32[8,1600]{1,0:T(8,128)}', space=vmem, size = 0xd000, scoped, tag = 'scratch operand']
  %s0 = inlined_call_operand.vmem [shape: f32[8,768], index: 0, kind: input, shape index: {}]
  %s1 = inlined_call_operand.vmem [shape: f32[8,768], index: 1, kind: input, shape index: {}]
  %s2 = inlined_call_operand.hbm [shape: s8[768,768], index: 2, kind: input, shape index: {}]
  %s3 = inlined_call_operand.vmem [shape: f32[2,768], index: 3, kind: input, shape index: {}]
  %s4 = inlined_call_operand.hbm [shape: s8[768,768], index: 4, kind: input, shape index: {}]
  %s5 = inlined_call_operand.vmem [shape: f32[2,768], index: 5, kind: input, shape index: {}]
  %s6 = inlined_call_operand.vmem [shape: s8[20,768,80], index: 6, kind: input, shape index: {}]
  %s7 = inlined_call_operand.vmem [shape: f32[20,80], index: 7, kind: input, shape index: {}]
  %s8 = inlined_call_operand.vmem [shape: f32[20,80], index: 8, kind: input, shape index: {}]
  %s9 = inlined_call_operand.vmem [shape: s8[20,768,80], index: 9, kind: input, shape index: {}]
  %s10 = inlined_call_operand.vmem [shape: f32[20,80], index: 10, kind: input, shape index: {}]
  %s11 = inlined_call_operand.vmem [shape: f32[20,80], index: 11, kind: input, shape index: {}]
  %s12 = inlined_call_operand.vmem [shape: s8[20,80,1200], index: 12, kind: input, shape index: {}]
  %s13 = inlined_call_operand.vmem [shape: f32[20,1200], index: 13, kind: input, shape index: {}]
  %s14 = inlined_call_operand.vmem [shape: f32[20,1200], index: 14, kind: input, shape index: {}]
  %s15 = inlined_call_operand.vmem [shape: s8[20,80,1200], index: 15, kind: input, shape index: {}]
  %s16 = inlined_call_operand.hbm [shape: f32[20,1200], index: 16, kind: input, shape index: {}]
  %s17 = inlined_call_operand.hbm [shape: f32[20,1200], index: 17, kind: input, shape index: {}]
  %s18 = inlined_call_operand.vmem [shape: s8[20,80,1600], index: 18, kind: input, shape index: {}]
  %s19 = inlined_call_operand.vmem [shape: f32[20,1600], index: 19, kind: input, shape index: {}]
  %s20 = inlined_call_operand.vmem [shape: bf16[1200,80], index: 20, kind: input, shape index: {}]
  %s21 = inlined_call_operand.vmem [shape: f32[1600,16], index: 21, kind: input, shape index: {}]
  %s22 = inlined_call_operand.vmem [shape: f32[2,8,16], index: 22, kind: output, shape index: {}]
  %s23 = sld [smem:[#allocation0]]
  $region145: #{mm_model_forward.1} parent=0
    _
  %s25 = ssub.s32 1, %s23
  %s26 = scalar_select 0, %s25, %s23
  $region1: #{mm_model_forward.1} parent=0
    #allocation5 [shape = 'u8[589824]{0}', space=vmem, size = 0x90000, scoped, tag = 'input window, operand 2, single buffered']
    #allocation6 [shape = 's32[2]{0}', space=sflag, size = 0x8, scoped, tag = 'scoped memory for mm_model_forward.1']
    #allocation7 [shape = 'u8[589824]{0}', space=vmem, size = 0x90000, scoped, tag = 'input window, operand 4, single buffered']
    #allocation8 [shape = 's32[1]{0}', space=sflag, size = 0x4, scoped, tag = 'scoped memory for mm_model_forward.1']
    #allocation9 [shape = 'u8[122880]{0}', space=vmem, size = 0x1e000, scoped, tag = 'input window, operand 16, single buffered']
    #allocation10 [shape = 'u8[122880]{0}', space=vmem, size = 0x1e000, scoped, tag = 'input window, operand 17, single buffered']
    #allocation11 [shape = 's32[1]{0}', space=sflag, size = 0x4, scoped, tag = 'scoped memory for mm_model_forward.1']
    %27 = vsyncpa [#allocation6], 0
    %28 = vsyncpa [#allocation8], 0
    %29 = vsyncpa [#allocation11], 0
    loop: start=0, step=1, limit=22
    $region2: #{mm_model_forward.1} parent=1 // loop_pre_header
      _
    $region3: #{mm_model_forward.1} parent=1 // loop_header
      %s31 = sphi 0, %s35
      %p32 = scmp.ge.s32.totalorder %s31, 22
      %s38 = sphi 0, %s50
      %s39 = sphi 0, %s46
      %s40 = sphi 0, %s38
      %s41 = sphi 0, %s39
      %s42 = sphi 0, %s40
      %s43 = sphi 0, %s41
      %s51 = sphi 0, %s51
      %s53 = sphi 0, %s51
      %s54 = sphi 0, %s53
      %s68 = sphi 0, %s54
      %s72 = sphi 0, %s72
      %s74 = sphi 0, %s72
      %s75 = sphi 0, %s74
      %s89 = sphi 0, %s75
      %s93 = sphi 0, %s93
      %s95 = sphi 0, %s93
      %s96 = sphi 0, %s95
      %s110 = sphi 0, %s96
      %s114 = sphi 0, %s114
      %s116 = sphi 0, %s114
      %s117 = sphi 0, %s116
      %s131 = sphi 0, %s117
      %s135 = sphi 0, %s135
      %s137 = sphi 0, %s135
      %s138 = sphi 0, %s137
      %s152 = sphi 0, %s138
      %s156 = sphi 0, %s156
      %s158 = sphi 0, %s156
      %s159 = sphi 0, %s158
      %s173 = sphi 0, %s159
      %s183 = sphi 0, %s185
      %s186 = sphi 0, %s183
      %s187 = sphi 0, %s186
      %s203 = sphi 0, %s187
      %s207 = sphi 0, %s207
      %s209 = sphi 0, %s207
      %s210 = sphi 0, %s209
      %s224 = sphi 0, %s210
      %s228 = sphi 0, %s228
      %s230 = sphi 0, %s228
      %s231 = sphi 0, %s230
      %s245 = sphi 0, %s231
      %s255 = sphi 0, %s257
      %s258 = sphi 0, %s255
      %s259 = sphi 0, %s258
      %s275 = sphi 0, %s259
      %s279 = sphi 0, %s279
      %s281 = sphi 0, %s279
      %s282 = sphi 0, %s281
      %s296 = sphi 0, %s282
      %s300 = sphi 0, %s300
      %s302 = sphi 0, %s300
      %s303 = sphi 0, %s302
      %s317 = sphi 0, %s303
      %s327 = sphi 0, %s329
      %s330 = sphi 0, %s327
      %s331 = sphi 0, %s330
      %s347 = sphi 0, %s331
      %s351 = sphi 0, %s351
      %s353 = sphi 0, %s351
      %s354 = sphi 0, %s353
      %s368 = sphi 0, %s354
      %s372 = sphi 0, %s372
      %s374 = sphi 0, %s372
      %s375 = sphi 0, %s374
      %s389 = sphi 0, %s375
      %s399 = sphi 0, %s401
      %s402 = sphi 0, %s399
      %s403 = sphi 0, %s402
      %s419 = sphi 0, %s403
      %s423 = sphi 0, %s423
      %s425 = sphi 0, %s423
      %s426 = sphi 0, %s425
      %s440 = sphi 0, %s426
      %s444 = sphi 0, %s444
      %s446 = sphi 0, %s444
      %s447 = sphi 0, %s446
      %s461 = sphi 0, %s447
      %s471 = sphi 0, %s473
      %s474 = sphi 0, %s471
      %s475 = sphi 0, %s474
      %s491 = sphi 0, %s475
      %s495 = sphi 0, %s495
      %s497 = sphi 0, %s495
      %s498 = sphi 0, %s497
      %s512 = sphi 0, %s498
      %s516 = sphi 0, %s516
      %s518 = sphi 0, %s516
      %s519 = sphi 0, %s518
      %s533 = sphi 0, %s519
      %s537 = sphi 0, %s537
      %s539 = sphi 0, %s537
      %s540 = sphi 0, %s539
      %s554 = sphi 0, %s540
      %s560 = sphi 0, %s562
      %s563 = sphi 0, %s560
      %s564 = sphi 0, %s563
      %s580 = sphi 0, %s564
    $region4: #{mm_model_forward.1} parent=1 // loop_header_branch
      %34 = sbr.rel (%p32) target = $region8
    $region5: #{mm_model_forward.1} parent=1 // loop_body
      %s36 = ssub.s32 %s31, 1
      %s37 = ssub.s32 %s31, 2
      %s44 = sadd.s32 1, %s39
      %p45 = scmp.ge.s32.totalorder %s44, 10
      %s46 = scalar_select %p45, 0, %s44
      %s47 = sadd.s32 1, %s38
      %s48 = scalar_select %p45, %s47, %s38
      %p49 = scmp.ge.s32.totalorder %s48, 2
      %s50 = scalar_select %p49, 0, %s48
      %s52 = sadd.s32 %s51, 1
      %p55 = scmp.eq.s32.totalorder %s31, 19
      %p56 = scmp.ne.s32.totalorder %s51, %s53
      %p57 = scmp.eq.s32.totalorder %s31, 0
      %p58 = por %p56, %p57
      %p59 = scmp.ne.s32.totalorder %s51, %s53
      %p60 = scmp.eq.s32.totalorder %s36, 19
      %p61 = por %p59, %p60
      %p62 = scmp.ne.s32.totalorder %s53, %s54
      %p63 = scmp.eq.s32.totalorder %s36, 0
      %p64 = por %p62, %p63
      %p65 = scmp.ne.s32.totalorder %s53, %s54
      %p66 = scmp.eq.s32.totalorder %s37, 19
      %p67 = por %p65, %p66
      %p69 = scmp.ne.s32.totalorder %s54, %s68
      %p70 = scmp.eq.s32.totalorder %s37, 0
      %p71 = por %p69, %p70
      %s73 = sadd.s32 %s72, 1
      %p76 = scmp.eq.s32.totalorder %s31, 19
      %p77 = scmp.ne.s32.totalorder %s72, %s74
      %p78 = scmp.eq.s32.totalorder %s31, 0
      %p79 = por %p77, %p78
      %p80 = scmp.ne.s32.totalorder %s72, %s74
      %p81 = scmp.eq.s32.totalorder %s36, 19
      %p82 = por %p80, %p81
      %p83 = scmp.ne.s32.totalorder %s74, %s75
      %p84 = scmp.eq.s32.totalorder %s36, 0
      %p85 = por %p83, %p84
      %p86 = scmp.ne.s32.totalorder %s74, %s75
      %p87 = scmp.eq.s32.totalorder %s37, 19
      %p88 = por %p86, %p87
      %p90 = scmp.ne.s32.totalorder %s75, %s89
      %p91 = scmp.eq.s32.totalorder %s37, 0
      %p92 = por %p90, %p91
      %s94 = sadd.s32 %s93, 1
      %p97 = scmp.eq.s32.totalorder %s31, 19
      %p98 = scmp.ne.s32.totalorder %s93, %s95
      %p99 = scmp.eq.s32.totalorder %s31, 0
      %p100 = por %p98, %p99
      %p101 = scmp.ne.s32.totalorder %s93, %s95
      %p102 = scmp.eq.s32.totalorder %s36, 19
      %p103 = por %p101, %p102
      %p104 = scmp.ne.s32.totalorder %s95, %s96
      %p105 = scmp.eq.s32.totalorder %s36, 0
      %p106 = por %p104, %p105
      %p107 = scmp.ne.s32.totalorder %s95, %s96
      %p108 = scmp.eq.s32.totalorder %s37, 19
      %p109 = por %p107, %p108
      %p111 = scmp.ne.s32.totalorder %s96, %s110
      %p112 = scmp.eq.s32.totalorder %s37, 0
      %p113 = por %p111, %p112
      %s115 = sadd.s32 %s114, 1
      %p118 = scmp.eq.s32.totalorder %s31, 19
      %p119 = scmp.ne.s32.totalorder %s114, %s116
      %p120 = scmp.eq.s32.totalorder %s31, 0
      %p121 = por %p119, %p120
      %p122 = scmp.ne.s32.totalorder %s114, %s116
      %p123 = scmp.eq.s32.totalorder %s36, 19
      %p124 = por %p122, %p123
      %p125 = scmp.ne.s32.totalorder %s116, %s117
      %p126 = scmp.eq.s32.totalorder %s36, 0
      %p127 = por %p125, %p126
      %p128 = scmp.ne.s32.totalorder %s116, %s117
      %p129 = scmp.eq.s32.totalorder %s37, 19
      %p130 = por %p128, %p129
      %p132 = scmp.ne.s32.totalorder %s117, %s131
      %p133 = scmp.eq.s32.totalorder %s37, 0
      %p134 = por %p132, %p133
      %s136 = sadd.s32 %s135, 1
      %p139 = scmp.eq.s32.totalorder %s31, 19
      %p140 = scmp.ne.s32.totalorder %s135, %s137
      %p141 = scmp.eq.s32.totalorder %s31, 0
      %p142 = por %p140, %p141
      %p143 = scmp.ne.s32.totalorder %s135, %s137
      %p144 = scmp.eq.s32.totalorder %s36, 19
      %p145 = por %p143, %p144
      %p146 = scmp.ne.s32.totalorder %s137, %s138
      %p147 = scmp.eq.s32.totalorder %s36, 0
      %p148 = por %p146, %p147
      %p149 = scmp.ne.s32.totalorder %s137, %s138
      %p150 = scmp.eq.s32.totalorder %s37, 19
      %p151 = por %p149, %p150
      %p153 = scmp.ne.s32.totalorder %s138, %s152
      %p154 = scmp.eq.s32.totalorder %s37, 0
      %p155 = por %p153, %p154
      %s157 = sadd.s32 %s156, 1
      %p160 = scmp.eq.s32.totalorder %s31, 19
      %p161 = scmp.ne.s32.totalorder %s156, %s158
      %p162 = scmp.eq.s32.totalorder %s31, 0
      %p163 = por %p161, %p162
      %p164 = scmp.ne.s32.totalorder %s156, %s158
      %p165 = scmp.eq.s32.totalorder %s36, 19
      %p166 = por %p164, %p165
      %p167 = scmp.ne.s32.totalorder %s158, %s159
      %p168 = scmp.eq.s32.totalorder %s36, 0
      %p169 = por %p167, %p168
      %p170 = scmp.ne.s32.totalorder %s158, %s159
      %p171 = scmp.eq.s32.totalorder %s37, 19
      %p172 = por %p170, %p171
      %p174 = scmp.ne.s32.totalorder %s159, %s173
      %p175 = scmp.eq.s32.totalorder %s37, 0
      %p176 = por %p174, %p175
      %s177 = smul.u32 %s38, 10
      %s178 = sadd.s32 %s177, %s39
      %s179 = smul.u32 %s50, 10
      %s180 = sadd.s32 %s179, %s46
      %s181 = ssub.s32 %s178, %s180
      %p182 = scmp.eq.s32.totalorder %s181, 0
      %s184 = sadd.s32 %s183, 1
      %s185 = scalar_select %p182, %s183, %s184
      %p188 = pneg %p182
      %p189 = scmp.eq.s32.totalorder %s31, 19
      %p190 = por %p188, %p189
      %p191 = scmp.ne.s32.totalorder %s183, %s186
      %p192 = scmp.eq.s32.totalorder %s31, 0
      %p193 = por %p191, %p192
      %p194 = scmp.ne.s32.totalorder %s183, %s186
      %p195 = scmp.eq.s32.totalorder %s36, 19
      %p196 = por %p194, %p195
      %p197 = scmp.ne.s32.totalorder %s186, %s187
      %p198 = scmp.eq.s32.totalorder %s36, 0
      %p199 = por %p197, %p198
      %p200 = scmp.ne.s32.totalorder %s186, %s187
      %p201 = scmp.eq.s32.totalorder %s37, 19
      %p202 = por %p200, %p201
      %p204 = scmp.ne.s32.totalorder %s187, %s203
      %p205 = scmp.eq.s32.totalorder %s37, 0
      %p206 = por %p204, %p205
      %s208 = sadd.s32 %s207, 1
      %p211 = scmp.eq.s32.totalorder %s31, 19
      %p212 = scmp.ne.s32.totalorder %s207, %s209
      %p213 = scmp.eq.s32.totalorder %s31, 0
      %p214 = por %p212, %p213
      %p215 = scmp.ne.s32.totalorder %s207, %s209
      %p216 = scmp.eq.s32.totalorder %s36, 19
      %p217 = por %p215, %p216
      %p218 = scmp.ne.s32.totalorder %s209, %s210
      %p219 = scmp.eq.s32.totalorder %s36, 0
      %p220 = por %p218, %p219
      %p221 = scmp.ne.s32.totalorder %s209, %s210
      %p222 = scmp.eq.s32.totalorder %s37, 19
      %p223 = por %p221, %p222
      %p225 = scmp.ne.s32.totalorder %s210, %s224
      %p226 = scmp.eq.s32.totalorder %s37, 0
      %p227 = por %p225, %p226
      %s229 = sadd.s32 %s228, 1
      %p232 = scmp.eq.s32.totalorder %s31, 19
      %p233 = scmp.ne.s32.totalorder %s228, %s230
      %p234 = scmp.eq.s32.totalorder %s31, 0
      %p235 = por %p233, %p234
      %p236 = scmp.ne.s32.totalorder %s228, %s230
      %p237 = scmp.eq.s32.totalorder %s36, 19
      %p238 = por %p236, %p237
      %p239 = scmp.ne.s32.totalorder %s230, %s231
      %p240 = scmp.eq.s32.totalorder %s36, 0
      %p241 = por %p239, %p240
      %p242 = scmp.ne.s32.totalorder %s230, %s231
      %p243 = scmp.eq.s32.totalorder %s37, 19
      %p244 = por %p242, %p243
      %p246 = scmp.ne.s32.totalorder %s231, %s245
      %p247 = scmp.eq.s32.totalorder %s37, 0
      %p248 = por %p246, %p247
      %s249 = smul.u32 %s38, 10
      %s250 = sadd.s32 %s249, %s39
      %s251 = smul.u32 %s50, 10
      %s252 = sadd.s32 %s251, %s46
      %s253 = ssub.s32 %s250, %s252
      %p254 = scmp.eq.s32.totalorder %s253, 0
      %s256 = sadd.s32 %s255, 1
      %s257 = scalar_select %p254, %s255, %s256
      %p260 = pneg %p254
      %p261 = scmp.eq.s32.totalorder %s31, 19
      %p262 = por %p260, %p261
      %p263 = scmp.ne.s32.totalorder %s255, %s258
      %p264 = scmp.eq.s32.totalorder %s31, 0
      %p265 = por %p263, %p264
      %p266 = scmp.ne.s32.totalorder %s255, %s258
      %p267 = scmp.eq.s32.totalorder %s36, 19
      %p268 = por %p266, %p267
      %p269 = scmp.ne.s32.totalorder %s258, %s259
      %p270 = scmp.eq.s32.totalorder %s36, 0
      %p271 = por %p269, %p270
      %p272 = scmp.ne.s32.totalorder %s258, %s259
      %p273 = scmp.eq.s32.totalorder %s37, 19
      %p274 = por %p272, %p273
      %p276 = scmp.ne.s32.totalorder %s259, %s275
      %p277 = scmp.eq.s32.totalorder %s37, 0
      %p278 = por %p276, %p277
      %s280 = sadd.s32 %s279, 1
      %p283 = scmp.eq.s32.totalorder %s31, 19
      %p284 = scmp.ne.s32.totalorder %s279, %s281
      %p285 = scmp.eq.s32.totalorder %s31, 0
      %p286 = por %p284, %p285
      %p287 = scmp.ne.s32.totalorder %s279, %s281
      %p288 = scmp.eq.s32.totalorder %s36, 19
      %p289 = por %p287, %p288
      %p290 = scmp.ne.s32.totalorder %s281, %s282
      %p291 = scmp.eq.s32.totalorder %s36, 0
      %p292 = por %p290, %p291
      %p293 = scmp.ne.s32.totalorder %s281, %s282
      %p294 = scmp.eq.s32.totalorder %s37, 19
      %p295 = por %p293, %p294
      %p297 = scmp.ne.s32.totalorder %s282, %s296
      %p298 = scmp.eq.s32.totalorder %s37, 0
      %p299 = por %p297, %p298
      %s301 = sadd.s32 %s300, 1
      %p304 = scmp.eq.s32.totalorder %s31, 19
      %p305 = scmp.ne.s32.totalorder %s300, %s302
      %p306 = scmp.eq.s32.totalorder %s31, 0
      %p307 = por %p305, %p306
      %p308 = scmp.ne.s32.totalorder %s300, %s302
      %p309 = scmp.eq.s32.totalorder %s36, 19
      %p310 = por %p308, %p309
      %p311 = scmp.ne.s32.totalorder %s302, %s303
      %p312 = scmp.eq.s32.totalorder %s36, 0
      %p313 = por %p311, %p312
      %p314 = scmp.ne.s32.totalorder %s302, %s303
      %p315 = scmp.eq.s32.totalorder %s37, 19
      %p316 = por %p314, %p315
      %p318 = scmp.ne.s32.totalorder %s303, %s317
      %p319 = scmp.eq.s32.totalorder %s37, 0
      %p320 = por %p318, %p319
      %s321 = smul.u32 %s38, 10
      %s322 = sadd.s32 %s321, %s39
      %s323 = smul.u32 %s50, 10
      %s324 = sadd.s32 %s323, %s46
      %s325 = ssub.s32 %s322, %s324
      %p326 = scmp.eq.s32.totalorder %s325, 0
      %s328 = sadd.s32 %s327, 1
      %s329 = scalar_select %p326, %s327, %s328
      %p332 = pneg %p326
      %p333 = scmp.eq.s32.totalorder %s31, 19
      %p334 = por %p332, %p333
      %p335 = scmp.ne.s32.totalorder %s327, %s330
      %p336 = scmp.eq.s32.totalorder %s31, 0
      %p337 = por %p335, %p336
      %p338 = scmp.ne.s32.totalorder %s327, %s330
      %p339 = scmp.eq.s32.totalorder %s36, 19
      %p340 = por %p338, %p339
      %p341 = scmp.ne.s32.totalorder %s330, %s331
      %p342 = scmp.eq.s32.totalorder %s36, 0
      %p343 = por %p341, %p342
      %p344 = scmp.ne.s32.totalorder %s330, %s331
      %p345 = scmp.eq.s32.totalorder %s37, 19
      %p346 = por %p344, %p345
      %p348 = scmp.ne.s32.totalorder %s331, %s347
      %p349 = scmp.eq.s32.totalorder %s37, 0
      %p350 = por %p348, %p349
      %s352 = sadd.s32 %s351, 1
      %p355 = scmp.eq.s32.totalorder %s31, 19
      %p356 = scmp.ne.s32.totalorder %s351, %s353
      %p357 = scmp.eq.s32.totalorder %s31, 0
      %p358 = por %p356, %p357
      %p359 = scmp.ne.s32.totalorder %s351, %s353
      %p360 = scmp.eq.s32.totalorder %s36, 19
      %p361 = por %p359, %p360
      %p362 = scmp.ne.s32.totalorder %s353, %s354
      %p363 = scmp.eq.s32.totalorder %s36, 0
      %p364 = por %p362, %p363
      %p365 = scmp.ne.s32.totalorder %s353, %s354
      %p366 = scmp.eq.s32.totalorder %s37, 19
      %p367 = por %p365, %p366
      %p369 = scmp.ne.s32.totalorder %s354, %s368
      %p370 = scmp.eq.s32.totalorder %s37, 0
      %p371 = por %p369, %p370
      %s373 = sadd.s32 %s372, 1
      %p376 = scmp.eq.s32.totalorder %s31, 19
      %p377 = scmp.ne.s32.totalorder %s372, %s374
      %p378 = scmp.eq.s32.totalorder %s31, 0
      %p379 = por %p377, %p378
      %p380 = scmp.ne.s32.totalorder %s372, %s374
      %p381 = scmp.eq.s32.totalorder %s36, 19
      %p382 = por %p380, %p381
      %p383 = scmp.ne.s32.totalorder %s374, %s375
      %p384 = scmp.eq.s32.totalorder %s36, 0
      %p385 = por %p383, %p384
      %p386 = scmp.ne.s32.totalorder %s374, %s375
      %p387 = scmp.eq.s32.totalorder %s37, 19
      %p388 = por %p386, %p387
      %p390 = scmp.ne.s32.totalorder %s375, %s389
      %p391 = scmp.eq.s32.totalorder %s37, 0
      %p392 = por %p390, %p391
      %s393 = smul.u32 %s38, 10
      %s394 = sadd.s32 %s393, %s39
      %s395 = smul.u32 %s50, 10
      %s396 = sadd.s32 %s395, %s46
      %s397 = ssub.s32 %s394, %s396
      %p398 = scmp.eq.s32.totalorder %s397, 0
      %s400 = sadd.s32 %s399, 1
      %s401 = scalar_select %p398, %s399, %s400
      %p404 = pneg %p398
      %p405 = scmp.eq.s32.totalorder %s31, 19
      %p406 = por %p404, %p405
      %p407 = scmp.ne.s32.totalorder %s399, %s402
      %p408 = scmp.eq.s32.totalorder %s31, 0
      %p409 = por %p407, %p408
      %p410 = scmp.ne.s32.totalorder %s399, %s402
      %p411 = scmp.eq.s32.totalorder %s36, 19
      %p412 = por %p410, %p411
      %p413 = scmp.ne.s32.totalorder %s402, %s403
      %p414 = scmp.eq.s32.totalorder %s36, 0
      %p415 = por %p413, %p414
      %p416 = scmp.ne.s32.totalorder %s402, %s403
      %p417 = scmp.eq.s32.totalorder %s37, 19
      %p418 = por %p416, %p417
      %p420 = scmp.ne.s32.totalorder %s403, %s419
      %p421 = scmp.eq.s32.totalorder %s37, 0
      %p422 = por %p420, %p421
      %s424 = sadd.s32 %s423, 1
      %p427 = scmp.eq.s32.totalorder %s31, 19
      %p428 = scmp.ne.s32.totalorder %s423, %s425
      %p429 = scmp.eq.s32.totalorder %s31, 0
      %p430 = por %p428, %p429
      %p431 = scmp.ne.s32.totalorder %s423, %s425
      %p432 = scmp.eq.s32.totalorder %s36, 19
      %p433 = por %p431, %p432
      %p434 = scmp.ne.s32.totalorder %s425, %s426
      %p435 = scmp.eq.s32.totalorder %s36, 0
      %p436 = por %p434, %p435
      %p437 = scmp.ne.s32.totalorder %s425, %s426
      %p438 = scmp.eq.s32.totalorder %s37, 19
      %p439 = por %p437, %p438
      %p441 = scmp.ne.s32.totalorder %s426, %s440
      %p442 = scmp.eq.s32.totalorder %s37, 0
      %p443 = por %p441, %p442
      %s445 = sadd.s32 %s444, 1
      %p448 = scmp.eq.s32.totalorder %s31, 19
      %p449 = scmp.ne.s32.totalorder %s444, %s446
      %p450 = scmp.eq.s32.totalorder %s31, 0
      %p451 = por %p449, %p450
      %p452 = scmp.ne.s32.totalorder %s444, %s446
      %p453 = scmp.eq.s32.totalorder %s36, 19
      %p454 = por %p452, %p453
      %p455 = scmp.ne.s32.totalorder %s446, %s447
      %p456 = scmp.eq.s32.totalorder %s36, 0
      %p457 = por %p455, %p456
      %p458 = scmp.ne.s32.totalorder %s446, %s447
      %p459 = scmp.eq.s32.totalorder %s37, 19
      %p460 = por %p458, %p459
      %p462 = scmp.ne.s32.totalorder %s447, %s461
      %p463 = scmp.eq.s32.totalorder %s37, 0
      %p464 = por %p462, %p463
      %s465 = smul.u32 %s38, 10
      %s466 = sadd.s32 %s465, %s39
      %s467 = smul.u32 %s50, 10
      %s468 = sadd.s32 %s467, %s46
      %s469 = ssub.s32 %s466, %s468
      %p470 = scmp.eq.s32.totalorder %s469, 0
      %s472 = sadd.s32 %s471, 1
      %s473 = scalar_select %p470, %s471, %s472
      %p476 = pneg %p470
      %p477 = scmp.eq.s32.totalorder %s31, 19
      %p478 = por %p476, %p477
      %p479 = scmp.ne.s32.totalorder %s471, %s474
      %p480 = scmp.eq.s32.totalorder %s31, 0
      %p481 = por %p479, %p480
      %p482 = scmp.ne.s32.totalorder %s471, %s474
      %p483 = scmp.eq.s32.totalorder %s36, 19
      %p484 = por %p482, %p483
      %p485 = scmp.ne.s32.totalorder %s474, %s475
      %p486 = scmp.eq.s32.totalorder %s36, 0
      %p487 = por %p485, %p486
      %p488 = scmp.ne.s32.totalorder %s474, %s475
      %p489 = scmp.eq.s32.totalorder %s37, 19
      %p490 = por %p488, %p489
      %p492 = scmp.ne.s32.totalorder %s475, %s491
      %p493 = scmp.eq.s32.totalorder %s37, 0
      %p494 = por %p492, %p493
      %s496 = sadd.s32 %s495, 1
      %p499 = scmp.eq.s32.totalorder %s31, 19
      %p500 = scmp.ne.s32.totalorder %s495, %s497
      %p501 = scmp.eq.s32.totalorder %s31, 0
      %p502 = por %p500, %p501
      %p503 = scmp.ne.s32.totalorder %s495, %s497
      %p504 = scmp.eq.s32.totalorder %s36, 19
      %p505 = por %p503, %p504
      %p506 = scmp.ne.s32.totalorder %s497, %s498
      %p507 = scmp.eq.s32.totalorder %s36, 0
      %p508 = por %p506, %p507
      %p509 = scmp.ne.s32.totalorder %s497, %s498
      %p510 = scmp.eq.s32.totalorder %s37, 19
      %p511 = por %p509, %p510
      %p513 = scmp.ne.s32.totalorder %s498, %s512
      %p514 = scmp.eq.s32.totalorder %s37, 0
      %p515 = por %p513, %p514
      %s517 = sadd.s32 %s516, 1
      %p520 = scmp.eq.s32.totalorder %s31, 19
      %p521 = scmp.ne.s32.totalorder %s516, %s518
      %p522 = scmp.eq.s32.totalorder %s31, 0
      %p523 = por %p521, %p522
      %p524 = scmp.ne.s32.totalorder %s516, %s518
      %p525 = scmp.eq.s32.totalorder %s36, 19
      %p526 = por %p524, %p525
      %p527 = scmp.ne.s32.totalorder %s518, %s519
      %p528 = scmp.eq.s32.totalorder %s36, 0
      %p529 = por %p527, %p528
      %p530 = scmp.ne.s32.totalorder %s518, %s519
      %p531 = scmp.eq.s32.totalorder %s37, 19
      %p532 = por %p530, %p531
      %p534 = scmp.ne.s32.totalorder %s519, %s533
      %p535 = scmp.eq.s32.totalorder %s37, 0
      %p536 = por %p534, %p535
      %s538 = sadd.s32 %s537, 1
      %p541 = scmp.eq.s32.totalorder %s31, 19
      %p542 = scmp.ne.s32.totalorder %s537, %s539
      %p543 = scmp.eq.s32.totalorder %s31, 0
      %p544 = por %p542, %p543
      %p545 = scmp.ne.s32.totalorder %s537, %s539
      %p546 = scmp.eq.s32.totalorder %s36, 19
      %p547 = por %p545, %p546
      %p548 = scmp.ne.s32.totalorder %s539, %s540
      %p549 = scmp.eq.s32.totalorder %s36, 0
      %p550 = por %p548, %p549
      %p551 = scmp.ne.s32.totalorder %s539, %s540
      %p552 = scmp.eq.s32.totalorder %s37, 19
      %p553 = por %p551, %p552
      %p555 = scmp.ne.s32.totalorder %s540, %s554
      %p556 = scmp.eq.s32.totalorder %s37, 0
      %p557 = por %p555, %p556
      %s558 = ssub.s32 %s38, %s50
      %p559 = scmp.eq.s32.totalorder %s558, 0
      %s561 = sadd.s32 %s560, 1
      %s562 = scalar_select %p559, %s560, %s561
      %p565 = pneg %p559
      %p566 = scmp.eq.s32.totalorder %s31, 19
      %p567 = por %p565, %p566
      %p568 = scmp.ne.s32.totalorder %s560, %s563
      %p569 = scmp.eq.s32.totalorder %s31, 0
      %p570 = por %p568, %p569
      %p571 = scmp.ne.s32.totalorder %s560, %s563
      %p572 = scmp.eq.s32.totalorder %s36, 19
      %p573 = por %p571, %p572
      %p574 = scmp.ne.s32.totalorder %s563, %s564
      %p575 = scmp.eq.s32.totalorder %s36, 0
      %p576 = por %p574, %p575
      %p577 = scmp.ne.s32.totalorder %s563, %s564
      %p578 = scmp.eq.s32.totalorder %s37, 19
      %p579 = por %p577, %p578
      %p581 = scmp.ne.s32.totalorder %s564, %s580
      %p582 = scmp.eq.s32.totalorder %s37, 0
      %p583 = por %p581, %p582
      %p584 = scmp.le.s32.totalorder 1, %s31
      %p585 = scmp.lt.s32.totalorder %s31, 21
      %p586 = pnand %p584, %p585
      %p587 = pneg %p586
      // Predicated region
      $region9: #{mm_model_forward.1} parent=5 // pred_check
        _
      $region10: #{mm_model_forward.1} parent=5 // pred_check_branch
        %589 = sbr.rel (%p586) target = $region12
      $region11: #{mm_model_forward.1} parent=5 // pred_region
        %s590 = ssub.s32 %s31, 1
        // Predicated region
        $region13: #{mm_model_forward.1} parent=11 // pred_check
          %p591 = pneg %p64
        $region14: #{mm_model_forward.1} parent=11 // pred_check_branch
          %593 = sbr.rel (%p591) target = $region16
        $region15: #{mm_model_forward.1} parent=11 // pred_region
          _
        $region16: #{mm_model_forward.1} parent=11 // pred_fallthru
          _
        // Predicated region
        $region17: #{mm_model_forward.1} parent=11 // pred_check
          %p594 = pneg %p85
        $region18: #{mm_model_forward.1} parent=11 // pred_check_branch
          %596 = sbr.rel (%p594) target = $region20
        $region19: #{mm_model_forward.1} parent=11 // pred_region
          _
        $region20: #{mm_model_forward.1} parent=11 // pred_fallthru
          _
        // Predicated region
        $region21: #{mm_model_forward.1} parent=11 // pred_check
          %p597 = pneg %p106
        $region22: #{mm_model_forward.1} parent=11 // pred_check_branch
          %599 = sbr.rel (%p597) target = $region24
        $region23: #{mm_model_forward.1} parent=11 // pred_region
          %s601 = ssub.s32 18432, 18432
          %602 = vsyncadd [#allocation6], %s601
          %s603 = sshll.u32 [#allocation5], 4
          %s604 = int_to_ptr.vmem [resolvable:$true] %s603
          %609 = dma.hbm_to_vmem [thread:$0]  %s2, 18432, %s604, [#allocation6], 768, 768, 48
        $region24: #{mm_model_forward.1} parent=11 // pred_fallthru
          _
        // Predicated region
        $region25: #{mm_model_forward.1} parent=11 // pred_check
          %p610 = pneg %p127
        $region26: #{mm_model_forward.1} parent=11 // pred_check_branch
          %612 = sbr.rel (%p610) target = $region28
        $region27: #{mm_model_forward.1} parent=11 // pred_region
          _
        $region28: #{mm_model_forward.1} parent=11 // pred_fallthru
          _
        // Predicated region
        $region29: #{mm_model_forward.1} parent=11 // pred_check
          %p613 = pneg %p148
        $region30: #{mm_model_forward.1} parent=11 // pred_check_branch
          %615 = sbr.rel (%p613) target = $region32
        $region31: #{mm_model_forward.1} parent=11 // pred_region
          %s617 = ssub.s32 18432, 18432
          %618 = vsyncadd [#allocation8], %s617
          %s619 = sshll.u32 [#allocation7], 4
          %s620 = int_to_ptr.vmem [resolvable:$true] %s619
          %625 = dma.hbm_to_vmem [thread:$0]  %s4, 18432, %s620, [#allocation8], 768, 768, 48
        $region32: #{mm_model_forward.1} parent=11 // pred_fallthru
          _
        // Predicated region
        $region33: #{mm_model_forward.1} parent=11 // pred_check
          %p626 = pneg %p169
        $region34: #{mm_model_forward.1} parent=11 // pred_check_branch
          %628 = sbr.rel (%p626) target = $region36
        $region35: #{mm_model_forward.1} parent=11 // pred_region
          _
        $region36: #{mm_model_forward.1} parent=11 // pred_fallthru
          _
        // Predicated region
        $region37: #{mm_model_forward.1} parent=11 // pred_check
          %p629 = pneg %p220
        $region38: #{mm_model_forward.1} parent=11 // pred_check_branch
          %631 = sbr.rel (%p629) target = $region40
        $region39: #{mm_model_forward.1} parent=11 // pred_region
          _
        $region40: #{mm_model_forward.1} parent=11 // pred_fallthru
          _
        // Predicated region
        $region41: #{mm_model_forward.1} parent=11 // pred_check
          %p632 = pneg %p241
        $region42: #{mm_model_forward.1} parent=11 // pred_check_branch
          %634 = sbr.rel (%p632) target = $region44
        $region43: #{mm_model_forward.1} parent=11 // pred_region
          _
        $region44: #{mm_model_forward.1} parent=11 // pred_fallthru
          _
        // Predicated region
        $region45: #{mm_model_forward.1} parent=11 // pred_check
          %p635 = pneg %p292
        $region46: #{mm_model_forward.1} parent=11 // pred_check_branch
          %637 = sbr.rel (%p635) target = $region48
        $region47: #{mm_model_forward.1} parent=11 // pred_region
          _
        $region48: #{mm_model_forward.1} parent=11 // pred_fallthru
          _
        // Predicated region
        $region49: #{mm_model_forward.1} parent=11 // pred_check
          %p638 = pneg %p313
        $region50: #{mm_model_forward.1} parent=11 // pred_check_branch
          %640 = sbr.rel (%p638) target = $region52
        $region51: #{mm_model_forward.1} parent=11 // pred_region
          _
        $region52: #{mm_model_forward.1} parent=11 // pred_fallthru
          _
        // Predicated region
        $region53: #{mm_model_forward.1} parent=11 // pred_check
          %p641 = pneg %p364
        $region54: #{mm_model_forward.1} parent=11 // pred_check_branch
          %643 = sbr.rel (%p641) target = $region56
        $region55: #{mm_model_forward.1} parent=11 // pred_region
          _
        $region56: #{mm_model_forward.1} parent=11 // pred_fallthru
          _
        // Predicated region
        $region57: #{mm_model_forward.1} parent=11 // pred_check
          %p644 = pneg %p385
        $region58: #{mm_model_forward.1} parent=11 // pred_check_branch
          %646 = sbr.rel (%p644) target = $region60
        $region59: #{mm_model_forward.1} parent=11 // pred_region
          _
        $region60: #{mm_model_forward.1} parent=11 // pred_fallthru
          _
        // Predicated region
        $region61: #{mm_model_forward.1} parent=11 // pred_check
          %p647 = pneg %p436
        $region62: #{mm_model_forward.1} parent=11 // pred_check_branch
          %649 = sbr.rel (%p647) target = $region64
        $region63: #{mm_model_forward.1} parent=11 // pred_region
          %s651 = ssub.s32 3840, 3840
          %652 = vsyncadd [#allocation8], %s651
          %s653 = sshll.u32 [#allocation9], 4
          %s654 = int_to_ptr.vmem [resolvable:$true] %s653
          %659 = dma.hbm_to_vmem [thread:$0]  %s16, 3840, %s654, [#allocation8], 1280, 1280, 80
        $region64: #{mm_model_forward.1} parent=11 // pred_fallthru
          _
        // Predicated region
        $region65: #{mm_model_forward.1} parent=11 // pred_check
          %p660 = pneg %p457
        $region66: #{mm_model_forward.1} parent=11 // pred_check_branch
          %662 = sbr.rel (%p660) target = $region68
        $region67: #{mm_model_forward.1} parent=11 // pred_region
          %s664 = ssub.s32 3840, 3840
          %665 = vsyncadd [#allocation11], %s664
          %s666 = sshll.u32 [#allocation10], 4
          %s667 = int_to_ptr.vmem [resolvable:$true] %s666
          %672 = dma.hbm_to_vmem [thread:$0]  %s17, 3840, %s667, [#allocation11], 1280, 1280, 80
        $region68: #{mm_model_forward.1} parent=11 // pred_fallthru
          _
        // Predicated region
        $region69: #{mm_model_forward.1} parent=11 // pred_check
          %p673 = pneg %p508
        $region70: #{mm_model_forward.1} parent=11 // pred_check_branch
          %675 = sbr.rel (%p673) target = $region72
        $region71: #{mm_model_forward.1} parent=11 // pred_region
          _
        $region72: #{mm_model_forward.1} parent=11 // pred_fallthru
          _
        // Predicated region
        $region73: #{mm_model_forward.1} parent=11 // pred_check
          %p676 = pneg %p529
        $region74: #{mm_model_forward.1} parent=11 // pred_check_branch
          %678 = sbr.rel (%p676) target = $region76
        $region75: #{mm_model_forward.1} parent=11 // pred_region
          _
        $region76: #{mm_model_forward.1} parent=11 // pred_fallthru
          _
        // Predicated region
        $region77: #{mm_model_forward.1} parent=11 // pred_check
          %p679 = pneg %p550
        $region78: #{mm_model_forward.1} parent=11 // pred_check_branch
          %681 = sbr.rel (%p679) target = $region80
        $region79: #{mm_model_forward.1} parent=11 // pred_region
          _
        $region80: #{mm_model_forward.1} parent=11 // pred_fallthru
          _
      $region12: #{mm_model_forward.1} parent=5 // pred_fallthru
        _
      %p682 = scmp.lt.s32.totalorder %s31, 20
      // Predicated region
      $region81: #{mm_model_forward.1} parent=5 // pred_check
        %p683 = pneg %p682
      $region82: #{mm_model_forward.1} parent=5 // pred_check_branch
        %685 = sbr.rel (%p683) target = $region84
      $region83: #{mm_model_forward.1} parent=5 // pred_region
        // Predicated region
        $region85: #{mm_model_forward.1} parent=83 // pred_check
          %p686 = pneg %p193
        $region86: #{mm_model_forward.1} parent=83 // pred_check_branch
          %688 = sbr.rel (%p686) target = $region88
        $region87: #{mm_model_forward.1} parent=83 // pred_region
          %s689 = smul.u32 %s38, 10
          %s690 = sadd.s32 %s689, %s39
          %p691 = scmp.lt.s32.totalorder %s690, 19
          %s692 = scalar_select %p691, %s690, 19
          %s693 = smul.addr %s692, 24
          %s694 = smul.addr %s693, 8
          %s695 = scalar_lea.vmem %s6, %s694
          %s696 = smul.u32 %s38, 10
          %s697 = sadd.s32 %s696, %s39
        $region88: #{mm_model_forward.1} parent=83 // pred_fallthru
          _
        // Predicated region
        $region89: #{mm_model_forward.1} parent=83 // pred_check
          %p698 = pneg %p265
        $region90: #{mm_model_forward.1} parent=83 // pred_check_branch
          %700 = sbr.rel (%p698) target = $region92
        $region91: #{mm_model_forward.1} parent=83 // pred_region
          %s701 = smul.u32 %s38, 10
          %s702 = sadd.s32 %s701, %s39
          %p703 = scmp.lt.s32.totalorder %s702, 19
          %s704 = scalar_select %p703, %s702, 19
          %s705 = smul.addr %s704, 24
          %s706 = smul.addr %s705, 8
          %s707 = scalar_lea.vmem %s9, %s706
          %s708 = smul.u32 %s38, 10
          %s709 = sadd.s32 %s708, %s39
        $region92: #{mm_model_forward.1} parent=83 // pred_fallthru
          _
        // Predicated region
        $region93: #{mm_model_forward.1} parent=83 // pred_check
          %p710 = pneg %p337
        $region94: #{mm_model_forward.1} parent=83 // pred_check_branch
          %712 = sbr.rel (%p710) target = $region96
        $region95: #{mm_model_forward.1} parent=83 // pred_region
          %s713 = smul.u32 %s38, 10
          %s714 = sadd.s32 %s713, %s39
          %p715 = scmp.lt.s32.totalorder %s714, 19
          %s716 = scalar_select %p715, %s714, 19
          %s717 = smul.addr %s716, 100
          %s718 = smul.addr %s717, 2
          %s719 = scalar_lea.vmem %s12, %s718
          %s720 = smul.u32 %s38, 10
          %s721 = sadd.s32 %s720, %s39
        $region96: #{mm_model_forward.1} parent=83 // pred_fallthru
          _
        // Predicated region
        $region97: #{mm_model_forward.1} parent=83 // pred_check
          %p722 = pneg %p409
        $region98: #{mm_model_forward.1} parent=83 // pred_check_branch
          %724 = sbr.rel (%p722) target = $region100
        $region99: #{mm_model_forward.1} parent=83 // pred_region
          %s725 = smul.u32 %s38, 10
          %s726 = sadd.s32 %s725, %s39
          %p727 = scmp.lt.s32.totalorder %s726, 19
          %s728 = scalar_select %p727, %s726, 19
          %s729 = smul.addr %s728, 100
          %s730 = smul.addr %s729, 2
          %s731 = scalar_lea.vmem %s15, %s730
          %s732 = smul.u32 %s38, 10
          %s733 = sadd.s32 %s732, %s39
        $region100: #{mm_model_forward.1} parent=83 // pred_fallthru
          _
        // Predicated region
        $region101: #{mm_model_forward.1} parent=83 // pred_check
          %p734 = pneg %p481
        $region102: #{mm_model_forward.1} parent=83 // pred_check_branch
          %736 = sbr.rel (%p734) target = $region104
        $region103: #{mm_model_forward.1} parent=83 // pred_region
          %s737 = smul.u32 %s38, 10
          %s738 = sadd.s32 %s737, %s39
          %p739 = scmp.lt.s32.totalorder %s738, 19
          %s740 = scalar_select %p739, %s738, 19
          %s741 = smul.addr %s740, 130
          %s742 = smul.addr %s741, 2
          %s743 = scalar_lea.vmem %s18, %s742
          %s744 = smul.u32 %s38, 10
          %s745 = sadd.s32 %s744, %s39
        $region104: #{mm_model_forward.1} parent=83 // pred_fallthru
          _
      $region84: #{mm_model_forward.1} parent=5 // pred_fallthru
        _
      %p746 = scmp.le.s32.totalorder 1, %s31
      %p747 = scmp.lt.s32.totalorder %s31, 21
      %p748 = pnand %p746, %p747
      %p749 = pneg %p748
      // Predicated region
      $region105: #{mm_model_forward.1} parent=5 // pred_check
        _
      $region106: #{mm_model_forward.1} parent=5 // pred_check_branch
        %751 = sbr.rel (%p748) target = $region108
      $region107: #{mm_model_forward.1} parent=5 // pred_region
        %s752 = ssub.s32 %s31, 1
        // Predicated region
        $region109: #{mm_model_forward.1} parent=107 // pred_check
          %p753 = pneg %p106
        $region110: #{mm_model_forward.1} parent=107 // pred_check_branch
          %755 = sbr.rel (%p753) target = $region112
        $region111: #{mm_model_forward.1} parent=107 // pred_region
          %756 = dma.done [#allocation6], 18432
        $region112: #{mm_model_forward.1} parent=107 // pred_fallthru
          _
        // Predicated region
        $region113: #{mm_model_forward.1} parent=107 // pred_check
          %p757 = pneg %p148
        $region114: #{mm_model_forward.1} parent=107 // pred_check_branch
          %759 = sbr.rel (%p757) target = $region116
        $region115: #{mm_model_forward.1} parent=107 // pred_region
          %760 = dma.done [#allocation8], 18432
        $region116: #{mm_model_forward.1} parent=107 // pred_fallthru
          _
        // Predicated region
        $region117: #{mm_model_forward.1} parent=107 // pred_check
          %p761 = pneg %p436
        $region118: #{mm_model_forward.1} parent=107 // pred_check_branch
          %763 = sbr.rel (%p761) target = $region120
        $region119: #{mm_model_forward.1} parent=107 // pred_region
          %764 = dma.done [#allocation8], 3840
        $region120: #{mm_model_forward.1} parent=107 // pred_fallthru
          _
        // Predicated region
        $region121: #{mm_model_forward.1} parent=107 // pred_check
          %p765 = pneg %p457
        $region122: #{mm_model_forward.1} parent=107 // pred_check_branch
          %767 = sbr.rel (%p765) target = $region124
        $region123: #{mm_model_forward.1} parent=107 // pred_region
          %768 = dma.done [#allocation11], 3840
        $region124: #{mm_model_forward.1} parent=107 // pred_fallthru
          _
        %p769 = pneg %p64
        %p770 = pneg %p61
        %p771 = pneg %p85
        %p772 = pneg %p82
        %p773 = pneg %p106
        %p774 = pneg %p103
        %p775 = pneg %p127
        %p776 = pneg %p124
        %p777 = pneg %p148
        %p778 = pneg %p145
        %p779 = pneg %p169
        %p780 = pneg %p166
        %s781 = smul.u32 %s40, 10
        %s782 = sadd.s32 %s781, %s41
        %p783 = scmp.lt.s32.totalorder %s782, 19
        %s784 = scalar_select %p783, %s782, 19
        %s785 = smul.addr %s784, 24
        %s786 = smul.addr %s785, 8
        %s787 = scalar_lea.vmem %s6, %s786
        %p788 = pneg %p199
        %p789 = pneg %p196
        %p790 = pneg %p220
        %p791 = pneg %p217
        %p792 = pneg %p241
        %p793 = pneg %p238
        %s794 = smul.u32 %s40, 10
        %s795 = sadd.s32 %s794, %s41
        %p796 = scmp.lt.s32.totalorder %s795, 19
        %s797 = scalar_select %p796, %s795, 19
        %s798 = smul.addr %s797, 24
        %s799 = smul.addr %s798, 8
        %s800 = scalar_lea.vmem %s9, %s799
        %p801 = pneg %p271
        %p802 = pneg %p268
        %p803 = pneg %p292
        %p804 = pneg %p289
        %p805 = pneg %p313
        %p806 = pneg %p310
        %s807 = smul.u32 %s40, 10
        %s808 = sadd.s32 %s807, %s41
        %p809 = scmp.lt.s32.totalorder %s808, 19
        %s810 = scalar_select %p809, %s808, 19
        %s811 = smul.addr %s810, 100
        %s812 = smul.addr %s811, 2
        %s813 = scalar_lea.vmem %s12, %s812
        %p814 = pneg %p343
        %p815 = pneg %p340
        %p816 = pneg %p364
        %p817 = pneg %p361
        %p818 = pneg %p385
        %p819 = pneg %p382
        %s820 = smul.u32 %s40, 10
        %s821 = sadd.s32 %s820, %s41
        %p822 = scmp.lt.s32.totalorder %s821, 19
        %s823 = scalar_select %p822, %s821, 19
        %s824 = smul.addr %s823, 100
        %s825 = smul.addr %s824, 2
        %s826 = scalar_lea.vmem %s15, %s825
        %p827 = pneg %p415
        %p828 = pneg %p412
        %p829 = pneg %p436
        %p830 = pneg %p433
        %p831 = pneg %p457
        %p832 = pneg %p454
        %s833 = smul.u32 %s40, 10
        %s834 = sadd.s32 %s833, %s41
        %p835 = scmp.lt.s32.totalorder %s834, 19
        %s836 = scalar_select %p835, %s834, 19
        %s837 = smul.addr %s836, 130
        %s838 = smul.addr %s837, 2
        %s839 = scalar_lea.vmem %s18, %s838
        %p840 = pneg %p487
        %p841 = pneg %p484
        %p842 = pneg %p508
        %p843 = pneg %p505
        %p844 = pneg %p529
        %p845 = pneg %p526
        %p846 = pneg %p550
        %p847 = pneg %p547
        %p848 = pneg %p576
        %p849 = pneg %p573
        %p850 = scmp.lt.s32.totalorder %s40, 1
        %s851 = scalar_select %p850, %s40, 1
        %s852 = smul.addr %s851, 8
        %s853 = scalar_lea.vmem %s22, %s852
        %s854 = smul.u32 %s40, 10
        %s855 = sadd.s32 %s854, %s41
        %p856 = scmp.lt.s32.totalorder %s855, 19
        %s857 = scalar_select %p856, %s855, 19
        %s858 = smul.addr %s857, 24
        %s859 = smul.addr %s858, 8
        %s860 = scalar_lea.vmem %s6, %s859
        %s861 = smul.u32 %s40, 10
        %s862 = sadd.s32 %s861, %s41
        %s863 = smul.u32 %s40, 10
        %s864 = sadd.s32 %s863, %s41
        %p865 = scmp.lt.s32.totalorder %s864, 19
        %s866 = scalar_select %p865, %s864, 19
        %s867 = smul.addr %s866, 24
        %s868 = smul.addr %s867, 8
        %s869 = scalar_lea.vmem %s9, %s868
        %s870 = smul.u32 %s40, 10
        %s871 = sadd.s32 %s870, %s41
        %s872 = smul.u32 %s40, 10
        %s873 = sadd.s32 %s872, %s41
        %p874 = scmp.lt.s32.totalorder %s873, 19
        %s875 = scalar_select %p874, %s873, 19
        %s876 = smul.addr %s875, 100
        %s877 = smul.addr %s876, 2
        %s878 = scalar_lea.vmem %s12, %s877
        %s879 = smul.u32 %s40, 10
        %s880 = sadd.s32 %s879, %s41
        %s881 = smul.u32 %s40, 10
        %s882 = sadd.s32 %s881, %s41
        %p883 = scmp.lt.s32.totalorder %s882, 19
        %s884 = scalar_select %p883, %s882, 19
        %s885 = smul.addr %s884, 100
        %s886 = smul.addr %s885, 2
        %s887 = scalar_lea.vmem %s15, %s886
        %s888 = smul.u32 %s40, 10
        %s889 = sadd.s32 %s888, %s41
        %s890 = smul.u32 %s40, 10
        %s891 = sadd.s32 %s890, %s41
        %p892 = scmp.lt.s32.totalorder %s891, 19
        %s893 = scalar_select %p892, %s891, 19
        %s894 = smul.addr %s893, 130
        %s895 = smul.addr %s894, 2
        %s896 = scalar_lea.vmem %s18, %s895
        %s897 = smul.u32 %s40, 10
        %s898 = sadd.s32 %s897, %s41
        %p899 = scmp.lt.s32.totalorder %s40, 1
        %s900 = scalar_select %p899, %s40, 1
        %s901 = smul.addr %s900, 8
        %s902 = scalar_lea.vmem %s22, %s901
        %s904 = smul.u32 %s40, 10
        %s905 = sadd.s32 %s904, %s41
        %p906 = scmp.eq.s32.totalorder %s41, 0
        // Predicated region
        $region125: #{mm_model_forward.1} parent=107 // pred_check
          %p907 = pneg %p906
        $region126: #{mm_model_forward.1} parent=107 // pred_check_branch
          %909 = sbr.rel (%p907) target = $region128
        $region127: #{mm_model_forward.1} parent=107 // pred_region
          %v910 = vld [vmem:[%s0] sm:$0xff]
          %v911 = vld [vmem:[%s0 + $0x8] sm:$0xff]
          %v912 = vld [vmem:[%s0 + $0x10] sm:$0xff]
          %v913 = vld [vmem:[%s0 + $0x18] sm:$0xff]
          %v914 = vld [vmem:[%s0 + $0x20] sm:$0xff]
          %v915 = vld [vmem:[%s0 + $0x28] sm:$0xff]
          %v916 = vld [vmem:[%s3] ss:$2 sm:$0x3f]
          %s917 = scalar_lea.vmem %s3, 1
          %v918 = vld [vmem:[%s917] ss:$2 sm:$0x3f]
          %v919 = vpack.c.bf16 %v910, %v910
          %v920 = vpack.c.bf16 %v911, %v911
          %v921 = vpack.c.bf16 %v912, %v912
          %v922 = vpack.c.bf16 %v913, %v913
          %v923 = vpack.c.bf16 %v914, %v914
          %v924 = vpack.c.bf16 %v915, %v915
          %v925 = vld [vmem:[#allocation5] sm:$0xff]
          %v926 = vld [vmem:[#allocation5 + $0x8] sm:$0xff]
          %v927 = vld [vmem:[#allocation5 + $0x10] sm:$0xff]
          %v928 = vld [vmem:[#allocation5 + $0x18] sm:$0xff]
          %v929 = vld [vmem:[#allocation5 + $0x20] sm:$0xff]
          %v930 = vld [vmem:[#allocation5 + $0x28] sm:$0xff]
          %v931 = vld [vmem:[#allocation5 + $0x30] sm:$0xff]
          %v932 = vld [vmem:[#allocation5 + $0x38] sm:$0xff]
          %v933 = vld [vmem:[#allocation5 + $0x40] sm:$0xff]
          %v934 = vld [vmem:[#allocation5 + $0x48] sm:$0xff]
          %v935 = vld [vmem:[#allocation5 + $0x50] sm:$0xff]
          %v936 = vld [vmem:[#allocation5 + $0x58] sm:$0xff]
          %v937 = vld [vmem:[#allocation5 + $0x60] sm:$0xff]
          %v938 = vld [vmem:[#allocation5 + $0x68] sm:$0xff]
          %v939 = vld [vmem:[#allocation5 + $0x70] sm:$0xff]
          %v940 = vld [vmem:[#allocation5 + $0x78] sm:$0xff]
          %v941 = vld [vmem:[#allocation5 + $0x80] sm:$0xff]
          %v942 = vld [vmem:[#allocation5 + $0x88] sm:$0xff]
          %v943 = vld [vmem:[#allocation5 + $0x90] sm:$0xff]
          %v944 = vld [vmem:[#allocation5 + $0x98] sm:$0xff]
          %v945 = vld [vmem:[#allocation5 + $0xa0] sm:$0xff]
          %v946 = vld [vmem:[#allocation5 + $0xa8] sm:$0xff]
          %v947 = vld [vmem:[#allocation5 + $0xb0] sm:$0xff]
          %v948 = vld [vmem:[#allocation5 + $0xb8] sm:$0xff]
          %v949 = vld [vmem:[#allocation5 + $0xc0] sm:$0xff]
          %v950 = vld [vmem:[#allocation5 + $0xc8] sm:$0xff]
          %v951 = vld [vmem:[#allocation5 + $0xd0] sm:$0xff]
          %v952 = vld [vmem:[#allocation5 + $0xd8] sm:$0xff]
          %v953 = vld [vmem:[#allocation5 + $0xe0] sm:$0xff]
          %v954 = vld [vmem:[#allocation5 + $0xe8] sm:$0xff]
          %v955 = vld [vmem:[#allocation5 + $0xf0] sm:$0xff]
          %v956 = vld [vmem:[#allocation5 + $0xf8] sm:$0xff]
          %v957 = vld [vmem:[#allocation5 + $0x100] sm:$0xff]
          %v958 = vld [vmem:[#allocation5 + $0x108] sm:$0xff]
          %v959 = vld [vmem:[#allocation5 + $0x110] sm:$0xff]
          %v960 = vld [vmem:[#allocation5 + $0x118] sm:$0xff]
          %v961 = vld [vmem:[#allocation5 + $0x120] sm:$0xff]
          %v962 = vld [vmem:[#allocation5 + $0x128] sm:$0xff]
          %v963 = vld [vmem:[#allocation5 + $0x130] sm:$0xff]
          %v964 = vld [vmem:[#allocation5 + $0x138] sm:$0xff]
          %v965 = vld [vmem:[#allocation5 + $0x140] sm:$0xff]
          %v966 = vld [vmem:[#allocation5 + $0x148] sm:$0xff]
          %v967 = vld [vmem:[#allocation5 + $0x150] sm:$0xff]
          %v968 = vld [vmem:[#allocation5 + $0x158] sm:$0xff]
          %v969 = vld [vmem:[#allocation5 + $0x160] sm:$0xff]
          %v970 = vld [vmem:[#allocation5 + $0x168] sm:$0xff]
          %v971 = vld [vmem:[#allocation5 + $0x170] sm:$0xff]
          %v972 = vld [vmem:[#allocation5 + $0x178] sm:$0xff]
          %v973 = vld [vmem:[#allocation5 + $0x180] sm:$0xff]
          %v974 = vld [vmem:[#allocation5 + $0x188] sm:$0xff]
          %v975 = vld [vmem:[#allocation5 + $0x190] sm:$0xff]
          %v976 = vld [vmem:[#allocation5 + $0x198] sm:$0xff]
          %v977 = vld [vmem:[#allocation5 + $0x1a0] sm:$0xff]
          %v978 = vld [vmem:[#allocation5 + $0x1a8] sm:$0xff]
          %v979 = vld [vmem:[#allocation5 + $0x1b0] sm:$0xff]
          %v980 = vld [vmem:[#allocation5 + $0x1b8] sm:$0xff]
          %v981 = vld [vmem:[#allocation5 + $0x1c0] sm:$0xff]
          %v982 = vld [vmem:[#allocation5 + $0x1c8] sm:$0xff]
          %v983 = vld [vmem:[#allocation5 + $0x1d0] sm:$0xff]
          %v984 = vld [vmem:[#allocation5 + $0x1d8] sm:$0xff]
          %v985 = vld [vmem:[#allocation5 + $0x1e0] sm:$0xff]
          %v986 = vld [vmem:[#allocation5 + $0x1e8] sm:$0xff]
          %v987 = vld [vmem:[#allocation5 + $0x1f0] sm:$0xff]
          %v988 = vld [vmem:[#allocation5 + $0x1f8] sm:$0xff]
          %v989 = vld [vmem:[#allocation5 + $0x200] sm:$0xff]
          %v990 = vld [vmem:[#allocation5 + $0x208] sm:$0xff]
          %v991 = vld [vmem:[#allocation5 + $0x210] sm:$0xff]
          %v992 = vld [vmem:[#allocation5 + $0x218] sm:$0xff]
          %v993 = vld [vmem:[#allocation5 + $0x220] sm:$0xff]
          %v994 = vld [vmem:[#allocation5 + $0x228] sm:$0xff]
          %v995 = vld [vmem:[#allocation5 + $0x230] sm:$0xff]
          %v996 = vld [vmem:[#allocation5 + $0x238] sm:$0xff]
          %v997 = vld [vmem:[#allocation5 + $0x240] sm:$0xff]
          %v998 = vld [vmem:[#allocation5 + $0x248] sm:$0xff]
          %v999 = vld [vmem:[#allocation5 + $0x250] sm:$0xff]
          %v1000 = vld [vmem:[#allocation5 + $0x258] sm:$0xff]
          %v1001 = vld [vmem:[#allocation5 + $0x260] sm:$0xff]
          %v1002 = vld [vmem:[#allocation5 + $0x268] sm:$0xff]
          %v1003 = vld [vmem:[#allocation5 + $0x270] sm:$0xff]
          %v1004 = vld [vmem:[#allocation5 + $0x278] sm:$0xff]
          %v1005 = vld [vmem:[#allocation5 + $0x280] sm:$0xff]
          %v1006 = vld [vmem:[#allocation5 + $0x288] sm:$0xff]
          %v1007 = vld [vmem:[#allocation5 + $0x290] sm:$0xff]
          %v1008 = vld [vmem:[#allocation5 + $0x298] sm:$0xff]
          %v1009 = vld [vmem:[#allocation5 + $0x2a0] sm:$0xff]
          %v1010 = vld [vmem:[#allocation5 + $0x2a8] sm:$0xff]
          %v1011 = vld [vmem:[#allocation5 + $0x2b0] sm:$0xff]
          %v1012 = vld [vmem:[#allocation5 + $0x2b8] sm:$0xff]
          %v1013 = vld [vmem:[#allocation5 + $0x2c0] sm:$0xff]
          %v1014 = vld [vmem:[#allocation5 + $0x2c8] sm:$0xff]
          %v1015 = vld [vmem:[#allocation5 + $0x2d0] sm:$0xff]
          %v1016 = vld [vmem:[#allocation5 + $0x2d8] sm:$0xff]
          %v1017 = vld [vmem:[#allocation5 + $0x2e0] sm:$0xff]
          %v1018 = vld [vmem:[#allocation5 + $0x2e8] sm:$0xff]
          %v1019 = vld [vmem:[#allocation5 + $0x2f0] sm:$0xff]
          %v1020 = vld [vmem:[#allocation5 + $0x2f8] sm:$0xff]
          %v1021 = vld [vmem:[#allocation5 + $0x300] sm:$0xff]
          %v1022 = vld [vmem:[#allocation5 + $0x308] sm:$0xff]
          %v1023 = vld [vmem:[#allocation5 + $0x310] sm:$0xff]
          %v1024 = vld [vmem:[#allocation5 + $0x318] sm:$0xff]
          %v1025 = vld [vmem:[#allocation5 + $0x320] sm:$0xff]
          %v1026 = vld [vmem:[#allocation5 + $0x328] sm:$0xff]
          %v1027 = vld [vmem:[#allocation5 + $0x330] sm:$0xff]
          %v1028 = vld [vmem:[#allocation5 + $0x338] sm:$0xff]
          %v1029 = vld [vmem:[#allocation5 + $0x340] sm:$0xff]
          %v1030 = vld [vmem:[#allocation5 + $0x348] sm:$0xff]
          %v1031 = vld [vmem:[#allocation5 + $0x350] sm:$0xff]
          %v1032 = vld [vmem:[#allocation5 + $0x358] sm:$0xff]
          %v1033 = vld [vmem:[#allocation5 + $0x360] sm:$0xff]
          %v1034 = vld [vmem:[#allocation5 + $0x368] sm:$0xff]
          %v1035 = vld [vmem:[#allocation5 + $0x370] sm:$0xff]
          %v1036 = vld [vmem:[#allocation5 + $0x378] sm:$0xff]
          %v1037 = vld [vmem:[#allocation5 + $0x380] sm:$0xff]
          %v1038 = vld [vmem:[#allocation5 + $0x388] sm:$0xff]
          %v1039 = vld [vmem:[#allocation5 + $0x390] sm:$0xff]
          %v1040 = vld [vmem:[#allocation5 + $0x398] sm:$0xff]
          %v1041 = vld [vmem:[#allocation5 + $0x3a0] sm:$0xff]
          %v1042 = vld [vmem:[#allocation5 + $0x3a8] sm:$0xff]
          %v1043 = vld [vmem:[#allocation5 + $0x3b0] sm:$0xff]
          %v1044 = vld [vmem:[#allocation5 + $0x3b8] sm:$0xff]
          %v1045 = vld [vmem:[#allocation5 + $0x3c0] sm:$0xff]
          %v1046 = vld [vmem:[#allocation5 + $0x3c8] sm:$0xff]
          %v1047 = vld [vmem:[#allocation5 + $0x3d0] sm:$0xff]
          %v1048 = vld [vmem:[#allocation5 + $0x3d8] sm:$0xff]
          %v1049 = vld [vmem:[#allocation5 + $0x3e0] sm:$0xff]
          %v1050 = vld [vmem:[#allocation5 + $0x3e8] sm:$0xff]
          %v1051 = vld [vmem:[#allocation5 + $0x3f0] sm:$0xff]
          %v1052 = vld [vmem:[#allocation5 + $0x3f8] sm:$0xff]
          %v1053 = vld [vmem:[#allocation5 + $0x400] sm:$0xff]
          %v1054 = vld [vmem:[#allocation5 + $0x408] sm:$0xff]
          %v1055 = vld [vmem:[#allocation5 + $0x410] sm:$0xff]
          %v1056 = vld [vmem:[#allocation5 + $0x418] sm:$0xff]
          %v1057 = vld [vmem:[#allocation5 + $0x420] sm:$0xff]
          %v1058 = vld [vmem:[#allocation5 + $0x428] sm:$0xff]
          %v1059 = vld [vmem:[#allocation5 + $0x430] sm:$0xff]
          %v1060 = vld [vmem:[#allocation5 + $0x438] sm:$0xff]
          %v1061 = vld [vmem:[#allocation5 + $0x440] sm:$0xff]
          %v1062 = vld [vmem:[#allocation5 + $0x448] sm:$0xff]
          %v1063 = vld [vmem:[#allocation5 + $0x450] sm:$0xff]
          %v1064 = vld [vmem:[#allocation5 + $0x458] sm:$0xff]
          %v1065 = vld [vmem:[#allocation5 + $0x460] sm:$0xff]
          %v1066 = vld [vmem:[#allocation5 + $0x468] sm:$0xff]
          %v1067 = vld [vmem:[#allocation5 + $0x470] sm:$0xff]
          %v1068 = vld [vmem:[#allocation5 + $0x478] sm:$0xff]
          %v1069 = vunpack.c.l.s8.bf16 %v925
          %v1070 = vunpack.c.l.s8.bf16 %v926
          %v1071 = vunpack.c.l.s8.bf16 %v927
          %v1072 = vunpack.c.l.s8.bf16 %v928
          %v1073 = vunpack.c.l.s8.bf16 %v929
          %v1074 = vunpack.c.l.s8.bf16 %v930
          %v1075 = vunpack.c.h.s8.bf16 %v925
          %v1076 = vunpack.c.h.s8.bf16 %v926
          %v1077 = vunpack.c.h.s8.bf16 %v927
          %v1078 = vunpack.c.h.s8.bf16 %v928
          %v1079 = vunpack.c.h.s8.bf16 %v929
          %v1080 = vunpack.c.h.s8.bf16 %v930
          %v1081 = vunpack.c.l.s8.bf16 %v931
          %v1082 = vunpack.c.l.s8.bf16 %v932
          %v1083 = vunpack.c.l.s8.bf16 %v933
          %v1084 = vunpack.c.l.s8.bf16 %v934
          %v1085 = vunpack.c.l.s8.bf16 %v935
          %v1086 = vunpack.c.l.s8.bf16 %v936
          %v1087 = vunpack.c.h.s8.bf16 %v931
          %v1088 = vunpack.c.h.s8.bf16 %v932
          %v1089 = vunpack.c.h.s8.bf16 %v933
          %v1090 = vunpack.c.h.s8.bf16 %v934
          %v1091 = vunpack.c.h.s8.bf16 %v935
          %v1092 = vunpack.c.h.s8.bf16 %v936
          %v1093 = vunpack.c.l.s8.bf16 %v937
          %v1094 = vunpack.c.l.s8.bf16 %v938
          %v1095 = vunpack.c.l.s8.bf16 %v939
          %v1096 = vunpack.c.l.s8.bf16 %v940
          %v1097 = vunpack.c.l.s8.bf16 %v941
          %v1098 = vunpack.c.l.s8.bf16 %v942
          %v1099 = vunpack.c.h.s8.bf16 %v937
          %v1100 = vunpack.c.h.s8.bf16 %v938
          %v1101 = vunpack.c.h.s8.bf16 %v939
          %v1102 = vunpack.c.h.s8.bf16 %v940
          %v1103 = vunpack.c.h.s8.bf16 %v941
          %v1104 = vunpack.c.h.s8.bf16 %v942
          %v1105 = vunpack.c.l.s8.bf16 %v943
          %v1106 = vunpack.c.l.s8.bf16 %v944
          %v1107 = vunpack.c.l.s8.bf16 %v945
          %v1108 = vunpack.c.l.s8.bf16 %v946
          %v1109 = vunpack.c.l.s8.bf16 %v947
          %v1110 = vunpack.c.l.s8.bf16 %v948
          %v1111 = vunpack.c.h.s8.bf16 %v943
          %v1112 = vunpack.c.h.s8.bf16 %v944
          %v1113 = vunpack.c.h.s8.bf16 %v945
          %v1114 = vunpack.c.h.s8.bf16 %v946
          %v1115 = vunpack.c.h.s8.bf16 %v947
          %v1116 = vunpack.c.h.s8.bf16 %v948
          %v1117 = vunpack.c.l.s8.bf16 %v949
          %v1118 = vunpack.c.l.s8.bf16 %v950
          %v1119 = vunpack.c.l.s8.bf16 %v951
          %v1120 = vunpack.c.l.s8.bf16 %v952
          %v1121 = vunpack.c.l.s8.bf16 %v953
          %v1122 = vunpack.c.l.s8.bf16 %v954
          %v1123 = vunpack.c.h.s8.bf16 %v949
          %v1124 = vunpack.c.h.s8.bf16 %v950
          %v1125 = vunpack.c.h.s8.bf16 %v951
          %v1126 = vunpack.c.h.s8.bf16 %v952
          %v1127 = vunpack.c.h.s8.bf16 %v953
          %v1128 = vunpack.c.h.s8.bf16 %v954
          %v1129 = vunpack.c.l.s8.bf16 %v955
          %v1130 = vunpack.c.l.s8.bf16 %v956
          %v1131 = vunpack.c.l.s8.bf16 %v957
          %v1132 = vunpack.c.l.s8.bf16 %v958
          %v1133 = vunpack.c.l.s8.bf16 %v959
          %v1134 = vunpack.c.l.s8.bf16 %v960
          %v1135 = vunpack.c.h.s8.bf16 %v955
          %v1136 = vunpack.c.h.s8.bf16 %v956
          %v1137 = vunpack.c.h.s8.bf16 %v957
          %v1138 = vunpack.c.h.s8.bf16 %v958
          %v1139 = vunpack.c.h.s8.bf16 %v959
          %v1140 = vunpack.c.h.s8.bf16 %v960
          %v1141 = vunpack.c.l.s8.bf16 %v961
          %v1142 = vunpack.c.l.s8.bf16 %v962
          %v1143 = vunpack.c.l.s8.bf16 %v963
          %v1144 = vunpack.c.l.s8.bf16 %v964
          %v1145 = vunpack.c.l.s8.bf16 %v965
          %v1146 = vunpack.c.l.s8.bf16 %v966
          %v1147 = vunpack.c.h.s8.bf16 %v961
          %v1148 = vunpack.c.h.s8.bf16 %v962
          %v1149 = vunpack.c.h.s8.bf16 %v963
          %v1150 = vunpack.c.h.s8.bf16 %v964
          %v1151 = vunpack.c.h.s8.bf16 %v965
          %v1152 = vunpack.c.h.s8.bf16 %v966
          %v1153 = vunpack.c.l.s8.bf16 %v967
          %v1154 = vunpack.c.l.s8.bf16 %v968
          %v1155 = vunpack.c.l.s8.bf16 %v969
          %v1156 = vunpack.c.l.s8.bf16 %v970
          %v1157 = vunpack.c.l.s8.bf16 %v971
          %v1158 = vunpack.c.l.s8.bf16 %v972
          %v1159 = vunpack.c.h.s8.bf16 %v967
          %v1160 = vunpack.c.h.s8.bf16 %v968
          %v1161 = vunpack.c.h.s8.bf16 %v969
          %v1162 = vunpack.c.h.s8.bf16 %v970
          %v1163 = vunpack.c.h.s8.bf16 %v971
          %v1164 = vunpack.c.h.s8.bf16 %v972
          %v1165 = vunpack.c.l.s8.bf16 %v973
          %v1166 = vunpack.c.l.s8.bf16 %v974
          %v1167 = vunpack.c.l.s8.bf16 %v975
          %v1168 = vunpack.c.l.s8.bf16 %v976
          %v1169 = vunpack.c.l.s8.bf16 %v977
          %v1170 = vunpack.c.l.s8.bf16 %v978
          %v1171 = vunpack.c.h.s8.bf16 %v973
          %v1172 = vunpack.c.h.s8.bf16 %v974
          %v1173 = vunpack.c.h.s8.bf16 %v975
          %v1174 = vunpack.c.h.s8.bf16 %v976
          %v1175 = vunpack.c.h.s8.bf16 %v977
          %v1176 = vunpack.c.h.s8.bf16 %v978
          %v1177 = vunpack.c.l.s8.bf16 %v979
          %v1178 = vunpack.c.l.s8.bf16 %v980
          %v1179 = vunpack.c.l.s8.bf16 %v981
          %v1180 = vunpack.c.l.s8.bf16 %v982
          %v1181 = vunpack.c.l.s8.bf16 %v983
          %v1182 = vunpack.c.l.s8.bf16 %v984
          %v1183 = vunpack.c.h.s8.bf16 %v979
          %v1184 = vunpack.c.h.s8.bf16 %v980
          %v1185 = vunpack.c.h.s8.bf16 %v981
          %v1186 = vunpack.c.h.s8.bf16 %v982
          %v1187 = vunpack.c.h.s8.bf16 %v983
          %v1188 = vunpack.c.h.s8.bf16 %v984
          %v1189 = vunpack.c.l.s8.bf16 %v985
          %v1190 = vunpack.c.l.s8.bf16 %v986
          %v1191 = vunpack.c.l.s8.bf16 %v987
          %v1192 = vunpack.c.l.s8.bf16 %v988
          %v1193 = vunpack.c.l.s8.bf16 %v989
          %v1194 = vunpack.c.l.s8.bf16 %v990
          %v1195 = vunpack.c.h.s8.bf16 %v985
          %v1196 = vunpack.c.h.s8.bf16 %v986
          %v1197 = vunpack.c.h.s8.bf16 %v987
          %v1198 = vunpack.c.h.s8.bf16 %v988
          %v1199 = vunpack.c.h.s8.bf16 %v989
          %v1200 = vunpack.c.h.s8.bf16 %v990
          %v1201 = vunpack.c.l.s8.bf16 %v991
          %v1202 = vunpack.c.l.s8.bf16 %v992
          %v1203 = vunpack.c.l.s8.bf16 %v993
          %v1204 = vunpack.c.l.s8.bf16 %v994
          %v1205 = vunpack.c.l.s8.bf16 %v995
          %v1206 = vunpack.c.l.s8.bf16 %v996
          %v1207 = vunpack.c.h.s8.bf16 %v991
          %v1208 = vunpack.c.h.s8.bf16 %v992
          %v1209 = vunpack.c.h.s8.bf16 %v993
          %v1210 = vunpack.c.h.s8.bf16 %v994
          %v1211 = vunpack.c.h.s8.bf16 %v995
          %v1212 = vunpack.c.h.s8.bf16 %v996
          %v1213 = vunpack.c.l.s8.bf16 %v997
          %v1214 = vunpack.c.l.s8.bf16 %v998
          %v1215 = vunpack.c.l.s8.bf16 %v999
          %v1216 = vunpack.c.l.s8.bf16 %v1000
          %v1217 = vunpack.c.l.s8.bf16 %v1001
          %v1218 = vunpack.c.l.s8.bf16 %v1002
          %v1219 = vunpack.c.h.s8.bf16 %v997
          %v1220 = vunpack.c.h.s8.bf16 %v998
          %v1221 = vunpack.c.h.s8.bf16 %v999
          %v1222 = vunpack.c.h.s8.bf16 %v1000
          %v1223 = vunpack.c.h.s8.bf16 %v1001
          %v1224 = vunpack.c.h.s8.bf16 %v1002
          %v1225 = vunpack.c.l.s8.bf16 %v1003
          %v1226 = vunpack.c.l.s8.bf16 %v1004
          %v1227 = vunpack.c.l.s8.bf16 %v1005
          %v1228 = vunpack.c.l.s8.bf16 %v1006
          %v1229 = vunpack.c.l.s8.bf16 %v1007
          %v1230 = vunpack.c.l.s8.bf16 %v1008
          %v1231 = vunpack.c.h.s8.bf16 %v1003
          %v1232 = vunpack.c.h.s8.bf16 %v1004
          %v1233 = vunpack.c.h.s8.bf16 %v1005
          %v1234 = vunpack.c.h.s8.bf16 %v1006
          %v1235 = vunpack.c.h.s8.bf16 %v1007
          %v1236 = vunpack.c.h.s8.bf16 %v1008
          %v1237 = vunpack.c.l.s8.bf16 %v1009
          %v1238 = vunpack.c.l.s8.bf16 %v1010
          %v1239 = vunpack.c.l.s8.bf16 %v1011
          %v1240 = vunpack.c.l.s8.bf16 %v1012
          %v1241 = vunpack.c.l.s8.bf16 %v1013
          %v1242 = vunpack.c.l.s8.bf16 %v1014
          %v1243 = vunpack.c.h.s8.bf16 %v1009
          %v1244 = vunpack.c.h.s8.bf16 %v1010
          %v1245 = vunpack.c.h.s8.bf16 %v1011
          %v1246 = vunpack.c.h.s8.bf16 %v1012
          %v1247 = vunpack.c.h.s8.bf16 %v1013
          %v1248 = vunpack.c.h.s8.bf16 %v1014
          %v1249 = vunpack.c.l.s8.bf16 %v1015
          %v1250 = vunpack.c.l.s8.bf16 %v1016
          %v1251 = vunpack.c.l.s8.bf16 %v1017
          %v1252 = vunpack.c.l.s8.bf16 %v1018
          %v1253 = vunpack.c.l.s8.bf16 %v1019
          %v1254 = vunpack.c.l.s8.bf16 %v1020
          %v1255 = vunpack.c.h.s8.bf16 %v1015
          %v1256 = vunpack.c.h.s8.bf16 %v1016
          %v1257 = vunpack.c.h.s8.bf16 %v1017
          %v1258 = vunpack.c.h.s8.bf16 %v1018
          %v1259 = vunpack.c.h.s8.bf16 %v1019
          %v1260 = vunpack.c.h.s8.bf16 %v1020
          %v1261 = vunpack.c.l.s8.bf16 %v1021
          %v1262 = vunpack.c.l.s8.bf16 %v1022
          %v1263 = vunpack.c.l.s8.bf16 %v1023
          %v1264 = vunpack.c.l.s8.bf16 %v1024
          %v1265 = vunpack.c.l.s8.bf16 %v1025
          %v1266 = vunpack.c.l.s8.bf16 %v1026
          %v1267 = vunpack.c.h.s8.bf16 %v1021
          %v1268 = vunpack.c.h.s8.bf16 %v1022
          %v1269 = vunpack.c.h.s8.bf16 %v1023
          %v1270 = vunpack.c.h.s8.bf16 %v1024
          %v1271 = vunpack.c.h.s8.bf16 %v1025
          %v1272 = vunpack.c.h.s8.bf16 %v1026
          %v1273 = vunpack.c.l.s8.bf16 %v1027
          %v1274 = vunpack.c.l.s8.bf16 %v1028
          %v1275 = vunpack.c.l.s8.bf16 %v1029
          %v1276 = vunpack.c.l.s8.bf16 %v1030
          %v1277 = vunpack.c.l.s8.bf16 %v1031
          %v1278 = vunpack.c.l.s8.bf16 %v1032
          %v1279 = vunpack.c.h.s8.bf16 %v1027
          %v1280 = vunpack.c.h.s8.bf16 %v1028
          %v1281 = vunpack.c.h.s8.bf16 %v1029
          %v1282 = vunpack.c.h.s8.bf16 %v1030
          %v1283 = vunpack.c.h.s8.bf16 %v1031
          %v1284 = vunpack.c.h.s8.bf16 %v1032
          %v1285 = vunpack.c.l.s8.bf16 %v1033
          %v1286 = vunpack.c.l.s8.bf16 %v1034
          %v1287 = vunpack.c.l.s8.bf16 %v1035
          %v1288 = vunpack.c.l.s8.bf16 %v1036
          %v1289 = vunpack.c.l.s8.bf16 %v1037
          %v1290 = vunpack.c.l.s8.bf16 %v1038
          %v1291 = vunpack.c.h.s8.bf16 %v1033
          %v1292 = vunpack.c.h.s8.bf16 %v1034
          %v1293 = vunpack.c.h.s8.bf16 %v1035
          %v1294 = vunpack.c.h.s8.bf16 %v1036
          %v1295 = vunpack.c.h.s8.bf16 %v1037
          %v1296 = vunpack.c.h.s8.bf16 %v1038
          %v1297 = vunpack.c.l.s8.bf16 %v1039
          %v1298 = vunpack.c.l.s8.bf16 %v1040
          %v1299 = vunpack.c.l.s8.bf16 %v1041
          %v1300 = vunpack.c.l.s8.bf16 %v1042
          %v1301 = vunpack.c.l.s8.bf16 %v1043
          %v1302 = vunpack.c.l.s8.bf16 %v1044
          %v1303 = vunpack.c.h.s8.bf16 %v1039
          %v1304 = vunpack.c.h.s8.bf16 %v1040
          %v1305 = vunpack.c.h.s8.bf16 %v1041
          %v1306 = vunpack.c.h.s8.bf16 %v1042
          %v1307 = vunpack.c.h.s8.bf16 %v1043
          %v1308 = vunpack.c.h.s8.bf16 %v1044
          %v1309 = vunpack.c.l.s8.bf16 %v1045
          %v1310 = vunpack.c.l.s8.bf16 %v1046
          %v1311 = vunpack.c.l.s8.bf16 %v1047
          %v1312 = vunpack.c.l.s8.bf16 %v1048
          %v1313 = vunpack.c.l.s8.bf16 %v1049
          %v1314 = vunpack.c.l.s8.bf16 %v1050
          %v1315 = vunpack.c.h.s8.bf16 %v1045
          %v1316 = vunpack.c.h.s8.bf16 %v1046
          %v1317 = vunpack.c.h.s8.bf16 %v1047
          %v1318 = vunpack.c.h.s8.bf16 %v1048
          %v1319 = vunpack.c.h.s8.bf16 %v1049
          %v1320 = vunpack.c.h.s8.bf16 %v1050
          %v1321 = vunpack.c.l.s8.bf16 %v1051
          %v1322 = vunpack.c.l.s8.bf16 %v1052
          %v1323 = vunpack.c.l.s8.bf16 %v1053
          %v1324 = vunpack.c.l.s8.bf16 %v1054
          %v1325 = vunpack.c.l.s8.bf16 %v1055
          %v1326 = vunpack.c.l.s8.bf16 %v1056
          %v1327 = vunpack.c.h.s8.bf16 %v1051
          %v1328 = vunpack.c.h.s8.bf16 %v1052
          %v1329 = vunpack.c.h.s8.bf16 %v1053
          %v1330 = vunpack.c.h.s8.bf16 %v1054
          %v1331 = vunpack.c.h.s8.bf16 %v1055
          %v1332 = vunpack.c.h.s8.bf16 %v1056
          %v1333 = vunpack.c.l.s8.bf16 %v1057
          %v1334 = vunpack.c.l.s8.bf16 %v1058
          %v1335 = vunpack.c.l.s8.bf16 %v1059
          %v1336 = vunpack.c.l.s8.bf16 %v1060
          %v1337 = vunpack.c.l.s8.bf16 %v1061
          %v1338 = vunpack.c.l.s8.bf16 %v1062
          %v1339 = vunpack.c.h.s8.bf16 %v1057
          %v1340 = vunpack.c.h.s8.bf16 %v1058
          %v1341 = vunpack.c.h.s8.bf16 %v1059
          %v1342 = vunpack.c.h.s8.bf16 %v1060
          %v1343 = vunpack.c.h.s8.bf16 %v1061
          %v1344 = vunpack.c.h.s8.bf16 %v1062
          %v1345 = vunpack.c.l.s8.bf16 %v1063
          %v1346 = vunpack.c.l.s8.bf16 %v1064
          %v1347 = vunpack.c.l.s8.bf16 %v1065
          %v1348 = vunpack.c.l.s8.bf16 %v1066
          %v1349 = vunpack.c.l.s8.bf16 %v1067
          %v1350 = vunpack.c.l.s8.bf16 %v1068
          %v1351 = vunpack.c.h.s8.bf16 %v1063
          %v1352 = vunpack.c.h.s8.bf16 %v1064
          %v1353 = vunpack.c.h.s8.bf16 %v1065
          %v1354 = vunpack.c.h.s8.bf16 %v1066
          %v1355 = vunpack.c.h.s8.bf16 %v1067
          %v1356 = vunpack.c.h.s8.bf16 %v1068
          %1357 = vmatprep.subr.bf16.mxu0 %v1112
          %1358 = vmatpush1.bf16.msra.mxu0 %v1111
          %1359 = vmatprep.subr.bf16.mxu0 %v1106
          %1360 = vmatpush1.bf16.msra.mxu0 %v1105
          %1361 = vmatprep.subr.bf16.mxu0 %v1100
          %1362 = vmatpush1.bf16.msra.mxu0 %v1099
          %1363 = vmatprep.subr.bf16.mxu0 %v1094
          %1364 = vmatpush1.bf16.msra.mxu0 %v1093
          %1365 = vmatprep.subr.bf16.mxu0 %v1088
          %1366 = vmatpush1.bf16.msra.mxu0 %v1087
          %1367 = vmatprep.subr.bf16.mxu0 %v1082
          %1368 = vmatpush1.bf16.msra.mxu0 %v1081
          %1369 = vmatprep.subr.bf16.mxu0 %v1076
          %1370 = vmatpush1.bf16.msra.mxu0 %v1075
          %1371 = vmatprep.subr.bf16.mxu0 %v1070
          %1372 = vmatpush1.bf16.msra.mxu0 %v1069
          %1373 = vmatprep.subr.bf16.mxu0 %v1160
          %1374 = vmatpush2.bf16.msra.mxu0 %v1159
          %1375 = vmatprep.subr.bf16.mxu0 %v1154
          %1376 = vmatpush2.bf16.msra.mxu0 %v1153
          %1377 = vmatprep.subr.bf16.mxu0 %v1148
          %1378 = vmatpush2.bf16.msra.mxu0 %v1147
          %1379 = vmatprep.subr.bf16.mxu0 %v1142
          %1380 = vmatpush2.bf16.msra.mxu0 %v1141
          %1381 = vmatprep.subr.bf16.mxu0 %v1136
          %1382 = vmatpush2.bf16.msra.mxu0 %v1135
          %1383 = vmatprep.subr.bf16.mxu0 %v1130
          %1384 = vmatpush2.bf16.msra.mxu0 %v1129
          %1385 = vmatprep.subr.bf16.mxu0 %v1124
          %1386 = vmatpush2.bf16.msra.mxu0 %v1123
          %1387 = vmatprep.subr.bf16.mxu0 %v1118
          %1388 = vmatpush2.bf16.msra.mxu0 %v1117
          %1389 = vmatprep.mubr.bf16.mxu0 %v920
          %1390 = vmatmul.mubr.bf16.gmra.mxu0 %v919
          %v1391 = vpop.f32.mrf.mxu0
          %v1392 = vadd.f32 0.0, %v1391
          %v1393 = vpop.f32.mrf.mxu0
          %v1394 = vadd.f32 0.0, %v1393
          %v1395 = vpop.f32.mrf.mxu0
          %v1396 = vpop.f32.mrf.mxu0
          %1397 = vdwg.mxu0
          %1398 = vmatprep.subr.bf16.mxu0 %v1208
          %1399 = vmatpush1.bf16.msra.mxu0 %v1207
          %1400 = vmatprep.subr.bf16.mxu0 %v1202
          %1401 = vmatpush1.bf16.msra.mxu0 %v1201
          %1402 = vmatprep.subr.bf16.mxu0 %v1196
          %1403 = vmatpush1.bf16.msra.mxu0 %v1195
          %1404 = vmatprep.subr.bf16.mxu0 %v1190
          %1405 = vmatpush1.bf16.msra.mxu0 %v1189
          %1406 = vmatprep.subr.bf16.mxu0 %v1184
          %1407 = vmatpush1.bf16.msra.mxu0 %v1183
          %1408 = vmatprep.subr.bf16.mxu0 %v1178
          %1409 = vmatpush1.bf16.msra.mxu0 %v1177
          %1410 = vmatprep.subr.bf16.mxu0 %v1172
          %1411 = vmatpush1.bf16.msra.mxu0 %v1171
          %1412 = vmatprep.subr.bf16.mxu0 %v1166
          %1413 = vmatpush1.bf16.msra.mxu0 %v1165
          %1414 = vmatprep.subr.bf16.mxu0 %v1256
          %1415 = vmatpush2.bf16.msra.mxu0 %v1255
          %1416 = vmatprep.subr.bf16.mxu0 %v1250
          %1417 = vmatpush2.bf16.msra.mxu0 %v1249
          %1418 = vmatprep.subr.bf16.mxu0 %v1244
          %1419 = vmatpush2.bf16.msra.mxu0 %v1243
          %1420 = vmatprep.subr.bf16.mxu0 %v1238
          %1421 = vmatpush2.bf16.msra.mxu0 %v1237
          %1422 = vmatprep.subr.bf16.mxu0 %v1232
          %1423 = vmatpush2.bf16.msra.mxu0 %v1231
          %1424 = vmatprep.subr.bf16.mxu0 %v1226
          %1425 = vmatpush2.bf16.msra.mxu0 %v1225
          %1426 = vmatprep.subr.bf16.mxu0 %v1220
          %1427 = vmatpush2.bf16.msra.mxu0 %v1219
          %1428 = vmatprep.subr.bf16.mxu0 %v1214
          %1429 = vmatpush2.bf16.msra.mxu0 %v1213
          %1430 = vmatprep.mubr.bf16.mxu0 %v922
          %1431 = vmatmul.mubr.bf16.gmra.mxu0 %v921
          %v1432 = vpop.f32.mrf.mxu0
          %v1433 = vadd.f32 %v1392, %v1432
          %v1434 = vpop.f32.mrf.mxu0
          %v1435 = vadd.f32 %v1394, %v1434
          %v1436 = vpop.f32.mrf.mxu0
          %v1437 = vpop.f32.mrf.mxu0
          %1438 = vdwg.mxu0
          %1439 = vmatprep.subr.bf16.mxu0 %v1304
          %1440 = vmatpush1.bf16.msra.mxu0 %v1303
          %1441 = vmatprep.subr.bf16.mxu0 %v1298
          %1442 = vmatpush1.bf16.msra.mxu0 %v1297
          %1443 = vmatprep.subr.bf16.mxu0 %v1292
          %1444 = vmatpush1.bf16.msra.mxu0 %v1291
          %1445 = vmatprep.subr.bf16.mxu0 %v1286
          %1446 = vmatpush1.bf16.msra.mxu0 %v1285
          %1447 = vmatprep.subr.bf16.mxu0 %v1280
          %1448 = vmatpush1.bf16.msra.mxu0 %v1279
          %1449 = vmatprep.subr.bf16.mxu0 %v1274
          %1450 = vmatpush1.bf16.msra.mxu0 %v1273
          %1451 = vmatprep.subr.bf16.mxu0 %v1268
          %1452 = vmatpush1.bf16.msra.mxu0 %v1267
          %1453 = vmatprep.subr.bf16.mxu0 %v1262
          %1454 = vmatpush1.bf16.msra.mxu0 %v1261
          %1455 = vmatprep.subr.bf16.mxu0 %v1352
          %1456 = vmatpush2.bf16.msra.mxu0 %v1351
          %1457 = vmatprep.subr.bf16.mxu0 %v1346
          %1458 = vmatpush2.bf16.msra.mxu0 %v1345
          %1459 = vmatprep.subr.bf16.mxu0 %v1340
          %1460 = vmatpush2.bf16.msra.mxu0 %v1339
          %1461 = vmatprep.subr.bf16.mxu0 %v1334
          %1462 = vmatpush2.bf16.msra.mxu0 %v1333
          %1463 = vmatprep.subr.bf16.mxu0 %v1328
          %1464 = vmatpush2.bf16.msra.mxu0 %v1327
          %1465 = vmatprep.subr.bf16.mxu0 %v1322
          %1466 = vmatpush2.bf16.msra.mxu0 %v1321
          %1467 = vmatprep.subr.bf16.mxu0 %v1316
          %1468 = vmatpush2.bf16.msra.mxu0 %v1315
          %1469 = vmatprep.subr.bf16.mxu0 %v1310
          %1470 = vmatpush2.bf16.msra.mxu0 %v1309
          %1471 = vmatprep.mubr.bf16.mxu0 %v924
          %1472 = vmatmul.mubr.bf16.gmra.mxu0 %v923
          %v1473 = vpop.f32.mrf.mxu0
          %v1474 = vadd.f32 %v1433, %v1473
          %v1475 = vpop.f32.mrf.mxu0
          %v1476 = vadd.f32 %v1435, %v1475
          %v1477 = vpop.f32.mrf.mxu0
          %v1478 = vpop.f32.mrf.mxu0
          %1479 = vdwg.mxu0
          %1480 = vmatprep.subr.bf16.mxu0 %v1114
          %1481 = vmatpush1.bf16.msra.mxu0 %v1113
          %1482 = vmatprep.subr.bf16.mxu0 %v1108
          %1483 = vmatpush1.bf16.msra.mxu0 %v1107
          %1484 = vmatprep.subr.bf16.mxu0 %v1102
          %1485 = vmatpush1.bf16.msra.mxu0 %v1101
          %1486 = vmatprep.subr.bf16.mxu0 %v1096
          %1487 = vmatpush1.bf16.msra.mxu0 %v1095
          %1488 = vmatprep.subr.bf16.mxu0 %v1090
          %1489 = vmatpush1.bf16.msra.mxu0 %v1089
          %1490 = vmatprep.subr.bf16.mxu0 %v1084
          %1491 = vmatpush1.bf16.msra.mxu0 %v1083
          %1492 = vmatprep.subr.bf16.mxu0 %v1078
          %1493 = vmatpush1.bf16.msra.mxu0 %v1077
          %1494 = vmatprep.subr.bf16.mxu0 %v1072
          %1495 = vmatpush1.bf16.msra.mxu0 %v1071
          %1496 = vmatprep.subr.bf16.mxu0 %v1162
          %1497 = vmatpush2.bf16.msra.mxu0 %v1161
          %1498 = vmatprep.subr.bf16.mxu0 %v1156
          %1499 = vmatpush2.bf16.msra.mxu0 %v1155
          %1500 = vmatprep.subr.bf16.mxu0 %v1150
          %1501 = vmatpush2.bf16.msra.mxu0 %v1149
          %1502 = vmatprep.subr.bf16.mxu0 %v1144
          %1503 = vmatpush2.bf16.msra.mxu0 %v1143
          %1504 = vmatprep.subr.bf16.mxu0 %v1138
          %1505 = vmatpush2.bf16.msra.mxu0 %v1137
          %1506 = vmatprep.subr.bf16.mxu0 %v1132
          %1507 = vmatpush2.bf16.msra.mxu0 %v1131
          %1508 = vmatprep.subr.bf16.mxu0 %v1126
          %1509 = vmatpush2.bf16.msra.mxu0 %v1125
          %1510 = vmatprep.subr.bf16.mxu0 %v1120
          %1511 = vmatpush2.bf16.msra.mxu0 %v1119
          %1512 = vmatprep.mubr.bf16.mxu0 %v920
          %1513 = vmatmul.mubr.bf16.gmra.mxu0 %v919
          %v1514 = vpop.f32.mrf.mxu0
          %v1515 = vadd.f32 0.0, %v1514
          %v1516 = vpop.f32.mrf.mxu0
          %v1517 = vadd.f32 0.0, %v1516
          %v1518 = vpop.f32.mrf.mxu0
          %v1519 = vpop.f32.mrf.mxu0
          %1520 = vdwg.mxu0
          %1521 = vmatprep.subr.bf16.mxu0 %v1210
          %1522 = vmatpush1.bf16.msra.mxu0 %v1209
          %1523 = vmatprep.subr.bf16.mxu0 %v1204
          %1524 = vmatpush1.bf16.msra.mxu0 %v1203
          %1525 = vmatprep.subr.bf16.mxu0 %v1198
          %1526 = vmatpush1.bf16.msra.mxu0 %v1197
          %1527 = vmatprep.subr.bf16.mxu0 %v1192
          %1528 = vmatpush1.bf16.msra.mxu0 %v1191
          %1529 = vmatprep.subr.bf16.mxu0 %v1186
          %1530 = vmatpush1.bf16.msra.mxu0 %v1185
          %1531 = vmatprep.subr.bf16.mxu0 %v1180
          %1532 = vmatpush1.bf16.msra.mxu0 %v1179
          %1533 = vmatprep.subr.bf16.mxu0 %v1174
          %1534 = vmatpush1.bf16.msra.mxu0 %v1173
          %1535 = vmatprep.subr.bf16.mxu0 %v1168
          %1536 = vmatpush1.bf16.msra.mxu0 %v1167
          %1537 = vmatprep.subr.bf16.mxu0 %v1258
          %1538 = vmatpush2.bf16.msra.mxu0 %v1257
          %1539 = vmatprep.subr.bf16.mxu0 %v1252
          %1540 = vmatpush2.bf16.msra.mxu0 %v1251
          %1541 = vmatprep.subr.bf16.mxu0 %v1246
          %1542 = vmatpush2.bf16.msra.mxu0 %v1245
          %1543 = vmatprep.subr.bf16.mxu0 %v1240
          %1544 = vmatpush2.bf16.msra.mxu0 %v1239
          %1545 = vmatprep.subr.bf16.mxu0 %v1234
          %1546 = vmatpush2.bf16.msra.mxu0 %v1233
          %1547 = vmatprep.subr.bf16.mxu0 %v1228
          %1548 = vmatpush2.bf16.msra.mxu0 %v1227
          %1549 = vmatprep.subr.bf16.mxu0 %v1222
          %1550 = vmatpush2.bf16.msra.mxu0 %v1221
          %1551 = vmatprep.subr.bf16.mxu0 %v1216
          %1552 = vmatpush2.bf16.msra.mxu0 %v1215
          %1553 = vmatprep.mubr.bf16.mxu0 %v922
          %1554 = vmatmul.mubr.bf16.gmra.mxu0 %v921
          %v1555 = vpop.f32.mrf.mxu0
          %v1556 = vadd.f32 %v1515, %v1555
          %v1557 = vpop.f32.mrf.mxu0
          %v1558 = vadd.f32 %v1517, %v1557
          %v1559 = vpop.f32.mrf.mxu0
          %v1560 = vpop.f32.mrf.mxu0
          %1561 = vdwg.mxu0
          %1562 = vmatprep.subr.bf16.mxu0 %v1306
          %1563 = vmatpush1.bf16.msra.mxu0 %v1305
          %1564 = vmatprep.subr.bf16.mxu0 %v1300
          %1565 = vmatpush1.bf16.msra.mxu0 %v1299
          %1566 = vmatprep.subr.bf16.mxu0 %v1294
          %1567 = vmatpush1.bf16.msra.mxu0 %v1293
          %1568 = vmatprep.subr.bf16.mxu0 %v1288
          %1569 = vmatpush1.bf16.msra.mxu0 %v1287
          %1570 = vmatprep.subr.bf16.mxu0 %v1282
          %1571 = vmatpush1.bf16.msra.mxu0 %v1281
          %1572 = vmatprep.subr.bf16.mxu0 %v1276
          %1573 = vmatpush1.bf16.msra.mxu0 %v1275
          %1574 = vmatprep.subr.bf16.mxu0 %v1270
          %1575 = vmatpush1.bf16.msra.mxu0 %v1269
          %1576 = vmatprep.subr.bf16.mxu0 %v1264
          %1577 = vmatpush1.bf16.msra.mxu0 %v1263
          %1578 = vmatprep.subr.bf16.mxu0 %v1354
          %1579 = vmatpush2.bf16.msra.mxu0 %v1353
          %1580 = vmatprep.subr.bf16.mxu0 %v1348
          %1581 = vmatpush2.bf16.msra.mxu0 %v1347
          %1582 = vmatprep.subr.bf16.mxu0 %v1342
          %1583 = vmatpush2.bf16.msra.mxu0 %v1341
          %1584 = vmatprep.subr.bf16.mxu0 %v1336
          %1585 = vmatpush2.bf16.msra.mxu0 %v1335
          %1586 = vmatprep.subr.bf16.mxu0 %v1330
          %1587 = vmatpush2.bf16.msra.mxu0 %v1329
          %1588 = vmatprep.subr.bf16.mxu0 %v1324
          %1589 = vmatpush2.bf16.msra.mxu0 %v1323
          %1590 = vmatprep.subr.bf16.mxu0 %v1318
          %1591 = vmatpush2.bf16.msra.mxu0 %v1317
          %1592 = vmatprep.subr.bf16.mxu0 %v1312
          %1593 = vmatpush2.bf16.msra.mxu0 %v1311
          %1594 = vmatprep.mubr.bf16.mxu0 %v924
          %1595 = vmatmul.mubr.bf16.gmra.mxu0 %v923
          %v1596 = vpop.f32.mrf.mxu0
          %v1597 = vadd.f32 %v1556, %v1596
          %v1598 = vpop.f32.mrf.mxu0
          %v1599 = vadd.f32 %v1558, %v1598
          %v1600 = vpop.f32.mrf.mxu0
          %v1601 = vpop.f32.mrf.mxu0
          %1602 = vdwg.mxu0
          %1603 = vmatprep.subr.bf16.mxu0 %v1116
          %1604 = vmatpush1.bf16.msra.mxu0 %v1115
          %1605 = vmatprep.subr.bf16.mxu0 %v1110
          %1606 = vmatpush1.bf16.msra.mxu0 %v1109
          %1607 = vmatprep.subr.bf16.mxu0 %v1104
          %1608 = vmatpush1.bf16.msra.mxu0 %v1103
          %1609 = vmatprep.subr.bf16.mxu0 %v1098
          %1610 = vmatpush1.bf16.msra.mxu0 %v1097
          %1611 = vmatprep.subr.bf16.mxu0 %v1092
          %1612 = vmatpush1.bf16.msra.mxu0 %v1091
          %1613 = vmatprep.subr.bf16.mxu0 %v1086
          %1614 = vmatpush1.bf16.msra.mxu0 %v1085
          %1615 = vmatprep.subr.bf16.mxu0 %v1080
          %1616 = vmatpush1.bf16.msra.mxu0 %v1079
          %1617 = vmatprep.subr.bf16.mxu0 %v1074
          %1618 = vmatpush1.bf16.msra.mxu0 %v1073
          %1619 = vmatprep.subr.bf16.mxu0 %v1164
          %1620 = vmatpush2.bf16.msra.mxu0 %v1163
          %1621 = vmatprep.subr.bf16.mxu0 %v1158
          %1622 = vmatpush2.bf16.msra.mxu0 %v1157
          %1623 = vmatprep.subr.bf16.mxu0 %v1152
          %1624 = vmatpush2.bf16.msra.mxu0 %v1151
          %1625 = vmatprep.subr.bf16.mxu0 %v1146
          %1626 = vmatpush2.bf16.msra.mxu0 %v1145
          %1627 = vmatprep.subr.bf16.mxu0 %v1140
          %1628 = vmatpush2.bf16.msra.mxu0 %v1139
          %1629 = vmatprep.subr.bf16.mxu0 %v1134
          %1630 = vmatpush2.bf16.msra.mxu0 %v1133
          %1631 = vmatprep.subr.bf16.mxu0 %v1128
          %1632 = vmatpush2.bf16.msra.mxu0 %v1127
          %1633 = vmatprep.subr.bf16.mxu0 %v1122
          %1634 = vmatpush2.bf16.msra.mxu0 %v1121
          %1635 = vmatprep.mubr.bf16.mxu0 %v920
          %1636 = vmatmul.mubr.bf16.gmra.mxu0 %v919
          %v1637 = vpop.f32.mrf.mxu0
          %v1638 = vadd.f32 0.0, %v1637
          %v1639 = vpop.f32.mrf.mxu0
          %v1640 = vadd.f32 0.0, %v1639
          %v1641 = vpop.f32.mrf.mxu0
          %v1642 = vpop.f32.mrf.mxu0
          %1643 = vdwg.mxu0
          %1644 = vmatprep.subr.bf16.mxu0 %v1212
          %1645 = vmatpush1.bf16.msra.mxu0 %v1211
          %1646 = vmatprep.subr.bf16.mxu0 %v1206
          %1647 = vmatpush1.bf16.msra.mxu0 %v1205
          %1648 = vmatprep.subr.bf16.mxu0 %v1200
          %1649 = vmatpush1.bf16.msra.mxu0 %v1199
          %1650 = vmatprep.subr.bf16.mxu0 %v1194
          %1651 = vmatpush1.bf16.msra.mxu0 %v1193
          %1652 = vmatprep.subr.bf16.mxu0 %v1188
          %1653 = vmatpush1.bf16.msra.mxu0 %v1187
          %1654 = vmatprep.subr.bf16.mxu0 %v1182
          %1655 = vmatpush1.bf16.msra.mxu0 %v1181
          %1656 = vmatprep.subr.bf16.mxu0 %v1176
          %1657 = vmatpush1.bf16.msra.mxu0 %v1175
          %1658 = vmatprep.subr.bf16.mxu0 %v1170
          %1659 = vmatpush1.bf16.msra.mxu0 %v1169
          %1660 = vmatprep.subr.bf16.mxu0 %v1260
          %1661 = vmatpush2.bf16.msra.mxu0 %v1259
          %1662 = vmatprep.subr.bf16.mxu0 %v1254
          %1663 = vmatpush2.bf16.msra.mxu0 %v1253
          %1664 = vmatprep.subr.bf16.mxu0 %v1248
          %1665 = vmatpush2.bf16.msra.mxu0 %v1247
          %1666 = vmatprep.subr.bf16.mxu0 %v1242
          %1667 = vmatpush2.bf16.msra.mxu0 %v1241
          %1668 = vmatprep.subr.bf16.mxu0 %v1236
          %1669 = vmatpush2.bf16.msra.mxu0 %v1235
          %1670 = vmatprep.subr.bf16.mxu0 %v1230
          %1671 = vmatpush2.bf16.msra.mxu0 %v1229
          %1672 = vmatprep.subr.bf16.mxu0 %v1224
          %1673 = vmatpush2.bf16.msra.mxu0 %v1223
          %1674 = vmatprep.subr.bf16.mxu0 %v1218
          %1675 = vmatpush2.bf16.msra.mxu0 %v1217
          %1676 = vmatprep.mubr.bf16.mxu0 %v922
          %1677 = vmatmul.mubr.bf16.gmra.mxu0 %v921
          %v1678 = vpop.f32.mrf.mxu0
          %v1679 = vadd.f32 %v1638, %v1678
          %v1680 = vpop.f32.mrf.mxu0
          %v1681 = vadd.f32 %v1640, %v1680
          %v1682 = vpop.f32.mrf.mxu0
          %v1683 = vpop.f32.mrf.mxu0
          %1684 = vdwg.mxu0
          %1685 = vmatprep.subr.bf16.mxu0 %v1308
          %1686 = vmatpush1.bf16.msra.mxu0 %v1307
          %1687 = vmatprep.subr.bf16.mxu0 %v1302
          %1688 = vmatpush1.bf16.msra.mxu0 %v1301
          %1689 = vmatprep.subr.bf16.mxu0 %v1296
          %1690 = vmatpush1.bf16.msra.mxu0 %v1295
          %1691 = vmatprep.subr.bf16.mxu0 %v1290
          %1692 = vmatpush1.bf16.msra.mxu0 %v1289
          %1693 = vmatprep.subr.bf16.mxu0 %v1284
          %1694 = vmatpush1.bf16.msra.mxu0 %v1283
          %1695 = vmatprep.subr.bf16.mxu0 %v1278
          %1696 = vmatpush1.bf16.msra.mxu0 %v1277
          %1697 = vmatprep.subr.bf16.mxu0 %v1272
          %1698 = vmatpush1.bf16.msra.mxu0 %v1271
          %1699 = vmatprep.subr.bf16.mxu0 %v1266
          %1700 = vmatpush1.bf16.msra.mxu0 %v1265
          %1701 = vmatprep.subr.bf16.mxu0 %v1356
          %1702 = vmatpush2.bf16.msra.mxu0 %v1355
          %1703 = vmatprep.subr.bf16.mxu0 %v1350
          %1704 = vmatpush2.bf16.msra.mxu0 %v1349
          %1705 = vmatprep.subr.bf16.mxu0 %v1344
          %1706 = vmatpush2.bf16.msra.mxu0 %v1343
          %1707 = vmatprep.subr.bf16.mxu0 %v1338
          %1708 = vmatpush2.bf16.msra.mxu0 %v1337
          %1709 = vmatprep.subr.bf16.mxu0 %v1332
          %1710 = vmatpush2.bf16.msra.mxu0 %v1331
          %1711 = vmatprep.subr.bf16.mxu0 %v1326
          %1712 = vmatpush2.bf16.msra.mxu0 %v1325
          %1713 = vmatprep.subr.bf16.mxu0 %v1320
          %1714 = vmatpush2.bf16.msra.mxu0 %v1319
          %1715 = vmatprep.subr.bf16.mxu0 %v1314
          %1716 = vmatpush2.bf16.msra.mxu0 %v1313
          %1717 = vmatprep.mubr.bf16.mxu0 %v924
          %1718 = vmatmul.mubr.bf16.gmra.mxu0 %v923
          %v1719 = vpop.f32.mrf.mxu0
          %v1720 = vadd.f32 %v1679, %v1719
          %v1721 = vpop.f32.mrf.mxu0
          %v1722 = vadd.f32 %v1681, %v1721
          %v1723 = vpop.f32.mrf.mxu0
          %v1724 = vpop.f32.mrf.mxu0
          %1725 = vdwg.mxu0
          %v1727 = vlaneseq
          %v1728 = vshrl.u32 %v1727, 7
          %v1729 = vsub.s32 0, %v1728
          %v1730 = vrot.slane %v916, %v1729
          %v1731 = vlaneseq
          %v1732 = vshrl.u32 %v1731, 7
          %v1733 = vsub.s32 1, %v1732
          %v1734 = vrot.slane %v916, %v1733
          %v1735 = vlaneseq
          %v1736 = vshrl.u32 %v1735, 7
          %v1737 = vsub.s32 2, %v1736
          %v1738 = vrot.slane %v916, %v1737
          %v1739 = vlaneseq
          %v1740 = vshrl.u32 %v1739, 7
          %v1741 = vsub.s32 3, %v1740
          %v1742 = vrot.slane %v916, %v1741
          %v1743 = vlaneseq
          %v1744 = vshrl.u32 %v1743, 7
          %v1745 = vsub.s32 4, %v1744
          %v1746 = vrot.slane %v916, %v1745
          %v1747 = vlaneseq
          %v1748 = vshrl.u32 %v1747, 7
          %v1749 = vsub.s32 5, %v1748
          %v1750 = vrot.slane %v916, %v1749
          %v1757 = vmul.f32 %v1474, %v1730
          %v1758 = vmul.f32 %v1476, %v1734
          %v1759 = vmul.f32 %v1597, %v1738
          %v1760 = vmul.f32 %v1599, %v1742
          %v1761 = vmul.f32 %v1720, %v1746
          %v1762 = vmul.f32 %v1722, %v1750
          %v1764 = vlaneseq
          %v1765 = vshrl.u32 %v1764, 7
          %v1766 = vsub.s32 0, %v1765
          %v1767 = vrot.slane %v918, %v1766
          %v1768 = vlaneseq
          %v1769 = vshrl.u32 %v1768, 7
          %v1770 = vsub.s32 1, %v1769
          %v1771 = vrot.slane %v918, %v1770
          %v1772 = vlaneseq
          %v1773 = vshrl.u32 %v1772, 7
          %v1774 = vsub.s32 2, %v1773
          %v1775 = vrot.slane %v918, %v1774
          %v1776 = vlaneseq
          %v1777 = vshrl.u32 %v1776, 7
          %v1778 = vsub.s32 3, %v1777
          %v1779 = vrot.slane %v918, %v1778
          %v1780 = vlaneseq
          %v1781 = vshrl.u32 %v1780, 7
          %v1782 = vsub.s32 4, %v1781
          %v1783 = vrot.slane %v918, %v1782
          %v1784 = vlaneseq
          %v1785 = vshrl.u32 %v1784, 7
          %v1786 = vsub.s32 5, %v1785
          %v1787 = vrot.slane %v918, %v1786
          %v1794 = vadd.f32 %v1757, %v1767
          %v1795 = vadd.f32 %v1758, %v1771
          %v1796 = vadd.f32 %v1759, %v1775
          %v1797 = vadd.f32 %v1760, %v1779
          %v1798 = vadd.f32 %v1761, %v1783
          %v1799 = vadd.f32 %v1762, %v1787
          %v1800 = vmul.f32 %v1794, %v1794
          %v1801 = vmul.f32 %v1795, %v1795
          %v1802 = vmul.f32 %v1796, %v1796
          %v1803 = vmul.f32 %v1797, %v1797
          %v1804 = vmul.f32 %v1798, %v1798
          %v1805 = vmul.f32 %v1799, %v1799
          %v1806 = vadd.f32 %v1800, %v1801
          %v1807 = vadd.f32 %v1806, %v1802
          %v1808 = vadd.f32 %v1807, %v1803
          %v1809 = vadd.f32 %v1808, %v1804
          %v1810 = vadd.f32 %v1809, %v1805
          %1811 = vadd.xlane.f32.xlu0 %v1810
          %v1812 = vpop.xlane.xlu0 %1811
          %v1813 = vrsqrt.pop %v1812
          %v1814 = vmul.f32 %v1812, %v1813
          %vm1815 = vcmp.eq.f32.partialorder %v1812, inf
          %v1816 = vsel %vm1815, %v1812, %v1814
          %vm1817 = vcmp.eq.f32.partialorder %v1812, 0.0
          %v1818 = vand.u32 %v1812, 2147483648
          %v1819 = vsel %vm1817, %v1818, %v1816
          %v1820 = vmax.f32 %v1819, 1e-12
          %v1821 = vrcp.pop %v1820
          %v1822 = vmul.f32 %v1794, %v1821
          %v1823 = vmul.f32 %v1795, %v1821
          %v1824 = vmul.f32 %v1796, %v1821
          %v1825 = vmul.f32 %v1797, %v1821
          %v1826 = vmul.f32 %v1798, %v1821
          %v1827 = vmul.f32 %v1799, %v1821
          %1828 = vst [vmem:[#allocation2] sm:$0xff] %v1822
          %1829 = vst [vmem:[#allocation2 + $0x8] sm:$0xff] %v1823
          %1830 = vst [vmem:[#allocation2 + $0x10] sm:$0xff] %v1824
          %1831 = vst [vmem:[#allocation2 + $0x18] sm:$0xff] %v1825
          %1832 = vst [vmem:[#allocation2 + $0x20] sm:$0xff] %v1826
          %1833 = vst [vmem:[#allocation2 + $0x28] sm:$0xff] %v1827
          %v1834 = vld [vmem:[%s1] sm:$0xff]
          %v1835 = vld [vmem:[%s1 + $0x8] sm:$0xff]
          %v1836 = vld [vmem:[%s1 + $0x10] sm:$0xff]
          %v1837 = vld [vmem:[%s1 + $0x18] sm:$0xff]
          %v1838 = vld [vmem:[%s1 + $0x20] sm:$0xff]
          %v1839 = vld [vmem:[%s1 + $0x28] sm:$0xff]
          %v1840 = vld [vmem:[%s5] ss:$2 sm:$0x3f]
          %s1841 = scalar_lea.vmem %s5, 1
          %v1842 = vld [vmem:[%s1841] ss:$2 sm:$0x3f]
          %v1843 = vpack.c.bf16 %v1834, %v1834
          %v1844 = vpack.c.bf16 %v1835, %v1835
          %v1845 = vpack.c.bf16 %v1836, %v1836
          %v1846 = vpack.c.bf16 %v1837, %v1837
          %v1847 = vpack.c.bf16 %v1838, %v1838
          %v1848 = vpack.c.bf16 %v1839, %v1839
          %v1849 = vld [vmem:[#allocation7] sm:$0xff]
          %v1850 = vld [vmem:[#allocation7 + $0x8] sm:$0xff]
          %v1851 = vld [vmem:[#allocation7 + $0x10] sm:$0xff]
          %v1852 = vld [vmem:[#allocation7 + $0x18] sm:$0xff]
          %v1853 = vld [vmem:[#allocation7 + $0x20] sm:$0xff]
          %v1854 = vld [vmem:[#allocation7 + $0x28] sm:$0xff]
          %v1855 = vld [vmem:[#allocation7 + $0x30] sm:$0xff]
          %v1856 = vld [vmem:[#allocation7 + $0x38] sm:$0xff]
          %v1857 = vld [vmem:[#allocation7 + $0x40] sm:$0xff]
          %v1858 = vld [vmem:[#allocation7 + $0x48] sm:$0xff]
          %v1859 = vld [vmem:[#allocation7 + $0x50] sm:$0xff]
          %v1860 = vld [vmem:[#allocation7 + $0x58] sm:$0xff]
          %v1861 = vld [vmem:[#allocation7 + $0x60] sm:$0xff]
          %v1862 = vld [vmem:[#allocation7 + $0x68] sm:$0xff]
          %v1863 = vld [vmem:[#allocation7 + $0x70] sm:$0xff]
          %v1864 = vld [vmem:[#allocation7 + $0x78] sm:$0xff]
          %v1865 = vld [vmem:[#allocation7 + $0x80] sm:$0xff]
          %v1866 = vld [vmem:[#allocation7 + $0x88] sm:$0xff]
          %v1867 = vld [vmem:[#allocation7 + $0x90] sm:$0xff]
          %v1868 = vld [vmem:[#allocation7 + $0x98] sm:$0xff]
          %v1869 = vld [vmem:[#allocation7 + $0xa0] sm:$0xff]
          %v1870 = vld [vmem:[#allocation7 + $0xa8] sm:$0xff]
          %v1871 = vld [vmem:[#allocation7 + $0xb0] sm:$0xff]
          %v1872 = vld [vmem:[#allocation7 + $0xb8] sm:$0xff]
          %v1873 = vld [vmem:[#allocation7 + $0xc0] sm:$0xff]
          %v1874 = vld [vmem:[#allocation7 + $0xc8] sm:$0xff]
          %v1875 = vld [vmem:[#allocation7 + $0xd0] sm:$0xff]
          %v1876 = vld [vmem:[#allocation7 + $0xd8] sm:$0xff]
          %v1877 = vld [vmem:[#allocation7 + $0xe0] sm:$0xff]
          %v1878 = vld [vmem:[#allocation7 + $0xe8] sm:$0xff]
          %v1879 = vld [vmem:[#allocation7 + $0xf0] sm:$0xff]
          %v1880 = vld [vmem:[#allocation7 + $0xf8] sm:$0xff]
          %v1881 = vld [vmem:[#allocation7 + $0x100] sm:$0xff]
          %v1882 = vld [vmem:[#allocation7 + $0x108] sm:$0xff]
          %v1883 = vld [vmem:[#allocation7 + $0x110] sm:$0xff]
          %v1884 = vld [vmem:[#allocation7 + $0x118] sm:$0xff]
          %v1885 = vld [vmem:[#allocation7 + $0x120] sm:$0xff]
          %v1886 = vld [vmem:[#allocation7 + $0x128] sm:$0xff]
          %v1887 = vld [vmem:[#allocation7 + $0x130] sm:$0xff]
          %v1888 = vld [vmem:[#allocation7 + $0x138] sm:$0xff]
          %v1889 = vld [vmem:[#allocation7 + $0x140] sm:$0xff]
          %v1890 = vld [vmem:[#allocation7 + $0x148] sm:$0xff]
          %v1891 = vld [vmem:[#allocation7 + $0x150] sm:$0xff]
          %v1892 = vld [vmem:[#allocation7 + $0x158] sm:$0xff]
          %v1893 = vld [vmem:[#allocation7 + $0x160] sm:$0xff]
          %v1894 = vld [vmem:[#allocation7 + $0x168] sm:$0xff]
          %v1895 = vld [vmem:[#allocation7 + $0x170] sm:$0xff]
          %v1896 = vld [vmem:[#allocation7 + $0x178] sm:$0xff]
          %v1897 = vld [vmem:[#allocation7 + $0x180] sm:$0xff]
          %v1898 = vld [vmem:[#allocation7 + $0x188] sm:$0xff]
          %v1899 = vld [vmem:[#allocation7 + $0x190] sm:$0xff]
          %v1900 = vld [vmem:[#allocation7 + $0x198] sm:$0xff]
          %v1901 = vld [vmem:[#allocation7 + $0x1a0] sm:$0xff]
          %v1902 = vld [vmem:[#allocation7 + $0x1a8] sm:$0xff]
          %v1903 = vld [vmem:[#allocation7 + $0x1b0] sm:$0xff]
          %v1904 = vld [vmem:[#allocation7 + $0x1b8] sm:$0xff]
          %v1905 = vld [vmem:[#allocation7 + $0x1c0] sm:$0xff]
          %v1906 = vld [vmem:[#allocation7 + $0x1c8] sm:$0xff]
          %v1907 = vld [vmem:[#allocation7 + $0x1d0] sm:$0xff]
          %v1908 = vld [vmem:[#allocation7 + $0x1d8] sm:$0xff]
          %v1909 = vld [vmem:[#allocation7 + $0x1e0] sm:$0xff]
          %v1910 = vld [vmem:[#allocation7 + $0x1e8] sm:$0xff]
          %v1911 = vld [vmem:[#allocation7 + $0x1f0] sm:$0xff]
          %v1912 = vld [vmem:[#allocation7 + $0x1f8] sm:$0xff]
          %v1913 = vld [vmem:[#allocation7 + $0x200] sm:$0xff]
          %v1914 = vld [vmem:[#allocation7 + $0x208] sm:$0xff]
          %v1915 = vld [vmem:[#allocation7 + $0x210] sm:$0xff]
          %v1916 = vld [vmem:[#allocation7 + $0x218] sm:$0xff]
          %v1917 = vld [vmem:[#allocation7 + $0x220] sm:$0xff]
          %v1918 = vld [vmem:[#allocation7 + $0x228] sm:$0xff]
          %v1919 = vld [vmem:[#allocation7 + $0x230] sm:$0xff]
          %v1920 = vld [vmem:[#allocation7 + $0x238] sm:$0xff]
          %v1921 = vld [vmem:[#allocation7 + $0x240] sm:$0xff]
          %v1922 = vld [vmem:[#allocation7 + $0x248] sm:$0xff]
          %v1923 = vld [vmem:[#allocation7 + $0x250] sm:$0xff]
          %v1924 = vld [vmem:[#allocation7 + $0x258] sm:$0xff]
          %v1925 = vld [vmem:[#allocation7 + $0x260] sm:$0xff]
          %v1926 = vld [vmem:[#allocation7 + $0x268] sm:$0xff]
          %v1927 = vld [vmem:[#allocation7 + $0x270] sm:$0xff]
          %v1928 = vld [vmem:[#allocation7 + $0x278] sm:$0xff]
          %v1929 = vld [vmem:[#allocation7 + $0x280] sm:$0xff]
          %v1930 = vld [vmem:[#allocation7 + $0x288] sm:$0xff]
          %v1931 = vld [vmem:[#allocation7 + $0x290] sm:$0xff]
          %v1932 = vld [vmem:[#allocation7 + $0x298] sm:$0xff]
          %v1933 = vld [vmem:[#allocation7 + $0x2a0] sm:$0xff]
          %v1934 = vld [vmem:[#allocation7 + $0x2a8] sm:$0xff]
          %v1935 = vld [vmem:[#allocation7 + $0x2b0] sm:$0xff]
          %v1936 = vld [vmem:[#allocation7 + $0x2b8] sm:$0xff]
          %v1937 = vld [vmem:[#allocation7 + $0x2c0] sm:$0xff]
          %v1938 = vld [vmem:[#allocation7 + $0x2c8] sm:$0xff]
          %v1939 = vld [vmem:[#allocation7 + $0x2d0] sm:$0xff]
          %v1940 = vld [vmem:[#allocation7 + $0x2d8] sm:$0xff]
          %v1941 = vld [vmem:[#allocation7 + $0x2e0] sm:$0xff]
          %v1942 = vld [vmem:[#allocation7 + $0x2e8] sm:$0xff]
          %v1943 = vld [vmem:[#allocation7 + $0x2f0] sm:$0xff]
          %v1944 = vld [vmem:[#allocation7 + $0x2f8] sm:$0xff]
          %v1945 = vld [vmem:[#allocation7 + $0x300] sm:$0xff]
          %v1946 = vld [vmem:[#allocation7 + $0x308] sm:$0xff]
          %v1947 = vld [vmem:[#allocation7 + $0x310] sm:$0xff]
          %v1948 = vld [vmem:[#allocation7 + $0x318] sm:$0xff]
          %v1949 = vld [vmem:[#allocation7 + $0x320] sm:$0xff]
          %v1950 = vld [vmem:[#allocation7 + $0x328] sm:$0xff]
          %v1951 = vld [vmem:[#allocation7 + $0x330] sm:$0xff]
          %v1952 = vld [vmem:[#allocation7 + $0x338] sm:$0xff]
          %v1953 = vld [vmem:[#allocation7 + $0x340] sm:$0xff]
          %v1954 = vld [vmem:[#allocation7 + $0x348] sm:$0xff]
          %v1955 = vld [vmem:[#allocation7 + $0x350] sm:$0xff]
          %v1956 = vld [vmem:[#allocation7 + $0x358] sm:$0xff]
          %v1957 = vld [vmem:[#allocation7 + $0x360] sm:$0xff]
          %v1958 = vld [vmem:[#allocation7 + $0x368] sm:$0xff]
          %v1959 = vld [vmem:[#allocation7 + $0x370] sm:$0xff]
          %v1960 = vld [vmem:[#allocation7 + $0x378] sm:$0xff]
          %v1961 = vld [vmem:[#allocation7 + $0x380] sm:$0xff]
          %v1962 = vld [vmem:[#allocation7 + $0x388] sm:$0xff]
          %v1963 = vld [vmem:[#allocation7 + $0x390] sm:$0xff]
          %v1964 = vld [vmem:[#allocation7 + $0x398] sm:$0xff]
          %v1965 = vld [vmem:[#allocation7 + $0x3a0] sm:$0xff]
          %v1966 = vld [vmem:[#allocation7 + $0x3a8] sm:$0xff]
          %v1967 = vld [vmem:[#allocation7 + $0x3b0] sm:$0xff]
          %v1968 = vld [vmem:[#allocation7 + $0x3b8] sm:$0xff]
          %v1969 = vld [vmem:[#allocation7 + $0x3c0] sm:$0xff]
          %v1970 = vld [vmem:[#allocation7 + $0x3c8] sm:$0xff]
          %v1971 = vld [vmem:[#allocation7 + $0x3d0] sm:$0xff]
          %v1972 = vld [vmem:[#allocation7 + $0x3d8] sm:$0xff]
          %v1973 = vld [vmem:[#allocation7 + $0x3e0] sm:$0xff]
          %v1974 = vld [vmem:[#allocation7 + $0x3e8] sm:$0xff]
          %v1975 = vld [vmem:[#allocation7 + $0x3f0] sm:$0xff]
          %v1976 = vld [vmem:[#allocation7 + $0x3f8] sm:$0xff]
          %v1977 = vld [vmem:[#allocation7 + $0x400] sm:$0xff]
          %v1978 = vld [vmem:[#allocation7 + $0x408] sm:$0xff]
          %v1979 = vld [vmem:[#allocation7 + $0x410] sm:$0xff]
          %v1980 = vld [vmem:[#allocation7 + $0x418] sm:$0xff]
          %v1981 = vld [vmem:[#allocation7 + $0x420] sm:$0xff]
          %v1982 = vld [vmem:[#allocation7 + $0x428] sm:$0xff]
          %v1983 = vld [vmem:[#allocation7 + $0x430] sm:$0xff]
          %v1984 = vld [vmem:[#allocation7 + $0x438] sm:$0xff]
          %v1985 = vld [vmem:[#allocation7 + $0x440] sm:$0xff]
          %v1986 = vld [vmem:[#allocation7 + $0x448] sm:$0xff]
          %v1987 = vld [vmem:[#allocation7 + $0x450] sm:$0xff]
          %v1988 = vld [vmem:[#allocation7 + $0x458] sm:$0xff]
          %v1989 = vld [vmem:[#allocation7 + $0x460] sm:$0xff]
          %v1990 = vld [vmem:[#allocation7 + $0x468] sm:$0xff]
          %v1991 = vld [vmem:[#allocation7 + $0x470] sm:$0xff]
          %v1992 = vld [vmem:[#allocation7 + $0x478] sm:$0xff]
          %v1993 = vunpack.c.l.s8.bf16 %v1849
          %v1994 = vunpack.c.l.s8.bf16 %v1850
          %v1995 = vunpack.c.l.s8.bf16 %v1851
          %v1996 = vunpack.c.l.s8.bf16 %v1852
          %v1997 = vunpack.c.l.s8.bf16 %v1853
          %v1998 = vunpack.c.l.s8.bf16 %v1854
          %v1999 = vunpack.c.h.s8.bf16 %v1849
          %v2000 = vunpack.c.h.s8.bf16 %v1850
          %v2001 = vunpack.c.h.s8.bf16 %v1851
          %v2002 = vunpack.c.h.s8.bf16 %v1852
          %v2003 = vunpack.c.h.s8.bf16 %v1853
          %v2004 = vunpack.c.h.s8.bf16 %v1854
          %v2005 = vunpack.c.l.s8.bf16 %v1855
          %v2006 = vunpack.c.l.s8.bf16 %v1856
          %v2007 = vunpack.c.l.s8.bf16 %v1857
          %v2008 = vunpack.c.l.s8.bf16 %v1858
          %v2009 = vunpack.c.l.s8.bf16 %v1859
          %v2010 = vunpack.c.l.s8.bf16 %v1860
          %v2011 = vunpack.c.h.s8.bf16 %v1855
          %v2012 = vunpack.c.h.s8.bf16 %v1856
          %v2013 = vunpack.c.h.s8.bf16 %v1857
          %v2014 = vunpack.c.h.s8.bf16 %v1858
          %v2015 = vunpack.c.h.s8.bf16 %v1859
          %v2016 = vunpack.c.h.s8.bf16 %v1860
          %v2017 = vunpack.c.l.s8.bf16 %v1861
          %v2018 = vunpack.c.l.s8.bf16 %v1862
          %v2019 = vunpack.c.l.s8.bf16 %v1863
          %v2020 = vunpack.c.l.s8.bf16 %v1864
          %v2021 = vunpack.c.l.s8.bf16 %v1865
          %v2022 = vunpack.c.l.s8.bf16 %v1866
          %v2023 = vunpack.c.h.s8.bf16 %v1861
          %v2024 = vunpack.c.h.s8.bf16 %v1862
          %v2025 = vunpack.c.h.s8.bf16 %v1863
          %v2026 = vunpack.c.h.s8.bf16 %v1864
          %v2027 = vunpack.c.h.s8.bf16 %v1865
          %v2028 = vunpack.c.h.s8.bf16 %v1866
          %v2029 = vunpack.c.l.s8.bf16 %v1867
          %v2030 = vunpack.c.l.s8.bf16 %v1868
          %v2031 = vunpack.c.l.s8.bf16 %v1869
          %v2032 = vunpack.c.l.s8.bf16 %v1870
          %v2033 = vunpack.c.l.s8.bf16 %v1871
          %v2034 = vunpack.c.l.s8.bf16 %v1872
          %v2035 = vunpack.c.h.s8.bf16 %v1867
          %v2036 = vunpack.c.h.s8.bf16 %v1868
          %v2037 = vunpack.c.h.s8.bf16 %v1869
          %v2038 = vunpack.c.h.s8.bf16 %v1870
          %v2039 = vunpack.c.h.s8.bf16 %v1871
          %v2040 = vunpack.c.h.s8.bf16 %v1872
          %v2041 = vunpack.c.l.s8.bf16 %v1873
          %v2042 = vunpack.c.l.s8.bf16 %v1874
          %v2043 = vunpack.c.l.s8.bf16 %v1875
          %v2044 = vunpack.c.l.s8.bf16 %v1876
          %v2045 = vunpack.c.l.s8.bf16 %v1877
          %v2046 = vunpack.c.l.s8.bf16 %v1878
          %v2047 = vunpack.c.h.s8.bf16 %v1873
          %v2048 = vunpack.c.h.s8.bf16 %v1874
          %v2049 = vunpack.c.h.s8.bf16 %v1875
          %v2050 = vunpack.c.h.s8.bf16 %v1876
          %v2051 = vunpack.c.h.s8.bf16 %v1877
          %v2052 = vunpack.c.h.s8.bf16 %v1878
          %v2053 = vunpack.c.l.s8.bf16 %v1879
          %v2054 = vunpack.c.l.s8.bf16 %v1880
          %v2055 = vunpack.c.l.s8.bf16 %v1881
          %v2056 = vunpack.c.l.s8.bf16 %v1882
          %v2057 = vunpack.c.l.s8.bf16 %v1883
          %v2058 = vunpack.c.l.s8.bf16 %v1884
          %v2059 = vunpack.c.h.s8.bf16 %v1879
          %v2060 = vunpack.c.h.s8.bf16 %v1880
          %v2061 = vunpack.c.h.s8.bf16 %v1881
          %v2062 = vunpack.c.h.s8.bf16 %v1882
          %v2063 = vunpack.c.h.s8.bf16 %v1883
          %v2064 = vunpack.c.h.s8.bf16 %v1884
          %v2065 = vunpack.c.l.s8.bf16 %v1885
          %v2066 = vunpack.c.l.s8.bf16 %v1886
          %v2067 = vunpack.c.l.s8.bf16 %v1887
          %v2068 = vunpack.c.l.s8.bf16 %v1888
          %v2069 = vunpack.c.l.s8.bf16 %v1889
          %v2070 = vunpack.c.l.s8.bf16 %v1890
          %v2071 = vunpack.c.h.s8.bf16 %v1885
          %v2072 = vunpack.c.h.s8.bf16 %v1886
          %v2073 = vunpack.c.h.s8.bf16 %v1887
          %v2074 = vunpack.c.h.s8.bf16 %v1888
          %v2075 = vunpack.c.h.s8.bf16 %v1889
          %v2076 = vunpack.c.h.s8.bf16 %v1890
          %v2077 = vunpack.c.l.s8.bf16 %v1891
          %v2078 = vunpack.c.l.s8.bf16 %v1892
          %v2079 = vunpack.c.l.s8.bf16 %v1893
          %v2080 = vunpack.c.l.s8.bf16 %v1894
          %v2081 = vunpack.c.l.s8.bf16 %v1895
          %v2082 = vunpack.c.l.s8.bf16 %v1896
          %v2083 = vunpack.c.h.s8.bf16 %v1891
          %v2084 = vunpack.c.h.s8.bf16 %v1892
          %v2085 = vunpack.c.h.s8.bf16 %v1893
          %v2086 = vunpack.c.h.s8.bf16 %v1894
          %v2087 = vunpack.c.h.s8.bf16 %v1895
          %v2088 = vunpack.c.h.s8.bf16 %v1896
          %v2089 = vunpack.c.l.s8.bf16 %v1897
          %v2090 = vunpack.c.l.s8.bf16 %v1898
          %v2091 = vunpack.c.l.s8.bf16 %v1899
          %v2092 = vunpack.c.l.s8.bf16 %v1900
          %v2093 = vunpack.c.l.s8.bf16 %v1901
          %v2094 = vunpack.c.l.s8.bf16 %v1902
          %v2095 = vunpack.c.h.s8.bf16 %v1897
          %v2096 = vunpack.c.h.s8.bf16 %v1898
          %v2097 = vunpack.c.h.s8.bf16 %v1899
          %v2098 = vunpack.c.h.s8.bf16 %v1900
          %v2099 = vunpack.c.h.s8.bf16 %v1901
          %v2100 = vunpack.c.h.s8.bf16 %v1902
          %v2101 = vunpack.c.l.s8.bf16 %v1903
          %v2102 = vunpack.c.l.s8.bf16 %v1904
          %v2103 = vunpack.c.l.s8.bf16 %v1905
          %v2104 = vunpack.c.l.s8.bf16 %v1906
          %v2105 = vunpack.c.l.s8.bf16 %v1907
          %v2106 = vunpack.c.l.s8.bf16 %v1908
          %v2107 = vunpack.c.h.s8.bf16 %v1903
          %v2108 = vunpack.c.h.s8.bf16 %v1904
          %v2109 = vunpack.c.h.s8.bf16 %v1905
          %v2110 = vunpack.c.h.s8.bf16 %v1906
          %v2111 = vunpack.c.h.s8.bf16 %v1907
          %v2112 = vunpack.c.h.s8.bf16 %v1908
          %v2113 = vunpack.c.l.s8.bf16 %v1909
          %v2114 = vunpack.c.l.s8.bf16 %v1910
          %v2115 = vunpack.c.l.s8.bf16 %v1911
          %v2116 = vunpack.c.l.s8.bf16 %v1912
          %v2117 = vunpack.c.l.s8.bf16 %v1913
          %v2118 = vunpack.c.l.s8.bf16 %v1914
          %v2119 = vunpack.c.h.s8.bf16 %v1909
          %v2120 = vunpack.c.h.s8.bf16 %v1910
          %v2121 = vunpack.c.h.s8.bf16 %v1911
          %v2122 = vunpack.c.h.s8.bf16 %v1912
          %v2123 = vunpack.c.h.s8.bf16 %v1913
          %v2124 = vunpack.c.h.s8.bf16 %v1914
          %v2125 = vunpack.c.l.s8.bf16 %v1915
          %v2126 = vunpack.c.l.s8.bf16 %v1916
          %v2127 = vunpack.c.l.s8.bf16 %v1917
          %v2128 = vunpack.c.l.s8.bf16 %v1918
          %v2129 = vunpack.c.l.s8.bf16 %v1919
          %v2130 = vunpack.c.l.s8.bf16 %v1920
          %v2131 = vunpack.c.h.s8.bf16 %v1915
          %v2132 = vunpack.c.h.s8.bf16 %v1916
          %v2133 = vunpack.c.h.s8.bf16 %v1917
          %v2134 = vunpack.c.h.s8.bf16 %v1918
          %v2135 = vunpack.c.h.s8.bf16 %v1919
          %v2136 = vunpack.c.h.s8.bf16 %v1920
          %v2137 = vunpack.c.l.s8.bf16 %v1921
          %v2138 = vunpack.c.l.s8.bf16 %v1922
          %v2139 = vunpack.c.l.s8.bf16 %v1923
          %v2140 = vunpack.c.l.s8.bf16 %v1924
          %v2141 = vunpack.c.l.s8.bf16 %v1925
          %v2142 = vunpack.c.l.s8.bf16 %v1926
          %v2143 = vunpack.c.h.s8.bf16 %v1921
          %v2144 = vunpack.c.h.s8.bf16 %v1922
          %v2145 = vunpack.c.h.s8.bf16 %v1923
          %v2146 = vunpack.c.h.s8.bf16 %v1924
          %v2147 = vunpack.c.h.s8.bf16 %v1925
          %v2148 = vunpack.c.h.s8.bf16 %v1926
          %v2149 = vunpack.c.l.s8.bf16 %v1927
          %v2150 = vunpack.c.l.s8.bf16 %v1928
          %v2151 = vunpack.c.l.s8.bf16 %v1929
          %v2152 = vunpack.c.l.s8.bf16 %v1930
          %v2153 = vunpack.c.l.s8.bf16 %v1931
          %v2154 = vunpack.c.l.s8.bf16 %v1932
          %v2155 = vunpack.c.h.s8.bf16 %v1927
          %v2156 = vunpack.c.h.s8.bf16 %v1928
          %v2157 = vunpack.c.h.s8.bf16 %v1929
          %v2158 = vunpack.c.h.s8.bf16 %v1930
          %v2159 = vunpack.c.h.s8.bf16 %v1931
          %v2160 = vunpack.c.h.s8.bf16 %v1932
          %v2161 = vunpack.c.l.s8.bf16 %v1933
          %v2162 = vunpack.c.l.s8.bf16 %v1934
          %v2163 = vunpack.c.l.s8.bf16 %v1935
          %v2164 = vunpack.c.l.s8.bf16 %v1936
          %v2165 = vunpack.c.l.s8.bf16 %v1937
          %v2166 = vunpack.c.l.s8.bf16 %v1938
          %v2167 = vunpack.c.h.s8.bf16 %v1933
          %v2168 = vunpack.c.h.s8.bf16 %v1934
          %v2169 = vunpack.c.h.s8.bf16 %v1935
          %v2170 = vunpack.c.h.s8.bf16 %v1936
          %v2171 = vunpack.c.h.s8.bf16 %v1937
          %v2172 = vunpack.c.h.s8.bf16 %v1938
          %v2173 = vunpack.c.l.s8.bf16 %v1939
          %v2174 = vunpack.c.l.s8.bf16 %v1940
          %v2175 = vunpack.c.l.s8.bf16 %v1941
          %v2176 = vunpack.c.l.s8.bf16 %v1942
          %v2177 = vunpack.c.l.s8.bf16 %v1943
          %v2178 = vunpack.c.l.s8.bf16 %v1944
          %v2179 = vunpack.c.h.s8.bf16 %v1939
          %v2180 = vunpack.c.h.s8.bf16 %v1940
          %v2181 = vunpack.c.h.s8.bf16 %v1941
          %v2182 = vunpack.c.h.s8.bf16 %v1942
          %v2183 = vunpack.c.h.s8.bf16 %v1943
          %v2184 = vunpack.c.h.s8.bf16 %v1944
          %v2185 = vunpack.c.l.s8.bf16 %v1945
          %v2186 = vunpack.c.l.s8.bf16 %v1946
          %v2187 = vunpack.c.l.s8.bf16 %v1947
          %v2188 = vunpack.c.l.s8.bf16 %v1948
          %v2189 = vunpack.c.l.s8.bf16 %v1949
          %v2190 = vunpack.c.l.s8.bf16 %v1950
          %v2191 = vunpack.c.h.s8.bf16 %v1945
          %v2192 = vunpack.c.h.s8.bf16 %v1946
          %v2193 = vunpack.c.h.s8.bf16 %v1947
          %v2194 = vunpack.c.h.s8.bf16 %v1948
          %v2195 = vunpack.c.h.s8.bf16 %v1949
          %v2196 = vunpack.c.h.s8.bf16 %v1950
          %v2197 = vunpack.c.l.s8.bf16 %v1951
          %v2198 = vunpack.c.l.s8.bf16 %v1952
          %v2199 = vunpack.c.l.s8.bf16 %v1953
          %v2200 = vunpack.c.l.s8.bf16 %v1954
          %v2201 = vunpack.c.l.s8.bf16 %v1955
          %v2202 = vunpack.c.l.s8.bf16 %v1956
          %v2203 = vunpack.c.h.s8.bf16 %v1951
          %v2204 = vunpack.c.h.s8.bf16 %v1952
          %v2205 = vunpack.c.h.s8.bf16 %v1953
          %v2206 = vunpack.c.h.s8.bf16 %v1954
          %v2207 = vunpack.c.h.s8.bf16 %v1955
          %v2208 = vunpack.c.h.s8.bf16 %v1956
          %v2209 = vunpack.c.l.s8.bf16 %v1957
          %v2210 = vunpack.c.l.s8.bf16 %v1958
          %v2211 = vunpack.c.l.s8.bf16 %v1959
          %v2212 = vunpack.c.l.s8.bf16 %v1960
          %v2213 = vunpack.c.l.s8.bf16 %v1961
          %v2214 = vunpack.c.l.s8.bf16 %v1962
          %v2215 = vunpack.c.h.s8.bf16 %v1957
          %v2216 = vunpack.c.h.s8.bf16 %v1958
          %v2217 = vunpack.c.h.s8.bf16 %v1959
          %v2218 = vunpack.c.h.s8.bf16 %v1960
          %v2219 = vunpack.c.h.s8.bf16 %v1961
          %v2220 = vunpack.c.h.s8.bf16 %v1962
          %v2221 = vunpack.c.l.s8.bf16 %v1963
          %v2222 = vunpack.c.l.s8.bf16 %v1964
          %v2223 = vunpack.c.l.s8.bf16 %v1965
          %v2224 = vunpack.c.l.s8.bf16 %v1966
          %v2225 = vunpack.c.l.s8.bf16 %v1967
          %v2226 = vunpack.c.l.s8.bf16 %v1968
          %v2227 = vunpack.c.h.s8.bf16 %v1963
          %v2228 = vunpack.c.h.s8.bf16 %v1964
          %v2229 = vunpack.c.h.s8.bf16 %v1965
          %v2230 = vunpack.c.h.s8.bf16 %v1966
          %v2231 = vunpack.c.h.s8.bf16 %v1967
          %v2232 = vunpack.c.h.s8.bf16 %v1968
          %v2233 = vunpack.c.l.s8.bf16 %v1969
          %v2234 = vunpack.c.l.s8.bf16 %v1970
          %v2235 = vunpack.c.l.s8.bf16 %v1971
          %v2236 = vunpack.c.l.s8.bf16 %v1972
          %v2237 = vunpack.c.l.s8.bf16 %v1973
          %v2238 = vunpack.c.l.s8.bf16 %v1974
          %v2239 = vunpack.c.h.s8.bf16 %v1969
          %v2240 = vunpack.c.h.s8.bf16 %v1970
          %v2241 = vunpack.c.h.s8.bf16 %v1971
          %v2242 = vunpack.c.h.s8.bf16 %v1972
          %v2243 = vunpack.c.h.s8.bf16 %v1973
          %v2244 = vunpack.c.h.s8.bf16 %v1974
          %v2245 = vunpack.c.l.s8.bf16 %v1975
          %v2246 = vunpack.c.l.s8.bf16 %v1976
          %v2247 = vunpack.c.l.s8.bf16 %v1977
          %v2248 = vunpack.c.l.s8.bf16 %v1978
          %v2249 = vunpack.c.l.s8.bf16 %v1979
          %v2250 = vunpack.c.l.s8.bf16 %v1980
          %v2251 = vunpack.c.h.s8.bf16 %v1975
          %v2252 = vunpack.c.h.s8.bf16 %v1976
          %v2253 = vunpack.c.h.s8.bf16 %v1977
          %v2254 = vunpack.c.h.s8.bf16 %v1978
          %v2255 = vunpack.c.h.s8.bf16 %v1979
          %v2256 = vunpack.c.h.s8.bf16 %v1980
          %v2257 = vunpack.c.l.s8.bf16 %v1981
          %v2258 = vunpack.c.l.s8.bf16 %v1982
          %v2259 = vunpack.c.l.s8.bf16 %v1983
          %v2260 = vunpack.c.l.s8.bf16 %v1984
          %v2261 = vunpack.c.l.s8.bf16 %v1985
          %v2262 = vunpack.c.l.s8.bf16 %v1986
          %v2263 = vunpack.c.h.s8.bf16 %v1981
          %v2264 = vunpack.c.h.s8.bf16 %v1982
          %v2265 = vunpack.c.h.s8.bf16 %v1983
          %v2266 = vunpack.c.h.s8.bf16 %v1984
          %v2267 = vunpack.c.h.s8.bf16 %v1985
          %v2268 = vunpack.c.h.s8.bf16 %v1986
          %v2269 = vunpack.c.l.s8.bf16 %v1987
          %v2270 = vunpack.c.l.s8.bf16 %v1988
          %v2271 = vunpack.c.l.s8.bf16 %v1989
          %v2272 = vunpack.c.l.s8.bf16 %v1990
          %v2273 = vunpack.c.l.s8.bf16 %v1991
          %v2274 = vunpack.c.l.s8.bf16 %v1992
          %v2275 = vunpack.c.h.s8.bf16 %v1987
          %v2276 = vunpack.c.h.s8.bf16 %v1988
          %v2277 = vunpack.c.h.s8.bf16 %v1989
          %v2278 = vunpack.c.h.s8.bf16 %v1990
          %v2279 = vunpack.c.h.s8.bf16 %v1991
          %v2280 = vunpack.c.h.s8.bf16 %v1992
          %2281 = vmatprep.subr.bf16.mxu0 %v2036
          %2282 = vmatpush1.bf16.msra.mxu0 %v2035
          %2283 = vmatprep.subr.bf16.mxu0 %v2030
          %2284 = vmatpush1.bf16.msra.mxu0 %v2029
          %2285 = vmatprep.subr.bf16.mxu0 %v2024
          %2286 = vmatpush1.bf16.msra.mxu0 %v2023
          %2287 = vmatprep.subr.bf16.mxu0 %v2018
          %2288 = vmatpush1.bf16.msra.mxu0 %v2017
          %2289 = vmatprep.subr.bf16.mxu0 %v2012
          %2290 = vmatpush1.bf16.msra.mxu0 %v2011
          %2291 = vmatprep.subr.bf16.mxu0 %v2006
          %2292 = vmatpush1.bf16.msra.mxu0 %v2005
          %2293 = vmatprep.subr.bf16.mxu0 %v2000
          %2294 = vmatpush1.bf16.msra.mxu0 %v1999
          %2295 = vmatprep.subr.bf16.mxu0 %v1994
          %2296 = vmatpush1.bf16.msra.mxu0 %v1993
          %2297 = vmatprep.subr.bf16.mxu0 %v2084
          %2298 = vmatpush2.bf16.msra.mxu0 %v2083
          %2299 = vmatprep.subr.bf16.mxu0 %v2078
          %2300 = vmatpush2.bf16.msra.mxu0 %v2077
          %2301 = vmatprep.subr.bf16.mxu0 %v2072
          %2302 = vmatpush2.bf16.msra.mxu0 %v2071
          %2303 = vmatprep.subr.bf16.mxu0 %v2066
          %2304 = vmatpush2.bf16.msra.mxu0 %v2065
          %2305 = vmatprep.subr.bf16.mxu0 %v2060
          %2306 = vmatpush2.bf16.msra.mxu0 %v2059
          %2307 = vmatprep.subr.bf16.mxu0 %v2054
          %2308 = vmatpush2.bf16.msra.mxu0 %v2053
          %2309 = vmatprep.subr.bf16.mxu0 %v2048
          %2310 = vmatpush2.bf16.msra.mxu0 %v2047
          %2311 = vmatprep.subr.bf16.mxu0 %v2042
          %2312 = vmatpush2.bf16.msra.mxu0 %v2041
          %2313 = vmatprep.mubr.bf16.mxu0 %v1844
          %2314 = vmatmul.mubr.bf16.gmra.mxu0 %v1843
          %v2315 = vpop.f32.mrf.mxu0
          %v2316 = vadd.f32 0.0, %v2315
          %v2317 = vpop.f32.mrf.mxu0
          %v2318 = vadd.f32 0.0, %v2317
          %v2319 = vpop.f32.mrf.mxu0
          %v2320 = vpop.f32.mrf.mxu0
          %2321 = vdwg.mxu0
          %2322 = vmatprep.subr.bf16.mxu0 %v2132
          %2323 = vmatpush1.bf16.msra.mxu0 %v2131
          %2324 = vmatprep.subr.bf16.mxu0 %v2126
          %2325 = vmatpush1.bf16.msra.mxu0 %v2125
          %2326 = vmatprep.subr.bf16.mxu0 %v2120
          %2327 = vmatpush1.bf16.msra.mxu0 %v2119
          %2328 = vmatprep.subr.bf16.mxu0 %v2114
          %2329 = vmatpush1.bf16.msra.mxu0 %v2113
          %2330 = vmatprep.subr.bf16.mxu0 %v2108
          %2331 = vmatpush1.bf16.msra.mxu0 %v2107
          %2332 = vmatprep.subr.bf16.mxu0 %v2102
          %2333 = vmatpush1.bf16.msra.mxu0 %v2101
          %2334 = vmatprep.subr.bf16.mxu0 %v2096
          %2335 = vmatpush1.bf16.msra.mxu0 %v2095
          %2336 = vmatprep.subr.bf16.mxu0 %v2090
          %2337 = vmatpush1.bf16.msra.mxu0 %v2089
          %2338 = vmatprep.subr.bf16.mxu0 %v2180
          %2339 = vmatpush2.bf16.msra.mxu0 %v2179
          %2340 = vmatprep.subr.bf16.mxu0 %v2174
          %2341 = vmatpush2.bf16.msra.mxu0 %v2173
          %2342 = vmatprep.subr.bf16.mxu0 %v2168
          %2343 = vmatpush2.bf16.msra.mxu0 %v2167
          %2344 = vmatprep.subr.bf16.mxu0 %v2162
          %2345 = vmatpush2.bf16.msra.mxu0 %v2161
          %2346 = vmatprep.subr.bf16.mxu0 %v2156
          %2347 = vmatpush2.bf16.msra.mxu0 %v2155
          %2348 = vmatprep.subr.bf16.mxu0 %v2150
          %2349 = vmatpush2.bf16.msra.mxu0 %v2149
          %2350 = vmatprep.subr.bf16.mxu0 %v2144
          %2351 = vmatpush2.bf16.msra.mxu0 %v2143
          %2352 = vmatprep.subr.bf16.mxu0 %v2138
          %2353 = vmatpush2.bf16.msra.mxu0 %v2137
          %2354 = vmatprep.mubr.bf16.mxu0 %v1846
          %2355 = vmatmul.mubr.bf16.gmra.mxu0 %v1845
          %v2356 = vpop.f32.mrf.mxu0
          %v2357 = vadd.f32 %v2316, %v2356
          %v2358 = vpop.f32.mrf.mxu0
          %v2359 = vadd.f32 %v2318, %v2358
          %v2360 = vpop.f32.mrf.mxu0
          %v2361 = vpop.f32.mrf.mxu0
          %2362 = vdwg.mxu0
          %2363 = vmatprep.subr.bf16.mxu0 %v2228
          %2364 = vmatpush1.bf16.msra.mxu0 %v2227
          %2365 = vmatprep.subr.bf16.mxu0 %v2222
          %2366 = vmatpush1.bf16.msra.mxu0 %v2221
          %2367 = vmatprep.subr.bf16.mxu0 %v2216
          %2368 = vmatpush1.bf16.msra.mxu0 %v2215
          %2369 = vmatprep.subr.bf16.mxu0 %v2210
          %2370 = vmatpush1.bf16.msra.mxu0 %v2209
          %2371 = vmatprep.subr.bf16.mxu0 %v2204
          %2372 = vmatpush1.bf16.msra.mxu0 %v2203
          %2373 = vmatprep.subr.bf16.mxu0 %v2198
          %2374 = vmatpush1.bf16.msra.mxu0 %v2197
          %2375 = vmatprep.subr.bf16.mxu0 %v2192
          %2376 = vmatpush1.bf16.msra.mxu0 %v2191
          %2377 = vmatprep.subr.bf16.mxu0 %v2186
          %2378 = vmatpush1.bf16.msra.mxu0 %v2185
          %2379 = vmatprep.subr.bf16.mxu0 %v2276
          %2380 = vmatpush2.bf16.msra.mxu0 %v2275
          %2381 = vmatprep.subr.bf16.mxu0 %v2270
          %2382 = vmatpush2.bf16.msra.mxu0 %v2269
          %2383 = vmatprep.subr.bf16.mxu0 %v2264
          %2384 = vmatpush2.bf16.msra.mxu0 %v2263
          %2385 = vmatprep.subr.bf16.mxu0 %v2258
          %2386 = vmatpush2.bf16.msra.mxu0 %v2257
          %2387 = vmatprep.subr.bf16.mxu0 %v2252
          %2388 = vmatpush2.bf16.msra.mxu0 %v2251
          %2389 = vmatprep.subr.bf16.mxu0 %v2246
          %2390 = vmatpush2.bf16.msra.mxu0 %v2245
          %2391 = vmatprep.subr.bf16.mxu0 %v2240
          %2392 = vmatpush2.bf16.msra.mxu0 %v2239
          %2393 = vmatprep.subr.bf16.mxu0 %v2234
          %2394 = vmatpush2.bf16.msra.mxu0 %v2233
          %2395 = vmatprep.mubr.bf16.mxu0 %v1848
          %2396 = vmatmul.mubr.bf16.gmra.mxu0 %v1847
          %v2397 = vpop.f32.mrf.mxu0
          %v2398 = vadd.f32 %v2357, %v2397
          %v2399 = vpop.f32.mrf.mxu0
          %v2400 = vadd.f32 %v2359, %v2399
          %v2401 = vpop.f32.mrf.mxu0
          %v2402 = vpop.f32.mrf.mxu0
          %2403 = vdwg.mxu0
          %2404 = vmatprep.subr.bf16.mxu0 %v2038
          %2405 = vmatpush1.bf16.msra.mxu0 %v2037
          %2406 = vmatprep.subr.bf16.mxu0 %v2032
          %2407 = vmatpush1.bf16.msra.mxu0 %v2031
          %2408 = vmatprep.subr.bf16.mxu0 %v2026
          %2409 = vmatpush1.bf16.msra.mxu0 %v2025
          %2410 = vmatprep.subr.bf16.mxu0 %v2020
          %2411 = vmatpush1.bf16.msra.mxu0 %v2019
          %2412 = vmatprep.subr.bf16.mxu0 %v2014
          %2413 = vmatpush1.bf16.msra.mxu0 %v2013
          %2414 = vmatprep.subr.bf16.mxu0 %v2008
          %2415 = vmatpush1.bf16.msra.mxu0 %v2007
          %2416 = vmatprep.subr.bf16.mxu0 %v2002
          %2417 = vmatpush1.bf16.msra.mxu0 %v2001
          %2418 = vmatprep.subr.bf16.mxu0 %v1996
          %2419 = vmatpush1.bf16.msra.mxu0 %v1995
          %2420 = vmatprep.subr.bf16.mxu0 %v2086
          %2421 = vmatpush2.bf16.msra.mxu0 %v2085
          %2422 = vmatprep.subr.bf16.mxu0 %v2080
          %2423 = vmatpush2.bf16.msra.mxu0 %v2079
          %2424 = vmatprep.subr.bf16.mxu0 %v2074
          %2425 = vmatpush2.bf16.msra.mxu0 %v2073
          %2426 = vmatprep.subr.bf16.mxu0 %v2068
          %2427 = vmatpush2.bf16.msra.mxu0 %v2067
          %2428 = vmatprep.subr.bf16.mxu0 %v2062
          %2429 = vmatpush2.bf16.msra.mxu0 %v2061
          %2430 = vmatprep.subr.bf16.mxu0 %v2056
          %2431 = vmatpush2.bf16.msra.mxu0 %v2055
          %2432 = vmatprep.subr.bf16.mxu0 %v2050
          %2433 = vmatpush2.bf16.msra.mxu0 %v2049
          %2434 = vmatprep.subr.bf16.mxu0 %v2044
          %2435 = vmatpush2.bf16.msra.mxu0 %v2043
          %2436 = vmatprep.mubr.bf16.mxu0 %v1844
          %2437 = vmatmul.mubr.bf16.gmra.mxu0 %v1843
          %v2438 = vpop.f32.mrf.mxu0
          %v2439 = vadd.f32 0.0, %v2438
          %v2440 = vpop.f32.mrf.mxu0
          %v2441 = vadd.f32 0.0, %v2440
          %v2442 = vpop.f32.mrf.mxu0
          %v2443 = vpop.f32.mrf.mxu0
          %2444 = vdwg.mxu0
          %2445 = vmatprep.subr.bf16.mxu0 %v2134
          %2446 = vmatpush1.bf16.msra.mxu0 %v2133
          %2447 = vmatprep.subr.bf16.mxu0 %v2128
          %2448 = vmatpush1.bf16.msra.mxu0 %v2127
          %2449 = vmatprep.subr.bf16.mxu0 %v2122
          %2450 = vmatpush1.bf16.msra.mxu0 %v2121
          %2451 = vmatprep.subr.bf16.mxu0 %v2116
          %2452 = vmatpush1.bf16.msra.mxu0 %v2115
          %2453 = vmatprep.subr.bf16.mxu0 %v2110
          %2454 = vmatpush1.bf16.msra.mxu0 %v2109
          %2455 = vmatprep.subr.bf16.mxu0 %v2104
          %2456 = vmatpush1.bf16.msra.mxu0 %v2103
          %2457 = vmatprep.subr.bf16.mxu0 %v2098
          %2458 = vmatpush1.bf16.msra.mxu0 %v2097
          %2459 = vmatprep.subr.bf16.mxu0 %v2092
          %2460 = vmatpush1.bf16.msra.mxu0 %v2091
          %2461 = vmatprep.subr.bf16.mxu0 %v2182
          %2462 = vmatpush2.bf16.msra.mxu0 %v2181
          %2463 = vmatprep.subr.bf16.mxu0 %v2176
          %2464 = vmatpush2.bf16.msra.mxu0 %v2175
          %2465 = vmatprep.subr.bf16.mxu0 %v2170
          %2466 = vmatpush2.bf16.msra.mxu0 %v2169
          %2467 = vmatprep.subr.bf16.mxu0 %v2164
          %2468 = vmatpush2.bf16.msra.mxu0 %v2163
          %2469 = vmatprep.subr.bf16.mxu0 %v2158
          %2470 = vmatpush2.bf16.msra.mxu0 %v2157
          %2471 = vmatprep.subr.bf16.mxu0 %v2152
          %2472 = vmatpush2.bf16.msra.mxu0 %v2151
          %2473 = vmatprep.subr.bf16.mxu0 %v2146
          %2474 = vmatpush2.bf16.msra.mxu0 %v2145
          %2475 = vmatprep.subr.bf16.mxu0 %v2140
          %2476 = vmatpush2.bf16.msra.mxu0 %v2139
          %2477 = vmatprep.mubr.bf16.mxu0 %v1846
          %2478 = vmatmul.mubr.bf16.gmra.mxu0 %v1845
          %v2479 = vpop.f32.mrf.mxu0
          %v2480 = vadd.f32 %v2439, %v2479
          %v2481 = vpop.f32.mrf.mxu0
          %v2482 = vadd.f32 %v2441, %v2481
          %v2483 = vpop.f32.mrf.mxu0
          %v2484 = vpop.f32.mrf.mxu0
          %2485 = vdwg.mxu0
          %2486 = vmatprep.subr.bf16.mxu0 %v2230
          %2487 = vmatpush1.bf16.msra.mxu0 %v2229
          %2488 = vmatprep.subr.bf16.mxu0 %v2224
          %2489 = vmatpush1.bf16.msra.mxu0 %v2223
          %2490 = vmatprep.subr.bf16.mxu0 %v2218
          %2491 = vmatpush1.bf16.msra.mxu0 %v2217
          %2492 = vmatprep.subr.bf16.mxu0 %v2212
          %2493 = vmatpush1.bf16.msra.mxu0 %v2211
          %2494 = vmatprep.subr.bf16.mxu0 %v2206
          %2495 = vmatpush1.bf16.msra.mxu0 %v2205
          %2496 = vmatprep.subr.bf16.mxu0 %v2200
          %2497 = vmatpush1.bf16.msra.mxu0 %v2199
          %2498 = vmatprep.subr.bf16.mxu0 %v2194
          %2499 = vmatpush1.bf16.msra.mxu0 %v2193
          %2500 = vmatprep.subr.bf16.mxu0 %v2188
          %2501 = vmatpush1.bf16.msra.mxu0 %v2187
          %2502 = vmatprep.subr.bf16.mxu0 %v2278
          %2503 = vmatpush2.bf16.msra.mxu0 %v2277
          %2504 = vmatprep.subr.bf16.mxu0 %v2272
          %2505 = vmatpush2.bf16.msra.mxu0 %v2271
          %2506 = vmatprep.subr.bf16.mxu0 %v2266
          %2507 = vmatpush2.bf16.msra.mxu0 %v2265
          %2508 = vmatprep.subr.bf16.mxu0 %v2260
          %2509 = vmatpush2.bf16.msra.mxu0 %v2259
          %2510 = vmatprep.subr.bf16.mxu0 %v2254
          %2511 = vmatpush2.bf16.msra.mxu0 %v2253
          %2512 = vmatprep.subr.bf16.mxu0 %v2248
          %2513 = vmatpush2.bf16.msra.mxu0 %v2247
          %2514 = vmatprep.subr.bf16.mxu0 %v2242
          %2515 = vmatpush2.bf16.msra.mxu0 %v2241
          %2516 = vmatprep.subr.bf16.mxu0 %v2236
          %2517 = vmatpush2.bf16.msra.mxu0 %v2235
          %2518 = vmatprep.mubr.bf16.mxu0 %v1848
          %2519 = vmatmul.mubr.bf16.gmra.mxu0 %v1847
          %v2520 = vpop.f32.mrf.mxu0
          %v2521 = vadd.f32 %v2480, %v2520
          %v2522 = vpop.f32.mrf.mxu0
          %v2523 = vadd.f32 %v2482, %v2522
          %v2524 = vpop.f32.mrf.mxu0
          %v2525 = vpop.f32.mrf.mxu0
          %2526 = vdwg.mxu0
          %2527 = vmatprep.subr.bf16.mxu0 %v2040
          %2528 = vmatpush1.bf16.msra.mxu0 %v2039
          %2529 = vmatprep.subr.bf16.mxu0 %v2034
          %2530 = vmatpush1.bf16.msra.mxu0 %v2033
          %2531 = vmatprep.subr.bf16.mxu0 %v2028
          %2532 = vmatpush1.bf16.msra.mxu0 %v2027
          %2533 = vmatprep.subr.bf16.mxu0 %v2022
          %2534 = vmatpush1.bf16.msra.mxu0 %v2021
          %2535 = vmatprep.subr.bf16.mxu0 %v2016
          %2536 = vmatpush1.bf16.msra.mxu0 %v2015
          %2537 = vmatprep.subr.bf16.mxu0 %v2010
          %2538 = vmatpush1.bf16.msra.mxu0 %v2009
          %2539 = vmatprep.subr.bf16.mxu0 %v2004
          %2540 = vmatpush1.bf16.msra.mxu0 %v2003
          %2541 = vmatprep.subr.bf16.mxu0 %v1998
          %2542 = vmatpush1.bf16.msra.mxu0 %v1997
          %2543 = vmatprep.subr.bf16.mxu0 %v2088
          %2544 = vmatpush2.bf16.msra.mxu0 %v2087
          %2545 = vmatprep.subr.bf16.mxu0 %v2082
          %2546 = vmatpush2.bf16.msra.mxu0 %v2081
          %2547 = vmatprep.subr.bf16.mxu0 %v2076
          %2548 = vmatpush2.bf16.msra.mxu0 %v2075
          %2549 = vmatprep.subr.bf16.mxu0 %v2070
          %2550 = vmatpush2.bf16.msra.mxu0 %v2069
          %2551 = vmatprep.subr.bf16.mxu0 %v2064
          %2552 = vmatpush2.bf16.msra.mxu0 %v2063
          %2553 = vmatprep.subr.bf16.mxu0 %v2058
          %2554 = vmatpush2.bf16.msra.mxu0 %v2057
          %2555 = vmatprep.subr.bf16.mxu0 %v2052
          %2556 = vmatpush2.bf16.msra.mxu0 %v2051
          %2557 = vmatprep.subr.bf16.mxu0 %v2046
          %2558 = vmatpush2.bf16.msra.mxu0 %v2045
          %2559 = vmatprep.mubr.bf16.mxu0 %v1844
          %2560 = vmatmul.mubr.bf16.gmra.mxu0 %v1843
          %v2561 = vpop.f32.mrf.mxu0
          %v2562 = vadd.f32 0.0, %v2561
          %v2563 = vpop.f32.mrf.mxu0
          %v2564 = vadd.f32 0.0, %v2563
          %v2565 = vpop.f32.mrf.mxu0
          %v2566 = vpop.f32.mrf.mxu0
          %2567 = vdwg.mxu0
          %2568 = vmatprep.subr.bf16.mxu0 %v2136
          %2569 = vmatpush1.bf16.msra.mxu0 %v2135
          %2570 = vmatprep.subr.bf16.mxu0 %v2130
          %2571 = vmatpush1.bf16.msra.mxu0 %v2129
          %2572 = vmatprep.subr.bf16.mxu0 %v2124
          %2573 = vmatpush1.bf16.msra.mxu0 %v2123
          %2574 = vmatprep.subr.bf16.mxu0 %v2118
          %2575 = vmatpush1.bf16.msra.mxu0 %v2117
          %2576 = vmatprep.subr.bf16.mxu0 %v2112
          %2577 = vmatpush1.bf16.msra.mxu0 %v2111
          %2578 = vmatprep.subr.bf16.mxu0 %v2106
          %2579 = vmatpush1.bf16.msra.mxu0 %v2105
          %2580 = vmatprep.subr.bf16.mxu0 %v2100
          %2581 = vmatpush1.bf16.msra.mxu0 %v2099
          %2582 = vmatprep.subr.bf16.mxu0 %v2094
          %2583 = vmatpush1.bf16.msra.mxu0 %v2093
          %2584 = vmatprep.subr.bf16.mxu0 %v2184
          %2585 = vmatpush2.bf16.msra.mxu0 %v2183
          %2586 = vmatprep.subr.bf16.mxu0 %v2178
          %2587 = vmatpush2.bf16.msra.mxu0 %v2177
          %2588 = vmatprep.subr.bf16.mxu0 %v2172
          %2589 = vmatpush2.bf16.msra.mxu0 %v2171
          %2590 = vmatprep.subr.bf16.mxu0 %v2166
          %2591 = vmatpush2.bf16.msra.mxu0 %v2165
          %2592 = vmatprep.subr.bf16.mxu0 %v2160
          %2593 = vmatpush2.bf16.msra.mxu0 %v2159
          %2594 = vmatprep.subr.bf16.mxu0 %v2154
          %2595 = vmatpush2.bf16.msra.mxu0 %v2153
          %2596 = vmatprep.subr.bf16.mxu0 %v2148
          %2597 = vmatpush2.bf16.msra.mxu0 %v2147
          %2598 = vmatprep.subr.bf16.mxu0 %v2142
          %2599 = vmatpush2.bf16.msra.mxu0 %v2141
          %2600 = vmatprep.mubr.bf16.mxu0 %v1846
          %2601 = vmatmul.mubr.bf16.gmra.mxu0 %v1845
          %v2602 = vpop.f32.mrf.mxu0
          %v2603 = vadd.f32 %v2562, %v2602
          %v2604 = vpop.f32.mrf.mxu0
          %v2605 = vadd.f32 %v2564, %v2604
          %v2606 = vpop.f32.mrf.mxu0
          %v2607 = vpop.f32.mrf.mxu0
          %2608 = vdwg.mxu0
          %2609 = vmatprep.subr.bf16.mxu0 %v2232
          %2610 = vmatpush1.bf16.msra.mxu0 %v2231
          %2611 = vmatprep.subr.bf16.mxu0 %v2226
          %2612 = vmatpush1.bf16.msra.mxu0 %v2225
          %2613 = vmatprep.subr.bf16.mxu0 %v2220
          %2614 = vmatpush1.bf16.msra.mxu0 %v2219
          %2615 = vmatprep.subr.bf16.mxu0 %v2214
          %2616 = vmatpush1.bf16.msra.mxu0 %v2213
          %2617 = vmatprep.subr.bf16.mxu0 %v2208
          %2618 = vmatpush1.bf16.msra.mxu0 %v2207
          %2619 = vmatprep.subr.bf16.mxu0 %v2202
          %2620 = vmatpush1.bf16.msra.mxu0 %v2201
          %2621 = vmatprep.subr.bf16.mxu0 %v2196
          %2622 = vmatpush1.bf16.msra.mxu0 %v2195
          %2623 = vmatprep.subr.bf16.mxu0 %v2190
          %2624 = vmatpush1.bf16.msra.mxu0 %v2189
          %2625 = vmatprep.subr.bf16.mxu0 %v2280
          %2626 = vmatpush2.bf16.msra.mxu0 %v2279
          %2627 = vmatprep.subr.bf16.mxu0 %v2274
          %2628 = vmatpush2.bf16.msra.mxu0 %v2273
          %2629 = vmatprep.subr.bf16.mxu0 %v2268
          %2630 = vmatpush2.bf16.msra.mxu0 %v2267
          %2631 = vmatprep.subr.bf16.mxu0 %v2262
          %2632 = vmatpush2.bf16.msra.mxu0 %v2261
          %2633 = vmatprep.subr.bf16.mxu0 %v2256
          %2634 = vmatpush2.bf16.msra.mxu0 %v2255
          %2635 = vmatprep.subr.bf16.mxu0 %v2250
          %2636 = vmatpush2.bf16.msra.mxu0 %v2249
          %2637 = vmatprep.subr.bf16.mxu0 %v2244
          %2638 = vmatpush2.bf16.msra.mxu0 %v2243
          %2639 = vmatprep.subr.bf16.mxu0 %v2238
          %2640 = vmatpush2.bf16.msra.mxu0 %v2237
          %2641 = vmatprep.mubr.bf16.mxu0 %v1848
          %2642 = vmatmul.mubr.bf16.gmra.mxu0 %v1847
          %v2643 = vpop.f32.mrf.mxu0
          %v2644 = vadd.f32 %v2603, %v2643
          %v2645 = vpop.f32.mrf.mxu0
          %v2646 = vadd.f32 %v2605, %v2645
          %v2647 = vpop.f32.mrf.mxu0
          %v2648 = vpop.f32.mrf.mxu0
          %2649 = vdwg.mxu0
          %v2651 = vlaneseq
          %v2652 = vshrl.u32 %v2651, 7
          %v2653 = vsub.s32 0, %v2652
          %v2654 = vrot.slane %v1840, %v2653
          %v2655 = vlaneseq
          %v2656 = vshrl.u32 %v2655, 7
          %v2657 = vsub.s32 1, %v2656
          %v2658 = vrot.slane %v1840, %v2657
          %v2659 = vlaneseq
          %v2660 = vshrl.u32 %v2659, 7
          %v2661 = vsub.s32 2, %v2660
          %v2662 = vrot.slane %v1840, %v2661
          %v2663 = vlaneseq
          %v2664 = vshrl.u32 %v2663, 7
          %v2665 = vsub.s32 3, %v2664
          %v2666 = vrot.slane %v1840, %v2665
          %v2667 = vlaneseq
          %v2668 = vshrl.u32 %v2667, 7
          %v2669 = vsub.s32 4, %v2668
          %v2670 = vrot.slane %v1840, %v2669
          %v2671 = vlaneseq
          %v2672 = vshrl.u32 %v2671, 7
          %v2673 = vsub.s32 5, %v2672
          %v2674 = vrot.slane %v1840, %v2673
          %v2681 = vmul.f32 %v2398, %v2654
          %v2682 = vmul.f32 %v2400, %v2658
          %v2683 = vmul.f32 %v2521, %v2662
          %v2684 = vmul.f32 %v2523, %v2666
          %v2685 = vmul.f32 %v2644, %v2670
          %v2686 = vmul.f32 %v2646, %v2674
          %v2688 = vlaneseq
          %v2689 = vshrl.u32 %v2688, 7
          %v2690 = vsub.s32 0, %v2689
          %v2691 = vrot.slane %v1842, %v2690
          %v2692 = vlaneseq
          %v2693 = vshrl.u32 %v2692, 7
          %v2694 = vsub.s32 1, %v2693
          %v2695 = vrot.slane %v1842, %v2694
          %v2696 = vlaneseq
          %v2697 = vshrl.u32 %v2696, 7
          %v2698 = vsub.s32 2, %v2697
          %v2699 = vrot.slane %v1842, %v2698
          %v2700 = vlaneseq
          %v2701 = vshrl.u32 %v2700, 7
          %v2702 = vsub.s32 3, %v2701
          %v2703 = vrot.slane %v1842, %v2702
          %v2704 = vlaneseq
          %v2705 = vshrl.u32 %v2704, 7
          %v2706 = vsub.s32 4, %v2705
          %v2707 = vrot.slane %v1842, %v2706
          %v2708 = vlaneseq
          %v2709 = vshrl.u32 %v2708, 7
          %v2710 = vsub.s32 5, %v2709
          %v2711 = vrot.slane %v1842, %v2710
          %v2718 = vadd.f32 %v2681, %v2691
          %v2719 = vadd.f32 %v2682, %v2695
          %v2720 = vadd.f32 %v2683, %v2699
          %v2721 = vadd.f32 %v2684, %v2703
          %v2722 = vadd.f32 %v2685, %v2707
          %v2723 = vadd.f32 %v2686, %v2711
          %v2724 = vmul.f32 %v2718, %v2718
          %v2725 = vmul.f32 %v2719, %v2719
          %v2726 = vmul.f32 %v2720, %v2720
          %v2727 = vmul.f32 %v2721, %v2721
          %v2728 = vmul.f32 %v2722, %v2722
          %v2729 = vmul.f32 %v2723, %v2723
          %v2730 = vadd.f32 %v2724, %v2725
          %v2731 = vadd.f32 %v2730, %v2726
          %v2732 = vadd.f32 %v2731, %v2727
          %v2733 = vadd.f32 %v2732, %v2728
          %v2734 = vadd.f32 %v2733, %v2729
          %2735 = vadd.xlane.f32.xlu0 %v2734
          %v2736 = vpop.xlane.xlu0 %2735
          %v2737 = vrsqrt.pop %v2736
          %v2738 = vmul.f32 %v2736, %v2737
          %vm2739 = vcmp.eq.f32.partialorder %v2736, inf
          %v2740 = vsel %vm2739, %v2736, %v2738
          %vm2741 = vcmp.eq.f32.partialorder %v2736, 0.0
          %v2742 = vand.u32 %v2736, 2147483648
          %v2743 = vsel %vm2741, %v2742, %v2740
          %v2744 = vmax.f32 %v2743, 1e-12
          %v2745 = vrcp.pop %v2744
          %v2746 = vmul.f32 %v2718, %v2745
          %v2747 = vmul.f32 %v2719, %v2745
          %v2748 = vmul.f32 %v2720, %v2745
          %v2749 = vmul.f32 %v2721, %v2745
          %v2750 = vmul.f32 %v2722, %v2745
          %v2751 = vmul.f32 %v2723, %v2745
          %2752 = vst [vmem:[#allocation3] sm:$0xff] %v2746
          %2753 = vst [vmem:[#allocation3 + $0x8] sm:$0xff] %v2747
          %2754 = vst [vmem:[#allocation3 + $0x10] sm:$0xff] %v2748
          %2755 = vst [vmem:[#allocation3 + $0x18] sm:$0xff] %v2749
          %2756 = vst [vmem:[#allocation3 + $0x20] sm:$0xff] %v2750
          %2757 = vst [vmem:[#allocation3 + $0x28] sm:$0xff] %v2751
          %2758 = vst [vmem:[#allocation4] sm:$0xff] 0.0
          %2759 = vst [vmem:[#allocation4 + $0x8] sm:$0xff] 0.0
          %2760 = vst [vmem:[#allocation4 + $0x10] sm:$0xff] 0.0
          %2761 = vst [vmem:[#allocation4 + $0x18] sm:$0xff] 0.0
          %2762 = vst [vmem:[#allocation4 + $0x20] sm:$0xff] 0.0
          %2763 = vst [vmem:[#allocation4 + $0x28] sm:$0xff] 0.0
          %2764 = vst [vmem:[#allocation4 + $0x30] sm:$0xff] 0.0
          %2765 = vst [vmem:[#allocation4 + $0x38] sm:$0xff] 0.0
          %2766 = vst [vmem:[#allocation4 + $0x40] sm:$0xff] 0.0
          %2767 = vst [vmem:[#allocation4 + $0x48] sm:$0xff] 0.0
          %2768 = vst [vmem:[#allocation4 + $0x50] sm:$0xff] 0.0
          %2769 = vst [vmem:[#allocation4 + $0x58] sm:$0xff] 0.0
          %vm2770 = vcmask 523264
          %2771 = vst.msk [vmem:[#allocation4 + $0x60] sm:$0xff] %vm2770, 0.0
        $region128: #{mm_model_forward.1} parent=107 // pred_fallthru
          _
        %v2772 = vld [vmem:[#allocation2] sm:$0xff]
        %v2773 = vld [vmem:[#allocation2 + $0x8] sm:$0xff]
        %v2774 = vld [vmem:[#allocation2 + $0x10] sm:$0xff]
        %v2775 = vld [vmem:[#allocation2 + $0x18] sm:$0xff]
        %v2776 = vld [vmem:[#allocation2 + $0x20] sm:$0xff]
        %v2777 = vld [vmem:[#allocation2 + $0x28] sm:$0xff]
        %s2778 = scalar_lea.vmem %s7, %s905
        %v2779 = vld [vmem:[%s2778] sm:$0x1]
        %s2780 = scalar_lea.vmem %s8, %s905
        %v2781 = vld [vmem:[%s2780] sm:$0x1]
        %v2782 = vpack.c.bf16 %v2772, %v2772
        %v2783 = vpack.c.bf16 %v2773, %v2773
        %v2784 = vpack.c.bf16 %v2774, %v2774
        %v2785 = vpack.c.bf16 %v2775, %v2775
        %v2786 = vpack.c.bf16 %v2776, %v2776
        %v2787 = vpack.c.bf16 %v2777, %v2777
        %v2788 = vld [vmem:[%s860] sm:$0xff]
        %v2789 = vld [vmem:[%s860 + $0x8] sm:$0xff]
        %v2790 = vld [vmem:[%s860 + $0x10] sm:$0xff]
        %v2791 = vld [vmem:[%s860 + $0x18] sm:$0xff]
        %v2792 = vld [vmem:[%s860 + $0x20] sm:$0xff]
        %v2793 = vld [vmem:[%s860 + $0x28] sm:$0xff]
        %v2794 = vld [vmem:[%s860 + $0x30] sm:$0xff]
        %v2795 = vld [vmem:[%s860 + $0x38] sm:$0xff]
        %v2796 = vld [vmem:[%s860 + $0x40] sm:$0xff]
        %v2797 = vld [vmem:[%s860 + $0x48] sm:$0xff]
        %v2798 = vld [vmem:[%s860 + $0x50] sm:$0xff]
        %v2799 = vld [vmem:[%s860 + $0x58] sm:$0xff]
        %v2800 = vld [vmem:[%s860 + $0x60] sm:$0xff]
        %v2801 = vld [vmem:[%s860 + $0x68] sm:$0xff]
        %v2802 = vld [vmem:[%s860 + $0x70] sm:$0xff]
        %v2803 = vld [vmem:[%s860 + $0x78] sm:$0xff]
        %v2804 = vld [vmem:[%s860 + $0x80] sm:$0xff]
        %v2805 = vld [vmem:[%s860 + $0x88] sm:$0xff]
        %v2806 = vld [vmem:[%s860 + $0x90] sm:$0xff]
        %v2807 = vld [vmem:[%s860 + $0x98] sm:$0xff]
        %v2808 = vld [vmem:[%s860 + $0xa0] sm:$0xff]
        %v2809 = vld [vmem:[%s860 + $0xa8] sm:$0xff]
        %v2810 = vld [vmem:[%s860 + $0xb0] sm:$0xff]
        %v2811 = vld [vmem:[%s860 + $0xb8] sm:$0xff]
        %v2812 = vunpack.c.l.s8.bf16 %v2788
        %v2813 = vunpack.c.h.s8.bf16 %v2788
        %v2814 = vunpack.c.l.s8.bf16 %v2789
        %v2815 = vunpack.c.h.s8.bf16 %v2789
        %v2816 = vunpack.c.l.s8.bf16 %v2790
        %v2817 = vunpack.c.h.s8.bf16 %v2790
        %v2818 = vunpack.c.l.s8.bf16 %v2791
        %v2819 = vunpack.c.h.s8.bf16 %v2791
        %v2820 = vunpack.c.l.s8.bf16 %v2792
        %v2821 = vunpack.c.h.s8.bf16 %v2792
        %v2822 = vunpack.c.l.s8.bf16 %v2793
        %v2823 = vunpack.c.h.s8.bf16 %v2793
        %v2824 = vunpack.c.l.s8.bf16 %v2794
        %v2825 = vunpack.c.h.s8.bf16 %v2794
        %v2826 = vunpack.c.l.s8.bf16 %v2795
        %v2827 = vunpack.c.h.s8.bf16 %v2795
        %v2828 = vunpack.c.l.s8.bf16 %v2796
        %v2829 = vunpack.c.h.s8.bf16 %v2796
        %v2830 = vunpack.c.l.s8.bf16 %v2797
        %v2831 = vunpack.c.h.s8.bf16 %v2797
        %v2832 = vunpack.c.l.s8.bf16 %v2798
        %v2833 = vunpack.c.h.s8.bf16 %v2798
        %v2834 = vunpack.c.l.s8.bf16 %v2799
        %v2835 = vunpack.c.h.s8.bf16 %v2799
        %v2836 = vunpack.c.l.s8.bf16 %v2800
        %v2837 = vunpack.c.h.s8.bf16 %v2800
        %v2838 = vunpack.c.l.s8.bf16 %v2801
        %v2839 = vunpack.c.h.s8.bf16 %v2801
        %v2840 = vunpack.c.l.s8.bf16 %v2802
        %v2841 = vunpack.c.h.s8.bf16 %v2802
        %v2842 = vunpack.c.l.s8.bf16 %v2803
        %v2843 = vunpack.c.h.s8.bf16 %v2803
        %v2844 = vunpack.c.l.s8.bf16 %v2804
        %v2845 = vunpack.c.h.s8.bf16 %v2804
        %v2846 = vunpack.c.l.s8.bf16 %v2805
        %v2847 = vunpack.c.h.s8.bf16 %v2805
        %v2848 = vunpack.c.l.s8.bf16 %v2806
        %v2849 = vunpack.c.h.s8.bf16 %v2806
        %v2850 = vunpack.c.l.s8.bf16 %v2807
        %v2851 = vunpack.c.h.s8.bf16 %v2807
        %v2852 = vunpack.c.l.s8.bf16 %v2808
        %v2853 = vunpack.c.h.s8.bf16 %v2808
        %v2854 = vunpack.c.l.s8.bf16 %v2809
        %v2855 = vunpack.c.h.s8.bf16 %v2809
        %v2856 = vunpack.c.l.s8.bf16 %v2810
        %v2857 = vunpack.c.h.s8.bf16 %v2810
        %v2858 = vunpack.c.l.s8.bf16 %v2811
        %v2859 = vunpack.c.h.s8.bf16 %v2811
        %2860 = vmatprep.subr.bf16.mxu0 0
        %2861 = vmatpush1.bf16.msra.mxu0 %v2819
        %2862 = vmatprep.subr.bf16.mxu0 0
        %2863 = vmatpush1.bf16.msra.mxu0 %v2818
        %2864 = vmatprep.subr.bf16.mxu0 0
        %2865 = vmatpush1.bf16.msra.mxu0 %v2817
        %2866 = vmatprep.subr.bf16.mxu0 0
        %2867 = vmatpush1.bf16.msra.mxu0 %v2816
        %2868 = vmatprep.subr.bf16.mxu0 0
        %2869 = vmatpush1.bf16.msra.mxu0 %v2815
        %2870 = vmatprep.subr.bf16.mxu0 0
        %2871 = vmatpush1.bf16.msra.mxu0 %v2814
        %2872 = vmatprep.subr.bf16.mxu0 0
        %2873 = vmatpush1.bf16.msra.mxu0 %v2813
        %2874 = vmatprep.subr.bf16.mxu0 0
        %2875 = vmatpush1.bf16.msra.mxu0 %v2812
        %2876 = vmatprep.subr.bf16.mxu0 0
        %2877 = vmatpush2.bf16.msra.mxu0 %v2827
        %2878 = vmatprep.subr.bf16.mxu0 0
        %2879 = vmatpush2.bf16.msra.mxu0 %v2826
        %2880 = vmatprep.subr.bf16.mxu0 0
        %2881 = vmatpush2.bf16.msra.mxu0 %v2825
        %2882 = vmatprep.subr.bf16.mxu0 0
        %2883 = vmatpush2.bf16.msra.mxu0 %v2824
        %2884 = vmatprep.subr.bf16.mxu0 0
        %2885 = vmatpush2.bf16.msra.mxu0 %v2823
        %2886 = vmatprep.subr.bf16.mxu0 0
        %2887 = vmatpush2.bf16.msra.mxu0 %v2822
        %2888 = vmatprep.subr.bf16.mxu0 0
        %2889 = vmatpush2.bf16.msra.mxu0 %v2821
        %2890 = vmatprep.subr.bf16.mxu0 0
        %2891 = vmatpush2.bf16.msra.mxu0 %v2820
        %2892 = vmatprep.mubr.bf16.mxu0 %v2783
        %2893 = vmatmul.mubr.bf16.gmra.mxu0 %v2782
        %v2894 = vpop.f32.mrf.mxu0
        %v2895 = vadd.f32 0.0, %v2894
        %v2896 = vpop.f32.mrf.mxu0
        %v2897 = vpop.f32.mrf.mxu0
        %v2898 = vpop.f32.mrf.mxu0
        %2899 = vdwg.mxu0
        %2900 = vmatprep.subr.bf16.mxu0 0
        %2901 = vmatpush1.bf16.msra.mxu0 %v2835
        %2902 = vmatprep.subr.bf16.mxu0 0
        %2903 = vmatpush1.bf16.msra.mxu0 %v2834
        %2904 = vmatprep.subr.bf16.mxu0 0
        %2905 = vmatpush1.bf16.msra.mxu0 %v2833
        %2906 = vmatprep.subr.bf16.mxu0 0
        %2907 = vmatpush1.bf16.msra.mxu0 %v2832
        %2908 = vmatprep.subr.bf16.mxu0 0
        %2909 = vmatpush1.bf16.msra.mxu0 %v2831
        %2910 = vmatprep.subr.bf16.mxu0 0
        %2911 = vmatpush1.bf16.msra.mxu0 %v2830
        %2912 = vmatprep.subr.bf16.mxu0 0
        %2913 = vmatpush1.bf16.msra.mxu0 %v2829
        %2914 = vmatprep.subr.bf16.mxu0 0
        %2915 = vmatpush1.bf16.msra.mxu0 %v2828
        %2916 = vmatprep.subr.bf16.mxu0 0
        %2917 = vmatpush2.bf16.msra.mxu0 %v2843
        %2918 = vmatprep.subr.bf16.mxu0 0
        %2919 = vmatpush2.bf16.msra.mxu0 %v2842
        %2920 = vmatprep.subr.bf16.mxu0 0
        %2921 = vmatpush2.bf16.msra.mxu0 %v2841
        %2922 = vmatprep.subr.bf16.mxu0 0
        %2923 = vmatpush2.bf16.msra.mxu0 %v2840
        %2924 = vmatprep.subr.bf16.mxu0 0
        %2925 = vmatpush2.bf16.msra.mxu0 %v2839
        %2926 = vmatprep.subr.bf16.mxu0 0
        %2927 = vmatpush2.bf16.msra.mxu0 %v2838
        %2928 = vmatprep.subr.bf16.mxu0 0
        %2929 = vmatpush2.bf16.msra.mxu0 %v2837
        %2930 = vmatprep.subr.bf16.mxu0 0
        %2931 = vmatpush2.bf16.msra.mxu0 %v2836
        %2932 = vmatprep.mubr.bf16.mxu0 %v2785
        %2933 = vmatmul.mubr.bf16.gmra.mxu0 %v2784
        %v2934 = vpop.f32.mrf.mxu0
        %v2935 = vadd.f32 %v2895, %v2934
        %v2936 = vpop.f32.mrf.mxu0
        %v2937 = vpop.f32.mrf.mxu0
        %v2938 = vpop.f32.mrf.mxu0
        %2939 = vdwg.mxu0
        %2940 = vmatprep.subr.bf16.mxu0 0
        %2941 = vmatpush1.bf16.msra.mxu0 %v2851
        %2942 = vmatprep.subr.bf16.mxu0 0
        %2943 = vmatpush1.bf16.msra.mxu0 %v2850
        %2944 = vmatprep.subr.bf16.mxu0 0
        %2945 = vmatpush1.bf16.msra.mxu0 %v2849
        %2946 = vmatprep.subr.bf16.mxu0 0
        %2947 = vmatpush1.bf16.msra.mxu0 %v2848
        %2948 = vmatprep.subr.bf16.mxu0 0
        %2949 = vmatpush1.bf16.msra.mxu0 %v2847
        %2950 = vmatprep.subr.bf16.mxu0 0
        %2951 = vmatpush1.bf16.msra.mxu0 %v2846
        %2952 = vmatprep.subr.bf16.mxu0 0
        %2953 = vmatpush1.bf16.msra.mxu0 %v2845
        %2954 = vmatprep.subr.bf16.mxu0 0
        %2955 = vmatpush1.bf16.msra.mxu0 %v2844
        %2956 = vmatprep.subr.bf16.mxu0 0
        %2957 = vmatpush2.bf16.msra.mxu0 %v2859
        %2958 = vmatprep.subr.bf16.mxu0 0
        %2959 = vmatpush2.bf16.msra.mxu0 %v2858
        %2960 = vmatprep.subr.bf16.mxu0 0
        %2961 = vmatpush2.bf16.msra.mxu0 %v2857
        %2962 = vmatprep.subr.bf16.mxu0 0
        %2963 = vmatpush2.bf16.msra.mxu0 %v2856
        %2964 = vmatprep.subr.bf16.mxu0 0
        %2965 = vmatpush2.bf16.msra.mxu0 %v2855
        %2966 = vmatprep.subr.bf16.mxu0 0
        %2967 = vmatpush2.bf16.msra.mxu0 %v2854
        %2968 = vmatprep.subr.bf16.mxu0 0
        %2969 = vmatpush2.bf16.msra.mxu0 %v2853
        %2970 = vmatprep.subr.bf16.mxu0 0
        %2971 = vmatpush2.bf16.msra.mxu0 %v2852
        %2972 = vmatprep.mubr.bf16.mxu0 %v2787
        %2973 = vmatmul.mubr.bf16.gmra.mxu0 %v2786
        %v2974 = vpop.f32.mrf.mxu0
        %v2975 = vadd.f32 %v2935, %v2974
        %v2976 = vpop.f32.mrf.mxu0
        %v2977 = vpop.f32.mrf.mxu0
        %v2978 = vpop.f32.mrf.mxu0
        %2979 = vdwg.mxu0
        %v2980 = vlaneseq
        %v2981 = vshrl.u32 %v2980, 7
        %v2982 = vsub.s32 0, %v2981
        %v2983 = vrot.slane %v2779, %v2982
        %v2984 = vmul.f32 %v2975, %v2983
        %v2985 = vlaneseq
        %v2986 = vshrl.u32 %v2985, 7
        %v2987 = vsub.s32 0, %v2986
        %v2988 = vrot.slane %v2781, %v2987
        %v2989 = vadd.f32 %v2984, %v2988
        %v2990 = vld [vmem:[#allocation3] sm:$0xff]
        %v2991 = vld [vmem:[#allocation3 + $0x8] sm:$0xff]
        %v2992 = vld [vmem:[#allocation3 + $0x10] sm:$0xff]
        %v2993 = vld [vmem:[#allocation3 + $0x18] sm:$0xff]
        %v2994 = vld [vmem:[#allocation3 + $0x20] sm:$0xff]
        %v2995 = vld [vmem:[#allocation3 + $0x28] sm:$0xff]
        %s2996 = scalar_lea.vmem %s10, %s905
        %v2997 = vld [vmem:[%s2996] sm:$0x1]
        %s2998 = scalar_lea.vmem %s11, %s905
        %v2999 = vld [vmem:[%s2998] sm:$0x1]
        %v3000 = vpack.c.bf16 %v2990, %v2990
        %v3001 = vpack.c.bf16 %v2991, %v2991
        %v3002 = vpack.c.bf16 %v2992, %v2992
        %v3003 = vpack.c.bf16 %v2993, %v2993
        %v3004 = vpack.c.bf16 %v2994, %v2994
        %v3005 = vpack.c.bf16 %v2995, %v2995
        %v3006 = vld [vmem:[%s869] sm:$0xff]
        %v3007 = vld [vmem:[%s869 + $0x8] sm:$0xff]
        %v3008 = vld [vmem:[%s869 + $0x10] sm:$0xff]
        %v3009 = vld [vmem:[%s869 + $0x18] sm:$0xff]
        %v3010 = vld [vmem:[%s869 + $0x20] sm:$0xff]
        %v3011 = vld [vmem:[%s869 + $0x28] sm:$0xff]
        %v3012 = vld [vmem:[%s869 + $0x30] sm:$0xff]
        %v3013 = vld [vmem:[%s869 + $0x38] sm:$0xff]
        %v3014 = vld [vmem:[%s869 + $0x40] sm:$0xff]
        %v3015 = vld [vmem:[%s869 + $0x48] sm:$0xff]
        %v3016 = vld [vmem:[%s869 + $0x50] sm:$0xff]
        %v3017 = vld [vmem:[%s869 + $0x58] sm:$0xff]
        %v3018 = vld [vmem:[%s869 + $0x60] sm:$0xff]
        %v3019 = vld [vmem:[%s869 + $0x68] sm:$0xff]
        %v3020 = vld [vmem:[%s869 + $0x70] sm:$0xff]
        %v3021 = vld [vmem:[%s869 + $0x78] sm:$0xff]
        %v3022 = vld [vmem:[%s869 + $0x80] sm:$0xff]
        %v3023 = vld [vmem:[%s869 + $0x88] sm:$0xff]
        %v3024 = vld [vmem:[%s869 + $0x90] sm:$0xff]
        %v3025 = vld [vmem:[%s869 + $0x98] sm:$0xff]
        %v3026 = vld [vmem:[%s869 + $0xa0] sm:$0xff]
        %v3027 = vld [vmem:[%s869 + $0xa8] sm:$0xff]
        %v3028 = vld [vmem:[%s869 + $0xb0] sm:$0xff]
        %v3029 = vld [vmem:[%s869 + $0xb8] sm:$0xff]
        %v3030 = vunpack.c.l.s8.bf16 %v3006
        %v3031 = vunpack.c.h.s8.bf16 %v3006
        %v3032 = vunpack.c.l.s8.bf16 %v3007
        %v3033 = vunpack.c.h.s8.bf16 %v3007
        %v3034 = vunpack.c.l.s8.bf16 %v3008
        %v3035 = vunpack.c.h.s8.bf16 %v3008
        %v3036 = vunpack.c.l.s8.bf16 %v3009
        %v3037 = vunpack.c.h.s8.bf16 %v3009
        %v3038 = vunpack.c.l.s8.bf16 %v3010
        %v3039 = vunpack.c.h.s8.bf16 %v3010
        %v3040 = vunpack.c.l.s8.bf16 %v3011
        %v3041 = vunpack.c.h.s8.bf16 %v3011
        %v3042 = vunpack.c.l.s8.bf16 %v3012
        %v3043 = vunpack.c.h.s8.bf16 %v3012
        %v3044 = vunpack.c.l.s8.bf16 %v3013
        %v3045 = vunpack.c.h.s8.bf16 %v3013
        %v3046 = vunpack.c.l.s8.bf16 %v3014
        %v3047 = vunpack.c.h.s8.bf16 %v3014
        %v3048 = vunpack.c.l.s8.bf16 %v3015
        %v3049 = vunpack.c.h.s8.bf16 %v3015
        %v3050 = vunpack.c.l.s8.bf16 %v3016
        %v3051 = vunpack.c.h.s8.bf16 %v3016
        %v3052 = vunpack.c.l.s8.bf16 %v3017
        %v3053 = vunpack.c.h.s8.bf16 %v3017
        %v3054 = vunpack.c.l.s8.bf16 %v3018
        %v3055 = vunpack.c.h.s8.bf16 %v3018
        %v3056 = vunpack.c.l.s8.bf16 %v3019
        %v3057 = vunpack.c.h.s8.bf16 %v3019
        %v3058 = vunpack.c.l.s8.bf16 %v3020
        %v3059 = vunpack.c.h.s8.bf16 %v3020
        %v3060 = vunpack.c.l.s8.bf16 %v3021
        %v3061 = vunpack.c.h.s8.bf16 %v3021
        %v3062 = vunpack.c.l.s8.bf16 %v3022
        %v3063 = vunpack.c.h.s8.bf16 %v3022
        %v3064 = vunpack.c.l.s8.bf16 %v3023
        %v3065 = vunpack.c.h.s8.bf16 %v3023
        %v3066 = vunpack.c.l.s8.bf16 %v3024
        %v3067 = vunpack.c.h.s8.bf16 %v3024
        %v3068 = vunpack.c.l.s8.bf16 %v3025
        %v3069 = vunpack.c.h.s8.bf16 %v3025
        %v3070 = vunpack.c.l.s8.bf16 %v3026
        %v3071 = vunpack.c.h.s8.bf16 %v3026
        %v3072 = vunpack.c.l.s8.bf16 %v3027
        %v3073 = vunpack.c.h.s8.bf16 %v3027
        %v3074 = vunpack.c.l.s8.bf16 %v3028
        %v3075 = vunpack.c.h.s8.bf16 %v3028
        %v3076 = vunpack.c.l.s8.bf16 %v3029
        %v3077 = vunpack.c.h.s8.bf16 %v3029
        %3078 = vmatprep.subr.bf16.mxu0 0
        %3079 = vmatpush1.bf16.msra.mxu0 %v3037
        %3080 = vmatprep.subr.bf16.mxu0 0
        %3081 = vmatpush1.bf16.msra.mxu0 %v3036
        %3082 = vmatprep.subr.bf16.mxu0 0
        %3083 = vmatpush1.bf16.msra.mxu0 %v3035
        %3084 = vmatprep.subr.bf16.mxu0 0
        %3085 = vmatpush1.bf16.msra.mxu0 %v3034
        %3086 = vmatprep.subr.bf16.mxu0 0
        %3087 = vmatpush1.bf16.msra.mxu0 %v3033
        %3088 = vmatprep.subr.bf16.mxu0 0
        %3089 = vmatpush1.bf16.msra.mxu0 %v3032
        %3090 = vmatprep.subr.bf16.mxu0 0
        %3091 = vmatpush1.bf16.msra.mxu0 %v3031
        %3092 = vmatprep.subr.bf16.mxu0 0
        %3093 = vmatpush1.bf16.msra.mxu0 %v3030
        %3094 = vmatprep.subr.bf16.mxu0 0
        %3095 = vmatpush2.bf16.msra.mxu0 %v3045
        %3096 = vmatprep.subr.bf16.mxu0 0
        %3097 = vmatpush2.bf16.msra.mxu0 %v3044
        %3098 = vmatprep.subr.bf16.mxu0 0
        %3099 = vmatpush2.bf16.msra.mxu0 %v3043
        %3100 = vmatprep.subr.bf16.mxu0 0
        %3101 = vmatpush2.bf16.msra.mxu0 %v3042
        %3102 = vmatprep.subr.bf16.mxu0 0
        %3103 = vmatpush2.bf16.msra.mxu0 %v3041
        %3104 = vmatprep.subr.bf16.mxu0 0
        %3105 = vmatpush2.bf16.msra.mxu0 %v3040
        %3106 = vmatprep.subr.bf16.mxu0 0
        %3107 = vmatpush2.bf16.msra.mxu0 %v3039
        %3108 = vmatprep.subr.bf16.mxu0 0
        %3109 = vmatpush2.bf16.msra.mxu0 %v3038
        %3110 = vmatprep.mubr.bf16.mxu0 %v3001
        %3111 = vmatmul.mubr.bf16.gmra.mxu0 %v3000
        %v3112 = vpop.f32.mrf.mxu0
        %v3113 = vadd.f32 0.0, %v3112
        %v3114 = vpop.f32.mrf.mxu0
        %v3115 = vpop.f32.mrf.mxu0
        %v3116 = vpop.f32.mrf.mxu0
        %3117 = vdwg.mxu0
        %3118 = vmatprep.subr.bf16.mxu0 0
        %3119 = vmatpush1.bf16.msra.mxu0 %v3053
        %3120 = vmatprep.subr.bf16.mxu0 0
        %3121 = vmatpush1.bf16.msra.mxu0 %v3052
        %3122 = vmatprep.subr.bf16.mxu0 0
        %3123 = vmatpush1.bf16.msra.mxu0 %v3051
        %3124 = vmatprep.subr.bf16.mxu0 0
        %3125 = vmatpush1.bf16.msra.mxu0 %v3050
        %3126 = vmatprep.subr.bf16.mxu0 0
        %3127 = vmatpush1.bf16.msra.mxu0 %v3049
        %3128 = vmatprep.subr.bf16.mxu0 0
        %3129 = vmatpush1.bf16.msra.mxu0 %v3048
        %3130 = vmatprep.subr.bf16.mxu0 0
        %3131 = vmatpush1.bf16.msra.mxu0 %v3047
        %3132 = vmatprep.subr.bf16.mxu0 0
        %3133 = vmatpush1.bf16.msra.mxu0 %v3046
        %3134 = vmatprep.subr.bf16.mxu0 0
        %3135 = vmatpush2.bf16.msra.mxu0 %v3061
        %3136 = vmatprep.subr.bf16.mxu0 0
        %3137 = vmatpush2.bf16.msra.mxu0 %v3060
        %3138 = vmatprep.subr.bf16.mxu0 0
        %3139 = vmatpush2.bf16.msra.mxu0 %v3059
        %3140 = vmatprep.subr.bf16.mxu0 0
        %3141 = vmatpush2.bf16.msra.mxu0 %v3058
        %3142 = vmatprep.subr.bf16.mxu0 0
        %3143 = vmatpush2.bf16.msra.mxu0 %v3057
        %3144 = vmatprep.subr.bf16.mxu0 0
        %3145 = vmatpush2.bf16.msra.mxu0 %v3056
        %3146 = vmatprep.subr.bf16.mxu0 0
        %3147 = vmatpush2.bf16.msra.mxu0 %v3055
        %3148 = vmatprep.subr.bf16.mxu0 0
        %3149 = vmatpush2.bf16.msra.mxu0 %v3054
        %3150 = vmatprep.mubr.bf16.mxu0 %v3003
        %3151 = vmatmul.mubr.bf16.gmra.mxu0 %v3002
        %v3152 = vpop.f32.mrf.mxu0
        %v3153 = vadd.f32 %v3113, %v3152
        %v3154 = vpop.f32.mrf.mxu0
        %v3155 = vpop.f32.mrf.mxu0
        %v3156 = vpop.f32.mrf.mxu0
        %3157 = vdwg.mxu0
        %3158 = vmatprep.subr.bf16.mxu0 0
        %3159 = vmatpush1.bf16.msra.mxu0 %v3069
        %3160 = vmatprep.subr.bf16.mxu0 0
        %3161 = vmatpush1.bf16.msra.mxu0 %v3068
        %3162 = vmatprep.subr.bf16.mxu0 0
        %3163 = vmatpush1.bf16.msra.mxu0 %v3067
        %3164 = vmatprep.subr.bf16.mxu0 0
        %3165 = vmatpush1.bf16.msra.mxu0 %v3066
        %3166 = vmatprep.subr.bf16.mxu0 0
        %3167 = vmatpush1.bf16.msra.mxu0 %v3065
        %3168 = vmatprep.subr.bf16.mxu0 0
        %3169 = vmatpush1.bf16.msra.mxu0 %v3064
        %3170 = vmatprep.subr.bf16.mxu0 0
        %3171 = vmatpush1.bf16.msra.mxu0 %v3063
        %3172 = vmatprep.subr.bf16.mxu0 0
        %3173 = vmatpush1.bf16.msra.mxu0 %v3062
        %3174 = vmatprep.subr.bf16.mxu0 0
        %3175 = vmatpush2.bf16.msra.mxu0 %v3077
        %3176 = vmatprep.subr.bf16.mxu0 0
        %3177 = vmatpush2.bf16.msra.mxu0 %v3076
        %3178 = vmatprep.subr.bf16.mxu0 0
        %3179 = vmatpush2.bf16.msra.mxu0 %v3075
        %3180 = vmatprep.subr.bf16.mxu0 0
        %3181 = vmatpush2.bf16.msra.mxu0 %v3074
        %3182 = vmatprep.subr.bf16.mxu0 0
        %3183 = vmatpush2.bf16.msra.mxu0 %v3073
        %3184 = vmatprep.subr.bf16.mxu0 0
        %3185 = vmatpush2.bf16.msra.mxu0 %v3072
        %3186 = vmatprep.subr.bf16.mxu0 0
        %3187 = vmatpush2.bf16.msra.mxu0 %v3071
        %3188 = vmatprep.subr.bf16.mxu0 0
        %3189 = vmatpush2.bf16.msra.mxu0 %v3070
        %3190 = vmatprep.mubr.bf16.mxu0 %v3005
        %3191 = vmatmul.mubr.bf16.gmra.mxu0 %v3004
        %v3192 = vpop.f32.mrf.mxu0
        %v3193 = vadd.f32 %v3153, %v3192
        %v3194 = vpop.f32.mrf.mxu0
        %v3195 = vpop.f32.mrf.mxu0
        %v3196 = vpop.f32.mrf.mxu0
        %3197 = vdwg.mxu0
        %v3198 = vlaneseq
        %v3199 = vshrl.u32 %v3198, 7
        %v3200 = vsub.s32 0, %v3199
        %v3201 = vrot.slane %v2997, %v3200
        %v3202 = vmul.f32 %v3193, %v3201
        %v3203 = vlaneseq
        %v3204 = vshrl.u32 %v3203, 7
        %v3205 = vsub.s32 0, %v3204
        %v3206 = vrot.slane %v2999, %v3205
        %v3207 = vadd.f32 %v3202, %v3206
        %s3208 = sshra.s32 %s905, 3
        %s3209 = sand.u32 %s905, 7
        %s3210 = sshra.s32 %s905, 3
        %s3211 = sand.u32 %s905, 7
        %s3212 = smul.u32 %s3208, 10
        %s3213 = smul.u32 %s3212, 8
        %s3214 = sadd.s32 %s3213, %s3211
        %s3215 = scalar_lea.vmem %s13, %s3214
        %v3216 = vld [vmem:[%s3215] ss:$8 sm:$0xf]
        %v3217 = vld [vmem:[%s3215] ss:$8 sm:$0xf0]
        %v3218 = vor.u32 %v3216, %v3217
        %s3219 = sadd.s32 %s3212, 8
        %s3220 = smul.u32 %s3219, 8
        %s3221 = sadd.s32 %s3220, %s3211
        %s3222 = scalar_lea.vmem %s13, %s3221
        %v3223 = vld [vmem:[%s3222] ss:$8 sm:$0x3]
        %s3224 = scalar_lea.vmem %s14, %s3214
        %v3225 = vld [vmem:[%s3224] ss:$8 sm:$0xf]
        %v3226 = vld [vmem:[%s3224] ss:$8 sm:$0xf0]
        %v3227 = vor.u32 %v3225, %v3226
        %s3228 = scalar_lea.vmem %s14, %s3221
        %v3229 = vld [vmem:[%s3228] ss:$8 sm:$0x3]
        %v3230 = vpack.c.bf16 %v2989, %v2989
        %v3231 = vld [vmem:[%s878] sm:$0xff]
        %v3232 = vld [vmem:[%s878 + $0x8] sm:$0xff]
        %v3233 = vld [vmem:[%s878 + $0x10] sm:$0xf]
        %v3234 = vld [vmem:[%s878 + $0x14] sm:$0xff]
        %v3235 = vld [vmem:[%s878 + $0x1c] sm:$0xff]
        %v3236 = vld [vmem:[%s878 + $0x24] sm:$0xf]
        %v3237 = vld [vmem:[%s878 + $0x28] sm:$0xff]
        %v3238 = vld [vmem:[%s878 + $0x30] sm:$0xff]
        %v3239 = vld [vmem:[%s878 + $0x38] sm:$0xf]
        %v3240 = vld [vmem:[%s878 + $0x3c] sm:$0xff]
        %v3241 = vld [vmem:[%s878 + $0x44] sm:$0xff]
        %v3242 = vld [vmem:[%s878 + $0x4c] sm:$0xf]
        %v3243 = vld [vmem:[%s878 + $0x50] sm:$0xff]
        %v3244 = vld [vmem:[%s878 + $0x58] sm:$0xff]
        %v3245 = vld [vmem:[%s878 + $0x60] sm:$0xf]
        %v3246 = vld [vmem:[%s878 + $0x64] sm:$0xff]
        %v3247 = vld [vmem:[%s878 + $0x6c] sm:$0xff]
        %v3248 = vld [vmem:[%s878 + $0x74] sm:$0xf]
        %v3249 = vld [vmem:[%s878 + $0x78] sm:$0xff]
        %v3250 = vld [vmem:[%s878 + $0x80] sm:$0xff]
        %v3251 = vld [vmem:[%s878 + $0x88] sm:$0xf]
        %v3252 = vld [vmem:[%s878 + $0x8c] sm:$0xff]
        %v3253 = vld [vmem:[%s878 + $0x94] sm:$0xff]
        %v3254 = vld [vmem:[%s878 + $0x9c] sm:$0xf]
        %v3255 = vld [vmem:[%s878 + $0xa0] sm:$0xff]
        %v3256 = vld [vmem:[%s878 + $0xa8] sm:$0xff]
        %v3257 = vld [vmem:[%s878 + $0xb0] sm:$0xf]
        %v3258 = vld [vmem:[%s878 + $0xb4] sm:$0xff]
        %v3259 = vld [vmem:[%s878 + $0xbc] sm:$0xff]
        %v3260 = vld [vmem:[%s878 + $0xc4] sm:$0xf]
        %v3261 = vunpack.c.l.s8.bf16 %v3231
        %v3262 = vunpack.c.h.s8.bf16 %v3231
        %v3263 = vunpack.c.l.s8.bf16 %v3232
        %v3264 = vunpack.c.h.s8.bf16 %v3232
        %v3265 = vunpack.c.l.s8.bf16 %v3233
        %v3266 = vunpack.c.l.s8.bf16 %v3234
        %v3267 = vunpack.c.h.s8.bf16 %v3234
        %v3268 = vunpack.c.l.s8.bf16 %v3235
        %v3269 = vunpack.c.h.s8.bf16 %v3235
        %v3270 = vunpack.c.l.s8.bf16 %v3236
        %v3271 = vunpack.c.l.s8.bf16 %v3237
        %v3272 = vunpack.c.h.s8.bf16 %v3237
        %v3273 = vunpack.c.l.s8.bf16 %v3238
        %v3274 = vunpack.c.h.s8.bf16 %v3238
        %v3275 = vunpack.c.l.s8.bf16 %v3239
        %v3276 = vunpack.c.l.s8.bf16 %v3240
        %v3277 = vunpack.c.h.s8.bf16 %v3240
        %v3278 = vunpack.c.l.s8.bf16 %v3241
        %v3279 = vunpack.c.h.s8.bf16 %v3241
        %v3280 = vunpack.c.l.s8.bf16 %v3242
        %v3281 = vunpack.c.l.s8.bf16 %v3243
        %v3282 = vunpack.c.h.s8.bf16 %v3243
        %v3283 = vunpack.c.l.s8.bf16 %v3244
        %v3284 = vunpack.c.h.s8.bf16 %v3244
        %v3285 = vunpack.c.l.s8.bf16 %v3245
        %v3286 = vunpack.c.l.s8.bf16 %v3246
        %v3287 = vunpack.c.h.s8.bf16 %v3246
        %v3288 = vunpack.c.l.s8.bf16 %v3247
        %v3289 = vunpack.c.h.s8.bf16 %v3247
        %v3290 = vunpack.c.l.s8.bf16 %v3248
        %v3291 = vunpack.c.l.s8.bf16 %v3249
        %v3292 = vunpack.c.h.s8.bf16 %v3249
        %v3293 = vunpack.c.l.s8.bf16 %v3250
        %v3294 = vunpack.c.h.s8.bf16 %v3250
        %v3295 = vunpack.c.l.s8.bf16 %v3251
        %v3296 = vunpack.c.l.s8.bf16 %v3252
        %v3297 = vunpack.c.h.s8.bf16 %v3252
        %v3298 = vunpack.c.l.s8.bf16 %v3253
        %v3299 = vunpack.c.h.s8.bf16 %v3253
        %v3300 = vunpack.c.l.s8.bf16 %v3254
        %v3301 = vunpack.c.l.s8.bf16 %v3255
        %v3302 = vunpack.c.h.s8.bf16 %v3255
        %v3303 = vunpack.c.l.s8.bf16 %v3256
        %v3304 = vunpack.c.h.s8.bf16 %v3256
        %v3305 = vunpack.c.l.s8.bf16 %v3257
        %v3306 = vunpack.c.l.s8.bf16 %v3258
        %v3307 = vunpack.c.h.s8.bf16 %v3258
        %v3308 = vunpack.c.l.s8.bf16 %v3259
        %v3309 = vunpack.c.h.s8.bf16 %v3259
        %v3310 = vunpack.c.l.s8.bf16 %v3260
        %v3361 = vunpack.c.l.b16 %v3261
        %v3362 = vunpack.c.h.b16 %v3261
        %v3363 = vunpack.c.l.b16 %v3262
        %v3364 = vunpack.c.h.b16 %v3262
        %v3365 = vunpack.c.l.b16 %v3263
        %v3366 = vunpack.c.h.b16 %v3263
        %v3367 = vunpack.c.l.b16 %v3264
        %v3368 = vunpack.c.h.b16 %v3264
        %v3369 = vunpack.c.l.b16 %v3265
        %v3370 = vunpack.c.h.b16 %v3265
        %v3371 = vunpack.c.l.b16 %v3266
        %v3372 = vunpack.c.h.b16 %v3266
        %v3373 = vunpack.c.l.b16 %v3267
        %v3374 = vunpack.c.h.b16 %v3267
        %v3375 = vunpack.c.l.b16 %v3268
        %v3376 = vunpack.c.h.b16 %v3268
        %v3377 = vunpack.c.l.b16 %v3269
        %v3378 = vunpack.c.h.b16 %v3269
        %v3379 = vunpack.c.l.b16 %v3270
        %v3380 = vunpack.c.h.b16 %v3270
        %v3381 = vunpack.c.l.b16 %v3271
        %v3382 = vunpack.c.h.b16 %v3271
        %v3383 = vunpack.c.l.b16 %v3272
        %v3384 = vunpack.c.h.b16 %v3272
        %v3385 = vunpack.c.l.b16 %v3273
        %v3386 = vunpack.c.h.b16 %v3273
        %v3387 = vunpack.c.l.b16 %v3274
        %v3388 = vunpack.c.h.b16 %v3274
        %v3389 = vunpack.c.l.b16 %v3275
        %v3390 = vunpack.c.h.b16 %v3275
        %v3391 = vunpack.c.l.b16 %v3276
        %v3392 = vunpack.c.h.b16 %v3276
        %v3393 = vunpack.c.l.b16 %v3277
        %v3394 = vunpack.c.h.b16 %v3277
        %v3395 = vunpack.c.l.b16 %v3278
        %v3396 = vunpack.c.h.b16 %v3278
        %v3397 = vunpack.c.l.b16 %v3279
        %v3398 = vunpack.c.h.b16 %v3279
        %v3399 = vunpack.c.l.b16 %v3280
        %v3400 = vunpack.c.h.b16 %v3280
        %v3401 = vunpack.c.l.b16 %v3281
        %v3402 = vunpack.c.h.b16 %v3281
        %v3403 = vunpack.c.l.b16 %v3282
        %v3404 = vunpack.c.h.b16 %v3282
        %v3405 = vunpack.c.l.b16 %v3283
        %v3406 = vunpack.c.h.b16 %v3283
        %v3407 = vunpack.c.l.b16 %v3284
        %v3408 = vunpack.c.h.b16 %v3284
        %v3409 = vunpack.c.l.b16 %v3285
        %v3410 = vunpack.c.h.b16 %v3285
        %v3411 = vunpack.c.l.b16 %v3286
        %v3412 = vunpack.c.h.b16 %v3286
        %v3413 = vunpack.c.l.b16 %v3287
        %v3414 = vunpack.c.h.b16 %v3287
        %v3415 = vunpack.c.l.b16 %v3288
        %v3416 = vunpack.c.h.b16 %v3288
        %v3417 = vunpack.c.l.b16 %v3289
        %v3418 = vunpack.c.h.b16 %v3289
        %v3419 = vunpack.c.l.b16 %v3290
        %v3420 = vunpack.c.h.b16 %v3290
        %v3421 = vunpack.c.l.b16 %v3291
        %v3422 = vunpack.c.h.b16 %v3291
        %v3423 = vunpack.c.l.b16 %v3292
        %v3424 = vunpack.c.h.b16 %v3292
        %v3425 = vunpack.c.l.b16 %v3293
        %v3426 = vunpack.c.h.b16 %v3293
        %v3427 = vunpack.c.l.b16 %v3294
        %v3428 = vunpack.c.h.b16 %v3294
        %v3429 = vunpack.c.l.b16 %v3295
        %v3430 = vunpack.c.h.b16 %v3295
        %v3431 = vunpack.c.l.b16 %v3296
        %v3432 = vunpack.c.h.b16 %v3296
        %v3433 = vunpack.c.l.b16 %v3297
        %v3434 = vunpack.c.h.b16 %v3297
        %v3435 = vunpack.c.l.b16 %v3298
        %v3436 = vunpack.c.h.b16 %v3298
        %v3437 = vunpack.c.l.b16 %v3299
        %v3438 = vunpack.c.h.b16 %v3299
        %v3439 = vunpack.c.l.b16 %v3300
        %v3440 = vunpack.c.h.b16 %v3300
        %v3441 = vunpack.c.l.b16 %v3301
        %v3442 = vunpack.c.h.b16 %v3301
        %v3443 = vunpack.c.l.b16 %v3302
        %v3444 = vunpack.c.h.b16 %v3302
        %v3445 = vunpack.c.l.b16 %v3303
        %v3446 = vunpack.c.h.b16 %v3303
        %v3447 = vunpack.c.l.b16 %v3304
        %v3448 = vunpack.c.h.b16 %v3304
        %v3449 = vunpack.c.l.b16 %v3305
        %v3450 = vunpack.c.h.b16 %v3305
        %v3451 = vunpack.c.l.b16 %v3306
        %v3452 = vunpack.c.h.b16 %v3306
        %v3453 = vunpack.c.l.b16 %v3307
        %v3454 = vunpack.c.h.b16 %v3307
        %v3455 = vunpack.c.l.b16 %v3308
        %v3456 = vunpack.c.h.b16 %v3308
        %v3457 = vunpack.c.l.b16 %v3309
        %v3458 = vunpack.c.h.b16 %v3309
        %v3459 = vunpack.c.l.b16 %v3310
        %v3460 = vunpack.c.h.b16 %v3310
        %v3461 = vpack.c.b16 %v3371, %v3361
        %v3462 = vpack.c.b16 %v3372, %v3362
        %v3463 = vpack.c.b16 %v3373, %v3363
        %v3464 = vpack.c.b16 %v3374, %v3364
        %v3465 = vpack.c.b16 %v3375, %v3365
        %v3466 = vpack.c.b16 %v3376, %v3366
        %v3467 = vpack.c.b16 %v3377, %v3367
        %v3468 = vpack.c.b16 %v3378, %v3368
        %v3469 = vpack.c.b16 %v3379, %v3369
        %v3470 = vpack.c.b16 %v3380, %v3370
        %v3471 = vpack.c.b16 %v3391, %v3381
        %v3472 = vpack.c.b16 %v3392, %v3382
        %v3473 = vpack.c.b16 %v3393, %v3383
        %v3474 = vpack.c.b16 %v3394, %v3384
        %v3475 = vpack.c.b16 %v3395, %v3385
        %v3476 = vpack.c.b16 %v3396, %v3386
        %v3477 = vpack.c.b16 %v3397, %v3387
        %v3478 = vpack.c.b16 %v3398, %v3388
        %v3479 = vpack.c.b16 %v3399, %v3389
        %v3480 = vpack.c.b16 %v3400, %v3390
        %v3481 = vpack.c.b16 %v3411, %v3401
        %v3482 = vpack.c.b16 %v3412, %v3402
        %v3483 = vpack.c.b16 %v3413, %v3403
        %v3484 = vpack.c.b16 %v3414, %v3404
        %v3485 = vpack.c.b16 %v3415, %v3405
        %v3486 = vpack.c.b16 %v3416, %v3406
        %v3487 = vpack.c.b16 %v3417, %v3407
        %v3488 = vpack.c.b16 %v3418, %v3408
        %v3489 = vpack.c.b16 %v3419, %v3409
        %v3490 = vpack.c.b16 %v3420, %v3410
        %v3491 = vpack.c.b16 %v3431, %v3421
        %v3492 = vpack.c.b16 %v3432, %v3422
        %v3493 = vpack.c.b16 %v3433, %v3423
        %v3494 = vpack.c.b16 %v3434, %v3424
        %v3495 = vpack.c.b16 %v3435, %v3425
        %v3496 = vpack.c.b16 %v3436, %v3426
        %v3497 = vpack.c.b16 %v3437, %v3427
        %v3498 = vpack.c.b16 %v3438, %v3428
        %v3499 = vpack.c.b16 %v3439, %v3429
        %v3500 = vpack.c.b16 %v3440, %v3430
        %v3501 = vpack.c.b16 %v3451, %v3441
        %v3502 = vpack.c.b16 %v3452, %v3442
        %v3503 = vpack.c.b16 %v3453, %v3443
        %v3504 = vpack.c.b16 %v3454, %v3444
        %v3505 = vpack.c.b16 %v3455, %v3445
        %v3506 = vpack.c.b16 %v3456, %v3446
        %v3507 = vpack.c.b16 %v3457, %v3447
        %v3508 = vpack.c.b16 %v3458, %v3448
        %v3509 = vpack.c.b16 %v3459, %v3449
        %v3510 = vpack.c.b16 %v3460, %v3450
        %vm3561 = vcmask 654336
        %v3563 = vsel %vm3561, %v3230, 0
        %3565 = vmatprep.subr.bf16.mxu0 0
        %3566 = vmatpush1.bf16.msra.mxu0 0
        %3567 = vmatprep.subr.bf16.mxu0 0
        %3568 = vmatpush1.bf16.msra.mxu0 0
        %3569 = vmatprep.subr.bf16.mxu0 0
        %3570 = vmatpush1.bf16.msra.mxu0 0
        %3571 = vmatprep.subr.bf16.mxu0 %v3502
        %3572 = vmatpush1.bf16.msra.mxu0 %v3501
        %3573 = vmatprep.subr.bf16.mxu0 %v3492
        %3574 = vmatpush1.bf16.msra.mxu0 %v3491
        %3575 = vmatprep.subr.bf16.mxu0 %v3482
        %3576 = vmatpush1.bf16.msra.mxu0 %v3481
        %3577 = vmatprep.subr.bf16.mxu0 %v3472
        %3578 = vmatpush1.bf16.msra.mxu0 %v3471
        %3579 = vmatprep.subr.bf16.mxu0 %v3462
        %3580 = vmatpush1.bf16.msra.mxu0 %v3461
        %3581 = vmatprep.subr.bf16.mxu0 0
        %3582 = vmatpush2.bf16.msra.mxu0 0
        %3583 = vmatprep.subr.bf16.mxu0 0
        %3584 = vmatpush2.bf16.msra.mxu0 0
        %3585 = vmatprep.subr.bf16.mxu0 0
        %3586 = vmatpush2.bf16.msra.mxu0 0
        %3587 = vmatprep.subr.bf16.mxu0 0
        %3588 = vmatpush2.bf16.msra.mxu0 0
        %3589 = vmatprep.subr.bf16.mxu0 0
        %3590 = vmatpush2.bf16.msra.mxu0 0
        %3591 = vmatprep.subr.bf16.mxu0 0
        %3592 = vmatpush2.bf16.msra.mxu0 0
        %3593 = vmatprep.subr.bf16.mxu0 0
        %3594 = vmatpush2.bf16.msra.mxu0 0
        %3595 = vmatprep.subr.bf16.mxu0 0
        %3596 = vmatpush2.bf16.msra.mxu0 0
        %3597 = vmatprep.mubr.bf16.mxu0 0
        %3598 = vmatmul.mubr.bf16.gmra.mxu0 %v3563
        %v3599 = vpop.f32.mrf.mxu0
        %v3600 = vadd.f32 0.0, %v3599
        %v3601 = vpop.f32.mrf.mxu0
        %v3602 = vadd.f32 0.0, %v3601
        %v3603 = vpop.f32.mrf.mxu0
        %v3604 = vpop.f32.mrf.mxu0
        %3605 = vdwg.mxu0
        %3606 = vmatprep.subr.bf16.mxu0 0
        %3607 = vmatpush1.bf16.msra.mxu0 0
        %3608 = vmatprep.subr.bf16.mxu0 0
        %3609 = vmatpush1.bf16.msra.mxu0 0
        %3610 = vmatprep.subr.bf16.mxu0 0
        %3611 = vmatpush1.bf16.msra.mxu0 0
        %3612 = vmatprep.subr.bf16.mxu0 %v3504
        %3613 = vmatpush1.bf16.msra.mxu0 %v3503
        %3614 = vmatprep.subr.bf16.mxu0 %v3494
        %3615 = vmatpush1.bf16.msra.mxu0 %v3493
        %3616 = vmatprep.subr.bf16.mxu0 %v3484
        %3617 = vmatpush1.bf16.msra.mxu0 %v3483
        %3618 = vmatprep.subr.bf16.mxu0 %v3474
        %3619 = vmatpush1.bf16.msra.mxu0 %v3473
        %3620 = vmatprep.subr.bf16.mxu0 %v3464
        %3621 = vmatpush1.bf16.msra.mxu0 %v3463
        %3622 = vmatprep.subr.bf16.mxu0 0
        %3623 = vmatpush2.bf16.msra.mxu0 0
        %3624 = vmatprep.subr.bf16.mxu0 0
        %3625 = vmatpush2.bf16.msra.mxu0 0
        %3626 = vmatprep.subr.bf16.mxu0 0
        %3627 = vmatpush2.bf16.msra.mxu0 0
        %3628 = vmatprep.subr.bf16.mxu0 0
        %3629 = vmatpush2.bf16.msra.mxu0 0
        %3630 = vmatprep.subr.bf16.mxu0 0
        %3631 = vmatpush2.bf16.msra.mxu0 0
        %3632 = vmatprep.subr.bf16.mxu0 0
        %3633 = vmatpush2.bf16.msra.mxu0 0
        %3634 = vmatprep.subr.bf16.mxu0 0
        %3635 = vmatpush2.bf16.msra.mxu0 0
        %3636 = vmatprep.subr.bf16.mxu0 0
        %3637 = vmatpush2.bf16.msra.mxu0 0
        %3638 = vmatprep.mubr.bf16.mxu0 0
        %3639 = vmatmul.mubr.bf16.gmra.mxu0 %v3563
        %v3640 = vpop.f32.mrf.mxu0
        %v3641 = vadd.f32 0.0, %v3640
        %v3642 = vpop.f32.mrf.mxu0
        %v3643 = vadd.f32 0.0, %v3642
        %v3644 = vpop.f32.mrf.mxu0
        %v3645 = vpop.f32.mrf.mxu0
        %3646 = vdwg.mxu0
        %3647 = vmatprep.subr.bf16.mxu0 0
        %3648 = vmatpush1.bf16.msra.mxu0 0
        %3649 = vmatprep.subr.bf16.mxu0 0
        %3650 = vmatpush1.bf16.msra.mxu0 0
        %3651 = vmatprep.subr.bf16.mxu0 0
        %3652 = vmatpush1.bf16.msra.mxu0 0
        %3653 = vmatprep.subr.bf16.mxu0 %v3506
        %3654 = vmatpush1.bf16.msra.mxu0 %v3505
        %3655 = vmatprep.subr.bf16.mxu0 %v3496
        %3656 = vmatpush1.bf16.msra.mxu0 %v3495
        %3657 = vmatprep.subr.bf16.mxu0 %v3486
        %3658 = vmatpush1.bf16.msra.mxu0 %v3485
        %3659 = vmatprep.subr.bf16.mxu0 %v3476
        %3660 = vmatpush1.bf16.msra.mxu0 %v3475
        %3661 = vmatprep.subr.bf16.mxu0 %v3466
        %3662 = vmatpush1.bf16.msra.mxu0 %v3465
        %3663 = vmatprep.subr.bf16.mxu0 0
        %3664 = vmatpush2.bf16.msra.mxu0 0
        %3665 = vmatprep.subr.bf16.mxu0 0
        %3666 = vmatpush2.bf16.msra.mxu0 0
        %3667 = vmatprep.subr.bf16.mxu0 0
        %3668 = vmatpush2.bf16.msra.mxu0 0
        %3669 = vmatprep.subr.bf16.mxu0 0
        %3670 = vmatpush2.bf16.msra.mxu0 0
        %3671 = vmatprep.subr.bf16.mxu0 0
        %3672 = vmatpush2.bf16.msra.mxu0 0
        %3673 = vmatprep.subr.bf16.mxu0 0
        %3674 = vmatpush2.bf16.msra.mxu0 0
        %3675 = vmatprep.subr.bf16.mxu0 0
        %3676 = vmatpush2.bf16.msra.mxu0 0
        %3677 = vmatprep.subr.bf16.mxu0 0
        %3678 = vmatpush2.bf16.msra.mxu0 0
        %3679 = vmatprep.mubr.bf16.mxu0 0
        %3680 = vmatmul.mubr.bf16.gmra.mxu0 %v3563
        %v3681 = vpop.f32.mrf.mxu0
        %v3682 = vadd.f32 0.0, %v3681
        %v3683 = vpop.f32.mrf.mxu0
        %v3684 = vadd.f32 0.0, %v3683
        %v3685 = vpop.f32.mrf.mxu0
        %v3686 = vpop.f32.mrf.mxu0
        %3687 = vdwg.mxu0
        %3688 = vmatprep.subr.bf16.mxu0 0
        %3689 = vmatpush1.bf16.msra.mxu0 0
        %3690 = vmatprep.subr.bf16.mxu0 0
        %3691 = vmatpush1.bf16.msra.mxu0 0
        %3692 = vmatprep.subr.bf16.mxu0 0
        %3693 = vmatpush1.bf16.msra.mxu0 0
        %3694 = vmatprep.subr.bf16.mxu0 %v3508
        %3695 = vmatpush1.bf16.msra.mxu0 %v3507
        %3696 = vmatprep.subr.bf16.mxu0 %v3498
        %3697 = vmatpush1.bf16.msra.mxu0 %v3497
        %3698 = vmatprep.subr.bf16.mxu0 %v3488
        %3699 = vmatpush1.bf16.msra.mxu0 %v3487
        %3700 = vmatprep.subr.bf16.mxu0 %v3478
        %3701 = vmatpush1.bf16.msra.mxu0 %v3477
        %3702 = vmatprep.subr.bf16.mxu0 %v3468
        %3703 = vmatpush1.bf16.msra.mxu0 %v3467
        %3704 = vmatprep.subr.bf16.mxu0 0
        %3705 = vmatpush2.bf16.msra.mxu0 0
        %3706 = vmatprep.subr.bf16.mxu0 0
        %3707 = vmatpush2.bf16.msra.mxu0 0
        %3708 = vmatprep.subr.bf16.mxu0 0
        %3709 = vmatpush2.bf16.msra.mxu0 0
        %3710 = vmatprep.subr.bf16.mxu0 0
        %3711 = vmatpush2.bf16.msra.mxu0 0
        %3712 = vmatprep.subr.bf16.mxu0 0
        %3713 = vmatpush2.bf16.msra.mxu0 0
        %3714 = vmatprep.subr.bf16.mxu0 0
        %3715 = vmatpush2.bf16.msra.mxu0 0
        %3716 = vmatprep.subr.bf16.mxu0 0
        %3717 = vmatpush2.bf16.msra.mxu0 0
        %3718 = vmatprep.subr.bf16.mxu0 0
        %3719 = vmatpush2.bf16.msra.mxu0 0
        %3720 = vmatprep.mubr.bf16.mxu0 0
        %3721 = vmatmul.mubr.bf16.gmra.mxu0 %v3563
        %v3722 = vpop.f32.mrf.mxu0
        %v3723 = vadd.f32 0.0, %v3722
        %v3724 = vpop.f32.mrf.mxu0
        %v3725 = vadd.f32 0.0, %v3724
        %v3726 = vpop.f32.mrf.mxu0
        %v3727 = vpop.f32.mrf.mxu0
        %3728 = vdwg.mxu0
        %3729 = vmatprep.subr.bf16.mxu0 0
        %3730 = vmatpush1.bf16.msra.mxu0 0
        %3731 = vmatprep.subr.bf16.mxu0 0
        %3732 = vmatpush1.bf16.msra.mxu0 0
        %3733 = vmatprep.subr.bf16.mxu0 0
        %3734 = vmatpush1.bf16.msra.mxu0 0
        %3735 = vmatprep.subr.bf16.mxu0 %v3510
        %3736 = vmatpush1.bf16.msra.mxu0 %v3509
        %3737 = vmatprep.subr.bf16.mxu0 %v3500
        %3738 = vmatpush1.bf16.msra.mxu0 %v3499
        %3739 = vmatprep.subr.bf16.mxu0 %v3490
        %3740 = vmatpush1.bf16.msra.mxu0 %v3489
        %3741 = vmatprep.subr.bf16.mxu0 %v3480
        %3742 = vmatpush1.bf16.msra.mxu0 %v3479
        %3743 = vmatprep.subr.bf16.mxu0 %v3470
        %3744 = vmatpush1.bf16.msra.mxu0 %v3469
        %3745 = vmatprep.subr.bf16.mxu0 0
        %3746 = vmatpush2.bf16.msra.mxu0 0
        %3747 = vmatprep.subr.bf16.mxu0 0
        %3748 = vmatpush2.bf16.msra.mxu0 0
        %3749 = vmatprep.subr.bf16.mxu0 0
        %3750 = vmatpush2.bf16.msra.mxu0 0
        %3751 = vmatprep.subr.bf16.mxu0 0
        %3752 = vmatpush2.bf16.msra.mxu0 0
        %3753 = vmatprep.subr.bf16.mxu0 0
        %3754 = vmatpush2.bf16.msra.mxu0 0
        %3755 = vmatprep.subr.bf16.mxu0 0
        %3756 = vmatpush2.bf16.msra.mxu0 0
        %3757 = vmatprep.subr.bf16.mxu0 0
        %3758 = vmatpush2.bf16.msra.mxu0 0
        %3759 = vmatprep.subr.bf16.mxu0 0
        %3760 = vmatpush2.bf16.msra.mxu0 0
        %3761 = vmatprep.mubr.bf16.mxu0 0
        %3762 = vmatmul.mubr.bf16.gmra.mxu0 %v3563
        %v3763 = vpop.f32.mrf.mxu0
        %v3764 = vadd.f32 0.0, %v3763
        %v3765 = vpop.f32.mrf.mxu0
        %v3766 = vadd.f32 0.0, %v3765
        %v3767 = vpop.f32.mrf.mxu0
        %v3768 = vpop.f32.mrf.mxu0
        %3769 = vdwg.mxu0
        %v3772 = vlaneseq
        %v3773 = vshrl.u32 %v3772, 7
        %v3774 = vsub.s32 0, %v3773
        %v3775 = vrot.slane %v3218, %v3774
        %v3776 = vlaneseq
        %v3777 = vshrl.u32 %v3776, 7
        %v3778 = vsub.s32 1, %v3777
        %v3779 = vrot.slane %v3218, %v3778
        %v3780 = vlaneseq
        %v3781 = vshrl.u32 %v3780, 7
        %v3782 = vsub.s32 2, %v3781
        %v3783 = vrot.slane %v3218, %v3782
        %v3784 = vlaneseq
        %v3785 = vshrl.u32 %v3784, 7
        %v3786 = vsub.s32 3, %v3785
        %v3787 = vrot.slane %v3218, %v3786
        %v3788 = vlaneseq
        %v3789 = vshrl.u32 %v3788, 7
        %v3790 = vsub.s32 4, %v3789
        %v3791 = vrot.slane %v3218, %v3790
        %v3792 = vlaneseq
        %v3793 = vshrl.u32 %v3792, 7
        %v3794 = vsub.s32 5, %v3793
        %v3795 = vrot.slane %v3218, %v3794
        %v3796 = vlaneseq
        %v3797 = vshrl.u32 %v3796, 7
        %v3798 = vsub.s32 6, %v3797
        %v3799 = vrot.slane %v3218, %v3798
        %v3800 = vlaneseq
        %v3801 = vshrl.u32 %v3800, 7
        %v3802 = vsub.s32 7, %v3801
        %v3803 = vrot.slane %v3218, %v3802
        %v3804 = vlaneseq
        %v3805 = vshrl.u32 %v3804, 7
        %v3806 = vsub.s32 0, %v3805
        %v3807 = vrot.slane %v3223, %v3806
        %v3808 = vlaneseq
        %v3809 = vshrl.u32 %v3808, 7
        %v3810 = vsub.s32 1, %v3809
        %v3811 = vrot.slane %v3223, %v3810
        %v3822 = vmul.f32 %v3600, %v3775
        %v3823 = vmul.f32 %v3602, %v3779
        %v3824 = vmul.f32 %v3641, %v3783
        %v3825 = vmul.f32 %v3643, %v3787
        %v3826 = vmul.f32 %v3682, %v3791
        %v3827 = vmul.f32 %v3684, %v3795
        %v3828 = vmul.f32 %v3723, %v3799
        %v3829 = vmul.f32 %v3725, %v3803
        %v3830 = vmul.f32 %v3764, %v3807
        %v3831 = vmul.f32 %v3766, %v3811
        %v3834 = vlaneseq
        %v3835 = vshrl.u32 %v3834, 7
        %v3836 = vsub.s32 0, %v3835
        %v3837 = vrot.slane %v3227, %v3836
        %v3838 = vlaneseq
        %v3839 = vshrl.u32 %v3838, 7
        %v3840 = vsub.s32 1, %v3839
        %v3841 = vrot.slane %v3227, %v3840
        %v3842 = vlaneseq
        %v3843 = vshrl.u32 %v3842, 7
        %v3844 = vsub.s32 2, %v3843
        %v3845 = vrot.slane %v3227, %v3844
        %v3846 = vlaneseq
        %v3847 = vshrl.u32 %v3846, 7
        %v3848 = vsub.s32 3, %v3847
        %v3849 = vrot.slane %v3227, %v3848
        %v3850 = vlaneseq
        %v3851 = vshrl.u32 %v3850, 7
        %v3852 = vsub.s32 4, %v3851
        %v3853 = vrot.slane %v3227, %v3852
        %v3854 = vlaneseq
        %v3855 = vshrl.u32 %v3854, 7
        %v3856 = vsub.s32 5, %v3855
        %v3857 = vrot.slane %v3227, %v3856
        %v3858 = vlaneseq
        %v3859 = vshrl.u32 %v3858, 7
        %v3860 = vsub.s32 6, %v3859
        %v3861 = vrot.slane %v3227, %v3860
        %v3862 = vlaneseq
        %v3863 = vshrl.u32 %v3862, 7
        %v3864 = vsub.s32 7, %v3863
        %v3865 = vrot.slane %v3227, %v3864
        %v3866 = vlaneseq
        %v3867 = vshrl.u32 %v3866, 7
        %v3868 = vsub.s32 0, %v3867
        %v3869 = vrot.slane %v3229, %v3868
        %v3870 = vlaneseq
        %v3871 = vshrl.u32 %v3870, 7
        %v3872 = vsub.s32 1, %v3871
        %v3873 = vrot.slane %v3229, %v3872
        %v3884 = vadd.f32 %v3822, %v3837
        %v3885 = vadd.f32 %v3823, %v3841
        %v3886 = vadd.f32 %v3824, %v3845
        %v3887 = vadd.f32 %v3825, %v3849
        %v3888 = vadd.f32 %v3826, %v3853
        %v3889 = vadd.f32 %v3827, %v3857
        %v3890 = vadd.f32 %v3828, %v3861
        %v3891 = vadd.f32 %v3829, %v3865
        %v3892 = vadd.f32 %v3830, %v3869
        %v3893 = vadd.f32 %v3831, %v3873
        %s3894 = scalar_lea.vmem [#allocation9], %s3214
        %v3895 = vld [vmem:[%s3894] ss:$8 sm:$0xf]
        %v3896 = vld [vmem:[%s3894] ss:$8 sm:$0xf0]
        %v3897 = vor.u32 %v3895, %v3896
        %s3898 = scalar_lea.vmem [#allocation9], %s3221
        %v3899 = vld [vmem:[%s3898] ss:$8 sm:$0x3]
        %s3900 = scalar_lea.vmem [#allocation10], %s3214
        %v3901 = vld [vmem:[%s3900] ss:$8 sm:$0xf]
        %v3902 = vld [vmem:[%s3900] ss:$8 sm:$0xf0]
        %v3903 = vor.u32 %v3901, %v3902
        %s3904 = scalar_lea.vmem [#allocation10], %s3221
        %v3905 = vld [vmem:[%s3904] ss:$8 sm:$0x3]
        %v3906 = vpack.c.bf16 %v3207, %v3207
        %v3907 = vld [vmem:[%s887] sm:$0xff]
        %v3908 = vld [vmem:[%s887 + $0x8] sm:$0xff]
        %v3909 = vld [vmem:[%s887 + $0x10] sm:$0xf]
        %v3910 = vld [vmem:[%s887 + $0x14] sm:$0xff]
        %v3911 = vld [vmem:[%s887 + $0x1c] sm:$0xff]
        %v3912 = vld [vmem:[%s887 + $0x24] sm:$0xf]
        %v3913 = vld [vmem:[%s887 + $0x28] sm:$0xff]
        %v3914 = vld [vmem:[%s887 + $0x30] sm:$0xff]
        %v3915 = vld [vmem:[%s887 + $0x38] sm:$0xf]
        %v3916 = vld [vmem:[%s887 + $0x3c] sm:$0xff]
        %v3917 = vld [vmem:[%s887 + $0x44] sm:$0xff]
        %v3918 = vld [vmem:[%s887 + $0x4c] sm:$0xf]
        %v3919 = vld [vmem:[%s887 + $0x50] sm:$0xff]
        %v3920 = vld [vmem:[%s887 + $0x58] sm:$0xff]
        %v3921 = vld [vmem:[%s887 + $0x60] sm:$0xf]
        %v3922 = vld [vmem:[%s887 + $0x64] sm:$0xff]
        %v3923 = vld [vmem:[%s887 + $0x6c] sm:$0xff]
        %v3924 = vld [vmem:[%s887 + $0x74] sm:$0xf]
        %v3925 = vld [vmem:[%s887 + $0x78] sm:$0xff]
        %v3926 = vld [vmem:[%s887 + $0x80] sm:$0xff]
        %v3927 = vld [vmem:[%s887 + $0x88] sm:$0xf]
        %v3928 = vld [vmem:[%s887 + $0x8c] sm:$0xff]
        %v3929 = vld [vmem:[%s887 + $0x94] sm:$0xff]
        %v3930 = vld [vmem:[%s887 + $0x9c] sm:$0xf]
        %v3931 = vld [vmem:[%s887 + $0xa0] sm:$0xff]
        %v3932 = vld [vmem:[%s887 + $0xa8] sm:$0xff]
        %v3933 = vld [vmem:[%s887 + $0xb0] sm:$0xf]
        %v3934 = vld [vmem:[%s887 + $0xb4] sm:$0xff]
        %v3935 = vld [vmem:[%s887 + $0xbc] sm:$0xff]
        %v3936 = vld [vmem:[%s887 + $0xc4] sm:$0xf]
        %v3937 = vunpack.c.l.s8.bf16 %v3907
        %v3938 = vunpack.c.h.s8.bf16 %v3907
        %v3939 = vunpack.c.l.s8.bf16 %v3908
        %v3940 = vunpack.c.h.s8.bf16 %v3908
        %v3941 = vunpack.c.l.s8.bf16 %v3909
        %v3942 = vunpack.c.l.s8.bf16 %v3910
        %v3943 = vunpack.c.h.s8.bf16 %v3910
        %v3944 = vunpack.c.l.s8.bf16 %v3911
        %v3945 = vunpack.c.h.s8.bf16 %v3911
        %v3946 = vunpack.c.l.s8.bf16 %v3912
        %v3947 = vunpack.c.l.s8.bf16 %v3913
        %v3948 = vunpack.c.h.s8.bf16 %v3913
        %v3949 = vunpack.c.l.s8.bf16 %v3914
        %v3950 = vunpack.c.h.s8.bf16 %v3914
        %v3951 = vunpack.c.l.s8.bf16 %v3915
        %v3952 = vunpack.c.l.s8.bf16 %v3916
        %v3953 = vunpack.c.h.s8.bf16 %v3916
        %v3954 = vunpack.c.l.s8.bf16 %v3917
        %v3955 = vunpack.c.h.s8.bf16 %v3917
        %v3956 = vunpack.c.l.s8.bf16 %v3918
        %v3957 = vunpack.c.l.s8.bf16 %v3919
        %v3958 = vunpack.c.h.s8.bf16 %v3919
        %v3959 = vunpack.c.l.s8.bf16 %v3920
        %v3960 = vunpack.c.h.s8.bf16 %v3920
        %v3961 = vunpack.c.l.s8.bf16 %v3921
        %v3962 = vunpack.c.l.s8.bf16 %v3922
        %v3963 = vunpack.c.h.s8.bf16 %v3922
        %v3964 = vunpack.c.l.s8.bf16 %v3923
        %v3965 = vunpack.c.h.s8.bf16 %v3923
        %v3966 = vunpack.c.l.s8.bf16 %v3924
        %v3967 = vunpack.c.l.s8.bf16 %v3925
        %v3968 = vunpack.c.h.s8.bf16 %v3925
        %v3969 = vunpack.c.l.s8.bf16 %v3926
        %v3970 = vunpack.c.h.s8.bf16 %v3926
        %v3971 = vunpack.c.l.s8.bf16 %v3927
        %v3972 = vunpack.c.l.s8.bf16 %v3928
        %v3973 = vunpack.c.h.s8.bf16 %v3928
        %v3974 = vunpack.c.l.s8.bf16 %v3929
        %v3975 = vunpack.c.h.s8.bf16 %v3929
        %v3976 = vunpack.c.l.s8.bf16 %v3930
        %v3977 = vunpack.c.l.s8.bf16 %v3931
        %v3978 = vunpack.c.h.s8.bf16 %v3931
        %v3979 = vunpack.c.l.s8.bf16 %v3932
        %v3980 = vunpack.c.h.s8.bf16 %v3932
        %v3981 = vunpack.c.l.s8.bf16 %v3933
        %v3982 = vunpack.c.l.s8.bf16 %v3934
        %v3983 = vunpack.c.h.s8.bf16 %v3934
        %v3984 = vunpack.c.l.s8.bf16 %v3935
        %v3985 = vunpack.c.h.s8.bf16 %v3935
        %v3986 = vunpack.c.l.s8.bf16 %v3936
        %v4037 = vunpack.c.l.b16 %v3937
        %v4038 = vunpack.c.h.b16 %v3937
        %v4039 = vunpack.c.l.b16 %v3938
        %v4040 = vunpack.c.h.b16 %v3938
        %v4041 = vunpack.c.l.b16 %v3939
        %v4042 = vunpack.c.h.b16 %v3939
        %v4043 = vunpack.c.l.b16 %v3940
        %v4044 = vunpack.c.h.b16 %v3940
        %v4045 = vunpack.c.l.b16 %v3941
        %v4046 = vunpack.c.h.b16 %v3941
        %v4047 = vunpack.c.l.b16 %v3942
        %v4048 = vunpack.c.h.b16 %v3942
        %v4049 = vunpack.c.l.b16 %v3943
        %v4050 = vunpack.c.h.b16 %v3943
        %v4051 = vunpack.c.l.b16 %v3944
        %v4052 = vunpack.c.h.b16 %v3944
        %v4053 = vunpack.c.l.b16 %v3945
        %v4054 = vunpack.c.h.b16 %v3945
        %v4055 = vunpack.c.l.b16 %v3946
        %v4056 = vunpack.c.h.b16 %v3946
        %v4057 = vunpack.c.l.b16 %v3947
        %v4058 = vunpack.c.h.b16 %v3947
        %v4059 = vunpack.c.l.b16 %v3948
        %v4060 = vunpack.c.h.b16 %v3948
        %v4061 = vunpack.c.l.b16 %v3949
        %v4062 = vunpack.c.h.b16 %v3949
        %v4063 = vunpack.c.l.b16 %v3950
        %v4064 = vunpack.c.h.b16 %v3950
        %v4065 = vunpack.c.l.b16 %v3951
        %v4066 = vunpack.c.h.b16 %v3951
        %v4067 = vunpack.c.l.b16 %v3952
        %v4068 = vunpack.c.h.b16 %v3952
        %v4069 = vunpack.c.l.b16 %v3953
        %v4070 = vunpack.c.h.b16 %v3953
        %v4071 = vunpack.c.l.b16 %v3954
        %v4072 = vunpack.c.h.b16 %v3954
        %v4073 = vunpack.c.l.b16 %v3955
        %v4074 = vunpack.c.h.b16 %v3955
        %v4075 = vunpack.c.l.b16 %v3956
        %v4076 = vunpack.c.h.b16 %v3956
        %v4077 = vunpack.c.l.b16 %v3957
        %v4078 = vunpack.c.h.b16 %v3957
        %v4079 = vunpack.c.l.b16 %v3958
        %v4080 = vunpack.c.h.b16 %v3958
        %v4081 = vunpack.c.l.b16 %v3959
        %v4082 = vunpack.c.h.b16 %v3959
        %v4083 = vunpack.c.l.b16 %v3960
        %v4084 = vunpack.c.h.b16 %v3960
        %v4085 = vunpack.c.l.b16 %v3961
        %v4086 = vunpack.c.h.b16 %v3961
        %v4087 = vunpack.c.l.b16 %v3962
        %v4088 = vunpack.c.h.b16 %v3962
        %v4089 = vunpack.c.l.b16 %v3963
        %v4090 = vunpack.c.h.b16 %v3963
        %v4091 = vunpack.c.l.b16 %v3964
        %v4092 = vunpack.c.h.b16 %v3964
        %v4093 = vunpack.c.l.b16 %v3965
        %v4094 = vunpack.c.h.b16 %v3965
        %v4095 = vunpack.c.l.b16 %v3966
        %v4096 = vunpack.c.h.b16 %v3966
        %v4097 = vunpack.c.l.b16 %v3967
        %v4098 = vunpack.c.h.b16 %v3967
        %v4099 = vunpack.c.l.b16 %v3968
        %v4100 = vunpack.c.h.b16 %v3968
        %v4101 = vunpack.c.l.b16 %v3969
        %v4102 = vunpack.c.h.b16 %v3969
        %v4103 = vunpack.c.l.b16 %v3970
        %v4104 = vunpack.c.h.b16 %v3970
        %v4105 = vunpack.c.l.b16 %v3971
        %v4106 = vunpack.c.h.b16 %v3971
        %v4107 = vunpack.c.l.b16 %v3972
        %v4108 = vunpack.c.h.b16 %v3972
        %v4109 = vunpack.c.l.b16 %v3973
        %v4110 = vunpack.c.h.b16 %v3973
        %v4111 = vunpack.c.l.b16 %v3974
        %v4112 = vunpack.c.h.b16 %v3974
        %v4113 = vunpack.c.l.b16 %v3975
        %v4114 = vunpack.c.h.b16 %v3975
        %v4115 = vunpack.c.l.b16 %v3976
        %v4116 = vunpack.c.h.b16 %v3976
        %v4117 = vunpack.c.l.b16 %v3977
        %v4118 = vunpack.c.h.b16 %v3977
        %v4119 = vunpack.c.l.b16 %v3978
        %v4120 = vunpack.c.h.b16 %v3978
        %v4121 = vunpack.c.l.b16 %v3979
        %v4122 = vunpack.c.h.b16 %v3979
        %v4123 = vunpack.c.l.b16 %v3980
        %v4124 = vunpack.c.h.b16 %v3980
        %v4125 = vunpack.c.l.b16 %v3981
        %v4126 = vunpack.c.h.b16 %v3981
        %v4127 = vunpack.c.l.b16 %v3982
        %v4128 = vunpack.c.h.b16 %v3982
        %v4129 = vunpack.c.l.b16 %v3983
        %v4130 = vunpack.c.h.b16 %v3983
        %v4131 = vunpack.c.l.b16 %v3984
        %v4132 = vunpack.c.h.b16 %v3984
        %v4133 = vunpack.c.l.b16 %v3985
        %v4134 = vunpack.c.h.b16 %v3985
        %v4135 = vunpack.c.l.b16 %v3986
        %v4136 = vunpack.c.h.b16 %v3986
        %v4137 = vpack.c.b16 %v4047, %v4037
        %v4138 = vpack.c.b16 %v4048, %v4038
        %v4139 = vpack.c.b16 %v4049, %v4039
        %v4140 = vpack.c.b16 %v4050, %v4040
        %v4141 = vpack.c.b16 %v4051, %v4041
        %v4142 = vpack.c.b16 %v4052, %v4042
        %v4143 = vpack.c.b16 %v4053, %v4043
        %v4144 = vpack.c.b16 %v4054, %v4044
        %v4145 = vpack.c.b16 %v4055, %v4045
        %v4146 = vpack.c.b16 %v4056, %v4046
        %v4147 = vpack.c.b16 %v4067, %v4057
        %v4148 = vpack.c.b16 %v4068, %v4058
        %v4149 = vpack.c.b16 %v4069, %v4059
        %v4150 = vpack.c.b16 %v4070, %v4060
        %v4151 = vpack.c.b16 %v4071, %v4061
        %v4152 = vpack.c.b16 %v4072, %v4062
        %v4153 = vpack.c.b16 %v4073, %v4063
        %v4154 = vpack.c.b16 %v4074, %v4064
        %v4155 = vpack.c.b16 %v4075, %v4065
        %v4156 = vpack.c.b16 %v4076, %v4066
        %v4157 = vpack.c.b16 %v4087, %v4077
        %v4158 = vpack.c.b16 %v4088, %v4078
        %v4159 = vpack.c.b16 %v4089, %v4079
        %v4160 = vpack.c.b16 %v4090, %v4080
        %v4161 = vpack.c.b16 %v4091, %v4081
        %v4162 = vpack.c.b16 %v4092, %v4082
        %v4163 = vpack.c.b16 %v4093, %v4083
        %v4164 = vpack.c.b16 %v4094, %v4084
        %v4165 = vpack.c.b16 %v4095, %v4085
        %v4166 = vpack.c.b16 %v4096, %v4086
        %v4167 = vpack.c.b16 %v4107, %v4097
        %v4168 = vpack.c.b16 %v4108, %v4098
        %v4169 = vpack.c.b16 %v4109, %v4099
        %v4170 = vpack.c.b16 %v4110, %v4100
        %v4171 = vpack.c.b16 %v4111, %v4101
        %v4172 = vpack.c.b16 %v4112, %v4102
        %v4173 = vpack.c.b16 %v4113, %v4103
        %v4174 = vpack.c.b16 %v4114, %v4104
        %v4175 = vpack.c.b16 %v4115, %v4105
        %v4176 = vpack.c.b16 %v4116, %v4106
        %v4177 = vpack.c.b16 %v4127, %v4117
        %v4178 = vpack.c.b16 %v4128, %v4118
        %v4179 = vpack.c.b16 %v4129, %v4119
        %v4180 = vpack.c.b16 %v4130, %v4120
        %v4181 = vpack.c.b16 %v4131, %v4121
        %v4182 = vpack.c.b16 %v4132, %v4122
        %v4183 = vpack.c.b16 %v4133, %v4123
        %v4184 = vpack.c.b16 %v4134, %v4124
        %v4185 = vpack.c.b16 %v4135, %v4125
        %v4186 = vpack.c.b16 %v4136, %v4126
        %v4238 = vsel %vm3561, %v3906, 0
        %4240 = vmatprep.subr.bf16.mxu0 0
        %4241 = vmatpush1.bf16.msra.mxu0 0
        %4242 = vmatprep.subr.bf16.mxu0 0
        %4243 = vmatpush1.bf16.msra.mxu0 0
        %4244 = vmatprep.subr.bf16.mxu0 0
        %4245 = vmatpush1.bf16.msra.mxu0 0
        %4246 = vmatprep.subr.bf16.mxu0 %v4178
        %4247 = vmatpush1.bf16.msra.mxu0 %v4177
        %4248 = vmatprep.subr.bf16.mxu0 %v4168
        %4249 = vmatpush1.bf16.msra.mxu0 %v4167
        %4250 = vmatprep.subr.bf16.mxu0 %v4158
        %4251 = vmatpush1.bf16.msra.mxu0 %v4157
        %4252 = vmatprep.subr.bf16.mxu0 %v4148
        %4253 = vmatpush1.bf16.msra.mxu0 %v4147
        %4254 = vmatprep.subr.bf16.mxu0 %v4138
        %4255 = vmatpush1.bf16.msra.mxu0 %v4137
        %4256 = vmatprep.subr.bf16.mxu0 0
        %4257 = vmatpush2.bf16.msra.mxu0 0
        %4258 = vmatprep.subr.bf16.mxu0 0
        %4259 = vmatpush2.bf16.msra.mxu0 0
        %4260 = vmatprep.subr.bf16.mxu0 0
        %4261 = vmatpush2.bf16.msra.mxu0 0
        %4262 = vmatprep.subr.bf16.mxu0 0
        %4263 = vmatpush2.bf16.msra.mxu0 0
        %4264 = vmatprep.subr.bf16.mxu0 0
        %4265 = vmatpush2.bf16.msra.mxu0 0
        %4266 = vmatprep.subr.bf16.mxu0 0
        %4267 = vmatpush2.bf16.msra.mxu0 0
        %4268 = vmatprep.subr.bf16.mxu0 0
        %4269 = vmatpush2.bf16.msra.mxu0 0
        %4270 = vmatprep.subr.bf16.mxu0 0
        %4271 = vmatpush2.bf16.msra.mxu0 0
        %4272 = vmatprep.mubr.bf16.mxu0 0
        %4273 = vmatmul.mubr.bf16.gmra.mxu0 %v4238
        %v4274 = vpop.f32.mrf.mxu0
        %v4275 = vadd.f32 0.0, %v4274
        %v4276 = vpop.f32.mrf.mxu0
        %v4277 = vadd.f32 0.0, %v4276
        %v4278 = vpop.f32.mrf.mxu0
        %v4279 = vpop.f32.mrf.mxu0
        %4280 = vdwg.mxu0
        %4281 = vmatprep.subr.bf16.mxu0 0
        %4282 = vmatpush1.bf16.msra.mxu0 0
        %4283 = vmatprep.subr.bf16.mxu0 0
        %4284 = vmatpush1.bf16.msra.mxu0 0
        %4285 = vmatprep.subr.bf16.mxu0 0
        %4286 = vmatpush1.bf16.msra.mxu0 0
        %4287 = vmatprep.subr.bf16.mxu0 %v4180
        %4288 = vmatpush1.bf16.msra.mxu0 %v4179
        %4289 = vmatprep.subr.bf16.mxu0 %v4170
        %4290 = vmatpush1.bf16.msra.mxu0 %v4169
        %4291 = vmatprep.subr.bf16.mxu0 %v4160
        %4292 = vmatpush1.bf16.msra.mxu0 %v4159
        %4293 = vmatprep.subr.bf16.mxu0 %v4150
        %4294 = vmatpush1.bf16.msra.mxu0 %v4149
        %4295 = vmatprep.subr.bf16.mxu0 %v4140
        %4296 = vmatpush1.bf16.msra.mxu0 %v4139
        %4297 = vmatprep.subr.bf16.mxu0 0
        %4298 = vmatpush2.bf16.msra.mxu0 0
        %4299 = vmatprep.subr.bf16.mxu0 0
        %4300 = vmatpush2.bf16.msra.mxu0 0
        %4301 = vmatprep.subr.bf16.mxu0 0
        %4302 = vmatpush2.bf16.msra.mxu0 0
        %4303 = vmatprep.subr.bf16.mxu0 0
        %4304 = vmatpush2.bf16.msra.mxu0 0
        %4305 = vmatprep.subr.bf16.mxu0 0
        %4306 = vmatpush2.bf16.msra.mxu0 0
        %4307 = vmatprep.subr.bf16.mxu0 0
        %4308 = vmatpush2.bf16.msra.mxu0 0
        %4309 = vmatprep.subr.bf16.mxu0 0
        %4310 = vmatpush2.bf16.msra.mxu0 0
        %4311 = vmatprep.subr.bf16.mxu0 0
        %4312 = vmatpush2.bf16.msra.mxu0 0
        %4313 = vmatprep.mubr.bf16.mxu0 0
        %4314 = vmatmul.mubr.bf16.gmra.mxu0 %v4238
        %v4315 = vpop.f32.mrf.mxu0
        %v4316 = vadd.f32 0.0, %v4315
        %v4317 = vpop.f32.mrf.mxu0
        %v4318 = vadd.f32 0.0, %v4317
        %v4319 = vpop.f32.mrf.mxu0
        %v4320 = vpop.f32.mrf.mxu0
        %4321 = vdwg.mxu0
        %4322 = vmatprep.subr.bf16.mxu0 0
        %4323 = vmatpush1.bf16.msra.mxu0 0
        %4324 = vmatprep.subr.bf16.mxu0 0
        %4325 = vmatpush1.bf16.msra.mxu0 0
        %4326 = vmatprep.subr.bf16.mxu0 0
        %4327 = vmatpush1.bf16.msra.mxu0 0
        %4328 = vmatprep.subr.bf16.mxu0 %v4182
        %4329 = vmatpush1.bf16.msra.mxu0 %v4181
        %4330 = vmatprep.subr.bf16.mxu0 %v4172
        %4331 = vmatpush1.bf16.msra.mxu0 %v4171
        %4332 = vmatprep.subr.bf16.mxu0 %v4162
        %4333 = vmatpush1.bf16.msra.mxu0 %v4161
        %4334 = vmatprep.subr.bf16.mxu0 %v4152
        %4335 = vmatpush1.bf16.msra.mxu0 %v4151
        %4336 = vmatprep.subr.bf16.mxu0 %v4142
        %4337 = vmatpush1.bf16.msra.mxu0 %v4141
        %4338 = vmatprep.subr.bf16.mxu0 0
        %4339 = vmatpush2.bf16.msra.mxu0 0
        %4340 = vmatprep.subr.bf16.mxu0 0
        %4341 = vmatpush2.bf16.msra.mxu0 0
        %4342 = vmatprep.subr.bf16.mxu0 0
        %4343 = vmatpush2.bf16.msra.mxu0 0
        %4344 = vmatprep.subr.bf16.mxu0 0
        %4345 = vmatpush2.bf16.msra.mxu0 0
        %4346 = vmatprep.subr.bf16.mxu0 0
        %4347 = vmatpush2.bf16.msra.mxu0 0
        %4348 = vmatprep.subr.bf16.mxu0 0
        %4349 = vmatpush2.bf16.msra.mxu0 0
        %4350 = vmatprep.subr.bf16.mxu0 0
        %4351 = vmatpush2.bf16.msra.mxu0 0
        %4352 = vmatprep.subr.bf16.mxu0 0
        %4353 = vmatpush2.bf16.msra.mxu0 0
        %4354 = vmatprep.mubr.bf16.mxu0 0
        %4355 = vmatmul.mubr.bf16.gmra.mxu0 %v4238
        %v4356 = vpop.f32.mrf.mxu0
        %v4357 = vadd.f32 0.0, %v4356
        %v4358 = vpop.f32.mrf.mxu0
        %v4359 = vadd.f32 0.0, %v4358
        %v4360 = vpop.f32.mrf.mxu0
        %v4361 = vpop.f32.mrf.mxu0
        %4362 = vdwg.mxu0
        %4363 = vmatprep.subr.bf16.mxu0 0
        %4364 = vmatpush1.bf16.msra.mxu0 0
        %4365 = vmatprep.subr.bf16.mxu0 0
        %4366 = vmatpush1.bf16.msra.mxu0 0
        %4367 = vmatprep.subr.bf16.mxu0 0
        %4368 = vmatpush1.bf16.msra.mxu0 0
        %4369 = vmatprep.subr.bf16.mxu0 %v4184
        %4370 = vmatpush1.bf16.msra.mxu0 %v4183
        %4371 = vmatprep.subr.bf16.mxu0 %v4174
        %4372 = vmatpush1.bf16.msra.mxu0 %v4173
        %4373 = vmatprep.subr.bf16.mxu0 %v4164
        %4374 = vmatpush1.bf16.msra.mxu0 %v4163
        %4375 = vmatprep.subr.bf16.mxu0 %v4154
        %4376 = vmatpush1.bf16.msra.mxu0 %v4153
        %4377 = vmatprep.subr.bf16.mxu0 %v4144
        %4378 = vmatpush1.bf16.msra.mxu0 %v4143
        %4379 = vmatprep.subr.bf16.mxu0 0
        %4380 = vmatpush2.bf16.msra.mxu0 0
        %4381 = vmatprep.subr.bf16.mxu0 0
        %4382 = vmatpush2.bf16.msra.mxu0 0
        %4383 = vmatprep.subr.bf16.mxu0 0
        %4384 = vmatpush2.bf16.msra.mxu0 0
        %4385 = vmatprep.subr.bf16.mxu0 0
        %4386 = vmatpush2.bf16.msra.mxu0 0
        %4387 = vmatprep.subr.bf16.mxu0 0
        %4388 = vmatpush2.bf16.msra.mxu0 0
        %4389 = vmatprep.subr.bf16.mxu0 0
        %4390 = vmatpush2.bf16.msra.mxu0 0
        %4391 = vmatprep.subr.bf16.mxu0 0
        %4392 = vmatpush2.bf16.msra.mxu0 0
        %4393 = vmatprep.subr.bf16.mxu0 0
        %4394 = vmatpush2.bf16.msra.mxu0 0
        %4395 = vmatprep.mubr.bf16.mxu0 0
        %4396 = vmatmul.mubr.bf16.gmra.mxu0 %v4238
        %v4397 = vpop.f32.mrf.mxu0
        %v4398 = vadd.f32 0.0, %v4397
        %v4399 = vpop.f32.mrf.mxu0
        %v4400 = vadd.f32 0.0, %v4399
        %v4401 = vpop.f32.mrf.mxu0
        %v4402 = vpop.f32.mrf.mxu0
        %4403 = vdwg.mxu0
        %4404 = vmatprep.subr.bf16.mxu0 0
        %4405 = vmatpush1.bf16.msra.mxu0 0
        %4406 = vmatprep.subr.bf16.mxu0 0
        %4407 = vmatpush1.bf16.msra.mxu0 0
        %4408 = vmatprep.subr.bf16.mxu0 0
        %4409 = vmatpush1.bf16.msra.mxu0 0
        %4410 = vmatprep.subr.bf16.mxu0 %v4186
        %4411 = vmatpush1.bf16.msra.mxu0 %v4185
        %4412 = vmatprep.subr.bf16.mxu0 %v4176
        %4413 = vmatpush1.bf16.msra.mxu0 %v4175
        %4414 = vmatprep.subr.bf16.mxu0 %v4166
        %4415 = vmatpush1.bf16.msra.mxu0 %v4165
        %4416 = vmatprep.subr.bf16.mxu0 %v4156
        %4417 = vmatpush1.bf16.msra.mxu0 %v4155
        %4418 = vmatprep.subr.bf16.mxu0 %v4146
        %4419 = vmatpush1.bf16.msra.mxu0 %v4145
        %4420 = vmatprep.subr.bf16.mxu0 0
        %4421 = vmatpush2.bf16.msra.mxu0 0
        %4422 = vmatprep.subr.bf16.mxu0 0
        %4423 = vmatpush2.bf16.msra.mxu0 0
        %4424 = vmatprep.subr.bf16.mxu0 0
        %4425 = vmatpush2.bf16.msra.mxu0 0
        %4426 = vmatprep.subr.bf16.mxu0 0
        %4427 = vmatpush2.bf16.msra.mxu0 0
        %4428 = vmatprep.subr.bf16.mxu0 0
        %4429 = vmatpush2.bf16.msra.mxu0 0
        %4430 = vmatprep.subr.bf16.mxu0 0
        %4431 = vmatpush2.bf16.msra.mxu0 0
        %4432 = vmatprep.subr.bf16.mxu0 0
        %4433 = vmatpush2.bf16.msra.mxu0 0
        %4434 = vmatprep.subr.bf16.mxu0 0
        %4435 = vmatpush2.bf16.msra.mxu0 0
        %4436 = vmatprep.mubr.bf16.mxu0 0
        %4437 = vmatmul.mubr.bf16.gmra.mxu0 %v4238
        %v4438 = vpop.f32.mrf.mxu0
        %v4439 = vadd.f32 0.0, %v4438
        %v4440 = vpop.f32.mrf.mxu0
        %v4441 = vadd.f32 0.0, %v4440
        %v4442 = vpop.f32.mrf.mxu0
        %v4443 = vpop.f32.mrf.mxu0
        %4444 = vdwg.mxu0
        %v4447 = vlaneseq
        %v4448 = vshrl.u32 %v4447, 7
        %v4449 = vsub.s32 0, %v4448
        %v4450 = vrot.slane %v3897, %v4449
        %v4451 = vlaneseq
        %v4452 = vshrl.u32 %v4451, 7
        %v4453 = vsub.s32 1, %v4452
        %v4454 = vrot.slane %v3897, %v4453
        %v4455 = vlaneseq
        %v4456 = vshrl.u32 %v4455, 7
        %v4457 = vsub.s32 2, %v4456
        %v4458 = vrot.slane %v3897, %v4457
        %v4459 = vlaneseq
        %v4460 = vshrl.u32 %v4459, 7
        %v4461 = vsub.s32 3, %v4460
        %v4462 = vrot.slane %v3897, %v4461
        %v4463 = vlaneseq
        %v4464 = vshrl.u32 %v4463, 7
        %v4465 = vsub.s32 4, %v4464
        %v4466 = vrot.slane %v3897, %v4465
        %v4467 = vlaneseq
        %v4468 = vshrl.u32 %v4467, 7
        %v4469 = vsub.s32 5, %v4468
        %v4470 = vrot.slane %v3897, %v4469
        %v4471 = vlaneseq
        %v4472 = vshrl.u32 %v4471, 7
        %v4473 = vsub.s32 6, %v4472
        %v4474 = vrot.slane %v3897, %v4473
        %v4475 = vlaneseq
        %v4476 = vshrl.u32 %v4475, 7
        %v4477 = vsub.s32 7, %v4476
        %v4478 = vrot.slane %v3897, %v4477
        %v4479 = vlaneseq
        %v4480 = vshrl.u32 %v4479, 7
        %v4481 = vsub.s32 0, %v4480
        %v4482 = vrot.slane %v3899, %v4481
        %v4483 = vlaneseq
        %v4484 = vshrl.u32 %v4483, 7
        %v4485 = vsub.s32 1, %v4484
        %v4486 = vrot.slane %v3899, %v4485
        %v4497 = vmul.f32 %v4275, %v4450
        %v4498 = vmul.f32 %v4277, %v4454
        %v4499 = vmul.f32 %v4316, %v4458
        %v4500 = vmul.f32 %v4318, %v4462
        %v4501 = vmul.f32 %v4357, %v4466
        %v4502 = vmul.f32 %v4359, %v4470
        %v4503 = vmul.f32 %v4398, %v4474
        %v4504 = vmul.f32 %v4400, %v4478
        %v4505 = vmul.f32 %v4439, %v4482
        %v4506 = vmul.f32 %v4441, %v4486
        %v4509 = vlaneseq
        %v4510 = vshrl.u32 %v4509, 7
        %v4511 = vsub.s32 0, %v4510
        %v4512 = vrot.slane %v3903, %v4511
        %v4513 = vlaneseq
        %v4514 = vshrl.u32 %v4513, 7
        %v4515 = vsub.s32 1, %v4514
        %v4516 = vrot.slane %v3903, %v4515
        %v4517 = vlaneseq
        %v4518 = vshrl.u32 %v4517, 7
        %v4519 = vsub.s32 2, %v4518
        %v4520 = vrot.slane %v3903, %v4519
        %v4521 = vlaneseq
        %v4522 = vshrl.u32 %v4521, 7
        %v4523 = vsub.s32 3, %v4522
        %v4524 = vrot.slane %v3903, %v4523
        %v4525 = vlaneseq
        %v4526 = vshrl.u32 %v4525, 7
        %v4527 = vsub.s32 4, %v4526
        %v4528 = vrot.slane %v3903, %v4527
        %v4529 = vlaneseq
        %v4530 = vshrl.u32 %v4529, 7
        %v4531 = vsub.s32 5, %v4530
        %v4532 = vrot.slane %v3903, %v4531
        %v4533 = vlaneseq
        %v4534 = vshrl.u32 %v4533, 7
        %v4535 = vsub.s32 6, %v4534
        %v4536 = vrot.slane %v3903, %v4535
        %v4537 = vlaneseq
        %v4538 = vshrl.u32 %v4537, 7
        %v4539 = vsub.s32 7, %v4538
        %v4540 = vrot.slane %v3903, %v4539
        %v4541 = vlaneseq
        %v4542 = vshrl.u32 %v4541, 7
        %v4543 = vsub.s32 0, %v4542
        %v4544 = vrot.slane %v3905, %v4543
        %v4545 = vlaneseq
        %v4546 = vshrl.u32 %v4545, 7
        %v4547 = vsub.s32 1, %v4546
        %v4548 = vrot.slane %v3905, %v4547
        %v4559 = vadd.f32 %v4497, %v4512
        %v4560 = vadd.f32 %v4498, %v4516
        %v4561 = vadd.f32 %v4499, %v4520
        %v4562 = vadd.f32 %v4500, %v4524
        %v4563 = vadd.f32 %v4501, %v4528
        %v4564 = vadd.f32 %v4502, %v4532
        %v4565 = vadd.f32 %v4503, %v4536
        %v4566 = vadd.f32 %v4504, %v4540
        %v4567 = vadd.f32 %v4505, %v4544
        %v4568 = vadd.f32 %v4506, %v4548
        %v4569 = vmul.f32 %v3884, %v4559
        %v4570 = vmul.f32 %v3885, %v4560
        %v4571 = vmul.f32 %v3886, %v4561
        %v4572 = vmul.f32 %v3887, %v4562
        %v4573 = vmul.f32 %v3888, %v4563
        %v4574 = vmul.f32 %v3889, %v4564
        %v4575 = vmul.f32 %v3890, %v4565
        %v4576 = vmul.f32 %v3891, %v4566
        %v4577 = vmul.f32 %v3892, %v4567
        %v4578 = vmul.f32 %v3893, %v4568
        %v4579 = vpack.c.bf16 %v4569, %v4569
        %v4580 = vpack.c.bf16 %v4570, %v4570
        %v4581 = vpack.c.bf16 %v4571, %v4571
        %v4582 = vpack.c.bf16 %v4572, %v4572
        %v4583 = vpack.c.bf16 %v4573, %v4573
        %v4584 = vpack.c.bf16 %v4574, %v4574
        %v4585 = vpack.c.bf16 %v4575, %v4575
        %v4586 = vpack.c.bf16 %v4576, %v4576
        %v4587 = vpack.c.bf16 %v4577, %v4577
        %v4588 = vpack.c.bf16 %v4578, %v4578
        %v4589 = vld [vmem:[%s20] sm:$0xf]
        %v4590 = vld [vmem:[%s20 + $0x4] sm:$0xf]
        %v4591 = vld [vmem:[%s20 + $0x8] sm:$0xf]
        %v4592 = vld [vmem:[%s20 + $0xc] sm:$0xf]
        %v4593 = vld [vmem:[%s20 + $0x10] sm:$0xf]
        %v4594 = vld [vmem:[%s20 + $0x14] sm:$0xf]
        %v4595 = vld [vmem:[%s20 + $0x18] sm:$0xf]
        %v4596 = vld [vmem:[%s20 + $0x1c] sm:$0xf]
        %v4597 = vld [vmem:[%s20 + $0x20] sm:$0xf]
        %v4598 = vld [vmem:[%s20 + $0x24] sm:$0xf]
        %v4599 = vld [vmem:[%s20 + $0x28] sm:$0xf]
        %v4600 = vld [vmem:[%s20 + $0x2c] sm:$0xf]
        %v4601 = vld [vmem:[%s20 + $0x30] sm:$0xf]
        %v4602 = vld [vmem:[%s20 + $0x34] sm:$0xf]
        %v4603 = vld [vmem:[%s20 + $0x38] sm:$0xf]
        %v4604 = vld [vmem:[%s20 + $0x3c] sm:$0xf]
        %v4605 = vld [vmem:[%s20 + $0x40] sm:$0xf]
        %v4606 = vld [vmem:[%s20 + $0x44] sm:$0xf]
        %v4607 = vld [vmem:[%s20 + $0x48] sm:$0xf]
        %v4608 = vld [vmem:[%s20 + $0x4c] sm:$0xf]
        %v4609 = vld [vmem:[%s20 + $0x50] sm:$0xf]
        %v4610 = vld [vmem:[%s20 + $0x54] sm:$0xf]
        %v4611 = vld [vmem:[%s20 + $0x58] sm:$0xf]
        %v4612 = vld [vmem:[%s20 + $0x5c] sm:$0xf]
        %v4613 = vld [vmem:[%s20 + $0x60] sm:$0xf]
        %v4614 = vld [vmem:[%s20 + $0x64] sm:$0xf]
        %v4615 = vld [vmem:[%s20 + $0x68] sm:$0xf]
        %v4616 = vld [vmem:[%s20 + $0x6c] sm:$0xf]
        %v4617 = vld [vmem:[%s20 + $0x70] sm:$0xf]
        %v4618 = vld [vmem:[%s20 + $0x74] sm:$0xf]
        %v4619 = vld [vmem:[%s20 + $0x78] sm:$0xf]
        %v4620 = vld [vmem:[%s20 + $0x7c] sm:$0xf]
        %v4621 = vld [vmem:[%s20 + $0x80] sm:$0xf]
        %v4622 = vld [vmem:[%s20 + $0x84] sm:$0xf]
        %v4623 = vld [vmem:[%s20 + $0x88] sm:$0xf]
        %v4624 = vld [vmem:[%s20 + $0x8c] sm:$0xf]
        %v4625 = vld [vmem:[%s20 + $0x90] sm:$0xf]
        %v4626 = vld [vmem:[%s20 + $0x94] sm:$0xf]
        %v4627 = vld [vmem:[%s20 + $0x98] sm:$0xf]
        %v4628 = vld [vmem:[%s20 + $0x9c] sm:$0xf]
        %v4629 = vld [vmem:[%s20 + $0xa0] sm:$0xf]
        %v4630 = vld [vmem:[%s20 + $0xa4] sm:$0xf]
        %v4631 = vld [vmem:[%s20 + $0xa8] sm:$0xf]
        %v4632 = vld [vmem:[%s20 + $0xac] sm:$0xf]
        %v4633 = vld [vmem:[%s20 + $0xb0] sm:$0xf]
        %v4634 = vld [vmem:[%s20 + $0xb4] sm:$0xf]
        %v4635 = vld [vmem:[%s20 + $0xb8] sm:$0xf]
        %v4636 = vld [vmem:[%s20 + $0xbc] sm:$0xf]
        %v4637 = vld [vmem:[%s20 + $0xc0] sm:$0xf]
        %v4638 = vld [vmem:[%s20 + $0xc4] sm:$0xf]
        %v4639 = vld [vmem:[%s20 + $0xc8] sm:$0xf]
        %v4640 = vld [vmem:[%s20 + $0xcc] sm:$0xf]
        %v4641 = vld [vmem:[%s20 + $0xd0] sm:$0xf]
        %v4642 = vld [vmem:[%s20 + $0xd4] sm:$0xf]
        %v4643 = vld [vmem:[%s20 + $0xd8] sm:$0xf]
        %v4644 = vld [vmem:[%s20 + $0xdc] sm:$0xf]
        %v4645 = vld [vmem:[%s20 + $0xe0] sm:$0xf]
        %v4646 = vld [vmem:[%s20 + $0xe4] sm:$0xf]
        %v4647 = vld [vmem:[%s20 + $0xe8] sm:$0xf]
        %v4648 = vld [vmem:[%s20 + $0xec] sm:$0xf]
        %v4649 = vld [vmem:[%s20 + $0xf0] sm:$0xf]
        %v4650 = vld [vmem:[%s20 + $0xf4] sm:$0xf]
        %v4651 = vld [vmem:[%s20 + $0xf8] sm:$0xf]
        %v4652 = vld [vmem:[%s20 + $0xfc] sm:$0xf]
        %v4653 = vld [vmem:[%s20 + $0x100] sm:$0xf]
        %v4654 = vld [vmem:[%s20 + $0x104] sm:$0xf]
        %v4655 = vld [vmem:[%s20 + $0x108] sm:$0xf]
        %v4656 = vld [vmem:[%s20 + $0x10c] sm:$0xf]
        %v4657 = vld [vmem:[%s20 + $0x110] sm:$0xf]
        %v4658 = vld [vmem:[%s20 + $0x114] sm:$0xf]
        %v4659 = vld [vmem:[%s20 + $0x118] sm:$0xf]
        %v4660 = vld [vmem:[%s20 + $0x11c] sm:$0xf]
        %v4661 = vld [vmem:[%s20 + $0x120] sm:$0xf]
        %v4662 = vld [vmem:[%s20 + $0x124] sm:$0xf]
        %v4663 = vld [vmem:[%s20 + $0x128] sm:$0xf]
        %v4664 = vld [vmem:[%s20 + $0x12c] sm:$0xf]
        %v4665 = vld [vmem:[%s20 + $0x130] sm:$0xf]
        %v4666 = vld [vmem:[%s20 + $0x134] sm:$0xf]
        %v4667 = vld [vmem:[%s20 + $0x138] sm:$0xf]
        %v4668 = vld [vmem:[%s20 + $0x13c] sm:$0xf]
        %v4669 = vld [vmem:[%s20 + $0x140] sm:$0xf]
        %v4670 = vld [vmem:[%s20 + $0x144] sm:$0xf]
        %v4671 = vld [vmem:[%s20 + $0x148] sm:$0xf]
        %v4672 = vld [vmem:[%s20 + $0x14c] sm:$0xf]
        %v4673 = vld [vmem:[%s20 + $0x150] sm:$0xf]
        %v4674 = vld [vmem:[%s20 + $0x154] sm:$0xf]
        %v4675 = vld [vmem:[%s20 + $0x158] sm:$0xf]
        %v4676 = vld [vmem:[%s20 + $0x15c] sm:$0xf]
        %v4677 = vld [vmem:[%s20 + $0x160] sm:$0xf]
        %v4678 = vld [vmem:[%s20 + $0x164] sm:$0xf]
        %v4679 = vld [vmem:[%s20 + $0x168] sm:$0xf]
        %v4680 = vld [vmem:[%s20 + $0x16c] sm:$0xf]
        %v4681 = vld [vmem:[%s20 + $0x170] sm:$0xf]
        %v4682 = vld [vmem:[%s20 + $0x174] sm:$0xf]
        %v4683 = vld [vmem:[%s20 + $0x178] sm:$0xf]
        %v4684 = vld [vmem:[%s20 + $0x17c] sm:$0xf]
        %v4685 = vld [vmem:[%s20 + $0x180] sm:$0xf]
        %v4686 = vld [vmem:[%s20 + $0x184] sm:$0xf]
        %v4687 = vld [vmem:[%s20 + $0x188] sm:$0xf]
        %v4688 = vld [vmem:[%s20 + $0x18c] sm:$0xf]
        %v4689 = vld [vmem:[%s20 + $0x190] sm:$0xf]
        %v4690 = vld [vmem:[%s20 + $0x194] sm:$0xf]
        %v4691 = vld [vmem:[%s20 + $0x198] sm:$0xf]
        %v4692 = vld [vmem:[%s20 + $0x19c] sm:$0xf]
        %v4693 = vld [vmem:[%s20 + $0x1a0] sm:$0xf]
        %v4694 = vld [vmem:[%s20 + $0x1a4] sm:$0xf]
        %v4695 = vld [vmem:[%s20 + $0x1a8] sm:$0xf]
        %v4696 = vld [vmem:[%s20 + $0x1ac] sm:$0xf]
        %v4697 = vld [vmem:[%s20 + $0x1b0] sm:$0xf]
        %v4698 = vld [vmem:[%s20 + $0x1b4] sm:$0xf]
        %v4699 = vld [vmem:[%s20 + $0x1b8] sm:$0xf]
        %v4700 = vld [vmem:[%s20 + $0x1bc] sm:$0xf]
        %v4701 = vld [vmem:[%s20 + $0x1c0] sm:$0xf]
        %v4702 = vld [vmem:[%s20 + $0x1c4] sm:$0xf]
        %v4703 = vld [vmem:[%s20 + $0x1c8] sm:$0xf]
        %v4704 = vld [vmem:[%s20 + $0x1cc] sm:$0xf]
        %v4705 = vld [vmem:[%s20 + $0x1d0] sm:$0xf]
        %v4706 = vld [vmem:[%s20 + $0x1d4] sm:$0xf]
        %v4707 = vld [vmem:[%s20 + $0x1d8] sm:$0xf]
        %v4708 = vld [vmem:[%s20 + $0x1dc] sm:$0xf]
        %v4709 = vld [vmem:[%s20 + $0x1e0] sm:$0xf]
        %v4710 = vld [vmem:[%s20 + $0x1e4] sm:$0xf]
        %v4711 = vld [vmem:[%s20 + $0x1e8] sm:$0xf]
        %v4712 = vld [vmem:[%s20 + $0x1ec] sm:$0xf]
        %v4713 = vld [vmem:[%s20 + $0x1f0] sm:$0xf]
        %v4714 = vld [vmem:[%s20 + $0x1f4] sm:$0xf]
        %v4715 = vld [vmem:[%s20 + $0x1f8] sm:$0xf]
        %v4716 = vld [vmem:[%s20 + $0x1fc] sm:$0xf]
        %v4717 = vld [vmem:[%s20 + $0x200] sm:$0xf]
        %v4718 = vld [vmem:[%s20 + $0x204] sm:$0xf]
        %v4719 = vld [vmem:[%s20 + $0x208] sm:$0xf]
        %v4720 = vld [vmem:[%s20 + $0x20c] sm:$0xf]
        %v4721 = vld [vmem:[%s20 + $0x210] sm:$0xf]
        %v4722 = vld [vmem:[%s20 + $0x214] sm:$0xf]
        %v4723 = vld [vmem:[%s20 + $0x218] sm:$0xf]
        %v4724 = vld [vmem:[%s20 + $0x21c] sm:$0xf]
        %v4725 = vld [vmem:[%s20 + $0x220] sm:$0xf]
        %v4726 = vld [vmem:[%s20 + $0x224] sm:$0xf]
        %v4727 = vld [vmem:[%s20 + $0x228] sm:$0xf]
        %v4728 = vld [vmem:[%s20 + $0x22c] sm:$0xf]
        %v4729 = vld [vmem:[%s20 + $0x230] sm:$0xf]
        %v4730 = vld [vmem:[%s20 + $0x234] sm:$0xf]
        %v4731 = vld [vmem:[%s20 + $0x238] sm:$0xf]
        %v4732 = vld [vmem:[%s20 + $0x23c] sm:$0xf]
        %v4733 = vld [vmem:[%s20 + $0x240] sm:$0xf]
        %v4734 = vld [vmem:[%s20 + $0x244] sm:$0xf]
        %v4735 = vld [vmem:[%s20 + $0x248] sm:$0xf]
        %v4736 = vld [vmem:[%s20 + $0x24c] sm:$0xf]
        %v4737 = vld [vmem:[%s20 + $0x250] sm:$0xf]
        %v4738 = vld [vmem:[%s20 + $0x254] sm:$0xf]
        %v4889 = vunpack.c.l.b16 %v4589
        %v4890 = vunpack.c.l.b16 %v4590
        %v4891 = vunpack.c.l.b16 %v4591
        %v4892 = vunpack.c.l.b16 %v4592
        %v4893 = vunpack.c.l.b16 %v4593
        %v4894 = vunpack.c.l.b16 %v4594
        %v4895 = vunpack.c.l.b16 %v4595
        %v4896 = vunpack.c.l.b16 %v4596
        %v4897 = vunpack.c.l.b16 %v4597
        %v4898 = vunpack.c.l.b16 %v4598
        %v4899 = vunpack.c.l.b16 %v4599
        %v4900 = vunpack.c.l.b16 %v4600
        %v4901 = vunpack.c.l.b16 %v4601
        %v4902 = vunpack.c.l.b16 %v4602
        %v4903 = vunpack.c.l.b16 %v4603
        %v4904 = vunpack.c.l.b16 %v4604
        %v4905 = vunpack.c.l.b16 %v4605
        %v4906 = vunpack.c.l.b16 %v4606
        %v4907 = vunpack.c.l.b16 %v4607
        %v4908 = vunpack.c.l.b16 %v4608
        %v4909 = vunpack.c.l.b16 %v4609
        %v4910 = vunpack.c.l.b16 %v4610
        %v4911 = vunpack.c.l.b16 %v4611
        %v4912 = vunpack.c.l.b16 %v4612
        %v4913 = vunpack.c.l.b16 %v4613
        %v4914 = vunpack.c.l.b16 %v4614
        %v4915 = vunpack.c.l.b16 %v4615
        %v4916 = vunpack.c.l.b16 %v4616
        %v4917 = vunpack.c.l.b16 %v4617
        %v4918 = vunpack.c.l.b16 %v4618
        %v4919 = vunpack.c.l.b16 %v4619
        %v4920 = vunpack.c.l.b16 %v4620
        %v4921 = vunpack.c.l.b16 %v4621
        %v4922 = vunpack.c.l.b16 %v4622
        %v4923 = vunpack.c.l.b16 %v4623
        %v4924 = vunpack.c.l.b16 %v4624
        %v4925 = vunpack.c.l.b16 %v4625
        %v4926 = vunpack.c.l.b16 %v4626
        %v4927 = vunpack.c.l.b16 %v4627
        %v4928 = vunpack.c.l.b16 %v4628
        %v4929 = vunpack.c.l.b16 %v4629
        %v4930 = vunpack.c.l.b16 %v4630
        %v4931 = vunpack.c.l.b16 %v4631
        %v4932 = vunpack.c.l.b16 %v4632
        %v4933 = vunpack.c.l.b16 %v4633
        %v4934 = vunpack.c.l.b16 %v4634
        %v4935 = vunpack.c.l.b16 %v4635
        %v4936 = vunpack.c.l.b16 %v4636
        %v4937 = vunpack.c.l.b16 %v4637
        %v4938 = vunpack.c.l.b16 %v4638
        %v4939 = vunpack.c.l.b16 %v4639
        %v4940 = vunpack.c.l.b16 %v4640
        %v4941 = vunpack.c.l.b16 %v4641
        %v4942 = vunpack.c.l.b16 %v4642
        %v4943 = vunpack.c.l.b16 %v4643
        %v4944 = vunpack.c.l.b16 %v4644
        %v4945 = vunpack.c.l.b16 %v4645
        %v4946 = vunpack.c.l.b16 %v4646
        %v4947 = vunpack.c.l.b16 %v4647
        %v4948 = vunpack.c.l.b16 %v4648
        %v4949 = vunpack.c.l.b16 %v4649
        %v4950 = vunpack.c.l.b16 %v4650
        %v4951 = vunpack.c.l.b16 %v4651
        %v4952 = vunpack.c.l.b16 %v4652
        %v4953 = vunpack.c.l.b16 %v4653
        %v4954 = vunpack.c.l.b16 %v4654
        %v4955 = vunpack.c.l.b16 %v4655
        %v4956 = vunpack.c.l.b16 %v4656
        %v4957 = vunpack.c.l.b16 %v4657
        %v4958 = vunpack.c.l.b16 %v4658
        %v4959 = vunpack.c.l.b16 %v4659
        %v4960 = vunpack.c.l.b16 %v4660
        %v4961 = vunpack.c.l.b16 %v4661
        %v4962 = vunpack.c.l.b16 %v4662
        %v4963 = vunpack.c.l.b16 %v4663
        %v4964 = vunpack.c.l.b16 %v4664
        %v4965 = vunpack.c.l.b16 %v4665
        %v4966 = vunpack.c.l.b16 %v4666
        %v4967 = vunpack.c.l.b16 %v4667
        %v4968 = vunpack.c.l.b16 %v4668
        %v4969 = vunpack.c.l.b16 %v4669
        %v4970 = vunpack.c.l.b16 %v4670
        %v4971 = vunpack.c.l.b16 %v4671
        %v4972 = vunpack.c.l.b16 %v4672
        %v4973 = vunpack.c.l.b16 %v4673
        %v4974 = vunpack.c.l.b16 %v4674
        %v4975 = vunpack.c.l.b16 %v4675
        %v4976 = vunpack.c.l.b16 %v4676
        %v4977 = vunpack.c.l.b16 %v4677
        %v4978 = vunpack.c.l.b16 %v4678
        %v4979 = vunpack.c.l.b16 %v4679
        %v4980 = vunpack.c.l.b16 %v4680
        %v4981 = vunpack.c.l.b16 %v4681
        %v4982 = vunpack.c.l.b16 %v4682
        %v4983 = vunpack.c.l.b16 %v4683
        %v4984 = vunpack.c.l.b16 %v4684
        %v4985 = vunpack.c.l.b16 %v4685
        %v4986 = vunpack.c.l.b16 %v4686
        %v4987 = vunpack.c.l.b16 %v4687
        %v4988 = vunpack.c.l.b16 %v4688
        %v4989 = vunpack.c.l.b16 %v4689
        %v4990 = vunpack.c.l.b16 %v4690
        %v4991 = vunpack.c.l.b16 %v4691
        %v4992 = vunpack.c.l.b16 %v4692
        %v4993 = vunpack.c.l.b16 %v4693
        %v4994 = vunpack.c.l.b16 %v4694
        %v4995 = vunpack.c.l.b16 %v4695
        %v4996 = vunpack.c.l.b16 %v4696
        %v4997 = vunpack.c.l.b16 %v4697
        %v4998 = vunpack.c.l.b16 %v4698
        %v4999 = vunpack.c.l.b16 %v4699
        %v5000 = vunpack.c.l.b16 %v4700
        %v5001 = vunpack.c.l.b16 %v4701
        %v5002 = vunpack.c.l.b16 %v4702
        %v5003 = vunpack.c.l.b16 %v4703
        %v5004 = vunpack.c.l.b16 %v4704
        %v5005 = vunpack.c.l.b16 %v4705
        %v5006 = vunpack.c.l.b16 %v4706
        %v5007 = vunpack.c.l.b16 %v4707
        %v5008 = vunpack.c.l.b16 %v4708
        %v5009 = vunpack.c.l.b16 %v4709
        %v5010 = vunpack.c.l.b16 %v4710
        %v5011 = vunpack.c.l.b16 %v4711
        %v5012 = vunpack.c.l.b16 %v4712
        %v5013 = vunpack.c.l.b16 %v4713
        %v5014 = vunpack.c.l.b16 %v4714
        %v5015 = vunpack.c.l.b16 %v4715
        %v5016 = vunpack.c.l.b16 %v4716
        %v5017 = vunpack.c.l.b16 %v4717
        %v5018 = vunpack.c.l.b16 %v4718
        %v5019 = vunpack.c.l.b16 %v4719
        %v5020 = vunpack.c.l.b16 %v4720
        %v5021 = vunpack.c.l.b16 %v4721
        %v5022 = vunpack.c.l.b16 %v4722
        %v5023 = vunpack.c.l.b16 %v4723
        %v5024 = vunpack.c.l.b16 %v4724
        %v5025 = vunpack.c.l.b16 %v4725
        %v5026 = vunpack.c.l.b16 %v4726
        %v5027 = vunpack.c.l.b16 %v4727
        %v5028 = vunpack.c.l.b16 %v4728
        %v5029 = vunpack.c.l.b16 %v4729
        %v5030 = vunpack.c.l.b16 %v4730
        %v5031 = vunpack.c.l.b16 %v4731
        %v5032 = vunpack.c.l.b16 %v4732
        %v5033 = vunpack.c.l.b16 %v4733
        %v5034 = vunpack.c.l.b16 %v4734
        %v5035 = vunpack.c.l.b16 %v4735
        %v5036 = vunpack.c.l.b16 %v4736
        %v5037 = vunpack.c.l.b16 %v4737
        %v5038 = vunpack.c.l.b16 %v4738
        %v5039 = vpack.c.b16 %v4890, %v4889
        %v5040 = vpack.c.b16 %v4892, %v4891
        %v5041 = vpack.c.b16 %v4894, %v4893
        %v5042 = vpack.c.b16 %v4896, %v4895
        %v5043 = vpack.c.b16 %v4898, %v4897
        %v5044 = vpack.c.b16 %v4900, %v4899
        %v5045 = vpack.c.b16 %v4902, %v4901
        %v5046 = vpack.c.b16 %v4904, %v4903
        %v5047 = vpack.c.b16 %v4906, %v4905
        %v5048 = vpack.c.b16 %v4908, %v4907
        %v5049 = vpack.c.b16 %v4910, %v4909
        %v5050 = vpack.c.b16 %v4912, %v4911
        %v5051 = vpack.c.b16 %v4914, %v4913
        %v5052 = vpack.c.b16 %v4916, %v4915
        %v5053 = vpack.c.b16 %v4918, %v4917
        %v5054 = vpack.c.b16 %v4920, %v4919
        %v5055 = vpack.c.b16 %v4922, %v4921
        %v5056 = vpack.c.b16 %v4924, %v4923
        %v5057 = vpack.c.b16 %v4926, %v4925
        %v5058 = vpack.c.b16 %v4928, %v4927
        %v5059 = vpack.c.b16 %v4930, %v4929
        %v5060 = vpack.c.b16 %v4932, %v4931
        %v5061 = vpack.c.b16 %v4934, %v4933
        %v5062 = vpack.c.b16 %v4936, %v4935
        %v5063 = vpack.c.b16 %v4938, %v4937
        %v5064 = vpack.c.b16 %v4940, %v4939
        %v5065 = vpack.c.b16 %v4942, %v4941
        %v5066 = vpack.c.b16 %v4944, %v4943
        %v5067 = vpack.c.b16 %v4946, %v4945
        %v5068 = vpack.c.b16 %v4948, %v4947
        %v5069 = vpack.c.b16 %v4950, %v4949
        %v5070 = vpack.c.b16 %v4952, %v4951
        %v5071 = vpack.c.b16 %v4954, %v4953
        %v5072 = vpack.c.b16 %v4956, %v4955
        %v5073 = vpack.c.b16 %v4958, %v4957
        %v5074 = vpack.c.b16 %v4960, %v4959
        %v5075 = vpack.c.b16 %v4962, %v4961
        %v5076 = vpack.c.b16 %v4964, %v4963
        %v5077 = vpack.c.b16 %v4966, %v4965
        %v5078 = vpack.c.b16 %v4968, %v4967
        %v5079 = vpack.c.b16 %v4970, %v4969
        %v5080 = vpack.c.b16 %v4972, %v4971
        %v5081 = vpack.c.b16 %v4974, %v4973
        %v5082 = vpack.c.b16 %v4976, %v4975
        %v5083 = vpack.c.b16 %v4978, %v4977
        %v5084 = vpack.c.b16 %v4980, %v4979
        %v5085 = vpack.c.b16 %v4982, %v4981
        %v5086 = vpack.c.b16 %v4984, %v4983
        %v5087 = vpack.c.b16 %v4986, %v4985
        %v5088 = vpack.c.b16 %v4988, %v4987
        %v5089 = vpack.c.b16 %v4990, %v4989
        %v5090 = vpack.c.b16 %v4992, %v4991
        %v5091 = vpack.c.b16 %v4994, %v4993
        %v5092 = vpack.c.b16 %v4996, %v4995
        %v5093 = vpack.c.b16 %v4998, %v4997
        %v5094 = vpack.c.b16 %v5000, %v4999
        %v5095 = vpack.c.b16 %v5002, %v5001
        %v5096 = vpack.c.b16 %v5004, %v5003
        %v5097 = vpack.c.b16 %v5006, %v5005
        %v5098 = vpack.c.b16 %v5008, %v5007
        %v5099 = vpack.c.b16 %v5010, %v5009
        %v5100 = vpack.c.b16 %v5012, %v5011
        %v5101 = vpack.c.b16 %v5014, %v5013
        %v5102 = vpack.c.b16 %v5016, %v5015
        %v5103 = vpack.c.b16 %v5018, %v5017
        %v5104 = vpack.c.b16 %v5020, %v5019
        %v5105 = vpack.c.b16 %v5022, %v5021
        %v5106 = vpack.c.b16 %v5024, %v5023
        %v5107 = vpack.c.b16 %v5026, %v5025
        %v5108 = vpack.c.b16 %v5028, %v5027
        %v5109 = vpack.c.b16 %v5030, %v5029
        %v5110 = vpack.c.b16 %v5032, %v5031
        %v5111 = vpack.c.b16 %v5034, %v5033
        %v5112 = vpack.c.b16 %v5036, %v5035
        %v5113 = vpack.c.b16 %v5038, %v5037
        %vm5189 = vcmask 392192
        %v5191 = vsel %vm5189, %v4588, 0
        %5193 = vmatprep.subr.bf16.mxu0 0
        %5194 = vmatpush1.bf16.msra.mxu0 %v5046
        %5195 = vmatprep.subr.bf16.mxu0 0
        %5196 = vmatpush1.bf16.msra.mxu0 %v5045
        %5197 = vmatprep.subr.bf16.mxu0 0
        %5198 = vmatpush1.bf16.msra.mxu0 %v5044
        %5199 = vmatprep.subr.bf16.mxu0 0
        %5200 = vmatpush1.bf16.msra.mxu0 %v5043
        %5201 = vmatprep.subr.bf16.mxu0 0
        %5202 = vmatpush1.bf16.msra.mxu0 %v5042
        %5203 = vmatprep.subr.bf16.mxu0 0
        %5204 = vmatpush1.bf16.msra.mxu0 %v5041
        %5205 = vmatprep.subr.bf16.mxu0 0
        %5206 = vmatpush1.bf16.msra.mxu0 %v5040
        %5207 = vmatprep.subr.bf16.mxu0 0
        %5208 = vmatpush1.bf16.msra.mxu0 %v5039
        %5209 = vmatprep.subr.bf16.mxu0 0
        %5210 = vmatpush2.bf16.msra.mxu0 %v5054
        %5211 = vmatprep.subr.bf16.mxu0 0
        %5212 = vmatpush2.bf16.msra.mxu0 %v5053
        %5213 = vmatprep.subr.bf16.mxu0 0
        %5214 = vmatpush2.bf16.msra.mxu0 %v5052
        %5215 = vmatprep.subr.bf16.mxu0 0
        %5216 = vmatpush2.bf16.msra.mxu0 %v5051
        %5217 = vmatprep.subr.bf16.mxu0 0
        %5218 = vmatpush2.bf16.msra.mxu0 %v5050
        %5219 = vmatprep.subr.bf16.mxu0 0
        %5220 = vmatpush2.bf16.msra.mxu0 %v5049
        %5221 = vmatprep.subr.bf16.mxu0 0
        %5222 = vmatpush2.bf16.msra.mxu0 %v5048
        %5223 = vmatprep.subr.bf16.mxu0 0
        %5224 = vmatpush2.bf16.msra.mxu0 %v5047
        %5225 = vmatprep.mubr.bf16.mxu0 %v4580
        %5226 = vmatmul.mubr.bf16.gmra.mxu0 %v4579
        %v5227 = vpop.f32.mrf.mxu0
        %v5228 = vadd.f32 0.0, %v5227
        %v5229 = vpop.f32.mrf.mxu0
        %v5230 = vpop.f32.mrf.mxu0
        %v5231 = vpop.f32.mrf.mxu0
        %5232 = vdwg.mxu0
        %5233 = vmatprep.subr.bf16.mxu0 0
        %5234 = vmatpush1.bf16.msra.mxu0 %v5062
        %5235 = vmatprep.subr.bf16.mxu0 0
        %5236 = vmatpush1.bf16.msra.mxu0 %v5061
        %5237 = vmatprep.subr.bf16.mxu0 0
        %5238 = vmatpush1.bf16.msra.mxu0 %v5060
        %5239 = vmatprep.subr.bf16.mxu0 0
        %5240 = vmatpush1.bf16.msra.mxu0 %v5059
        %5241 = vmatprep.subr.bf16.mxu0 0
        %5242 = vmatpush1.bf16.msra.mxu0 %v5058
        %5243 = vmatprep.subr.bf16.mxu0 0
        %5244 = vmatpush1.bf16.msra.mxu0 %v5057
        %5245 = vmatprep.subr.bf16.mxu0 0
        %5246 = vmatpush1.bf16.msra.mxu0 %v5056
        %5247 = vmatprep.subr.bf16.mxu0 0
        %5248 = vmatpush1.bf16.msra.mxu0 %v5055
        %5249 = vmatprep.subr.bf16.mxu0 0
        %5250 = vmatpush2.bf16.msra.mxu0 %v5070
        %5251 = vmatprep.subr.bf16.mxu0 0
        %5252 = vmatpush2.bf16.msra.mxu0 %v5069
        %5253 = vmatprep.subr.bf16.mxu0 0
        %5254 = vmatpush2.bf16.msra.mxu0 %v5068
        %5255 = vmatprep.subr.bf16.mxu0 0
        %5256 = vmatpush2.bf16.msra.mxu0 %v5067
        %5257 = vmatprep.subr.bf16.mxu0 0
        %5258 = vmatpush2.bf16.msra.mxu0 %v5066
        %5259 = vmatprep.subr.bf16.mxu0 0
        %5260 = vmatpush2.bf16.msra.mxu0 %v5065
        %5261 = vmatprep.subr.bf16.mxu0 0
        %5262 = vmatpush2.bf16.msra.mxu0 %v5064
        %5263 = vmatprep.subr.bf16.mxu0 0
        %5264 = vmatpush2.bf16.msra.mxu0 %v5063
        %5265 = vmatprep.mubr.bf16.mxu0 %v4582
        %5266 = vmatmul.mubr.bf16.gmra.mxu0 %v4581
        %v5267 = vpop.f32.mrf.mxu0
        %v5268 = vadd.f32 %v5228, %v5267
        %v5269 = vpop.f32.mrf.mxu0
        %v5270 = vpop.f32.mrf.mxu0
        %v5271 = vpop.f32.mrf.mxu0
        %5272 = vdwg.mxu0
        %5273 = vmatprep.subr.bf16.mxu0 0
        %5274 = vmatpush1.bf16.msra.mxu0 %v5078
        %5275 = vmatprep.subr.bf16.mxu0 0
        %5276 = vmatpush1.bf16.msra.mxu0 %v5077
        %5277 = vmatprep.subr.bf16.mxu0 0
        %5278 = vmatpush1.bf16.msra.mxu0 %v5076
        %5279 = vmatprep.subr.bf16.mxu0 0
        %5280 = vmatpush1.bf16.msra.mxu0 %v5075
        %5281 = vmatprep.subr.bf16.mxu0 0
        %5282 = vmatpush1.bf16.msra.mxu0 %v5074
        %5283 = vmatprep.subr.bf16.mxu0 0
        %5284 = vmatpush1.bf16.msra.mxu0 %v5073
        %5285 = vmatprep.subr.bf16.mxu0 0
        %5286 = vmatpush1.bf16.msra.mxu0 %v5072
        %5287 = vmatprep.subr.bf16.mxu0 0
        %5288 = vmatpush1.bf16.msra.mxu0 %v5071
        %5289 = vmatprep.subr.bf16.mxu0 0
        %5290 = vmatpush2.bf16.msra.mxu0 %v5086
        %5291 = vmatprep.subr.bf16.mxu0 0
        %5292 = vmatpush2.bf16.msra.mxu0 %v5085
        %5293 = vmatprep.subr.bf16.mxu0 0
        %5294 = vmatpush2.bf16.msra.mxu0 %v5084
        %5295 = vmatprep.subr.bf16.mxu0 0
        %5296 = vmatpush2.bf16.msra.mxu0 %v5083
        %5297 = vmatprep.subr.bf16.mxu0 0
        %5298 = vmatpush2.bf16.msra.mxu0 %v5082
        %5299 = vmatprep.subr.bf16.mxu0 0
        %5300 = vmatpush2.bf16.msra.mxu0 %v5081
        %5301 = vmatprep.subr.bf16.mxu0 0
        %5302 = vmatpush2.bf16.msra.mxu0 %v5080
        %5303 = vmatprep.subr.bf16.mxu0 0
        %5304 = vmatpush2.bf16.msra.mxu0 %v5079
        %5305 = vmatprep.mubr.bf16.mxu0 %v4584
        %5306 = vmatmul.mubr.bf16.gmra.mxu0 %v4583
        %v5307 = vpop.f32.mrf.mxu0
        %v5308 = vadd.f32 %v5268, %v5307
        %v5309 = vpop.f32.mrf.mxu0
        %v5310 = vpop.f32.mrf.mxu0
        %v5311 = vpop.f32.mrf.mxu0
        %5312 = vdwg.mxu0
        %5313 = vmatprep.subr.bf16.mxu0 0
        %5314 = vmatpush1.bf16.msra.mxu0 %v5094
        %5315 = vmatprep.subr.bf16.mxu0 0
        %5316 = vmatpush1.bf16.msra.mxu0 %v5093
        %5317 = vmatprep.subr.bf16.mxu0 0
        %5318 = vmatpush1.bf16.msra.mxu0 %v5092
        %5319 = vmatprep.subr.bf16.mxu0 0
        %5320 = vmatpush1.bf16.msra.mxu0 %v5091
        %5321 = vmatprep.subr.bf16.mxu0 0
        %5322 = vmatpush1.bf16.msra.mxu0 %v5090
        %5323 = vmatprep.subr.bf16.mxu0 0
        %5324 = vmatpush1.bf16.msra.mxu0 %v5089
        %5325 = vmatprep.subr.bf16.mxu0 0
        %5326 = vmatpush1.bf16.msra.mxu0 %v5088
        %5327 = vmatprep.subr.bf16.mxu0 0
        %5328 = vmatpush1.bf16.msra.mxu0 %v5087
        %5329 = vmatprep.subr.bf16.mxu0 0
        %5330 = vmatpush2.bf16.msra.mxu0 %v5102
        %5331 = vmatprep.subr.bf16.mxu0 0
        %5332 = vmatpush2.bf16.msra.mxu0 %v5101
        %5333 = vmatprep.subr.bf16.mxu0 0
        %5334 = vmatpush2.bf16.msra.mxu0 %v5100
        %5335 = vmatprep.subr.bf16.mxu0 0
        %5336 = vmatpush2.bf16.msra.mxu0 %v5099
        %5337 = vmatprep.subr.bf16.mxu0 0
        %5338 = vmatpush2.bf16.msra.mxu0 %v5098
        %5339 = vmatprep.subr.bf16.mxu0 0
        %5340 = vmatpush2.bf16.msra.mxu0 %v5097
        %5341 = vmatprep.subr.bf16.mxu0 0
        %5342 = vmatpush2.bf16.msra.mxu0 %v5096
        %5343 = vmatprep.subr.bf16.mxu0 0
        %5344 = vmatpush2.bf16.msra.mxu0 %v5095
        %5345 = vmatprep.mubr.bf16.mxu0 %v4586
        %5346 = vmatmul.mubr.bf16.gmra.mxu0 %v4585
        %v5347 = vpop.f32.mrf.mxu0
        %v5348 = vadd.f32 %v5308, %v5347
        %v5349 = vpop.f32.mrf.mxu0
        %v5350 = vpop.f32.mrf.mxu0
        %v5351 = vpop.f32.mrf.mxu0
        %5352 = vdwg.mxu0
        %5353 = vmatprep.subr.bf16.mxu0 0
        %5354 = vmatpush1.bf16.msra.mxu0 %v5110
        %5355 = vmatprep.subr.bf16.mxu0 0
        %5356 = vmatpush1.bf16.msra.mxu0 %v5109
        %5357 = vmatprep.subr.bf16.mxu0 0
        %5358 = vmatpush1.bf16.msra.mxu0 %v5108
        %5359 = vmatprep.subr.bf16.mxu0 0
        %5360 = vmatpush1.bf16.msra.mxu0 %v5107
        %5361 = vmatprep.subr.bf16.mxu0 0
        %5362 = vmatpush1.bf16.msra.mxu0 %v5106
        %5363 = vmatprep.subr.bf16.mxu0 0
        %5364 = vmatpush1.bf16.msra.mxu0 %v5105
        %5365 = vmatprep.subr.bf16.mxu0 0
        %5366 = vmatpush1.bf16.msra.mxu0 %v5104
        %5367 = vmatprep.subr.bf16.mxu0 0
        %5368 = vmatpush1.bf16.msra.mxu0 %v5103
        %5369 = vmatprep.subr.bf16.mxu0 0
        %5370 = vmatpush2.bf16.msra.mxu0 0
        %5371 = vmatprep.subr.bf16.mxu0 0
        %5372 = vmatpush2.bf16.msra.mxu0 0
        %5373 = vmatprep.subr.bf16.mxu0 0
        %5374 = vmatpush2.bf16.msra.mxu0 0
        %5375 = vmatprep.subr.bf16.mxu0 0
        %5376 = vmatpush2.bf16.msra.mxu0 0
        %5377 = vmatprep.subr.bf16.mxu0 0
        %5378 = vmatpush2.bf16.msra.mxu0 0
        %5379 = vmatprep.subr.bf16.mxu0 0
        %5380 = vmatpush2.bf16.msra.mxu0 %v5113
        %5381 = vmatprep.subr.bf16.mxu0 0
        %5382 = vmatpush2.bf16.msra.mxu0 %v5112
        %5383 = vmatprep.subr.bf16.mxu0 0
        %5384 = vmatpush2.bf16.msra.mxu0 %v5111
        %5385 = vmatprep.mubr.bf16.mxu0 %v5191
        %5386 = vmatmul.mubr.bf16.gmra.mxu0 %v4587
        %v5387 = vpop.f32.mrf.mxu0
        %v5388 = vadd.f32 %v5348, %v5387
        %v5389 = vpop.f32.mrf.mxu0
        %v5390 = vpop.f32.mrf.mxu0
        %v5391 = vpop.f32.mrf.mxu0
        %5392 = vdwg.mxu0
        %v5393 = vmax.f32 %v5388, 0.0
        %v5394 = vrsqrt.pop %v5393
        %v5395 = vmul.f32 %v5393, %v5394
        %vm5396 = vcmp.eq.f32.partialorder %v5393, inf
        %v5397 = vsel %vm5396, %v5393, %v5395
        %vm5398 = vcmp.eq.f32.partialorder %v5393, 0.0
        %v5399 = vand.u32 %v5393, 2147483648
        %v5400 = vsel %vm5398, %v5399, %v5397
        %v5401 = vsub.f32 0.0, %v5388
        %v5402 = vmax.f32 %v5401, 0.0
        %v5403 = vrsqrt.pop %v5402
        %v5404 = vmul.f32 %v5402, %v5403
        %vm5405 = vcmp.eq.f32.partialorder %v5402, inf
        %v5406 = vsel %vm5405, %v5402, %v5404
        %vm5407 = vcmp.eq.f32.partialorder %v5402, 0.0
        %v5408 = vand.u32 %v5402, 2147483648
        %v5409 = vsel %vm5407, %v5408, %v5406
        %v5410 = vsub.f32 %v5400, %v5409
        %v5411 = vmul.f32 %v5410, %v5410
        %v5412 = vsel %vm3561, %v5411, 0.0
        %5413 = vadd.xlane.f32.xlu0 %v5412
        %v5414 = vpop.xlane.xlu0 %5413
        %v5415 = vrsqrt.pop %v5414
        %v5416 = vmul.f32 %v5414, %v5415
        %vm5417 = vcmp.eq.f32.partialorder %v5414, inf
        %v5418 = vsel %vm5417, %v5414, %v5416
        %vm5419 = vcmp.eq.f32.partialorder %v5414, 0.0
        %v5420 = vand.u32 %v5414, 2147483648
        %v5421 = vsel %vm5419, %v5420, %v5418
        %v5422 = vmax.f32 %v5421, 1e-12
        %v5423 = vrcp.pop %v5422
        %v5424 = vmul.f32 %v5410, %v5423
        %v5425 = vld [vmem:[#allocation4] sm:$0xff]
        %v5426 = vld [vmem:[#allocation4 + $0x8] sm:$0xff]
        %v5427 = vld [vmem:[#allocation4 + $0x10] sm:$0xff]
        %v5428 = vld [vmem:[#allocation4 + $0x18] sm:$0xff]
        %v5429 = vld [vmem:[#allocation4 + $0x20] sm:$0xff]
        %v5430 = vld [vmem:[#allocation4 + $0x28] sm:$0xff]
        %v5431 = vld [vmem:[#allocation4 + $0x30] sm:$0xff]
        %v5432 = vld [vmem:[#allocation4 + $0x38] sm:$0xff]
        %v5433 = vld [vmem:[#allocation4 + $0x40] sm:$0xff]
        %v5434 = vld [vmem:[#allocation4 + $0x48] sm:$0xff]
        %v5435 = vld [vmem:[#allocation4 + $0x50] sm:$0xff]
        %v5436 = vld [vmem:[#allocation4 + $0x58] sm:$0xff]
        %v5437 = vld [vmem:[#allocation4 + $0x60] sm:$0xff]
        %v5438 = vpack.c.bf16 %v5424, %v5424
        %v5439 = vld [vmem:[%s896] sm:$0xff]
        %v5440 = vld [vmem:[%s896 + $0x8] sm:$0xff]
        %v5441 = vld [vmem:[%s896 + $0x10] sm:$0xff]
        %v5442 = vld [vmem:[%s896 + $0x18] sm:$0x3]
        %v5443 = vld [vmem:[%s896 + $0x1a] sm:$0xff]
        %v5444 = vld [vmem:[%s896 + $0x22] sm:$0xff]
        %v5445 = vld [vmem:[%s896 + $0x2a] sm:$0xff]
        %v5446 = vld [vmem:[%s896 + $0x32] sm:$0x3]
        %v5447 = vld [vmem:[%s896 + $0x34] sm:$0xff]
        %v5448 = vld [vmem:[%s896 + $0x3c] sm:$0xff]
        %v5449 = vld [vmem:[%s896 + $0x44] sm:$0xff]
        %v5450 = vld [vmem:[%s896 + $0x4c] sm:$0x3]
        %v5451 = vld [vmem:[%s896 + $0x4e] sm:$0xff]
        %v5452 = vld [vmem:[%s896 + $0x56] sm:$0xff]
        %v5453 = vld [vmem:[%s896 + $0x5e] sm:$0xff]
        %v5454 = vld [vmem:[%s896 + $0x66] sm:$0x3]
        %v5455 = vld [vmem:[%s896 + $0x68] sm:$0xff]
        %v5456 = vld [vmem:[%s896 + $0x70] sm:$0xff]
        %v5457 = vld [vmem:[%s896 + $0x78] sm:$0xff]
        %v5458 = vld [vmem:[%s896 + $0x80] sm:$0x3]
        %v5459 = vld [vmem:[%s896 + $0x82] sm:$0xff]
        %v5460 = vld [vmem:[%s896 + $0x8a] sm:$0xff]
        %v5461 = vld [vmem:[%s896 + $0x92] sm:$0xff]
        %v5462 = vld [vmem:[%s896 + $0x9a] sm:$0x3]
        %v5463 = vld [vmem:[%s896 + $0x9c] sm:$0xff]
        %v5464 = vld [vmem:[%s896 + $0xa4] sm:$0xff]
        %v5465 = vld [vmem:[%s896 + $0xac] sm:$0xff]
        %v5466 = vld [vmem:[%s896 + $0xb4] sm:$0x3]
        %v5467 = vld [vmem:[%s896 + $0xb6] sm:$0xff]
        %v5468 = vld [vmem:[%s896 + $0xbe] sm:$0xff]
        %v5469 = vld [vmem:[%s896 + $0xc6] sm:$0xff]
        %v5470 = vld [vmem:[%s896 + $0xce] sm:$0x3]
        %v5471 = vld [vmem:[%s896 + $0xd0] sm:$0xff]
        %v5472 = vld [vmem:[%s896 + $0xd8] sm:$0xff]
        %v5473 = vld [vmem:[%s896 + $0xe0] sm:$0xff]
        %v5474 = vld [vmem:[%s896 + $0xe8] sm:$0x3]
        %v5475 = vld [vmem:[%s896 + $0xea] sm:$0xff]
        %v5476 = vld [vmem:[%s896 + $0xf2] sm:$0xff]
        %v5477 = vld [vmem:[%s896 + $0xfa] sm:$0xff]
        %v5478 = vld [vmem:[%s896 + $0x102] sm:$0x3]
        %v5479 = vunpack.c.l.s8.bf16 %v5439
        %v5480 = vunpack.c.h.s8.bf16 %v5439
        %v5481 = vunpack.c.l.s8.bf16 %v5440
        %v5482 = vunpack.c.h.s8.bf16 %v5440
        %v5483 = vunpack.c.l.s8.bf16 %v5441
        %v5484 = vunpack.c.h.s8.bf16 %v5441
        %v5485 = vunpack.c.l.s8.bf16 %v5442
        %v5486 = vunpack.c.l.s8.bf16 %v5443
        %v5487 = vunpack.c.h.s8.bf16 %v5443
        %v5488 = vunpack.c.l.s8.bf16 %v5444
        %v5489 = vunpack.c.h.s8.bf16 %v5444
        %v5490 = vunpack.c.l.s8.bf16 %v5445
        %v5491 = vunpack.c.h.s8.bf16 %v5445
        %v5492 = vunpack.c.l.s8.bf16 %v5446
        %v5493 = vunpack.c.l.s8.bf16 %v5447
        %v5494 = vunpack.c.h.s8.bf16 %v5447
        %v5495 = vunpack.c.l.s8.bf16 %v5448
        %v5496 = vunpack.c.h.s8.bf16 %v5448
        %v5497 = vunpack.c.l.s8.bf16 %v5449
        %v5498 = vunpack.c.h.s8.bf16 %v5449
        %v5499 = vunpack.c.l.s8.bf16 %v5450
        %v5500 = vunpack.c.l.s8.bf16 %v5451
        %v5501 = vunpack.c.h.s8.bf16 %v5451
        %v5502 = vunpack.c.l.s8.bf16 %v5452
        %v5503 = vunpack.c.h.s8.bf16 %v5452
        %v5504 = vunpack.c.l.s8.bf16 %v5453
        %v5505 = vunpack.c.h.s8.bf16 %v5453
        %v5506 = vunpack.c.l.s8.bf16 %v5454
        %v5507 = vunpack.c.l.s8.bf16 %v5455
        %v5508 = vunpack.c.h.s8.bf16 %v5455
        %v5509 = vunpack.c.l.s8.bf16 %v5456
        %v5510 = vunpack.c.h.s8.bf16 %v5456
        %v5511 = vunpack.c.l.s8.bf16 %v5457
        %v5512 = vunpack.c.h.s8.bf16 %v5457
        %v5513 = vunpack.c.l.s8.bf16 %v5458
        %v5514 = vunpack.c.l.s8.bf16 %v5459
        %v5515 = vunpack.c.h.s8.bf16 %v5459
        %v5516 = vunpack.c.l.s8.bf16 %v5460
        %v5517 = vunpack.c.h.s8.bf16 %v5460
        %v5518 = vunpack.c.l.s8.bf16 %v5461
        %v5519 = vunpack.c.h.s8.bf16 %v5461
        %v5520 = vunpack.c.l.s8.bf16 %v5462
        %v5521 = vunpack.c.l.s8.bf16 %v5463
        %v5522 = vunpack.c.h.s8.bf16 %v5463
        %v5523 = vunpack.c.l.s8.bf16 %v5464
        %v5524 = vunpack.c.h.s8.bf16 %v5464
        %v5525 = vunpack.c.l.s8.bf16 %v5465
        %v5526 = vunpack.c.h.s8.bf16 %v5465
        %v5527 = vunpack.c.l.s8.bf16 %v5466
        %v5528 = vunpack.c.l.s8.bf16 %v5467
        %v5529 = vunpack.c.h.s8.bf16 %v5467
        %v5530 = vunpack.c.l.s8.bf16 %v5468
        %v5531 = vunpack.c.h.s8.bf16 %v5468
        %v5532 = vunpack.c.l.s8.bf16 %v5469
        %v5533 = vunpack.c.h.s8.bf16 %v5469
        %v5534 = vunpack.c.l.s8.bf16 %v5470
        %v5535 = vunpack.c.l.s8.bf16 %v5471
        %v5536 = vunpack.c.h.s8.bf16 %v5471
        %v5537 = vunpack.c.l.s8.bf16 %v5472
        %v5538 = vunpack.c.h.s8.bf16 %v5472
        %v5539 = vunpack.c.l.s8.bf16 %v5473
        %v5540 = vunpack.c.h.s8.bf16 %v5473
        %v5541 = vunpack.c.l.s8.bf16 %v5474
        %v5542 = vunpack.c.l.s8.bf16 %v5475
        %v5543 = vunpack.c.h.s8.bf16 %v5475
        %v5544 = vunpack.c.l.s8.bf16 %v5476
        %v5545 = vunpack.c.h.s8.bf16 %v5476
        %v5546 = vunpack.c.l.s8.bf16 %v5477
        %v5547 = vunpack.c.h.s8.bf16 %v5477
        %v5548 = vunpack.c.l.s8.bf16 %v5478
        %v5619 = vunpack.c.l.b16 %v5479
        %v5620 = vunpack.c.h.b16 %v5479
        %v5621 = vunpack.c.l.b16 %v5480
        %v5622 = vunpack.c.h.b16 %v5480
        %v5623 = vunpack.c.l.b16 %v5481
        %v5624 = vunpack.c.h.b16 %v5481
        %v5625 = vunpack.c.l.b16 %v5482
        %v5626 = vunpack.c.h.b16 %v5482
        %v5627 = vunpack.c.l.b16 %v5483
        %v5628 = vunpack.c.h.b16 %v5483
        %v5629 = vunpack.c.l.b16 %v5484
        %v5630 = vunpack.c.h.b16 %v5484
        %v5631 = vunpack.c.l.b16 %v5485
        %v5632 = vunpack.c.l.b16 %v5486
        %v5633 = vunpack.c.h.b16 %v5486
        %v5634 = vunpack.c.l.b16 %v5487
        %v5635 = vunpack.c.h.b16 %v5487
        %v5636 = vunpack.c.l.b16 %v5488
        %v5637 = vunpack.c.h.b16 %v5488
        %v5638 = vunpack.c.l.b16 %v5489
        %v5639 = vunpack.c.h.b16 %v5489
        %v5640 = vunpack.c.l.b16 %v5490
        %v5641 = vunpack.c.h.b16 %v5490
        %v5642 = vunpack.c.l.b16 %v5491
        %v5643 = vunpack.c.h.b16 %v5491
        %v5644 = vunpack.c.l.b16 %v5492
        %v5645 = vunpack.c.l.b16 %v5493
        %v5646 = vunpack.c.h.b16 %v5493
        %v5647 = vunpack.c.l.b16 %v5494
        %v5648 = vunpack.c.h.b16 %v5494
        %v5649 = vunpack.c.l.b16 %v5495
        %v5650 = vunpack.c.h.b16 %v5495
        %v5651 = vunpack.c.l.b16 %v5496
        %v5652 = vunpack.c.h.b16 %v5496
        %v5653 = vunpack.c.l.b16 %v5497
        %v5654 = vunpack.c.h.b16 %v5497
        %v5655 = vunpack.c.l.b16 %v5498
        %v5656 = vunpack.c.h.b16 %v5498
        %v5657 = vunpack.c.l.b16 %v5499
        %v5658 = vunpack.c.l.b16 %v5500
        %v5659 = vunpack.c.h.b16 %v5500
        %v5660 = vunpack.c.l.b16 %v5501
        %v5661 = vunpack.c.h.b16 %v5501
        %v5662 = vunpack.c.l.b16 %v5502
        %v5663 = vunpack.c.h.b16 %v5502
        %v5664 = vunpack.c.l.b16 %v5503
        %v5665 = vunpack.c.h.b16 %v5503
        %v5666 = vunpack.c.l.b16 %v5504
        %v5667 = vunpack.c.h.b16 %v5504
        %v5668 = vunpack.c.l.b16 %v5505
        %v5669 = vunpack.c.h.b16 %v5505
        %v5670 = vunpack.c.l.b16 %v5506
        %v5671 = vunpack.c.l.b16 %v5507
        %v5672 = vunpack.c.h.b16 %v5507
        %v5673 = vunpack.c.l.b16 %v5508
        %v5674 = vunpack.c.h.b16 %v5508
        %v5675 = vunpack.c.l.b16 %v5509
        %v5676 = vunpack.c.h.b16 %v5509
        %v5677 = vunpack.c.l.b16 %v5510
        %v5678 = vunpack.c.h.b16 %v5510
        %v5679 = vunpack.c.l.b16 %v5511
        %v5680 = vunpack.c.h.b16 %v5511
        %v5681 = vunpack.c.l.b16 %v5512
        %v5682 = vunpack.c.h.b16 %v5512
        %v5683 = vunpack.c.l.b16 %v5513
        %v5684 = vunpack.c.l.b16 %v5514
        %v5685 = vunpack.c.h.b16 %v5514
        %v5686 = vunpack.c.l.b16 %v5515
        %v5687 = vunpack.c.h.b16 %v5515
        %v5688 = vunpack.c.l.b16 %v5516
        %v5689 = vunpack.c.h.b16 %v5516
        %v5690 = vunpack.c.l.b16 %v5517
        %v5691 = vunpack.c.h.b16 %v5517
        %v5692 = vunpack.c.l.b16 %v5518
        %v5693 = vunpack.c.h.b16 %v5518
        %v5694 = vunpack.c.l.b16 %v5519
        %v5695 = vunpack.c.h.b16 %v5519
        %v5696 = vunpack.c.l.b16 %v5520
        %v5697 = vunpack.c.l.b16 %v5521
        %v5698 = vunpack.c.h.b16 %v5521
        %v5699 = vunpack.c.l.b16 %v5522
        %v5700 = vunpack.c.h.b16 %v5522
        %v5701 = vunpack.c.l.b16 %v5523
        %v5702 = vunpack.c.h.b16 %v5523
        %v5703 = vunpack.c.l.b16 %v5524
        %v5704 = vunpack.c.h.b16 %v5524
        %v5705 = vunpack.c.l.b16 %v5525
        %v5706 = vunpack.c.h.b16 %v5525
        %v5707 = vunpack.c.l.b16 %v5526
        %v5708 = vunpack.c.h.b16 %v5526
        %v5709 = vunpack.c.l.b16 %v5527
        %v5710 = vunpack.c.l.b16 %v5528
        %v5711 = vunpack.c.h.b16 %v5528
        %v5712 = vunpack.c.l.b16 %v5529
        %v5713 = vunpack.c.h.b16 %v5529
        %v5714 = vunpack.c.l.b16 %v5530
        %v5715 = vunpack.c.h.b16 %v5530
        %v5716 = vunpack.c.l.b16 %v5531
        %v5717 = vunpack.c.h.b16 %v5531
        %v5718 = vunpack.c.l.b16 %v5532
        %v5719 = vunpack.c.h.b16 %v5532
        %v5720 = vunpack.c.l.b16 %v5533
        %v5721 = vunpack.c.h.b16 %v5533
        %v5722 = vunpack.c.l.b16 %v5534
        %v5723 = vunpack.c.l.b16 %v5535
        %v5724 = vunpack.c.h.b16 %v5535
        %v5725 = vunpack.c.l.b16 %v5536
        %v5726 = vunpack.c.h.b16 %v5536
        %v5727 = vunpack.c.l.b16 %v5537
        %v5728 = vunpack.c.h.b16 %v5537
        %v5729 = vunpack.c.l.b16 %v5538
        %v5730 = vunpack.c.h.b16 %v5538
        %v5731 = vunpack.c.l.b16 %v5539
        %v5732 = vunpack.c.h.b16 %v5539
        %v5733 = vunpack.c.l.b16 %v5540
        %v5734 = vunpack.c.h.b16 %v5540
        %v5735 = vunpack.c.l.b16 %v5541
        %v5736 = vunpack.c.l.b16 %v5542
        %v5737 = vunpack.c.h.b16 %v5542
        %v5738 = vunpack.c.l.b16 %v5543
        %v5739 = vunpack.c.h.b16 %v5543
        %v5740 = vunpack.c.l.b16 %v5544
        %v5741 = vunpack.c.h.b16 %v5544
        %v5742 = vunpack.c.l.b16 %v5545
        %v5743 = vunpack.c.h.b16 %v5545
        %v5744 = vunpack.c.l.b16 %v5546
        %v5745 = vunpack.c.h.b16 %v5546
        %v5746 = vunpack.c.l.b16 %v5547
        %v5747 = vunpack.c.h.b16 %v5547
        %v5748 = vunpack.c.l.b16 %v5548
        %v5749 = vpack.c.b16 %v5632, %v5619
        %v5750 = vpack.c.b16 %v5633, %v5620
        %v5751 = vpack.c.b16 %v5634, %v5621
        %v5752 = vpack.c.b16 %v5635, %v5622
        %v5753 = vpack.c.b16 %v5636, %v5623
        %v5754 = vpack.c.b16 %v5637, %v5624
        %v5755 = vpack.c.b16 %v5638, %v5625
        %v5756 = vpack.c.b16 %v5639, %v5626
        %v5757 = vpack.c.b16 %v5640, %v5627
        %v5758 = vpack.c.b16 %v5641, %v5628
        %v5759 = vpack.c.b16 %v5642, %v5629
        %v5760 = vpack.c.b16 %v5643, %v5630
        %v5761 = vpack.c.b16 %v5644, %v5631
        %v5762 = vpack.c.b16 %v5658, %v5645
        %v5763 = vpack.c.b16 %v5659, %v5646
        %v5764 = vpack.c.b16 %v5660, %v5647
        %v5765 = vpack.c.b16 %v5661, %v5648
        %v5766 = vpack.c.b16 %v5662, %v5649
        %v5767 = vpack.c.b16 %v5663, %v5650
        %v5768 = vpack.c.b16 %v5664, %v5651
        %v5769 = vpack.c.b16 %v5665, %v5652
        %v5770 = vpack.c.b16 %v5666, %v5653
        %v5771 = vpack.c.b16 %v5667, %v5654
        %v5772 = vpack.c.b16 %v5668, %v5655
        %v5773 = vpack.c.b16 %v5669, %v5656
        %v5774 = vpack.c.b16 %v5670, %v5657
        %v5775 = vpack.c.b16 %v5684, %v5671
        %v5776 = vpack.c.b16 %v5685, %v5672
        %v5777 = vpack.c.b16 %v5686, %v5673
        %v5778 = vpack.c.b16 %v5687, %v5674
        %v5779 = vpack.c.b16 %v5688, %v5675
        %v5780 = vpack.c.b16 %v5689, %v5676
        %v5781 = vpack.c.b16 %v5690, %v5677
        %v5782 = vpack.c.b16 %v5691, %v5678
        %v5783 = vpack.c.b16 %v5692, %v5679
        %v5784 = vpack.c.b16 %v5693, %v5680
        %v5785 = vpack.c.b16 %v5694, %v5681
        %v5786 = vpack.c.b16 %v5695, %v5682
        %v5787 = vpack.c.b16 %v5696, %v5683
        %v5788 = vpack.c.b16 %v5710, %v5697
        %v5789 = vpack.c.b16 %v5711, %v5698
        %v5790 = vpack.c.b16 %v5712, %v5699
        %v5791 = vpack.c.b16 %v5713, %v5700
        %v5792 = vpack.c.b16 %v5714, %v5701
        %v5793 = vpack.c.b16 %v5715, %v5702
        %v5794 = vpack.c.b16 %v5716, %v5703
        %v5795 = vpack.c.b16 %v5717, %v5704
        %v5796 = vpack.c.b16 %v5718, %v5705
        %v5797 = vpack.c.b16 %v5719, %v5706
        %v5798 = vpack.c.b16 %v5720, %v5707
        %v5799 = vpack.c.b16 %v5721, %v5708
        %v5800 = vpack.c.b16 %v5722, %v5709
        %v5801 = vpack.c.b16 %v5736, %v5723
        %v5802 = vpack.c.b16 %v5737, %v5724
        %v5803 = vpack.c.b16 %v5738, %v5725
        %v5804 = vpack.c.b16 %v5739, %v5726
        %v5805 = vpack.c.b16 %v5740, %v5727
        %v5806 = vpack.c.b16 %v5741, %v5728
        %v5807 = vpack.c.b16 %v5742, %v5729
        %v5808 = vpack.c.b16 %v5743, %v5730
        %v5809 = vpack.c.b16 %v5744, %v5731
        %v5810 = vpack.c.b16 %v5745, %v5732
        %v5811 = vpack.c.b16 %v5746, %v5733
        %v5812 = vpack.c.b16 %v5747, %v5734
        %v5813 = vpack.c.b16 %v5748, %v5735
        %v5880 = vsel %vm3561, %v5438, 0
        %5882 = vmatprep.subr.bf16.mxu0 0
        %5883 = vmatpush1.bf16.msra.mxu0 0
        %5884 = vmatprep.subr.bf16.mxu0 0
        %5885 = vmatpush1.bf16.msra.mxu0 0
        %5886 = vmatprep.subr.bf16.mxu0 0
        %5887 = vmatpush1.bf16.msra.mxu0 0
        %5888 = vmatprep.subr.bf16.mxu0 %v5802
        %5889 = vmatpush1.bf16.msra.mxu0 %v5801
        %5890 = vmatprep.subr.bf16.mxu0 %v5789
        %5891 = vmatpush1.bf16.msra.mxu0 %v5788
        %5892 = vmatprep.subr.bf16.mxu0 %v5776
        %5893 = vmatpush1.bf16.msra.mxu0 %v5775
        %5894 = vmatprep.subr.bf16.mxu0 %v5763
        %5895 = vmatpush1.bf16.msra.mxu0 %v5762
        %5896 = vmatprep.subr.bf16.mxu0 %v5750
        %5897 = vmatpush1.bf16.msra.mxu0 %v5749
        %5898 = vmatprep.subr.bf16.mxu0 0
        %5899 = vmatpush2.bf16.msra.mxu0 0
        %5900 = vmatprep.subr.bf16.mxu0 0
        %5901 = vmatpush2.bf16.msra.mxu0 0
        %5902 = vmatprep.subr.bf16.mxu0 0
        %5903 = vmatpush2.bf16.msra.mxu0 0
        %5904 = vmatprep.subr.bf16.mxu0 0
        %5905 = vmatpush2.bf16.msra.mxu0 0
        %5906 = vmatprep.subr.bf16.mxu0 0
        %5907 = vmatpush2.bf16.msra.mxu0 0
        %5908 = vmatprep.subr.bf16.mxu0 0
        %5909 = vmatpush2.bf16.msra.mxu0 0
        %5910 = vmatprep.subr.bf16.mxu0 0
        %5911 = vmatpush2.bf16.msra.mxu0 0
        %5912 = vmatprep.subr.bf16.mxu0 0
        %5913 = vmatpush2.bf16.msra.mxu0 0
        %5914 = vmatprep.mubr.bf16.mxu0 0
        %5915 = vmatmul.mubr.bf16.gmra.mxu0 %v5880
        %v5916 = vpop.f32.mrf.mxu0
        %v5917 = vadd.f32 0.0, %v5916
        %v5918 = vpop.f32.mrf.mxu0
        %v5919 = vadd.f32 0.0, %v5918
        %v5920 = vpop.f32.mrf.mxu0
        %v5921 = vpop.f32.mrf.mxu0
        %5922 = vdwg.mxu0
        %5923 = vmatprep.subr.bf16.mxu0 0
        %5924 = vmatpush1.bf16.msra.mxu0 0
        %5925 = vmatprep.subr.bf16.mxu0 0
        %5926 = vmatpush1.bf16.msra.mxu0 0
        %5927 = vmatprep.subr.bf16.mxu0 0
        %5928 = vmatpush1.bf16.msra.mxu0 0
        %5929 = vmatprep.subr.bf16.mxu0 %v5804
        %5930 = vmatpush1.bf16.msra.mxu0 %v5803
        %5931 = vmatprep.subr.bf16.mxu0 %v5791
        %5932 = vmatpush1.bf16.msra.mxu0 %v5790
        %5933 = vmatprep.subr.bf16.mxu0 %v5778
        %5934 = vmatpush1.bf16.msra.mxu0 %v5777
        %5935 = vmatprep.subr.bf16.mxu0 %v5765
        %5936 = vmatpush1.bf16.msra.mxu0 %v5764
        %5937 = vmatprep.subr.bf16.mxu0 %v5752
        %5938 = vmatpush1.bf16.msra.mxu0 %v5751
        %5939 = vmatprep.subr.bf16.mxu0 0
        %5940 = vmatpush2.bf16.msra.mxu0 0
        %5941 = vmatprep.subr.bf16.mxu0 0
        %5942 = vmatpush2.bf16.msra.mxu0 0
        %5943 = vmatprep.subr.bf16.mxu0 0
        %5944 = vmatpush2.bf16.msra.mxu0 0
        %5945 = vmatprep.subr.bf16.mxu0 0
        %5946 = vmatpush2.bf16.msra.mxu0 0
        %5947 = vmatprep.subr.bf16.mxu0 0
        %5948 = vmatpush2.bf16.msra.mxu0 0
        %5949 = vmatprep.subr.bf16.mxu0 0
        %5950 = vmatpush2.bf16.msra.mxu0 0
        %5951 = vmatprep.subr.bf16.mxu0 0
        %5952 = vmatpush2.bf16.msra.mxu0 0
        %5953 = vmatprep.subr.bf16.mxu0 0
        %5954 = vmatpush2.bf16.msra.mxu0 0
        %5955 = vmatprep.mubr.bf16.mxu0 0
        %5956 = vmatmul.mubr.bf16.gmra.mxu0 %v5880
        %v5957 = vpop.f32.mrf.mxu0
        %v5958 = vadd.f32 0.0, %v5957
        %v5959 = vpop.f32.mrf.mxu0
        %v5960 = vadd.f32 0.0, %v5959
        %v5961 = vpop.f32.mrf.mxu0
        %v5962 = vpop.f32.mrf.mxu0
        %5963 = vdwg.mxu0
        %5964 = vmatprep.subr.bf16.mxu0 0
        %5965 = vmatpush1.bf16.msra.mxu0 0
        %5966 = vmatprep.subr.bf16.mxu0 0
        %5967 = vmatpush1.bf16.msra.mxu0 0
        %5968 = vmatprep.subr.bf16.mxu0 0
        %5969 = vmatpush1.bf16.msra.mxu0 0
        %5970 = vmatprep.subr.bf16.mxu0 %v5806
        %5971 = vmatpush1.bf16.msra.mxu0 %v5805
        %5972 = vmatprep.subr.bf16.mxu0 %v5793
        %5973 = vmatpush1.bf16.msra.mxu0 %v5792
        %5974 = vmatprep.subr.bf16.mxu0 %v5780
        %5975 = vmatpush1.bf16.msra.mxu0 %v5779
        %5976 = vmatprep.subr.bf16.mxu0 %v5767
        %5977 = vmatpush1.bf16.msra.mxu0 %v5766
        %5978 = vmatprep.subr.bf16.mxu0 %v5754
        %5979 = vmatpush1.bf16.msra.mxu0 %v5753
        %5980 = vmatprep.subr.bf16.mxu0 0
        %5981 = vmatpush2.bf16.msra.mxu0 0
        %5982 = vmatprep.subr.bf16.mxu0 0
        %5983 = vmatpush2.bf16.msra.mxu0 0
        %5984 = vmatprep.subr.bf16.mxu0 0
        %5985 = vmatpush2.bf16.msra.mxu0 0
        %5986 = vmatprep.subr.bf16.mxu0 0
        %5987 = vmatpush2.bf16.msra.mxu0 0
        %5988 = vmatprep.subr.bf16.mxu0 0
        %5989 = vmatpush2.bf16.msra.mxu0 0
        %5990 = vmatprep.subr.bf16.mxu0 0
        %5991 = vmatpush2.bf16.msra.mxu0 0
        %5992 = vmatprep.subr.bf16.mxu0 0
        %5993 = vmatpush2.bf16.msra.mxu0 0
        %5994 = vmatprep.subr.bf16.mxu0 0
        %5995 = vmatpush2.bf16.msra.mxu0 0
        %5996 = vmatprep.mubr.bf16.mxu0 0
        %5997 = vmatmul.mubr.bf16.gmra.mxu0 %v5880
        %v5998 = vpop.f32.mrf.mxu0
        %v5999 = vadd.f32 0.0, %v5998
        %v6000 = vpop.f32.mrf.mxu0
        %v6001 = vadd.f32 0.0, %v6000
        %v6002 = vpop.f32.mrf.mxu0
        %v6003 = vpop.f32.mrf.mxu0
        %6004 = vdwg.mxu0
        %6005 = vmatprep.subr.bf16.mxu0 0
        %6006 = vmatpush1.bf16.msra.mxu0 0
        %6007 = vmatprep.subr.bf16.mxu0 0
        %6008 = vmatpush1.bf16.msra.mxu0 0
        %6009 = vmatprep.subr.bf16.mxu0 0
        %6010 = vmatpush1.bf16.msra.mxu0 0
        %6011 = vmatprep.subr.bf16.mxu0 %v5808
        %6012 = vmatpush1.bf16.msra.mxu0 %v5807
        %6013 = vmatprep.subr.bf16.mxu0 %v5795
        %6014 = vmatpush1.bf16.msra.mxu0 %v5794
        %6015 = vmatprep.subr.bf16.mxu0 %v5782
        %6016 = vmatpush1.bf16.msra.mxu0 %v5781
        %6017 = vmatprep.subr.bf16.mxu0 %v5769
        %6018 = vmatpush1.bf16.msra.mxu0 %v5768
        %6019 = vmatprep.subr.bf16.mxu0 %v5756
        %6020 = vmatpush1.bf16.msra.mxu0 %v5755
        %6021 = vmatprep.subr.bf16.mxu0 0
        %6022 = vmatpush2.bf16.msra.mxu0 0
        %6023 = vmatprep.subr.bf16.mxu0 0
        %6024 = vmatpush2.bf16.msra.mxu0 0
        %6025 = vmatprep.subr.bf16.mxu0 0
        %6026 = vmatpush2.bf16.msra.mxu0 0
        %6027 = vmatprep.subr.bf16.mxu0 0
        %6028 = vmatpush2.bf16.msra.mxu0 0
        %6029 = vmatprep.subr.bf16.mxu0 0
        %6030 = vmatpush2.bf16.msra.mxu0 0
        %6031 = vmatprep.subr.bf16.mxu0 0
        %6032 = vmatpush2.bf16.msra.mxu0 0
        %6033 = vmatprep.subr.bf16.mxu0 0
        %6034 = vmatpush2.bf16.msra.mxu0 0
        %6035 = vmatprep.subr.bf16.mxu0 0
        %6036 = vmatpush2.bf16.msra.mxu0 0
        %6037 = vmatprep.mubr.bf16.mxu0 0
        %6038 = vmatmul.mubr.bf16.gmra.mxu0 %v5880
        %v6039 = vpop.f32.mrf.mxu0
        %v6040 = vadd.f32 0.0, %v6039
        %v6041 = vpop.f32.mrf.mxu0
        %v6042 = vadd.f32 0.0, %v6041
        %v6043 = vpop.f32.mrf.mxu0
        %v6044 = vpop.f32.mrf.mxu0
        %6045 = vdwg.mxu0
        %6046 = vmatprep.subr.bf16.mxu0 0
        %6047 = vmatpush1.bf16.msra.mxu0 0
        %6048 = vmatprep.subr.bf16.mxu0 0
        %6049 = vmatpush1.bf16.msra.mxu0 0
        %6050 = vmatprep.subr.bf16.mxu0 0
        %6051 = vmatpush1.bf16.msra.mxu0 0
        %6052 = vmatprep.subr.bf16.mxu0 %v5810
        %6053 = vmatpush1.bf16.msra.mxu0 %v5809
        %6054 = vmatprep.subr.bf16.mxu0 %v5797
        %6055 = vmatpush1.bf16.msra.mxu0 %v5796
        %6056 = vmatprep.subr.bf16.mxu0 %v5784
        %6057 = vmatpush1.bf16.msra.mxu0 %v5783
        %6058 = vmatprep.subr.bf16.mxu0 %v5771
        %6059 = vmatpush1.bf16.msra.mxu0 %v5770
        %6060 = vmatprep.subr.bf16.mxu0 %v5758
        %6061 = vmatpush1.bf16.msra.mxu0 %v5757
        %6062 = vmatprep.subr.bf16.mxu0 0
        %6063 = vmatpush2.bf16.msra.mxu0 0
        %6064 = vmatprep.subr.bf16.mxu0 0
        %6065 = vmatpush2.bf16.msra.mxu0 0
        %6066 = vmatprep.subr.bf16.mxu0 0
        %6067 = vmatpush2.bf16.msra.mxu0 0
        %6068 = vmatprep.subr.bf16.mxu0 0
        %6069 = vmatpush2.bf16.msra.mxu0 0
        %6070 = vmatprep.subr.bf16.mxu0 0
        %6071 = vmatpush2.bf16.msra.mxu0 0
        %6072 = vmatprep.subr.bf16.mxu0 0
        %6073 = vmatpush2.bf16.msra.mxu0 0
        %6074 = vmatprep.subr.bf16.mxu0 0
        %6075 = vmatpush2.bf16.msra.mxu0 0
        %6076 = vmatprep.subr.bf16.mxu0 0
        %6077 = vmatpush2.bf16.msra.mxu0 0
        %6078 = vmatprep.mubr.bf16.mxu0 0
        %6079 = vmatmul.mubr.bf16.gmra.mxu0 %v5880
        %v6080 = vpop.f32.mrf.mxu0
        %v6081 = vadd.f32 0.0, %v6080
        %v6082 = vpop.f32.mrf.mxu0
        %v6083 = vadd.f32 0.0, %v6082
        %v6084 = vpop.f32.mrf.mxu0
        %v6085 = vpop.f32.mrf.mxu0
        %6086 = vdwg.mxu0
        %6087 = vmatprep.subr.bf16.mxu0 0
        %6088 = vmatpush1.bf16.msra.mxu0 0
        %6089 = vmatprep.subr.bf16.mxu0 0
        %6090 = vmatpush1.bf16.msra.mxu0 0
        %6091 = vmatprep.subr.bf16.mxu0 0
        %6092 = vmatpush1.bf16.msra.mxu0 0
        %6093 = vmatprep.subr.bf16.mxu0 %v5812
        %6094 = vmatpush1.bf16.msra.mxu0 %v5811
        %6095 = vmatprep.subr.bf16.mxu0 %v5799
        %6096 = vmatpush1.bf16.msra.mxu0 %v5798
        %6097 = vmatprep.subr.bf16.mxu0 %v5786
        %6098 = vmatpush1.bf16.msra.mxu0 %v5785
        %6099 = vmatprep.subr.bf16.mxu0 %v5773
        %6100 = vmatpush1.bf16.msra.mxu0 %v5772
        %6101 = vmatprep.subr.bf16.mxu0 %v5760
        %6102 = vmatpush1.bf16.msra.mxu0 %v5759
        %6103 = vmatprep.subr.bf16.mxu0 0
        %6104 = vmatpush2.bf16.msra.mxu0 0
        %6105 = vmatprep.subr.bf16.mxu0 0
        %6106 = vmatpush2.bf16.msra.mxu0 0
        %6107 = vmatprep.subr.bf16.mxu0 0
        %6108 = vmatpush2.bf16.msra.mxu0 0
        %6109 = vmatprep.subr.bf16.mxu0 0
        %6110 = vmatpush2.bf16.msra.mxu0 0
        %6111 = vmatprep.subr.bf16.mxu0 0
        %6112 = vmatpush2.bf16.msra.mxu0 0
        %6113 = vmatprep.subr.bf16.mxu0 0
        %6114 = vmatpush2.bf16.msra.mxu0 0
        %6115 = vmatprep.subr.bf16.mxu0 0
        %6116 = vmatpush2.bf16.msra.mxu0 0
        %6117 = vmatprep.subr.bf16.mxu0 0
        %6118 = vmatpush2.bf16.msra.mxu0 0
        %6119 = vmatprep.mubr.bf16.mxu0 0
        %6120 = vmatmul.mubr.bf16.gmra.mxu0 %v5880
        %v6121 = vpop.f32.mrf.mxu0
        %v6122 = vadd.f32 0.0, %v6121
        %v6123 = vpop.f32.mrf.mxu0
        %v6124 = vadd.f32 0.0, %v6123
        %v6125 = vpop.f32.mrf.mxu0
        %v6126 = vpop.f32.mrf.mxu0
        %6127 = vdwg.mxu0
        %6128 = vmatprep.subr.bf16.mxu0 0
        %6129 = vmatpush1.bf16.msra.mxu0 0
        %6130 = vmatprep.subr.bf16.mxu0 0
        %6131 = vmatpush1.bf16.msra.mxu0 0
        %6132 = vmatprep.subr.bf16.mxu0 0
        %6133 = vmatpush1.bf16.msra.mxu0 0
        %6134 = vmatprep.subr.bf16.mxu0 0
        %6135 = vmatpush1.bf16.msra.mxu0 %v5813
        %6136 = vmatprep.subr.bf16.mxu0 0
        %6137 = vmatpush1.bf16.msra.mxu0 %v5800
        %6138 = vmatprep.subr.bf16.mxu0 0
        %6139 = vmatpush1.bf16.msra.mxu0 %v5787
        %6140 = vmatprep.subr.bf16.mxu0 0
        %6141 = vmatpush1.bf16.msra.mxu0 %v5774
        %6142 = vmatprep.subr.bf16.mxu0 0
        %6143 = vmatpush1.bf16.msra.mxu0 %v5761
        %6144 = vmatprep.subr.bf16.mxu0 0
        %6145 = vmatpush2.bf16.msra.mxu0 0
        %6146 = vmatprep.subr.bf16.mxu0 0
        %6147 = vmatpush2.bf16.msra.mxu0 0
        %6148 = vmatprep.subr.bf16.mxu0 0
        %6149 = vmatpush2.bf16.msra.mxu0 0
        %6150 = vmatprep.subr.bf16.mxu0 0
        %6151 = vmatpush2.bf16.msra.mxu0 0
        %6152 = vmatprep.subr.bf16.mxu0 0
        %6153 = vmatpush2.bf16.msra.mxu0 0
        %6154 = vmatprep.subr.bf16.mxu0 0
        %6155 = vmatpush2.bf16.msra.mxu0 0
        %6156 = vmatprep.subr.bf16.mxu0 0
        %6157 = vmatpush2.bf16.msra.mxu0 0
        %6158 = vmatprep.subr.bf16.mxu0 0
        %6159 = vmatpush2.bf16.msra.mxu0 0
        %6160 = vmatprep.mubr.bf16.mxu0 0
        %6161 = vmatmul.mubr.bf16.gmra.mxu0 %v5880
        %v6162 = vpop.f32.mrf.mxu0
        %v6163 = vadd.f32 0.0, %v6162
        %v6164 = vpop.f32.mrf.mxu0
        %v6165 = vpop.f32.mrf.mxu0
        %v6166 = vpop.f32.mrf.mxu0
        %6167 = vdwg.mxu0
        %s6168 = smul.u32 %s3208, 13
        %s6169 = smul.u32 %s6168, 8
        %s6170 = sadd.s32 %s6169, %s3211
        %s6171 = scalar_lea.vmem %s19, %s6170
        %v6172 = vld [vmem:[%s6171] ss:$8 sm:$0xf]
        %v6173 = vld [vmem:[%s6171] ss:$8 sm:$0xf0]
        %v6174 = vor.u32 %v6172, %v6173
        %s6175 = sadd.s32 %s6168, 8
        %s6176 = smul.u32 %s6175, 8
        %s6177 = sadd.s32 %s6176, %s3211
        %s6178 = scalar_lea.vmem %s19, %s6177
        %v6179 = vld [vmem:[%s6178] ss:$8 sm:$0xf]
        %v6180 = vld [vmem:[%s6178] ss:$8 sm:$0x10]
        %v6181 = vor.u32 %v6179, %v6180
        %v6184 = vlaneseq
        %v6185 = vshrl.u32 %v6184, 7
        %v6186 = vsub.s32 0, %v6185
        %v6187 = vrot.slane %v6174, %v6186
        %v6188 = vlaneseq
        %v6189 = vshrl.u32 %v6188, 7
        %v6190 = vsub.s32 1, %v6189
        %v6191 = vrot.slane %v6174, %v6190
        %v6192 = vlaneseq
        %v6193 = vshrl.u32 %v6192, 7
        %v6194 = vsub.s32 2, %v6193
        %v6195 = vrot.slane %v6174, %v6194
        %v6196 = vlaneseq
        %v6197 = vshrl.u32 %v6196, 7
        %v6198 = vsub.s32 3, %v6197
        %v6199 = vrot.slane %v6174, %v6198
        %v6200 = vlaneseq
        %v6201 = vshrl.u32 %v6200, 7
        %v6202 = vsub.s32 4, %v6201
        %v6203 = vrot.slane %v6174, %v6202
        %v6204 = vlaneseq
        %v6205 = vshrl.u32 %v6204, 7
        %v6206 = vsub.s32 5, %v6205
        %v6207 = vrot.slane %v6174, %v6206
        %v6208 = vlaneseq
        %v6209 = vshrl.u32 %v6208, 7
        %v6210 = vsub.s32 6, %v6209
        %v6211 = vrot.slane %v6174, %v6210
        %v6212 = vlaneseq
        %v6213 = vshrl.u32 %v6212, 7
        %v6214 = vsub.s32 7, %v6213
        %v6215 = vrot.slane %v6174, %v6214
        %v6216 = vlaneseq
        %v6217 = vshrl.u32 %v6216, 7
        %v6218 = vsub.s32 0, %v6217
        %v6219 = vrot.slane %v6181, %v6218
        %v6220 = vlaneseq
        %v6221 = vshrl.u32 %v6220, 7
        %v6222 = vsub.s32 1, %v6221
        %v6223 = vrot.slane %v6181, %v6222
        %v6224 = vlaneseq
        %v6225 = vshrl.u32 %v6224, 7
        %v6226 = vsub.s32 2, %v6225
        %v6227 = vrot.slane %v6181, %v6226
        %v6228 = vlaneseq
        %v6229 = vshrl.u32 %v6228, 7
        %v6230 = vsub.s32 3, %v6229
        %v6231 = vrot.slane %v6181, %v6230
        %v6232 = vlaneseq
        %v6233 = vshrl.u32 %v6232, 7
        %v6234 = vsub.s32 4, %v6233
        %v6235 = vrot.slane %v6181, %v6234
        %v6249 = vmul.f32 %v5917, %v6187
        %v6250 = vmul.f32 %v5919, %v6191
        %v6251 = vmul.f32 %v5958, %v6195
        %v6252 = vmul.f32 %v5960, %v6199
        %v6253 = vmul.f32 %v5999, %v6203
        %v6254 = vmul.f32 %v6001, %v6207
        %v6255 = vmul.f32 %v6040, %v6211
        %v6256 = vmul.f32 %v6042, %v6215
        %v6257 = vmul.f32 %v6081, %v6219
        %v6258 = vmul.f32 %v6083, %v6223
        %v6259 = vmul.f32 %v6122, %v6227
        %v6260 = vmul.f32 %v6124, %v6231
        %v6261 = vmul.f32 %v6163, %v6235
        %v6262 = vadd.f32 %v5425, %v6249
        %v6263 = vadd.f32 %v5426, %v6250
        %v6264 = vadd.f32 %v5427, %v6251
        %v6265 = vadd.f32 %v5428, %v6252
        %v6266 = vadd.f32 %v5429, %v6253
        %v6267 = vadd.f32 %v5430, %v6254
        %v6268 = vadd.f32 %v5431, %v6255
        %v6269 = vadd.f32 %v5432, %v6256
        %v6270 = vadd.f32 %v5433, %v6257
        %v6271 = vadd.f32 %v5434, %v6258
        %v6272 = vadd.f32 %v5435, %v6259
        %v6273 = vadd.f32 %v5436, %v6260
        %v6274 = vadd.f32 %v5437, %v6261
        %6275 = vst [vmem:[#allocation4] sm:$0xff] %v6262
        %6276 = vst [vmem:[#allocation4 + $0x8] sm:$0xff] %v6263
        %6277 = vst [vmem:[#allocation4 + $0x10] sm:$0xff] %v6264
        %6278 = vst [vmem:[#allocation4 + $0x18] sm:$0xff] %v6265
        %6279 = vst [vmem:[#allocation4 + $0x20] sm:$0xff] %v6266
        %6280 = vst [vmem:[#allocation4 + $0x28] sm:$0xff] %v6267
        %6281 = vst [vmem:[#allocation4 + $0x30] sm:$0xff] %v6268
        %6282 = vst [vmem:[#allocation4 + $0x38] sm:$0xff] %v6269
        %6283 = vst [vmem:[#allocation4 + $0x40] sm:$0xff] %v6270
        %6284 = vst [vmem:[#allocation4 + $0x48] sm:$0xff] %v6271
        %6285 = vst [vmem:[#allocation4 + $0x50] sm:$0xff] %v6272
        %6286 = vst [vmem:[#allocation4 + $0x58] sm:$0xff] %v6273
        %vm6287 = vcmask 523264
        %6288 = vst.msk [vmem:[#allocation4 + $0x60] sm:$0xff] %vm6287, %v6274
        %p6289 = scmp.eq.s32.totalorder %s41, 9
        // Predicated region
        $region129: #{mm_model_forward.1} parent=107 // pred_check
          %p6290 = pneg %p6289
        $region130: #{mm_model_forward.1} parent=107 // pred_check_branch
          %6292 = sbr.rel (%p6290) target = $region132
        $region131: #{mm_model_forward.1} parent=107 // pred_region
          %v6293 = vld [vmem:[#allocation4] sm:$0xff]
          %v6294 = vld [vmem:[#allocation4 + $0x8] sm:$0xff]
          %v6295 = vld [vmem:[#allocation4 + $0x10] sm:$0xff]
          %v6296 = vld [vmem:[#allocation4 + $0x18] sm:$0xff]
          %v6297 = vld [vmem:[#allocation4 + $0x20] sm:$0xff]
          %v6298 = vld [vmem:[#allocation4 + $0x28] sm:$0xff]
          %v6299 = vld [vmem:[#allocation4 + $0x30] sm:$0xff]
          %v6300 = vld [vmem:[#allocation4 + $0x38] sm:$0xff]
          %v6301 = vld [vmem:[#allocation4 + $0x40] sm:$0xff]
          %v6302 = vld [vmem:[#allocation4 + $0x48] sm:$0xff]
          %v6303 = vld [vmem:[#allocation4 + $0x50] sm:$0xff]
          %v6304 = vld [vmem:[#allocation4 + $0x58] sm:$0xff]
          %v6305 = vld [vmem:[#allocation4 + $0x60] sm:$0xff]
          %v6306 = vld [vmem:[%s21] sm:$0xff]
          %v6307 = vld [vmem:[%s21 + $0x8] sm:$0xff]
          %v6308 = vld [vmem:[%s21 + $0x10] sm:$0xff]
          %v6309 = vld [vmem:[%s21 + $0x18] sm:$0xff]
          %v6310 = vld [vmem:[%s21 + $0x20] sm:$0xff]
          %v6311 = vld [vmem:[%s21 + $0x28] sm:$0xff]
          %v6312 = vld [vmem:[%s21 + $0x30] sm:$0xff]
          %v6313 = vld [vmem:[%s21 + $0x38] sm:$0xff]
          %v6314 = vld [vmem:[%s21 + $0x40] sm:$0xff]
          %v6315 = vld [vmem:[%s21 + $0x48] sm:$0xff]
          %v6316 = vld [vmem:[%s21 + $0x50] sm:$0xff]
          %v6317 = vld [vmem:[%s21 + $0x58] sm:$0xff]
          %v6318 = vld [vmem:[%s21 + $0x60] sm:$0xff]
          %v6319 = vld [vmem:[%s21 + $0x68] sm:$0xff]
          %v6320 = vld [vmem:[%s21 + $0x70] sm:$0xff]
          %v6321 = vld [vmem:[%s21 + $0x78] sm:$0xff]
          %v6322 = vld [vmem:[%s21 + $0x80] sm:$0xff]
          %v6323 = vld [vmem:[%s21 + $0x88] sm:$0xff]
          %v6324 = vld [vmem:[%s21 + $0x90] sm:$0xff]
          %v6325 = vld [vmem:[%s21 + $0x98] sm:$0xff]
          %v6326 = vld [vmem:[%s21 + $0xa0] sm:$0xff]
          %v6327 = vld [vmem:[%s21 + $0xa8] sm:$0xff]
          %v6328 = vld [vmem:[%s21 + $0xb0] sm:$0xff]
          %v6329 = vld [vmem:[%s21 + $0xb8] sm:$0xff]
          %v6330 = vld [vmem:[%s21 + $0xc0] sm:$0xff]
          %v6331 = vld [vmem:[%s21 + $0xc8] sm:$0xff]
          %v6332 = vld [vmem:[%s21 + $0xd0] sm:$0xff]
          %v6333 = vld [vmem:[%s21 + $0xd8] sm:$0xff]
          %v6334 = vld [vmem:[%s21 + $0xe0] sm:$0xff]
          %v6335 = vld [vmem:[%s21 + $0xe8] sm:$0xff]
          %v6336 = vld [vmem:[%s21 + $0xf0] sm:$0xff]
          %v6337 = vld [vmem:[%s21 + $0xf8] sm:$0xff]
          %v6338 = vld [vmem:[%s21 + $0x100] sm:$0xff]
          %v6339 = vld [vmem:[%s21 + $0x108] sm:$0xff]
          %v6340 = vld [vmem:[%s21 + $0x110] sm:$0xff]
          %v6341 = vld [vmem:[%s21 + $0x118] sm:$0xff]
          %v6342 = vld [vmem:[%s21 + $0x120] sm:$0xff]
          %v6343 = vld [vmem:[%s21 + $0x128] sm:$0xff]
          %v6344 = vld [vmem:[%s21 + $0x130] sm:$0xff]
          %v6345 = vld [vmem:[%s21 + $0x138] sm:$0xff]
          %v6346 = vld [vmem:[%s21 + $0x140] sm:$0xff]
          %v6347 = vld [vmem:[%s21 + $0x148] sm:$0xff]
          %v6348 = vld [vmem:[%s21 + $0x150] sm:$0xff]
          %v6349 = vld [vmem:[%s21 + $0x158] sm:$0xff]
          %v6350 = vld [vmem:[%s21 + $0x160] sm:$0xff]
          %v6351 = vld [vmem:[%s21 + $0x168] sm:$0xff]
          %v6352 = vld [vmem:[%s21 + $0x170] sm:$0xff]
          %v6353 = vld [vmem:[%s21 + $0x178] sm:$0xff]
          %v6354 = vld [vmem:[%s21 + $0x180] sm:$0xff]
          %v6355 = vld [vmem:[%s21 + $0x188] sm:$0xff]
          %v6356 = vld [vmem:[%s21 + $0x190] sm:$0xff]
          %v6357 = vld [vmem:[%s21 + $0x198] sm:$0xff]
          %v6358 = vld [vmem:[%s21 + $0x1a0] sm:$0xff]
          %v6359 = vld [vmem:[%s21 + $0x1a8] sm:$0xff]
          %v6360 = vld [vmem:[%s21 + $0x1b0] sm:$0xff]
          %v6361 = vld [vmem:[%s21 + $0x1b8] sm:$0xff]
          %v6362 = vld [vmem:[%s21 + $0x1c0] sm:$0xff]
          %v6363 = vld [vmem:[%s21 + $0x1c8] sm:$0xff]
          %v6364 = vld [vmem:[%s21 + $0x1d0] sm:$0xff]
          %v6365 = vld [vmem:[%s21 + $0x1d8] sm:$0xff]
          %v6366 = vld [vmem:[%s21 + $0x1e0] sm:$0xff]
          %v6367 = vld [vmem:[%s21 + $0x1e8] sm:$0xff]
          %v6368 = vld [vmem:[%s21 + $0x1f0] sm:$0xff]
          %v6369 = vld [vmem:[%s21 + $0x1f8] sm:$0xff]
          %v6370 = vld [vmem:[%s21 + $0x200] sm:$0xff]
          %v6371 = vld [vmem:[%s21 + $0x208] sm:$0xff]
          %v6372 = vld [vmem:[%s21 + $0x210] sm:$0xff]
          %v6373 = vld [vmem:[%s21 + $0x218] sm:$0xff]
          %v6374 = vld [vmem:[%s21 + $0x220] sm:$0xff]
          %v6375 = vld [vmem:[%s21 + $0x228] sm:$0xff]
          %v6376 = vld [vmem:[%s21 + $0x230] sm:$0xff]
          %v6377 = vld [vmem:[%s21 + $0x238] sm:$0xff]
          %v6378 = vld [vmem:[%s21 + $0x240] sm:$0xff]
          %v6379 = vld [vmem:[%s21 + $0x248] sm:$0xff]
          %v6380 = vld [vmem:[%s21 + $0x250] sm:$0xff]
          %v6381 = vld [vmem:[%s21 + $0x258] sm:$0xff]
          %v6382 = vld [vmem:[%s21 + $0x260] sm:$0xff]
          %v6383 = vld [vmem:[%s21 + $0x268] sm:$0xff]
          %v6384 = vld [vmem:[%s21 + $0x270] sm:$0xff]
          %v6385 = vld [vmem:[%s21 + $0x278] sm:$0xff]
          %v6386 = vld [vmem:[%s21 + $0x280] sm:$0xff]
          %v6387 = vld [vmem:[%s21 + $0x288] sm:$0xff]
          %v6388 = vld [vmem:[%s21 + $0x290] sm:$0xff]
          %v6389 = vld [vmem:[%s21 + $0x298] sm:$0xff]
          %v6390 = vld [vmem:[%s21 + $0x2a0] sm:$0xff]
          %v6391 = vld [vmem:[%s21 + $0x2a8] sm:$0xff]
          %v6392 = vld [vmem:[%s21 + $0x2b0] sm:$0xff]
          %v6393 = vld [vmem:[%s21 + $0x2b8] sm:$0xff]
          %v6394 = vld [vmem:[%s21 + $0x2c0] sm:$0xff]
          %v6395 = vld [vmem:[%s21 + $0x2c8] sm:$0xff]
          %v6396 = vld [vmem:[%s21 + $0x2d0] sm:$0xff]
          %v6397 = vld [vmem:[%s21 + $0x2d8] sm:$0xff]
          %v6398 = vld [vmem:[%s21 + $0x2e0] sm:$0xff]
          %v6399 = vld [vmem:[%s21 + $0x2e8] sm:$0xff]
          %v6400 = vld [vmem:[%s21 + $0x2f0] sm:$0xff]
          %v6401 = vld [vmem:[%s21 + $0x2f8] sm:$0xff]
          %v6402 = vld [vmem:[%s21 + $0x300] sm:$0xff]
          %v6403 = vld [vmem:[%s21 + $0x308] sm:$0xff]
          %v6404 = vld [vmem:[%s21 + $0x310] sm:$0xff]
          %v6405 = vld [vmem:[%s21 + $0x318] sm:$0xff]
          %v6406 = vld [vmem:[%s21 + $0x320] sm:$0xff]
          %v6407 = vld [vmem:[%s21 + $0x328] sm:$0xff]
          %v6408 = vld [vmem:[%s21 + $0x330] sm:$0xff]
          %v6409 = vld [vmem:[%s21 + $0x338] sm:$0xff]
          %v6410 = vld [vmem:[%s21 + $0x340] sm:$0xff]
          %v6411 = vld [vmem:[%s21 + $0x348] sm:$0xff]
          %v6412 = vld [vmem:[%s21 + $0x350] sm:$0xff]
          %v6413 = vld [vmem:[%s21 + $0x358] sm:$0xff]
          %v6414 = vld [vmem:[%s21 + $0x360] sm:$0xff]
          %v6415 = vld [vmem:[%s21 + $0x368] sm:$0xff]
          %v6416 = vld [vmem:[%s21 + $0x370] sm:$0xff]
          %v6417 = vld [vmem:[%s21 + $0x378] sm:$0xff]
          %v6418 = vld [vmem:[%s21 + $0x380] sm:$0xff]
          %v6419 = vld [vmem:[%s21 + $0x388] sm:$0xff]
          %v6420 = vld [vmem:[%s21 + $0x390] sm:$0xff]
          %v6421 = vld [vmem:[%s21 + $0x398] sm:$0xff]
          %v6422 = vld [vmem:[%s21 + $0x3a0] sm:$0xff]
          %v6423 = vld [vmem:[%s21 + $0x3a8] sm:$0xff]
          %v6424 = vld [vmem:[%s21 + $0x3b0] sm:$0xff]
          %v6425 = vld [vmem:[%s21 + $0x3b8] sm:$0xff]
          %v6426 = vld [vmem:[%s21 + $0x3c0] sm:$0xff]
          %v6427 = vld [vmem:[%s21 + $0x3c8] sm:$0xff]
          %v6428 = vld [vmem:[%s21 + $0x3d0] sm:$0xff]
          %v6429 = vld [vmem:[%s21 + $0x3d8] sm:$0xff]
          %v6430 = vld [vmem:[%s21 + $0x3e0] sm:$0xff]
          %v6431 = vld [vmem:[%s21 + $0x3e8] sm:$0xff]
          %v6432 = vld [vmem:[%s21 + $0x3f0] sm:$0xff]
          %v6433 = vld [vmem:[%s21 + $0x3f8] sm:$0xff]
          %v6434 = vld [vmem:[%s21 + $0x400] sm:$0xff]
          %v6435 = vld [vmem:[%s21 + $0x408] sm:$0xff]
          %v6436 = vld [vmem:[%s21 + $0x410] sm:$0xff]
          %v6437 = vld [vmem:[%s21 + $0x418] sm:$0xff]
          %v6438 = vld [vmem:[%s21 + $0x420] sm:$0xff]
          %v6439 = vld [vmem:[%s21 + $0x428] sm:$0xff]
          %v6440 = vld [vmem:[%s21 + $0x430] sm:$0xff]
          %v6441 = vld [vmem:[%s21 + $0x438] sm:$0xff]
          %v6442 = vld [vmem:[%s21 + $0x440] sm:$0xff]
          %v6443 = vld [vmem:[%s21 + $0x448] sm:$0xff]
          %v6444 = vld [vmem:[%s21 + $0x450] sm:$0xff]
          %v6445 = vld [vmem:[%s21 + $0x458] sm:$0xff]
          %v6446 = vld [vmem:[%s21 + $0x460] sm:$0xff]
          %v6447 = vld [vmem:[%s21 + $0x468] sm:$0xff]
          %v6448 = vld [vmem:[%s21 + $0x470] sm:$0xff]
          %v6449 = vld [vmem:[%s21 + $0x478] sm:$0xff]
          %v6450 = vld [vmem:[%s21 + $0x480] sm:$0xff]
          %v6451 = vld [vmem:[%s21 + $0x488] sm:$0xff]
          %v6452 = vld [vmem:[%s21 + $0x490] sm:$0xff]
          %v6453 = vld [vmem:[%s21 + $0x498] sm:$0xff]
          %v6454 = vld [vmem:[%s21 + $0x4a0] sm:$0xff]
          %v6455 = vld [vmem:[%s21 + $0x4a8] sm:$0xff]
          %v6456 = vld [vmem:[%s21 + $0x4b0] sm:$0xff]
          %v6457 = vld [vmem:[%s21 + $0x4b8] sm:$0xff]
          %v6458 = vld [vmem:[%s21 + $0x4c0] sm:$0xff]
          %v6459 = vld [vmem:[%s21 + $0x4c8] sm:$0xff]
          %v6460 = vld [vmem:[%s21 + $0x4d0] sm:$0xff]
          %v6461 = vld [vmem:[%s21 + $0x4d8] sm:$0xff]
          %v6462 = vld [vmem:[%s21 + $0x4e0] sm:$0xff]
          %v6463 = vld [vmem:[%s21 + $0x4e8] sm:$0xff]
          %v6464 = vld [vmem:[%s21 + $0x4f0] sm:$0xff]
          %v6465 = vld [vmem:[%s21 + $0x4f8] sm:$0xff]
          %v6466 = vld [vmem:[%s21 + $0x500] sm:$0xff]
          %v6467 = vld [vmem:[%s21 + $0x508] sm:$0xff]
          %v6468 = vld [vmem:[%s21 + $0x510] sm:$0xff]
          %v6469 = vld [vmem:[%s21 + $0x518] sm:$0xff]
          %v6470 = vld [vmem:[%s21 + $0x520] sm:$0xff]
          %v6471 = vld [vmem:[%s21 + $0x528] sm:$0xff]
          %v6472 = vld [vmem:[%s21 + $0x530] sm:$0xff]
          %v6473 = vld [vmem:[%s21 + $0x538] sm:$0xff]
          %v6474 = vld [vmem:[%s21 + $0x540] sm:$0xff]
          %v6475 = vld [vmem:[%s21 + $0x548] sm:$0xff]
          %v6476 = vld [vmem:[%s21 + $0x550] sm:$0xff]
          %v6477 = vld [vmem:[%s21 + $0x558] sm:$0xff]
          %v6478 = vld [vmem:[%s21 + $0x560] sm:$0xff]
          %v6479 = vld [vmem:[%s21 + $0x568] sm:$0xff]
          %v6480 = vld [vmem:[%s21 + $0x570] sm:$0xff]
          %v6481 = vld [vmem:[%s21 + $0x578] sm:$0xff]
          %v6482 = vld [vmem:[%s21 + $0x580] sm:$0xff]
          %v6483 = vld [vmem:[%s21 + $0x588] sm:$0xff]
          %v6484 = vld [vmem:[%s21 + $0x590] sm:$0xff]
          %v6485 = vld [vmem:[%s21 + $0x598] sm:$0xff]
          %v6486 = vld [vmem:[%s21 + $0x5a0] sm:$0xff]
          %v6487 = vld [vmem:[%s21 + $0x5a8] sm:$0xff]
          %v6488 = vld [vmem:[%s21 + $0x5b0] sm:$0xff]
          %v6489 = vld [vmem:[%s21 + $0x5b8] sm:$0xff]
          %v6490 = vld [vmem:[%s21 + $0x5c0] sm:$0xff]
          %v6491 = vld [vmem:[%s21 + $0x5c8] sm:$0xff]
          %v6492 = vld [vmem:[%s21 + $0x5d0] sm:$0xff]
          %v6493 = vld [vmem:[%s21 + $0x5d8] sm:$0xff]
          %v6494 = vld [vmem:[%s21 + $0x5e0] sm:$0xff]
          %v6495 = vld [vmem:[%s21 + $0x5e8] sm:$0xff]
          %v6496 = vld [vmem:[%s21 + $0x5f0] sm:$0xff]
          %v6497 = vld [vmem:[%s21 + $0x5f8] sm:$0xff]
          %v6498 = vld [vmem:[%s21 + $0x600] sm:$0xff]
          %v6499 = vld [vmem:[%s21 + $0x608] sm:$0xff]
          %v6500 = vld [vmem:[%s21 + $0x610] sm:$0xff]
          %v6501 = vld [vmem:[%s21 + $0x618] sm:$0xff]
          %v6502 = vld [vmem:[%s21 + $0x620] sm:$0xff]
          %v6503 = vld [vmem:[%s21 + $0x628] sm:$0xff]
          %v6504 = vld [vmem:[%s21 + $0x630] sm:$0xff]
          %v6505 = vld [vmem:[%s21 + $0x638] sm:$0xff]
          %v6507 = vsel %vm6287, %v6305, 0
          %6509 = vmatprep.subr.mxu0 0.0
          %6510 = vmatpush1.msra.mxu0 %v6321
          %6511 = vmatprep.subr.mxu0 0.0
          %6512 = vmatpush1.msra.mxu0 %v6320
          %6513 = vmatprep.subr.mxu0 0.0
          %6514 = vmatpush1.msra.mxu0 %v6319
          %6515 = vmatprep.subr.mxu0 0.0
          %6516 = vmatpush1.msra.mxu0 %v6318
          %6517 = vmatprep.subr.mxu0 0.0
          %6518 = vmatpush1.msra.mxu0 %v6317
          %6519 = vmatprep.subr.mxu0 0.0
          %6520 = vmatpush1.msra.mxu0 %v6316
          %6521 = vmatprep.subr.mxu0 0.0
          %6522 = vmatpush1.msra.mxu0 %v6315
          %6523 = vmatprep.subr.mxu0 0.0
          %6524 = vmatpush1.msra.mxu0 %v6314
          %6525 = vmatprep.subr.mxu0 0.0
          %6526 = vmatpush1.msra.mxu0 %v6313
          %6527 = vmatprep.subr.mxu0 0.0
          %6528 = vmatpush1.msra.mxu0 %v6312
          %6529 = vmatprep.subr.mxu0 0.0
          %6530 = vmatpush1.msra.mxu0 %v6311
          %6531 = vmatprep.subr.mxu0 0.0
          %6532 = vmatpush1.msra.mxu0 %v6310
          %6533 = vmatprep.subr.mxu0 0.0
          %6534 = vmatpush1.msra.mxu0 %v6309
          %6535 = vmatprep.subr.mxu0 0.0
          %6536 = vmatpush1.msra.mxu0 %v6308
          %6537 = vmatprep.subr.mxu0 0.0
          %6538 = vmatpush1.msra.mxu0 %v6307
          %6539 = vmatprep.subr.mxu0 0.0
          %6540 = vmatpush1.msra.mxu0 %v6306
          %6541 = vmatprep.subr.mxu0 0.0
          %6542 = vmatpush2.msra.mxu0 %v6337
          %6543 = vmatprep.subr.mxu0 0.0
          %6544 = vmatpush2.msra.mxu0 %v6336
          %6545 = vmatprep.subr.mxu0 0.0
          %6546 = vmatpush2.msra.mxu0 %v6335
          %6547 = vmatprep.subr.mxu0 0.0
          %6548 = vmatpush2.msra.mxu0 %v6334
          %6549 = vmatprep.subr.mxu0 0.0
          %6550 = vmatpush2.msra.mxu0 %v6333
          %6551 = vmatprep.subr.mxu0 0.0
          %6552 = vmatpush2.msra.mxu0 %v6332
          %6553 = vmatprep.subr.mxu0 0.0
          %6554 = vmatpush2.msra.mxu0 %v6331
          %6555 = vmatprep.subr.mxu0 0.0
          %6556 = vmatpush2.msra.mxu0 %v6330
          %6557 = vmatprep.subr.mxu0 0.0
          %6558 = vmatpush2.msra.mxu0 %v6329
          %6559 = vmatprep.subr.mxu0 0.0
          %6560 = vmatpush2.msra.mxu0 %v6328
          %6561 = vmatprep.subr.mxu0 0.0
          %6562 = vmatpush2.msra.mxu0 %v6327
          %6563 = vmatprep.subr.mxu0 0.0
          %6564 = vmatpush2.msra.mxu0 %v6326
          %6565 = vmatprep.subr.mxu0 0.0
          %6566 = vmatpush2.msra.mxu0 %v6325
          %6567 = vmatprep.subr.mxu0 0.0
          %6568 = vmatpush2.msra.mxu0 %v6324
          %6569 = vmatprep.subr.mxu0 0.0
          %6570 = vmatpush2.msra.mxu0 %v6323
          %6571 = vmatprep.subr.mxu0 0.0
          %6572 = vmatpush2.msra.mxu0 %v6322
          %6573 = vmatprep.mubr.f32.mxu0 %v6294
          %6574 = vmatmul.mubr.f32.gmra.mxu0 %v6293
          %v6575 = vpop.f32.mrf.mxu0
          %v6576 = vadd.f32 0.0, %v6575
          %v6577 = vpop.f32.mrf.mxu0
          %6578 = vdwg.mxu0
          %6579 = vmatprep.subr.mxu0 0.0
          %6580 = vmatpush1.msra.mxu0 %v6353
          %6581 = vmatprep.subr.mxu0 0.0
          %6582 = vmatpush1.msra.mxu0 %v6352
          %6583 = vmatprep.subr.mxu0 0.0
          %6584 = vmatpush1.msra.mxu0 %v6351
          %6585 = vmatprep.subr.mxu0 0.0
          %6586 = vmatpush1.msra.mxu0 %v6350
          %6587 = vmatprep.subr.mxu0 0.0
          %6588 = vmatpush1.msra.mxu0 %v6349
          %6589 = vmatprep.subr.mxu0 0.0
          %6590 = vmatpush1.msra.mxu0 %v6348
          %6591 = vmatprep.subr.mxu0 0.0
          %6592 = vmatpush1.msra.mxu0 %v6347
          %6593 = vmatprep.subr.mxu0 0.0
          %6594 = vmatpush1.msra.mxu0 %v6346
          %6595 = vmatprep.subr.mxu0 0.0
          %6596 = vmatpush1.msra.mxu0 %v6345
          %6597 = vmatprep.subr.mxu0 0.0
          %6598 = vmatpush1.msra.mxu0 %v6344
          %6599 = vmatprep.subr.mxu0 0.0
          %6600 = vmatpush1.msra.mxu0 %v6343
          %6601 = vmatprep.subr.mxu0 0.0
          %6602 = vmatpush1.msra.mxu0 %v6342
          %6603 = vmatprep.subr.mxu0 0.0
          %6604 = vmatpush1.msra.mxu0 %v6341
          %6605 = vmatprep.subr.mxu0 0.0
          %6606 = vmatpush1.msra.mxu0 %v6340
          %6607 = vmatprep.subr.mxu0 0.0
          %6608 = vmatpush1.msra.mxu0 %v6339
          %6609 = vmatprep.subr.mxu0 0.0
          %6610 = vmatpush1.msra.mxu0 %v6338
          %6611 = vmatprep.subr.mxu0 0.0
          %6612 = vmatpush2.msra.mxu0 %v6369
          %6613 = vmatprep.subr.mxu0 0.0
          %6614 = vmatpush2.msra.mxu0 %v6368
          %6615 = vmatprep.subr.mxu0 0.0
          %6616 = vmatpush2.msra.mxu0 %v6367
          %6617 = vmatprep.subr.mxu0 0.0
          %6618 = vmatpush2.msra.mxu0 %v6366
          %6619 = vmatprep.subr.mxu0 0.0
          %6620 = vmatpush2.msra.mxu0 %v6365
          %6621 = vmatprep.subr.mxu0 0.0
          %6622 = vmatpush2.msra.mxu0 %v6364
          %6623 = vmatprep.subr.mxu0 0.0
          %6624 = vmatpush2.msra.mxu0 %v6363
          %6625 = vmatprep.subr.mxu0 0.0
          %6626 = vmatpush2.msra.mxu0 %v6362
          %6627 = vmatprep.subr.mxu0 0.0
          %6628 = vmatpush2.msra.mxu0 %v6361
          %6629 = vmatprep.subr.mxu0 0.0
          %6630 = vmatpush2.msra.mxu0 %v6360
          %6631 = vmatprep.subr.mxu0 0.0
          %6632 = vmatpush2.msra.mxu0 %v6359
          %6633 = vmatprep.subr.mxu0 0.0
          %6634 = vmatpush2.msra.mxu0 %v6358
          %6635 = vmatprep.subr.mxu0 0.0
          %6636 = vmatpush2.msra.mxu0 %v6357
          %6637 = vmatprep.subr.mxu0 0.0
          %6638 = vmatpush2.msra.mxu0 %v6356
          %6639 = vmatprep.subr.mxu0 0.0
          %6640 = vmatpush2.msra.mxu0 %v6355
          %6641 = vmatprep.subr.mxu0 0.0
          %6642 = vmatpush2.msra.mxu0 %v6354
          %6643 = vmatprep.mubr.f32.mxu0 %v6296
          %6644 = vmatmul.mubr.f32.gmra.mxu0 %v6295
          %v6645 = vpop.f32.mrf.mxu0
          %v6646 = vadd.f32 %v6576, %v6645
          %v6647 = vpop.f32.mrf.mxu0
          %6648 = vdwg.mxu0
          %6649 = vmatprep.subr.mxu0 0.0
          %6650 = vmatpush1.msra.mxu0 %v6385
          %6651 = vmatprep.subr.mxu0 0.0
          %6652 = vmatpush1.msra.mxu0 %v6384
          %6653 = vmatprep.subr.mxu0 0.0
          %6654 = vmatpush1.msra.mxu0 %v6383
          %6655 = vmatprep.subr.mxu0 0.0
          %6656 = vmatpush1.msra.mxu0 %v6382
          %6657 = vmatprep.subr.mxu0 0.0
          %6658 = vmatpush1.msra.mxu0 %v6381
          %6659 = vmatprep.subr.mxu0 0.0
          %6660 = vmatpush1.msra.mxu0 %v6380
          %6661 = vmatprep.subr.mxu0 0.0
          %6662 = vmatpush1.msra.mxu0 %v6379
          %6663 = vmatprep.subr.mxu0 0.0
          %6664 = vmatpush1.msra.mxu0 %v6378
          %6665 = vmatprep.subr.mxu0 0.0
          %6666 = vmatpush1.msra.mxu0 %v6377
          %6667 = vmatprep.subr.mxu0 0.0
          %6668 = vmatpush1.msra.mxu0 %v6376
          %6669 = vmatprep.subr.mxu0 0.0
          %6670 = vmatpush1.msra.mxu0 %v6375
          %6671 = vmatprep.subr.mxu0 0.0
          %6672 = vmatpush1.msra.mxu0 %v6374
          %6673 = vmatprep.subr.mxu0 0.0
          %6674 = vmatpush1.msra.mxu0 %v6373
          %6675 = vmatprep.subr.mxu0 0.0
          %6676 = vmatpush1.msra.mxu0 %v6372
          %6677 = vmatprep.subr.mxu0 0.0
          %6678 = vmatpush1.msra.mxu0 %v6371
          %6679 = vmatprep.subr.mxu0 0.0
          %6680 = vmatpush1.msra.mxu0 %v6370
          %6681 = vmatprep.subr.mxu0 0.0
          %6682 = vmatpush2.msra.mxu0 %v6401
          %6683 = vmatprep.subr.mxu0 0.0
          %6684 = vmatpush2.msra.mxu0 %v6400
          %6685 = vmatprep.subr.mxu0 0.0
          %6686 = vmatpush2.msra.mxu0 %v6399
          %6687 = vmatprep.subr.mxu0 0.0
          %6688 = vmatpush2.msra.mxu0 %v6398
          %6689 = vmatprep.subr.mxu0 0.0
          %6690 = vmatpush2.msra.mxu0 %v6397
          %6691 = vmatprep.subr.mxu0 0.0
          %6692 = vmatpush2.msra.mxu0 %v6396
          %6693 = vmatprep.subr.mxu0 0.0
          %6694 = vmatpush2.msra.mxu0 %v6395
          %6695 = vmatprep.subr.mxu0 0.0
          %6696 = vmatpush2.msra.mxu0 %v6394
          %6697 = vmatprep.subr.mxu0 0.0
          %6698 = vmatpush2.msra.mxu0 %v6393
          %6699 = vmatprep.subr.mxu0 0.0
          %6700 = vmatpush2.msra.mxu0 %v6392
          %6701 = vmatprep.subr.mxu0 0.0
          %6702 = vmatpush2.msra.mxu0 %v6391
          %6703 = vmatprep.subr.mxu0 0.0
          %6704 = vmatpush2.msra.mxu0 %v6390
          %6705 = vmatprep.subr.mxu0 0.0
          %6706 = vmatpush2.msra.mxu0 %v6389
          %6707 = vmatprep.subr.mxu0 0.0
          %6708 = vmatpush2.msra.mxu0 %v6388
          %6709 = vmatprep.subr.mxu0 0.0
          %6710 = vmatpush2.msra.mxu0 %v6387
          %6711 = vmatprep.subr.mxu0 0.0
          %6712 = vmatpush2.msra.mxu0 %v6386
          %6713 = vmatprep.mubr.f32.mxu0 %v6298
          %6714 = vmatmul.mubr.f32.gmra.mxu0 %v6297
          %v6715 = vpop.f32.mrf.mxu0
          %v6716 = vadd.f32 %v6646, %v6715
          %v6717 = vpop.f32.mrf.mxu0
          %6718 = vdwg.mxu0
          %6719 = vmatprep.subr.mxu0 0.0
          %6720 = vmatpush1.msra.mxu0 %v6417
          %6721 = vmatprep.subr.mxu0 0.0
          %6722 = vmatpush1.msra.mxu0 %v6416
          %6723 = vmatprep.subr.mxu0 0.0
          %6724 = vmatpush1.msra.mxu0 %v6415
          %6725 = vmatprep.subr.mxu0 0.0
          %6726 = vmatpush1.msra.mxu0 %v6414
          %6727 = vmatprep.subr.mxu0 0.0
          %6728 = vmatpush1.msra.mxu0 %v6413
          %6729 = vmatprep.subr.mxu0 0.0
          %6730 = vmatpush1.msra.mxu0 %v6412
          %6731 = vmatprep.subr.mxu0 0.0
          %6732 = vmatpush1.msra.mxu0 %v6411
          %6733 = vmatprep.subr.mxu0 0.0
          %6734 = vmatpush1.msra.mxu0 %v6410
          %6735 = vmatprep.subr.mxu0 0.0
          %6736 = vmatpush1.msra.mxu0 %v6409
          %6737 = vmatprep.subr.mxu0 0.0
          %6738 = vmatpush1.msra.mxu0 %v6408
          %6739 = vmatprep.subr.mxu0 0.0
          %6740 = vmatpush1.msra.mxu0 %v6407
          %6741 = vmatprep.subr.mxu0 0.0
          %6742 = vmatpush1.msra.mxu0 %v6406
          %6743 = vmatprep.subr.mxu0 0.0
          %6744 = vmatpush1.msra.mxu0 %v6405
          %6745 = vmatprep.subr.mxu0 0.0
          %6746 = vmatpush1.msra.mxu0 %v6404
          %6747 = vmatprep.subr.mxu0 0.0
          %6748 = vmatpush1.msra.mxu0 %v6403
          %6749 = vmatprep.subr.mxu0 0.0
          %6750 = vmatpush1.msra.mxu0 %v6402
          %6751 = vmatprep.subr.mxu0 0.0
          %6752 = vmatpush2.msra.mxu0 %v6433
          %6753 = vmatprep.subr.mxu0 0.0
          %6754 = vmatpush2.msra.mxu0 %v6432
          %6755 = vmatprep.subr.mxu0 0.0
          %6756 = vmatpush2.msra.mxu0 %v6431
          %6757 = vmatprep.subr.mxu0 0.0
          %6758 = vmatpush2.msra.mxu0 %v6430
          %6759 = vmatprep.subr.mxu0 0.0
          %6760 = vmatpush2.msra.mxu0 %v6429
          %6761 = vmatprep.subr.mxu0 0.0
          %6762 = vmatpush2.msra.mxu0 %v6428
          %6763 = vmatprep.subr.mxu0 0.0
          %6764 = vmatpush2.msra.mxu0 %v6427
          %6765 = vmatprep.subr.mxu0 0.0
          %6766 = vmatpush2.msra.mxu0 %v6426
          %6767 = vmatprep.subr.mxu0 0.0
          %6768 = vmatpush2.msra.mxu0 %v6425
          %6769 = vmatprep.subr.mxu0 0.0
          %6770 = vmatpush2.msra.mxu0 %v6424
          %6771 = vmatprep.subr.mxu0 0.0
          %6772 = vmatpush2.msra.mxu0 %v6423
          %6773 = vmatprep.subr.mxu0 0.0
          %6774 = vmatpush2.msra.mxu0 %v6422
          %6775 = vmatprep.subr.mxu0 0.0
          %6776 = vmatpush2.msra.mxu0 %v6421
          %6777 = vmatprep.subr.mxu0 0.0
          %6778 = vmatpush2.msra.mxu0 %v6420
          %6779 = vmatprep.subr.mxu0 0.0
          %6780 = vmatpush2.msra.mxu0 %v6419
          %6781 = vmatprep.subr.mxu0 0.0
          %6782 = vmatpush2.msra.mxu0 %v6418
          %6783 = vmatprep.mubr.f32.mxu0 %v6300
          %6784 = vmatmul.mubr.f32.gmra.mxu0 %v6299
          %v6785 = vpop.f32.mrf.mxu0
          %v6786 = vadd.f32 %v6716, %v6785
          %v6787 = vpop.f32.mrf.mxu0
          %6788 = vdwg.mxu0
          %6789 = vmatprep.subr.mxu0 0.0
          %6790 = vmatpush1.msra.mxu0 %v6449
          %6791 = vmatprep.subr.mxu0 0.0
          %6792 = vmatpush1.msra.mxu0 %v6448
          %6793 = vmatprep.subr.mxu0 0.0
          %6794 = vmatpush1.msra.mxu0 %v6447
          %6795 = vmatprep.subr.mxu0 0.0
          %6796 = vmatpush1.msra.mxu0 %v6446
          %6797 = vmatprep.subr.mxu0 0.0
          %6798 = vmatpush1.msra.mxu0 %v6445
          %6799 = vmatprep.subr.mxu0 0.0
          %6800 = vmatpush1.msra.mxu0 %v6444
          %6801 = vmatprep.subr.mxu0 0.0
          %6802 = vmatpush1.msra.mxu0 %v6443
          %6803 = vmatprep.subr.mxu0 0.0
          %6804 = vmatpush1.msra.mxu0 %v6442
          %6805 = vmatprep.subr.mxu0 0.0
          %6806 = vmatpush1.msra.mxu0 %v6441
          %6807 = vmatprep.subr.mxu0 0.0
          %6808 = vmatpush1.msra.mxu0 %v6440
          %6809 = vmatprep.subr.mxu0 0.0
          %6810 = vmatpush1.msra.mxu0 %v6439
          %6811 = vmatprep.subr.mxu0 0.0
          %6812 = vmatpush1.msra.mxu0 %v6438
          %6813 = vmatprep.subr.mxu0 0.0
          %6814 = vmatpush1.msra.mxu0 %v6437
          %6815 = vmatprep.subr.mxu0 0.0
          %6816 = vmatpush1.msra.mxu0 %v6436
          %6817 = vmatprep.subr.mxu0 0.0
          %6818 = vmatpush1.msra.mxu0 %v6435
          %6819 = vmatprep.subr.mxu0 0.0
          %6820 = vmatpush1.msra.mxu0 %v6434
          %6821 = vmatprep.subr.mxu0 0.0
          %6822 = vmatpush2.msra.mxu0 %v6465
          %6823 = vmatprep.subr.mxu0 0.0
          %6824 = vmatpush2.msra.mxu0 %v6464
          %6825 = vmatprep.subr.mxu0 0.0
          %6826 = vmatpush2.msra.mxu0 %v6463
          %6827 = vmatprep.subr.mxu0 0.0
          %6828 = vmatpush2.msra.mxu0 %v6462
          %6829 = vmatprep.subr.mxu0 0.0
          %6830 = vmatpush2.msra.mxu0 %v6461
          %6831 = vmatprep.subr.mxu0 0.0
          %6832 = vmatpush2.msra.mxu0 %v6460
          %6833 = vmatprep.subr.mxu0 0.0
          %6834 = vmatpush2.msra.mxu0 %v6459
          %6835 = vmatprep.subr.mxu0 0.0
          %6836 = vmatpush2.msra.mxu0 %v6458
          %6837 = vmatprep.subr.mxu0 0.0
          %6838 = vmatpush2.msra.mxu0 %v6457
          %6839 = vmatprep.subr.mxu0 0.0
          %6840 = vmatpush2.msra.mxu0 %v6456
          %6841 = vmatprep.subr.mxu0 0.0
          %6842 = vmatpush2.msra.mxu0 %v6455
          %6843 = vmatprep.subr.mxu0 0.0
          %6844 = vmatpush2.msra.mxu0 %v6454
          %6845 = vmatprep.subr.mxu0 0.0
          %6846 = vmatpush2.msra.mxu0 %v6453
          %6847 = vmatprep.subr.mxu0 0.0
          %6848 = vmatpush2.msra.mxu0 %v6452
          %6849 = vmatprep.subr.mxu0 0.0
          %6850 = vmatpush2.msra.mxu0 %v6451
          %6851 = vmatprep.subr.mxu0 0.0
          %6852 = vmatpush2.msra.mxu0 %v6450
          %6853 = vmatprep.mubr.f32.mxu0 %v6302
          %6854 = vmatmul.mubr.f32.gmra.mxu0 %v6301
          %v6855 = vpop.f32.mrf.mxu0
          %v6856 = vadd.f32 %v6786, %v6855
          %v6857 = vpop.f32.mrf.mxu0
          %6858 = vdwg.mxu0
          %6859 = vmatprep.subr.mxu0 0.0
          %6860 = vmatpush1.msra.mxu0 %v6481
          %6861 = vmatprep.subr.mxu0 0.0
          %6862 = vmatpush1.msra.mxu0 %v6480
          %6863 = vmatprep.subr.mxu0 0.0
          %6864 = vmatpush1.msra.mxu0 %v6479
          %6865 = vmatprep.subr.mxu0 0.0
          %6866 = vmatpush1.msra.mxu0 %v6478
          %6867 = vmatprep.subr.mxu0 0.0
          %6868 = vmatpush1.msra.mxu0 %v6477
          %6869 = vmatprep.subr.mxu0 0.0
          %6870 = vmatpush1.msra.mxu0 %v6476
          %6871 = vmatprep.subr.mxu0 0.0
          %6872 = vmatpush1.msra.mxu0 %v6475
          %6873 = vmatprep.subr.mxu0 0.0
          %6874 = vmatpush1.msra.mxu0 %v6474
          %6875 = vmatprep.subr.mxu0 0.0
          %6876 = vmatpush1.msra.mxu0 %v6473
          %6877 = vmatprep.subr.mxu0 0.0
          %6878 = vmatpush1.msra.mxu0 %v6472
          %6879 = vmatprep.subr.mxu0 0.0
          %6880 = vmatpush1.msra.mxu0 %v6471
          %6881 = vmatprep.subr.mxu0 0.0
          %6882 = vmatpush1.msra.mxu0 %v6470
          %6883 = vmatprep.subr.mxu0 0.0
          %6884 = vmatpush1.msra.mxu0 %v6469
          %6885 = vmatprep.subr.mxu0 0.0
          %6886 = vmatpush1.msra.mxu0 %v6468
          %6887 = vmatprep.subr.mxu0 0.0
          %6888 = vmatpush1.msra.mxu0 %v6467
          %6889 = vmatprep.subr.mxu0 0.0
          %6890 = vmatpush1.msra.mxu0 %v6466
          %6891 = vmatprep.subr.mxu0 0.0
          %6892 = vmatpush2.msra.mxu0 %v6497
          %6893 = vmatprep.subr.mxu0 0.0
          %6894 = vmatpush2.msra.mxu0 %v6496
          %6895 = vmatprep.subr.mxu0 0.0
          %6896 = vmatpush2.msra.mxu0 %v6495
          %6897 = vmatprep.subr.mxu0 0.0
          %6898 = vmatpush2.msra.mxu0 %v6494
          %6899 = vmatprep.subr.mxu0 0.0
          %6900 = vmatpush2.msra.mxu0 %v6493
          %6901 = vmatprep.subr.mxu0 0.0
          %6902 = vmatpush2.msra.mxu0 %v6492
          %6903 = vmatprep.subr.mxu0 0.0
          %6904 = vmatpush2.msra.mxu0 %v6491
          %6905 = vmatprep.subr.mxu0 0.0
          %6906 = vmatpush2.msra.mxu0 %v6490
          %6907 = vmatprep.subr.mxu0 0.0
          %6908 = vmatpush2.msra.mxu0 %v6489
          %6909 = vmatprep.subr.mxu0 0.0
          %6910 = vmatpush2.msra.mxu0 %v6488
          %6911 = vmatprep.subr.mxu0 0.0
          %6912 = vmatpush2.msra.mxu0 %v6487
          %6913 = vmatprep.subr.mxu0 0.0
          %6914 = vmatpush2.msra.mxu0 %v6486
          %6915 = vmatprep.subr.mxu0 0.0
          %6916 = vmatpush2.msra.mxu0 %v6485
          %6917 = vmatprep.subr.mxu0 0.0
          %6918 = vmatpush2.msra.mxu0 %v6484
          %6919 = vmatprep.subr.mxu0 0.0
          %6920 = vmatpush2.msra.mxu0 %v6483
          %6921 = vmatprep.subr.mxu0 0.0
          %6922 = vmatpush2.msra.mxu0 %v6482
          %6923 = vmatprep.mubr.f32.mxu0 %v6304
          %6924 = vmatmul.mubr.f32.gmra.mxu0 %v6303
          %v6925 = vpop.f32.mrf.mxu0
          %v6926 = vadd.f32 %v6856, %v6925
          %v6927 = vpop.f32.mrf.mxu0
          %6928 = vdwg.mxu0
          %6929 = vmatprep.subr.mxu0 0.0
          %6930 = vmatpush1.msra.mxu0 0.0
          %6931 = vmatprep.subr.mxu0 0.0
          %6932 = vmatpush1.msra.mxu0 0.0
          %6933 = vmatprep.subr.mxu0 0.0
          %6934 = vmatpush1.msra.mxu0 0.0
          %6935 = vmatprep.subr.mxu0 0.0
          %6936 = vmatpush1.msra.mxu0 0.0
          %6937 = vmatprep.subr.mxu0 0.0
          %6938 = vmatpush1.msra.mxu0 0.0
          %6939 = vmatprep.subr.mxu0 0.0
          %6940 = vmatpush1.msra.mxu0 0.0
          %6941 = vmatprep.subr.mxu0 0.0
          %6942 = vmatpush1.msra.mxu0 0.0
          %6943 = vmatprep.subr.mxu0 0.0
          %6944 = vmatpush1.msra.mxu0 0.0
          %6945 = vmatprep.subr.mxu0 0.0
          %6946 = vmatpush1.msra.mxu0 %v6505
          %6947 = vmatprep.subr.mxu0 0.0
          %6948 = vmatpush1.msra.mxu0 %v6504
          %6949 = vmatprep.subr.mxu0 0.0
          %6950 = vmatpush1.msra.mxu0 %v6503
          %6951 = vmatprep.subr.mxu0 0.0
          %6952 = vmatpush1.msra.mxu0 %v6502
          %6953 = vmatprep.subr.mxu0 0.0
          %6954 = vmatpush1.msra.mxu0 %v6501
          %6955 = vmatprep.subr.mxu0 0.0
          %6956 = vmatpush1.msra.mxu0 %v6500
          %6957 = vmatprep.subr.mxu0 0.0
          %6958 = vmatpush1.msra.mxu0 %v6499
          %6959 = vmatprep.subr.mxu0 0.0
          %6960 = vmatpush1.msra.mxu0 %v6498
          %6961 = vmatprep.subr.mxu0 0.0
          %6962 = vmatpush2.msra.mxu0 0.0
          %6963 = vmatprep.subr.mxu0 0.0
          %6964 = vmatpush2.msra.mxu0 0.0
          %6965 = vmatprep.subr.mxu0 0.0
          %6966 = vmatpush2.msra.mxu0 0.0
          %6967 = vmatprep.subr.mxu0 0.0
          %6968 = vmatpush2.msra.mxu0 0.0
          %6969 = vmatprep.subr.mxu0 0.0
          %6970 = vmatpush2.msra.mxu0 0.0
          %6971 = vmatprep.subr.mxu0 0.0
          %6972 = vmatpush2.msra.mxu0 0.0
          %6973 = vmatprep.subr.mxu0 0.0
          %6974 = vmatpush2.msra.mxu0 0.0
          %6975 = vmatprep.subr.mxu0 0.0
          %6976 = vmatpush2.msra.mxu0 0.0
          %6977 = vmatprep.subr.mxu0 0.0
          %6978 = vmatpush2.msra.mxu0 0.0
          %6979 = vmatprep.subr.mxu0 0.0
          %6980 = vmatpush2.msra.mxu0 0.0
          %6981 = vmatprep.subr.mxu0 0.0
          %6982 = vmatpush2.msra.mxu0 0.0
          %6983 = vmatprep.subr.mxu0 0.0
          %6984 = vmatpush2.msra.mxu0 0.0
          %6985 = vmatprep.subr.mxu0 0.0
          %6986 = vmatpush2.msra.mxu0 0.0
          %6987 = vmatprep.subr.mxu0 0.0
          %6988 = vmatpush2.msra.mxu0 0.0
          %6989 = vmatprep.subr.mxu0 0.0
          %6990 = vmatpush2.msra.mxu0 0.0
          %6991 = vmatprep.subr.mxu0 0.0
          %6992 = vmatpush2.msra.mxu0 0.0
          %6993 = vmatprep.mubr.f32.mxu0 0.0
          %6994 = vmatmul.mubr.f32.gmra.mxu0 %v6507
          %v6995 = vpop.f32.mrf.mxu0
          %v6996 = vadd.f32 %v6926, %v6995
          %v6997 = vpop.f32.mrf.mxu0
          %6998 = vdwg.mxu0
          %vm6999 = vcmask 130048
          %7000 = vst.msk [vmem:[%s902] sm:$0xff] %vm6999, %v6996
        $region132: #{mm_model_forward.1} parent=107 // pred_fallthru
          _
        %p7001 = scmp.lt.s32.totalorder %s40, 1
        %s7002 = scalar_select %p7001, %s40, 1
        %s7003 = smul.addr %s7002, 8
        %s7004 = scalar_lea.vmem %s22, %s7003
        // Predicated region
        $region133: #{mm_model_forward.1} parent=107 // pred_check
          %p7005 = pneg %p573
        $region134: #{mm_model_forward.1} parent=107 // pred_check_branch
          %7007 = sbr.rel (%p7005) target = $region136
        $region135: #{mm_model_forward.1} parent=107 // pred_region
          _
        $region136: #{mm_model_forward.1} parent=107 // pred_fallthru
          _
      $region108: #{mm_model_forward.1} parent=5 // pred_fallthru
        _
      %p7008 = scmp.le.s32.totalorder 2, %s31
      // Predicated region
      $region137: #{mm_model_forward.1} parent=5 // pred_check
        %p7009 = pneg %p7008
      $region138: #{mm_model_forward.1} parent=5 // pred_check_branch
        %7011 = sbr.rel (%p7009) target = $region140
      $region139: #{mm_model_forward.1} parent=5 // pred_region
        %s7012 = ssub.s32 %s31, 2
        // Predicated region
        $region141: #{mm_model_forward.1} parent=139 // pred_check
          %p7013 = pneg %p579
        $region142: #{mm_model_forward.1} parent=139 // pred_check_branch
          %7015 = sbr.rel (%p7013) target = $region144
        $region143: #{mm_model_forward.1} parent=139 // pred_region
          %p7016 = scmp.lt.s32.totalorder %s42, 1
          %s7017 = scalar_select %p7016, %s42, 1
          %s7018 = smul.addr %s7017, 8
          %s7019 = scalar_lea.vmem %s22, %s7018
        $region144: #{mm_model_forward.1} parent=139 // pred_fallthru
          _
      $region140: #{mm_model_forward.1} parent=5 // pred_fallthru
        _
    $region6: #{mm_model_forward.1} parent=1 // loop_footer
      %s35 = sadd.s32 1, %s31
    $region7: #{mm_model_forward.1} parent=1 // loop_footer_branch
      %30 = sbr.rel target = $region3
    $region8: #{mm_model_forward.1} parent=1 // loop_exit
      _
    %7020 = vsyncpa [#allocation6], 1
    %s7021 = scalar_lea.sflag [#allocation6], 1
    %7022 = vsyncpa %s7021, 1
    %7023 = vsyncpa [#allocation8], 1
    %7024 = vsyncpa [#allocation11], 1

</llo_original>
